<compile_context>
chip_gen: v5e
topology: v5e:2x2
jax: 0.10.0
libtpu: 0.0.40
codegen_flags: <defaults>
</compile_context>

<pallas_src>
import jax
import jax.numpy as jnp
from jax.experimental import pallas as pl
from jax.experimental.pallas import tpu as pltpu


CONV_CFG = [(3, 16), (16, 16), (16, 32), (32, 64), (64, 128), (128, 128)]
FLAT_DIM = 128 * 4 * 4


# ----------------------------------------------------------------------------
# In-kernel helpers (traced Python, everything stays in VMEM)
# ----------------------------------------------------------------------------
def _conv3x3_relu(pad_ref, w_ref, b_ref, hh, ww, cin):
    """3x3 stride-1 conv + bias + ReLU read from a zero-padded VMEM ref.

    pad_ref: (hh+2, ww+2, cin) bf16, zero halo
    w_ref  : (9*cin, cout)     bf16, rows ordered (kh, kw, cin)
    b_ref  : (1, cout)         f32
    returns: (hh*ww, cout)     f32
    """
    taps = [
        pad_ref[kh:kh + hh, kw:kw + ww, :].reshape(hh * ww, cin)
        for kh in range(3) for kw in range(3)
    ]
    patch = jnp.concatenate(taps, axis=-1)                    # (hh*ww, 9*cin) bf16
    acc = jnp.dot(patch, w_ref[...], preferred_element_type=jnp.float32)
    return jnp.maximum(acc + b_ref[...], 0.0)


def _maxpool2x2(h, hh, ww, c):
    """2x2 / stride-2 max-pool of a value laid out as (hh*ww, c) -> (hh//2, ww//2, c)."""
    h = h.reshape(hh // 2, 2, ww, c)
    h = jnp.maximum(h[:, 0], h[:, 1])            # pool over row pairs
    h = h.reshape(hh // 2, ww // 2, 2, c)
    h = jnp.maximum(h[:, :, 0], h[:, :, 1])      # pool over column pairs
    return h                                     # (hh//2, ww//2, c) f32


# ----------------------------------------------------------------------------
# Fused whole-network kernel (one image per grid step)
# ----------------------------------------------------------------------------
def netv2_kernel(xcol_ref,
                 w1, b1, w2, b2, w3, b3, w4, b4, w5, b5, w6, b6, wl, bl,
                 o_ref,
                 p2, p3, p4, p5, p6):
    # Zero the padded scratch buffers (cheap; keeps the zero halo valid and is
    # safe under "parallel" batch sharding — no reliance on program_id == 0).
    for p in (p2, p3, p4, p5, p6):
        p[...] = jnp.zeros_like(p)

    # conv1: 3 -> 16, stride 2, padding 1  (im2col patch built in the wrapper)
    h = jnp.dot(xcol_ref[0], w1[...], preferred_element_type=jnp.float32)
    h = jnp.maximum(h + b1[...], 0.0)                            # (256, 16)
    p2[1:17, 1:17, :] = h.astype(jnp.bfloat16).reshape(16, 16, 16)

    # conv2: 16 -> 16, then maxpool 2x2
    h = _conv3x3_relu(p2, w2, b2, 16, 16, 16)                    # (256, 16)
    h = _maxpool2x2(h, 16, 16, 16)                               # (8, 8, 16)
    p3[1:9, 1:9, :] = h.astype(jnp.bfloat16)

    # conv3: 16 -> 32
    h = _conv3x3_relu(p3, w3, b3, 8, 8, 16)                      # (64, 32)
    p4[1:9, 1:9, :] = h.astype(jnp.bfloat16).reshape(8, 8, 32)

    # conv4: 32 -> 64, then maxpool 2x2
    h = _conv3x3_relu(p4, w4, b4, 8, 8, 32)                      # (64, 64)
    h = _maxpool2x2(h, 8, 8, 64)                                 # (4, 4, 64)
    p5[1:5, 1:5, :] = h.astype(jnp.bfloat16)

    # conv5: 64 -> 128
    h = _conv3x3_relu(p5, w5, b5, 4, 4, 64)                      # (16, 128)
    p6[1:5, 1:5, :] = h.astype(jnp.bfloat16).reshape(4, 4, 128)

    # conv6: 128 -> 128
    h = _conv3x3_relu(p6, w6, b6, 4, 4, 128)                     # (16, 128)

    # flatten (row = h*4 + w, lanes = channels -> HWC order) + Linear(2048, 10)
    feat = h.reshape(1, FLAT_DIM).astype(jnp.bfloat16)
    logits = jnp.dot(feat, wl[...], preferred_element_type=jnp.float32) + bl[...]
    o_ref[...] = logits.reshape(1, 1, 10)


# ----------------------------------------------------------------------------
# Wrapper
# ----------------------------------------------------------------------------
def _full_spec(shape):
    zeros = (0,) * len(shape)
    return pl.BlockSpec(shape, lambda i: zeros)


def netv2_forward(x_nchw, params):
    conv_w, conv_b, wl, bl = params
    bsz = x_nchw.shape[0]

    # Layer-1 im2col with stride 2 and padding 1 (cheap JAX glue on the raw,
    # tiny input; folds the stride into the patch so only 16x16 outputs exist).
    x = jnp.transpose(x_nchw, (0, 2, 3, 1)).astype(jnp.float32)   # NCHW -> NHWC
    xp = jnp.pad(x, ((0, 0), (1, 1), (1, 1), (0, 0)))             # (B, 34, 34, 3)
    taps = [xp[:, kh:kh + 32:2, kw:kw + 32:2, :]
            for kh in range(3) for kw in range(3)]
    x_col = jnp.concatenate(taps, axis=-1).reshape(bsz, 256, 27)
    x_col = x_col.astype(jnp.bfloat16)

    weight_args = []
    in_specs = [pl.BlockSpec((1, 256, 27), lambda i: (i, 0, 0))]
    for w, b in zip(conv_w, conv_b):
        weight_args += [w, b]
        in_specs += [_full_spec(w.shape), _full_spec(b.shape)]
    weight_args += [wl, bl]
    in_specs += [_full_spec(wl.shape), _full_spec(bl.shape)]

    out = pl.pallas_call(
        netv2_kernel,
        out_shape=jax.ShapeDtypeStruct((bsz, 1, 10), jnp.float32),
        grid=(bsz,),
        in_specs=in_specs,
        out_specs=pl.BlockSpec((1, 1, 10), lambda i: (i, 0, 0)),
        scratch_shapes=[
            pltpu.VMEM((18, 18, 16), jnp.bfloat16),   # padded conv2 input
            pltpu.VMEM((10, 10, 16), jnp.bfloat16),   # padded conv3 input
            pltpu.VMEM((10, 10, 32), jnp.bfloat16),   # padded conv4 input
            pltpu.VMEM((6, 6, 64), jnp.bfloat16),     # padded conv5 input
            pltpu.VMEM((6, 6, 128), jnp.bfloat16),    # padded conv6 input
        ],
        compiler_params=pltpu.CompilerParams(
            dimension_semantics=("parallel",)),
    )(x_col, *weight_args)
    return out.reshape(bsz, 10)


# ----------------------------------------------------------------------------
# Parameters (mirrors weight_init: kaiming_normal_ conv/linear weights, zero
# conv bias, PyTorch-default uniform linear bias). Conv weights stored im2col-
# flattened; linear weight rows permuted CHW -> HWC to match the in-kernel
# lane-dense flatten.
# ----------------------------------------------------------------------------
def init_params(key):
    keys = jax.random.split(key, len(CONV_CFG) + 2)
    conv_w, conv_b = [], []
    for i, (cin, cout) in enumerate(CONV_CFG):
        fan_in = cin * 9
        std = (2.0 / fan_in) ** 0.5                    # kaiming_normal_, relu gain
        w = jax.random.normal(keys[i], (3, 3, cin, cout), jnp.float32) * std
        conv_w.append(w.reshape(9 * cin, cout).astype(jnp.bfloat16))
        conv_b.append(jnp.zeros((1, cout), jnp.float32))

    std = (2.0 / FLAT_DIM) ** 0.5
    wl_chw = jax.random.normal(keys[-2], (FLAT_DIM, 10), jnp.float32) * std
    r = jnp.arange(FLAT_DIM)
    h_, w_, c_ = r // (4 * 128), (r // 128) % 4, r % 128
    perm = c_ * 16 + h_ * 4 + w_                       # HWC row -> CHW row
    wl_hwc = wl_chw[perm].astype(jnp.bfloat16)
    bound = 1.0 / (FLAT_DIM ** 0.5)
    bl = jax.random.uniform(keys[-1], (1, 10), jnp.float32, -bound, bound)
    return conv_w, conv_b, wl_hwc, bl


if __name__ == "__main__":
    key = jax.random.PRNGKey(0)
    pkey, xkey = jax.random.split(key)
    params = init_params(pkey)
    # NetV2's Linear(128*4*4, 10) implies 32x32 spatial input (CIFAR-like).
    x = jax.random.normal(xkey, (2, 3, 32, 32), jnp.float32)
    fwd = jax.jit(netv2_forward)
    out = jax.block_until_ready(fwd(x, params))
    assert out.shape == (2, 10) and out.dtype == jnp.float32
    assert bool(jnp.all(jnp.isfinite(out)))
    print("KERNEL_OK")
</pallas_src>

<mosaic_0001>
module attributes {stable_mosaic.version = 11 : i64} {
  func.func @netv2_kernel(%arg0: i32, %arg1: memref<1x256x27xbf16, #tpu.memory_space<vmem>>, %arg2: memref<27x16xbf16, #tpu.memory_space<vmem>>, %arg3: memref<1x16xf32, #tpu.memory_space<vmem>>, %arg4: memref<144x16xbf16, #tpu.memory_space<vmem>>, %arg5: memref<1x16xf32, #tpu.memory_space<vmem>>, %arg6: memref<144x32xbf16, #tpu.memory_space<vmem>>, %arg7: memref<1x32xf32, #tpu.memory_space<vmem>>, %arg8: memref<288x64xbf16, #tpu.memory_space<vmem>>, %arg9: memref<1x64xf32, #tpu.memory_space<vmem>>, %arg10: memref<576x128xbf16, #tpu.memory_space<vmem>>, %arg11: memref<1x128xf32, #tpu.memory_space<vmem>>, %arg12: memref<1152x128xbf16, #tpu.memory_space<vmem>>, %arg13: memref<1x128xf32, #tpu.memory_space<vmem>>, %arg14: memref<2048x10xbf16, #tpu.memory_space<vmem>>, %arg15: memref<1x10xf32, #tpu.memory_space<vmem>>, %arg16: memref<1x1x10xf32, #tpu.memory_space<vmem>>, %arg17: memref<18x18x16xbf16, #tpu.memory_space<vmem>>, %arg18: memref<10x10x16xbf16, #tpu.memory_space<vmem>>, %arg19: memref<10x10x32xbf16, #tpu.memory_space<vmem>>, %arg20: memref<6x6x64xbf16, #tpu.memory_space<vmem>>, %arg21: memref<6x6x128xbf16, #tpu.memory_space<vmem>>) attributes {dimension_semantics = [#tpu.dimension_semantics<parallel>], iteration_bounds = array<i64: 2>, scalar_prefetch = 0 : i64, scratch_operands = 5 : i64, tpu.core_type = #tpu.core_type<tc>, window_params = [{transform_indices = @transform_0, window_bounds = array<i64: 1, 256, 27>}, {pipeline_mode = #tpu.pipeline_mode<synchronous>, transform_indices = @transform_1, window_bounds = array<i64: 27, 16>}, {pipeline_mode = #tpu.pipeline_mode<synchronous>, transform_indices = @transform_2, window_bounds = array<i64: 1, 16>}, {pipeline_mode = #tpu.pipeline_mode<synchronous>, transform_indices = @transform_3, window_bounds = array<i64: 144, 16>}, {pipeline_mode = #tpu.pipeline_mode<synchronous>, transform_indices = @transform_4, window_bounds = array<i64: 1, 16>}, {pipeline_mode = #tpu.pipeline_mode<synchronous>, transform_indices = @transform_5, window_bounds = array<i64: 144, 32>}, {pipeline_mode = #tpu.pipeline_mode<synchronous>, transform_indices = @transform_6, window_bounds = array<i64: 1, 32>}, {pipeline_mode = #tpu.pipeline_mode<synchronous>, transform_indices = @transform_7, window_bounds = array<i64: 288, 64>}, {pipeline_mode = #tpu.pipeline_mode<synchronous>, transform_indices = @transform_8, window_bounds = array<i64: 1, 64>}, {pipeline_mode = #tpu.pipeline_mode<synchronous>, transform_indices = @transform_9, window_bounds = array<i64: 576, 128>}, {pipeline_mode = #tpu.pipeline_mode<synchronous>, transform_indices = @transform_10, window_bounds = array<i64: 1, 128>}, {pipeline_mode = #tpu.pipeline_mode<synchronous>, transform_indices = @transform_11, window_bounds = array<i64: 1152, 128>}, {pipeline_mode = #tpu.pipeline_mode<synchronous>, transform_indices = @transform_12, window_bounds = array<i64: 1, 128>}, {pipeline_mode = #tpu.pipeline_mode<synchronous>, transform_indices = @transform_13, window_bounds = array<i64: 2048, 10>}, {pipeline_mode = #tpu.pipeline_mode<synchronous>, transform_indices = @transform_14, window_bounds = array<i64: 1, 10>}, {transform_indices = @transform_15, window_bounds = array<i64: 1, 1, 10>}]} {
    %cst = arith.constant 0.000000e+00 : bf16
    %0 = vector.broadcast %cst : bf16 to vector<18x18x16xbf16>
    %c0 = arith.constant 0 : index
    %c0_0 = arith.constant 0 : index
    %c0_1 = arith.constant 0 : index
    %1 = vector.load %arg17[%c0, %c0_0, %c0_1] : memref<18x18x16xbf16, #tpu.memory_space<vmem>>, vector<18x18x16xbf16>
    tpu.vector_store %arg17[%c0, %c0_0, %c0_1], %0 {strides = array<i32>} : memref<18x18x16xbf16, #tpu.memory_space<vmem>>, vector<18x18x16xbf16>,
    %cst_2 = arith.constant 0.000000e+00 : bf16
    %2 = vector.broadcast %cst_2 : bf16 to vector<10x10x16xbf16>
    %c0_3 = arith.constant 0 : index
    %c0_4 = arith.constant 0 : index
    %c0_5 = arith.constant 0 : index
    %3 = vector.load %arg18[%c0_3, %c0_4, %c0_5] : memref<10x10x16xbf16, #tpu.memory_space<vmem>>, vector<10x10x16xbf16>
    tpu.vector_store %arg18[%c0_3, %c0_4, %c0_5], %2 {strides = array<i32>} : memref<10x10x16xbf16, #tpu.memory_space<vmem>>, vector<10x10x16xbf16>,
    %cst_6 = arith.constant 0.000000e+00 : bf16
    %4 = vector.broadcast %cst_6 : bf16 to vector<10x10x32xbf16>
    %c0_7 = arith.constant 0 : index
    %c0_8 = arith.constant 0 : index
    %c0_9 = arith.constant 0 : index
    %5 = vector.load %arg19[%c0_7, %c0_8, %c0_9] : memref<10x10x32xbf16, #tpu.memory_space<vmem>>, vector<10x10x32xbf16>
    tpu.vector_store %arg19[%c0_7, %c0_8, %c0_9], %4 {strides = array<i32>} : memref<10x10x32xbf16, #tpu.memory_space<vmem>>, vector<10x10x32xbf16>,
    %cst_10 = arith.constant 0.000000e+00 : bf16
    %6 = vector.broadcast %cst_10 : bf16 to vector<6x6x64xbf16>
    %c0_11 = arith.constant 0 : index
    %c0_12 = arith.constant 0 : index
    %c0_13 = arith.constant 0 : index
    %7 = vector.load %arg20[%c0_11, %c0_12, %c0_13] : memref<6x6x64xbf16, #tpu.memory_space<vmem>>, vector<6x6x64xbf16>
    tpu.vector_store %arg20[%c0_11, %c0_12, %c0_13], %6 {strides = array<i32>} : memref<6x6x64xbf16, #tpu.memory_space<vmem>>, vector<6x6x64xbf16>,
    %cst_14 = arith.constant 0.000000e+00 : bf16
    %8 = vector.broadcast %cst_14 : bf16 to vector<6x6x128xbf16>
    %c0_15 = arith.constant 0 : index
    %c0_16 = arith.constant 0 : index
    %c0_17 = arith.constant 0 : index
    %9 = vector.load %arg21[%c0_15, %c0_16, %c0_17] : memref<6x6x128xbf16, #tpu.memory_space<vmem>>, vector<6x6x128xbf16>
    tpu.vector_store %arg21[%c0_15, %c0_16, %c0_17], %8 {strides = array<i32>} : memref<6x6x128xbf16, #tpu.memory_space<vmem>>, vector<6x6x128xbf16>,
    %c0_18 = arith.constant 0 : index
    %c0_19 = arith.constant 0 : index
    %c0_20 = arith.constant 0 : index
    %10 = vector.load %arg1[%c0_18, %c0_19, %c0_20] : memref<1x256x27xbf16, #tpu.memory_space<vmem>>, vector<1x256x27xbf16>
    %11 = vector.shape_cast %10 : vector<1x256x27xbf16> to vector<256x27xbf16>
    %c0_21 = arith.constant 0 : index
    %c0_22 = arith.constant 0 : index
    %12 = vector.load %arg2[%c0_21, %c0_22] : memref<27x16xbf16, #tpu.memory_space<vmem>>, vector<27x16xbf16>
    %cst_23 = arith.constant dense<0.000000e+00> : vector<256x16xf32>
    %13 = tpu.matmul %11, %12, %cst_23 {dimension_numbers = #tpu.dot_dimension_numbers<[1], [0], [0], [1], [0, 0, 1, 1], [], []>} : vector<256x27xbf16>, vector<27x16xbf16>, vector<256x16xf32> -> vector<256x16xf32>
    %c0_24 = arith.constant 0 : index
    %c0_25 = arith.constant 0 : index
    %14 = vector.load %arg3[%c0_24, %c0_25] : memref<1x16xf32, #tpu.memory_space<vmem>>, vector<1x16xf32>
    %15 = vector.broadcast %14 : vector<1x16xf32> to vector<256x16xf32>
    %16 = arith.addf %13, %15 : vector<256x16xf32>
    %cst_26 = arith.constant 0.000000e+00 : f32
    %17 = vector.broadcast %cst_26 : f32 to vector<256x16xf32>
    %18 = arith.maximumf %16, %17 : vector<256x16xf32>
    %19 = arith.truncf %18 : vector<256x16xf32> to vector<256x16xbf16>
    %20 = vector.shape_cast %19 : vector<256x16xbf16> to vector<16x16x16xbf16>
    %c1 = arith.constant 1 : index
    %c1_27 = arith.constant 1 : index
    %c0_28 = arith.constant 0 : index
    %21 = vector.load %arg17[%c1, %c1_27, %c0_28] : memref<18x18x16xbf16, #tpu.memory_space<vmem>>, vector<16x16x16xbf16>
    tpu.vector_store %arg17[%c1, %c1_27, %c0_28], %20 {strides = array<i32>} : memref<18x18x16xbf16, #tpu.memory_space<vmem>>, vector<16x16x16xbf16>,
    %c0_29 = arith.constant 0 : index
    %c0_30 = arith.constant 0 : index
    %c0_31 = arith.constant 0 : index
    %22 = vector.load %arg17[%c0_29, %c0_30, %c0_31] : memref<18x18x16xbf16, #tpu.memory_space<vmem>>, vector<16x16x16xbf16>
    %23 = vector.shape_cast %22 : vector<16x16x16xbf16> to vector<256x16xbf16>
    %c0_32 = arith.constant 0 : index
    %c1_33 = arith.constant 1 : index
    %c0_34 = arith.constant 0 : index
    %24 = vector.load %arg17[%c0_32, %c1_33, %c0_34] : memref<18x18x16xbf16, #tpu.memory_space<vmem>>, vector<16x16x16xbf16>
    %25 = vector.shape_cast %24 : vector<16x16x16xbf16> to vector<256x16xbf16>
    %c0_35 = arith.constant 0 : index
    %c2 = arith.constant 2 : index
    %c0_36 = arith.constant 0 : index
    %26 = vector.load %arg17[%c0_35, %c2, %c0_36] : memref<18x18x16xbf16, #tpu.memory_space<vmem>>, vector<16x16x16xbf16>
    %27 = vector.shape_cast %26 : vector<16x16x16xbf16> to vector<256x16xbf16>
    %c1_37 = arith.constant 1 : index
    %c0_38 = arith.constant 0 : index
    %c0_39 = arith.constant 0 : index
    %28 = vector.load %arg17[%c1_37, %c0_38, %c0_39] : memref<18x18x16xbf16, #tpu.memory_space<vmem>>, vector<16x16x16xbf16>
    %29 = vector.shape_cast %28 : vector<16x16x16xbf16> to vector<256x16xbf16>
    %c1_40 = arith.constant 1 : index
    %c1_41 = arith.constant 1 : index
    %c0_42 = arith.constant 0 : index
    %30 = vector.load %arg17[%c1_40, %c1_41, %c0_42] : memref<18x18x16xbf16, #tpu.memory_space<vmem>>, vector<16x16x16xbf16>
    %31 = vector.shape_cast %30 : vector<16x16x16xbf16> to vector<256x16xbf16>
    %c1_43 = arith.constant 1 : index
    %c2_44 = arith.constant 2 : index
    %c0_45 = arith.constant 0 : index
    %32 = vector.load %arg17[%c1_43, %c2_44, %c0_45] : memref<18x18x16xbf16, #tpu.memory_space<vmem>>, vector<16x16x16xbf16>
    %33 = vector.shape_cast %32 : vector<16x16x16xbf16> to vector<256x16xbf16>
    %c2_46 = arith.constant 2 : index
    %c0_47 = arith.constant 0 : index
    %c0_48 = arith.constant 0 : index
    %34 = vector.load %arg17[%c2_46, %c0_47, %c0_48] : memref<18x18x16xbf16, #tpu.memory_space<vmem>>, vector<16x16x16xbf16>
    %35 = vector.shape_cast %34 : vector<16x16x16xbf16> to vector<256x16xbf16>
    %c2_49 = arith.constant 2 : index
    %c1_50 = arith.constant 1 : index
    %c0_51 = arith.constant 0 : index
    %36 = vector.load %arg17[%c2_49, %c1_50, %c0_51] : memref<18x18x16xbf16, #tpu.memory_space<vmem>>, vector<16x16x16xbf16>
    %37 = vector.shape_cast %36 : vector<16x16x16xbf16> to vector<256x16xbf16>
    %c2_52 = arith.constant 2 : index
    %c2_53 = arith.constant 2 : index
    %c0_54 = arith.constant 0 : index
    %38 = vector.load %arg17[%c2_52, %c2_53, %c0_54] : memref<18x18x16xbf16, #tpu.memory_space<vmem>>, vector<16x16x16xbf16>
    %39 = vector.shape_cast %38 : vector<16x16x16xbf16> to vector<256x16xbf16>
    %40 = tpu.concatenate %23, %25, %27, %29, %31, %33, %35, %37, %39 in 1 : vector<256x16xbf16>, vector<256x16xbf16>, vector<256x16xbf16>, vector<256x16xbf16>, vector<256x16xbf16>, vector<256x16xbf16>, vector<256x16xbf16>, vector<256x16xbf16>, vector<256x16xbf16> -> vector<256x144xbf16>
    %c0_55 = arith.constant 0 : index
    %c0_56 = arith.constant 0 : index
    %41 = vector.load %arg4[%c0_55, %c0_56] : memref<144x16xbf16, #tpu.memory_space<vmem>>, vector<144x16xbf16>
    %cst_57 = arith.constant dense<0.000000e+00> : vector<256x16xf32>
    %42 = tpu.matmul %40, %41, %cst_57 {dimension_numbers = #tpu.dot_dimension_numbers<[1], [0], [0], [1], [0, 0, 1, 1], [], []>} : vector<256x144xbf16>, vector<144x16xbf16>, vector<256x16xf32> -> vector<256x16xf32>
    %c0_58 = arith.constant 0 : index
    %c0_59 = arith.constant 0 : index
    %43 = vector.load %arg5[%c0_58, %c0_59] : memref<1x16xf32, #tpu.memory_space<vmem>>, vector<1x16xf32>
    %44 = vector.broadcast %43 : vector<1x16xf32> to vector<256x16xf32>
    %45 = arith.addf %42, %44 : vector<256x16xf32>
    %cst_60 = arith.constant 0.000000e+00 : f32
    %46 = vector.broadcast %cst_60 : f32 to vector<256x16xf32>
    %47 = arith.maximumf %45, %46 : vector<256x16xf32>
    %48 = vector.shape_cast %47 : vector<256x16xf32> to vector<8x2x16x16xf32>
    %49 = vector.extract_strided_slice %48 {offsets = [0, 0, 0, 0], sizes = [8, 1, 16, 16], strides = [1, 1, 1, 1]} : vector<8x2x16x16xf32> to vector<8x1x16x16xf32>
    %50 = vector.shape_cast %49 : vector<8x1x16x16xf32> to vector<8x16x16xf32>
    %51 = vector.extract_strided_slice %48 {offsets = [0, 1, 0, 0], sizes = [8, 1, 16, 16], strides = [1, 1, 1, 1]} : vector<8x2x16x16xf32> to vector<8x1x16x16xf32>
    %52 = vector.shape_cast %51 : vector<8x1x16x16xf32> to vector<8x16x16xf32>
    %53 = arith.maximumf %50, %52 : vector<8x16x16xf32>
    %54 = vector.shape_cast %53 : vector<8x16x16xf32> to vector<8x8x2x16xf32>
    %55 = vector.extract_strided_slice %54 {offsets = [0, 0, 0, 0], sizes = [8, 8, 1, 16], strides = [1, 1, 1, 1]} : vector<8x8x2x16xf32> to vector<8x8x1x16xf32>
    %56 = vector.shape_cast %55 : vector<8x8x1x16xf32> to vector<8x8x16xf32>
    %57 = vector.extract_strided_slice %54 {offsets = [0, 0, 1, 0], sizes = [8, 8, 1, 16], strides = [1, 1, 1, 1]} : vector<8x8x2x16xf32> to vector<8x8x1x16xf32>
    %58 = vector.shape_cast %57 : vector<8x8x1x16xf32> to vector<8x8x16xf32>
    %59 = arith.maximumf %56, %58 : vector<8x8x16xf32>
    %60 = arith.truncf %59 : vector<8x8x16xf32> to vector<8x8x16xbf16>
    %c1_61 = arith.constant 1 : index
    %c1_62 = arith.constant 1 : index
    %c0_63 = arith.constant 0 : index
    %61 = vector.load %arg18[%c1_61, %c1_62, %c0_63] : memref<10x10x16xbf16, #tpu.memory_space<vmem>>, vector<8x8x16xbf16>
    tpu.vector_store %arg18[%c1_61, %c1_62, %c0_63], %60 {strides = array<i32>} : memref<10x10x16xbf16, #tpu.memory_space<vmem>>, vector<8x8x16xbf16>,
    %c0_64 = arith.constant 0 : index
    %c0_65 = arith.constant 0 : index
    %c0_66 = arith.constant 0 : index
    %62 = vector.load %arg18[%c0_64, %c0_65, %c0_66] : memref<10x10x16xbf16, #tpu.memory_space<vmem>>, vector<8x8x16xbf16>
    %63 = vector.shape_cast %62 : vector<8x8x16xbf16> to vector<64x16xbf16>
    %c0_67 = arith.constant 0 : index
    %c1_68 = arith.constant 1 : index
    %c0_69 = arith.constant 0 : index
    %64 = vector.load %arg18[%c0_67, %c1_68, %c0_69] : memref<10x10x16xbf16, #tpu.memory_space<vmem>>, vector<8x8x16xbf16>
    %65 = vector.shape_cast %64 : vector<8x8x16xbf16> to vector<64x16xbf16>
    %c0_70 = arith.constant 0 : index
    %c2_71 = arith.constant 2 : index
    %c0_72 = arith.constant 0 : index
    %66 = vector.load %arg18[%c0_70, %c2_71, %c0_72] : memref<10x10x16xbf16, #tpu.memory_space<vmem>>, vector<8x8x16xbf16>
    %67 = vector.shape_cast %66 : vector<8x8x16xbf16> to vector<64x16xbf16>
    %c1_73 = arith.constant 1 : index
    %c0_74 = arith.constant 0 : index
    %c0_75 = arith.constant 0 : index
    %68 = vector.load %arg18[%c1_73, %c0_74, %c0_75] : memref<10x10x16xbf16, #tpu.memory_space<vmem>>, vector<8x8x16xbf16>
    %69 = vector.shape_cast %68 : vector<8x8x16xbf16> to vector<64x16xbf16>
    %c1_76 = arith.constant 1 : index
    %c1_77 = arith.constant 1 : index
    %c0_78 = arith.constant 0 : index
    %70 = vector.load %arg18[%c1_76, %c1_77, %c0_78] : memref<10x10x16xbf16, #tpu.memory_space<vmem>>, vector<8x8x16xbf16>
    %71 = vector.shape_cast %70 : vector<8x8x16xbf16> to vector<64x16xbf16>
    %c1_79 = arith.constant 1 : index
    %c2_80 = arith.constant 2 : index
    %c0_81 = arith.constant 0 : index
    %72 = vector.load %arg18[%c1_79, %c2_80, %c0_81] : memref<10x10x16xbf16, #tpu.memory_space<vmem>>, vector<8x8x16xbf16>
    %73 = vector.shape_cast %72 : vector<8x8x16xbf16> to vector<64x16xbf16>
    %c2_82 = arith.constant 2 : index
    %c0_83 = arith.constant 0 : index
    %c0_84 = arith.constant 0 : index
    %74 = vector.load %arg18[%c2_82, %c0_83, %c0_84] : memref<10x10x16xbf16, #tpu.memory_space<vmem>>, vector<8x8x16xbf16>
    %75 = vector.shape_cast %74 : vector<8x8x16xbf16> to vector<64x16xbf16>
    %c2_85 = arith.constant 2 : index
    %c1_86 = arith.constant 1 : index
    %c0_87 = arith.constant 0 : index
    %76 = vector.load %arg18[%c2_85, %c1_86, %c0_87] : memref<10x10x16xbf16, #tpu.memory_space<vmem>>, vector<8x8x16xbf16>
    %77 = vector.shape_cast %76 : vector<8x8x16xbf16> to vector<64x16xbf16>
    %c2_88 = arith.constant 2 : index
    %c2_89 = arith.constant 2 : index
    %c0_90 = arith.constant 0 : index
    %78 = vector.load %arg18[%c2_88, %c2_89, %c0_90] : memref<10x10x16xbf16, #tpu.memory_space<vmem>>, vector<8x8x16xbf16>
    %79 = vector.shape_cast %78 : vector<8x8x16xbf16> to vector<64x16xbf16>
    %80 = tpu.concatenate %63, %65, %67, %69, %71, %73, %75, %77, %79 in 1 : vector<64x16xbf16>, vector<64x16xbf16>, vector<64x16xbf16>, vector<64x16xbf16>, vector<64x16xbf16>, vector<64x16xbf16>, vector<64x16xbf16>, vector<64x16xbf16>, vector<64x16xbf16> -> vector<64x144xbf16>
    %c0_91 = arith.constant 0 : index
    %c0_92 = arith.constant 0 : index
    %81 = vector.load %arg6[%c0_91, %c0_92] : memref<144x32xbf16, #tpu.memory_space<vmem>>, vector<144x32xbf16>
    %cst_93 = arith.constant dense<0.000000e+00> : vector<64x32xf32>
    %82 = tpu.matmul %80, %81, %cst_93 {dimension_numbers = #tpu.dot_dimension_numbers<[1], [0], [0], [1], [0, 0, 1, 1], [], []>} : vector<64x144xbf16>, vector<144x32xbf16>, vector<64x32xf32> -> vector<64x32xf32>
    %c0_94 = arith.constant 0 : index
    %c0_95 = arith.constant 0 : index
    %83 = vector.load %arg7[%c0_94, %c0_95] : memref<1x32xf32, #tpu.memory_space<vmem>>, vector<1x32xf32>
    %84 = vector.broadcast %83 : vector<1x32xf32> to vector<64x32xf32>
    %85 = arith.addf %82, %84 : vector<64x32xf32>
    %cst_96 = arith.constant 0.000000e+00 : f32
    %86 = vector.broadcast %cst_96 : f32 to vector<64x32xf32>
    %87 = arith.maximumf %85, %86 : vector<64x32xf32>
    %88 = arith.truncf %87 : vector<64x32xf32> to vector<64x32xbf16>
    %89 = vector.shape_cast %88 : vector<64x32xbf16> to vector<8x8x32xbf16>
    %c1_97 = arith.constant 1 : index
    %c1_98 = arith.constant 1 : index
    %c0_99 = arith.constant 0 : index
    %90 = vector.load %arg19[%c1_97, %c1_98, %c0_99] : memref<10x10x32xbf16, #tpu.memory_space<vmem>>, vector<8x8x32xbf16>
    tpu.vector_store %arg19[%c1_97, %c1_98, %c0_99], %89 {strides = array<i32>} : memref<10x10x32xbf16, #tpu.memory_space<vmem>>, vector<8x8x32xbf16>,
    %c0_100 = arith.constant 0 : index
    %c0_101 = arith.constant 0 : index
    %c0_102 = arith.constant 0 : index
    %91 = vector.load %arg19[%c0_100, %c0_101, %c0_102] : memref<10x10x32xbf16, #tpu.memory_space<vmem>>, vector<8x8x32xbf16>
    %92 = vector.shape_cast %91 : vector<8x8x32xbf16> to vector<64x32xbf16>
    %c0_103 = arith.constant 0 : index
    %c1_104 = arith.constant 1 : index
    %c0_105 = arith.constant 0 : index
    %93 = vector.load %arg19[%c0_103, %c1_104, %c0_105] : memref<10x10x32xbf16, #tpu.memory_space<vmem>>, vector<8x8x32xbf16>
    %94 = vector.shape_cast %93 : vector<8x8x32xbf16> to vector<64x32xbf16>
    %c0_106 = arith.constant 0 : index
    %c2_107 = arith.constant 2 : index
    %c0_108 = arith.constant 0 : index
    %95 = vector.load %arg19[%c0_106, %c2_107, %c0_108] : memref<10x10x32xbf16, #tpu.memory_space<vmem>>, vector<8x8x32xbf16>
    %96 = vector.shape_cast %95 : vector<8x8x32xbf16> to vector<64x32xbf16>
    %c1_109 = arith.constant 1 : index
    %c0_110 = arith.constant 0 : index
    %c0_111 = arith.constant 0 : index
    %97 = vector.load %arg19[%c1_109, %c0_110, %c0_111] : memref<10x10x32xbf16, #tpu.memory_space<vmem>>, vector<8x8x32xbf16>
    %98 = vector.shape_cast %97 : vector<8x8x32xbf16> to vector<64x32xbf16>
    %c1_112 = arith.constant 1 : index
    %c1_113 = arith.constant 1 : index
    %c0_114 = arith.constant 0 : index
    %99 = vector.load %arg19[%c1_112, %c1_113, %c0_114] : memref<10x10x32xbf16, #tpu.memory_space<vmem>>, vector<8x8x32xbf16>
    %100 = vector.shape_cast %99 : vector<8x8x32xbf16> to vector<64x32xbf16>
    %c1_115 = arith.constant 1 : index
    %c2_116 = arith.constant 2 : index
    %c0_117 = arith.constant 0 : index
    %101 = vector.load %arg19[%c1_115, %c2_116, %c0_117] : memref<10x10x32xbf16, #tpu.memory_space<vmem>>, vector<8x8x32xbf16>
    %102 = vector.shape_cast %101 : vector<8x8x32xbf16> to vector<64x32xbf16>
    %c2_118 = arith.constant 2 : index
    %c0_119 = arith.constant 0 : index
    %c0_120 = arith.constant 0 : index
    %103 = vector.load %arg19[%c2_118, %c0_119, %c0_120] : memref<10x10x32xbf16, #tpu.memory_space<vmem>>, vector<8x8x32xbf16>
    %104 = vector.shape_cast %103 : vector<8x8x32xbf16> to vector<64x32xbf16>
    %c2_121 = arith.constant 2 : index
    %c1_122 = arith.constant 1 : index
    %c0_123 = arith.constant 0 : index
    %105 = vector.load %arg19[%c2_121, %c1_122, %c0_123] : memref<10x10x32xbf16, #tpu.memory_space<vmem>>, vector<8x8x32xbf16>
    %106 = vector.shape_cast %105 : vector<8x8x32xbf16> to vector<64x32xbf16>
    %c2_124 = arith.constant 2 : index
    %c2_125 = arith.constant 2 : index
    %c0_126 = arith.constant 0 : index
    %107 = vector.load %arg19[%c2_124, %c2_125, %c0_126] : memref<10x10x32xbf16, #tpu.memory_space<vmem>>, vector<8x8x32xbf16>
    %108 = vector.shape_cast %107 : vector<8x8x32xbf16> to vector<64x32xbf16>
    %109 = tpu.concatenate %92, %94, %96, %98, %100, %102, %104, %106, %108 in 1 : vector<64x32xbf16>, vector<64x32xbf16>, vector<64x32xbf16>, vector<64x32xbf16>, vector<64x32xbf16>, vector<64x32xbf16>, vector<64x32xbf16>, vector<64x32xbf16>, vector<64x32xbf16> -> vector<64x288xbf16>
    %c0_127 = arith.constant 0 : index
    %c0_128 = arith.constant 0 : index
    %110 = vector.load %arg8[%c0_127, %c0_128] : memref<288x64xbf16, #tpu.memory_space<vmem>>, vector<288x64xbf16>
    %cst_129 = arith.constant dense<0.000000e+00> : vector<64x64xf32>
    %111 = tpu.matmul %109, %110, %cst_129 {dimension_numbers = #tpu.dot_dimension_numbers<[1], [0], [0], [1], [0, 0, 1, 1], [], []>} : vector<64x288xbf16>, vector<288x64xbf16>, vector<64x64xf32> -> vector<64x64xf32>
    %c0_130 = arith.constant 0 : index
    %c0_131 = arith.constant 0 : index
    %112 = vector.load %arg9[%c0_130, %c0_131] : memref<1x64xf32, #tpu.memory_space<vmem>>, vector<1x64xf32>
    %113 = vector.broadcast %112 : vector<1x64xf32> to vector<64x64xf32>
    %114 = arith.addf %111, %113 : vector<64x64xf32>
    %cst_132 = arith.constant 0.000000e+00 : f32
    %115 = vector.broadcast %cst_132 : f32 to vector<64x64xf32>
    %116 = arith.maximumf %114, %115 : vector<64x64xf32>
    %117 = vector.shape_cast %116 : vector<64x64xf32> to vector<4x2x8x64xf32>
    %118 = vector.extract_strided_slice %117 {offsets = [0, 0, 0, 0], sizes = [4, 1, 8, 64], strides = [1, 1, 1, 1]} : vector<4x2x8x64xf32> to vector<4x1x8x64xf32>
    %119 = vector.shape_cast %118 : vector<4x1x8x64xf32> to vector<4x8x64xf32>
    %120 = vector.extract_strided_slice %117 {offsets = [0, 1, 0, 0], sizes = [4, 1, 8, 64], strides = [1, 1, 1, 1]} : vector<4x2x8x64xf32> to vector<4x1x8x64xf32>
    %121 = vector.shape_cast %120 : vector<4x1x8x64xf32> to vector<4x8x64xf32>
    %122 = arith.maximumf %119, %121 : vector<4x8x64xf32>
    %123 = vector.shape_cast %122 : vector<4x8x64xf32> to vector<4x4x2x64xf32>
    %124 = vector.extract_strided_slice %123 {offsets = [0, 0, 0, 0], sizes = [4, 4, 1, 64], strides = [1, 1, 1, 1]} : vector<4x4x2x64xf32> to vector<4x4x1x64xf32>
    %125 = vector.shape_cast %124 : vector<4x4x1x64xf32> to vector<4x4x64xf32>
    %126 = vector.extract_strided_slice %123 {offsets = [0, 0, 1, 0], sizes = [4, 4, 1, 64], strides = [1, 1, 1, 1]} : vector<4x4x2x64xf32> to vector<4x4x1x64xf32>
    %127 = vector.shape_cast %126 : vector<4x4x1x64xf32> to vector<4x4x64xf32>
    %128 = arith.maximumf %125, %127 : vector<4x4x64xf32>
    %129 = arith.truncf %128 : vector<4x4x64xf32> to vector<4x4x64xbf16>
    %c1_133 = arith.constant 1 : index
    %c1_134 = arith.constant 1 : index
    %c0_135 = arith.constant 0 : index
    %130 = vector.load %arg20[%c1_133, %c1_134, %c0_135] : memref<6x6x64xbf16, #tpu.memory_space<vmem>>, vector<4x4x64xbf16>
    tpu.vector_store %arg20[%c1_133, %c1_134, %c0_135], %129 {strides = array<i32>} : memref<6x6x64xbf16, #tpu.memory_space<vmem>>, vector<4x4x64xbf16>,
    %c0_136 = arith.constant 0 : index
    %c0_137 = arith.constant 0 : index
    %c0_138 = arith.constant 0 : index
    %131 = vector.load %arg20[%c0_136, %c0_137, %c0_138] : memref<6x6x64xbf16, #tpu.memory_space<vmem>>, vector<4x4x64xbf16>
    %132 = vector.shape_cast %131 : vector<4x4x64xbf16> to vector<16x64xbf16>
    %c0_139 = arith.constant 0 : index
    %c1_140 = arith.constant 1 : index
    %c0_141 = arith.constant 0 : index
    %133 = vector.load %arg20[%c0_139, %c1_140, %c0_141] : memref<6x6x64xbf16, #tpu.memory_space<vmem>>, vector<4x4x64xbf16>
    %134 = vector.shape_cast %133 : vector<4x4x64xbf16> to vector<16x64xbf16>
    %c0_142 = arith.constant 0 : index
    %c2_143 = arith.constant 2 : index
    %c0_144 = arith.constant 0 : index
    %135 = vector.load %arg20[%c0_142, %c2_143, %c0_144] : memref<6x6x64xbf16, #tpu.memory_space<vmem>>, vector<4x4x64xbf16>
    %136 = vector.shape_cast %135 : vector<4x4x64xbf16> to vector<16x64xbf16>
    %c1_145 = arith.constant 1 : index
    %c0_146 = arith.constant 0 : index
    %c0_147 = arith.constant 0 : index
    %137 = vector.load %arg20[%c1_145, %c0_146, %c0_147] : memref<6x6x64xbf16, #tpu.memory_space<vmem>>, vector<4x4x64xbf16>
    %138 = vector.shape_cast %137 : vector<4x4x64xbf16> to vector<16x64xbf16>
    %c1_148 = arith.constant 1 : index
    %c1_149 = arith.constant 1 : index
    %c0_150 = arith.constant 0 : index
    %139 = vector.load %arg20[%c1_148, %c1_149, %c0_150] : memref<6x6x64xbf16, #tpu.memory_space<vmem>>, vector<4x4x64xbf16>
    %140 = vector.shape_cast %139 : vector<4x4x64xbf16> to vector<16x64xbf16>
    %c1_151 = arith.constant 1 : index
    %c2_152 = arith.constant 2 : index
    %c0_153 = arith.constant 0 : index
    %141 = vector.load %arg20[%c1_151, %c2_152, %c0_153] : memref<6x6x64xbf16, #tpu.memory_space<vmem>>, vector<4x4x64xbf16>
    %142 = vector.shape_cast %141 : vector<4x4x64xbf16> to vector<16x64xbf16>
    %c2_154 = arith.constant 2 : index
    %c0_155 = arith.constant 0 : index
    %c0_156 = arith.constant 0 : index
    %143 = vector.load %arg20[%c2_154, %c0_155, %c0_156] : memref<6x6x64xbf16, #tpu.memory_space<vmem>>, vector<4x4x64xbf16>
    %144 = vector.shape_cast %143 : vector<4x4x64xbf16> to vector<16x64xbf16>
    %c2_157 = arith.constant 2 : index
    %c1_158 = arith.constant 1 : index
    %c0_159 = arith.constant 0 : index
    %145 = vector.load %arg20[%c2_157, %c1_158, %c0_159] : memref<6x6x64xbf16, #tpu.memory_space<vmem>>, vector<4x4x64xbf16>
    %146 = vector.shape_cast %145 : vector<4x4x64xbf16> to vector<16x64xbf16>
    %c2_160 = arith.constant 2 : index
    %c2_161 = arith.constant 2 : index
    %c0_162 = arith.constant 0 : index
    %147 = vector.load %arg20[%c2_160, %c2_161, %c0_162] : memref<6x6x64xbf16, #tpu.memory_space<vmem>>, vector<4x4x64xbf16>
    %148 = vector.shape_cast %147 : vector<4x4x64xbf16> to vector<16x64xbf16>
    %149 = tpu.concatenate %132, %134, %136, %138, %140, %142, %144, %146, %148 in 1 : vector<16x64xbf16>, vector<16x64xbf16>, vector<16x64xbf16>, vector<16x64xbf16>, vector<16x64xbf16>, vector<16x64xbf16>, vector<16x64xbf16>, vector<16x64xbf16>, vector<16x64xbf16> -> vector<16x576xbf16>
    %c0_163 = arith.constant 0 : index
    %c0_164 = arith.constant 0 : index
    %150 = vector.load %arg10[%c0_163, %c0_164] : memref<576x128xbf16, #tpu.memory_space<vmem>>, vector<576x128xbf16>
    %cst_165 = arith.constant dense<0.000000e+00> : vector<16x128xf32>
    %151 = tpu.matmul %149, %150, %cst_165 {dimension_numbers = #tpu.dot_dimension_numbers<[1], [0], [0], [1], [0, 0, 1, 1], [], []>} : vector<16x576xbf16>, vector<576x128xbf16>, vector<16x128xf32> -> vector<16x128xf32>
    %c0_166 = arith.constant 0 : index
    %c0_167 = arith.constant 0 : index
    %152 = vector.load %arg11[%c0_166, %c0_167] : memref<1x128xf32, #tpu.memory_space<vmem>>, vector<1x128xf32>
    %153 = vector.broadcast %152 : vector<1x128xf32> to vector<16x128xf32>
    %154 = arith.addf %151, %153 : vector<16x128xf32>
    %cst_168 = arith.constant 0.000000e+00 : f32
    %155 = vector.broadcast %cst_168 : f32 to vector<16x128xf32>
    %156 = arith.maximumf %154, %155 : vector<16x128xf32>
    %157 = arith.truncf %156 : vector<16x128xf32> to vector<16x128xbf16>
    %158 = vector.shape_cast %157 : vector<16x128xbf16> to vector<4x4x128xbf16>
    %c1_169 = arith.constant 1 : index
    %c1_170 = arith.constant 1 : index
    %c0_171 = arith.constant 0 : index
    %159 = vector.load %arg21[%c1_169, %c1_170, %c0_171] : memref<6x6x128xbf16, #tpu.memory_space<vmem>>, vector<4x4x128xbf16>
    tpu.vector_store %arg21[%c1_169, %c1_170, %c0_171], %158 {strides = array<i32>} : memref<6x6x128xbf16, #tpu.memory_space<vmem>>, vector<4x4x128xbf16>,
    %c0_172 = arith.constant 0 : index
    %c0_173 = arith.constant 0 : index
    %c0_174 = arith.constant 0 : index
    %160 = vector.load %arg21[%c0_172, %c0_173, %c0_174] : memref<6x6x128xbf16, #tpu.memory_space<vmem>>, vector<4x4x128xbf16>
    %161 = vector.shape_cast %160 : vector<4x4x128xbf16> to vector<16x128xbf16>
    %c0_175 = arith.constant 0 : index
    %c1_176 = arith.constant 1 : index
    %c0_177 = arith.constant 0 : index
    %162 = vector.load %arg21[%c0_175, %c1_176, %c0_177] : memref<6x6x128xbf16, #tpu.memory_space<vmem>>, vector<4x4x128xbf16>
    %163 = vector.shape_cast %162 : vector<4x4x128xbf16> to vector<16x128xbf16>
    %c0_178 = arith.constant 0 : index
    %c2_179 = arith.constant 2 : index
    %c0_180 = arith.constant 0 : index
    %164 = vector.load %arg21[%c0_178, %c2_179, %c0_180] : memref<6x6x128xbf16, #tpu.memory_space<vmem>>, vector<4x4x128xbf16>
    %165 = vector.shape_cast %164 : vector<4x4x128xbf16> to vector<16x128xbf16>
    %c1_181 = arith.constant 1 : index
    %c0_182 = arith.constant 0 : index
    %c0_183 = arith.constant 0 : index
    %166 = vector.load %arg21[%c1_181, %c0_182, %c0_183] : memref<6x6x128xbf16, #tpu.memory_space<vmem>>, vector<4x4x128xbf16>
    %167 = vector.shape_cast %166 : vector<4x4x128xbf16> to vector<16x128xbf16>
    %c1_184 = arith.constant 1 : index
    %c1_185 = arith.constant 1 : index
    %c0_186 = arith.constant 0 : index
    %168 = vector.load %arg21[%c1_184, %c1_185, %c0_186] : memref<6x6x128xbf16, #tpu.memory_space<vmem>>, vector<4x4x128xbf16>
    %169 = vector.shape_cast %168 : vector<4x4x128xbf16> to vector<16x128xbf16>
    %c1_187 = arith.constant 1 : index
    %c2_188 = arith.constant 2 : index
    %c0_189 = arith.constant 0 : index
    %170 = vector.load %arg21[%c1_187, %c2_188, %c0_189] : memref<6x6x128xbf16, #tpu.memory_space<vmem>>, vector<4x4x128xbf16>
    %171 = vector.shape_cast %170 : vector<4x4x128xbf16> to vector<16x128xbf16>
    %c2_190 = arith.constant 2 : index
    %c0_191 = arith.constant 0 : index
    %c0_192 = arith.constant 0 : index
    %172 = vector.load %arg21[%c2_190, %c0_191, %c0_192] : memref<6x6x128xbf16, #tpu.memory_space<vmem>>, vector<4x4x128xbf16>
    %173 = vector.shape_cast %172 : vector<4x4x128xbf16> to vector<16x128xbf16>
    %c2_193 = arith.constant 2 : index
    %c1_194 = arith.constant 1 : index
    %c0_195 = arith.constant 0 : index
    %174 = vector.load %arg21[%c2_193, %c1_194, %c0_195] : memref<6x6x128xbf16, #tpu.memory_space<vmem>>, vector<4x4x128xbf16>
    %175 = vector.shape_cast %174 : vector<4x4x128xbf16> to vector<16x128xbf16>
    %c2_196 = arith.constant 2 : index
    %c2_197 = arith.constant 2 : index
    %c0_198 = arith.constant 0 : index
    %176 = vector.load %arg21[%c2_196, %c2_197, %c0_198] : memref<6x6x128xbf16, #tpu.memory_space<vmem>>, vector<4x4x128xbf16>
    %177 = vector.shape_cast %176 : vector<4x4x128xbf16> to vector<16x128xbf16>
    %178 = tpu.concatenate %161, %163, %165, %167, %169, %171, %173, %175, %177 in 1 : vector<16x128xbf16>, vector<16x128xbf16>, vector<16x128xbf16>, vector<16x128xbf16>, vector<16x128xbf16>, vector<16x128xbf16>, vector<16x128xbf16>, vector<16x128xbf16>, vector<16x128xbf16> -> vector<16x1152xbf16>
    %c0_199 = arith.constant 0 : index
    %c0_200 = arith.constant 0 : index
    %179 = vector.load %arg12[%c0_199, %c0_200] : memref<1152x128xbf16, #tpu.memory_space<vmem>>, vector<1152x128xbf16>
    %cst_201 = arith.constant dense<0.000000e+00> : vector<16x128xf32>
    %180 = tpu.matmul %178, %179, %cst_201 {dimension_numbers = #tpu.dot_dimension_numbers<[1], [0], [0], [1], [0, 0, 1, 1], [], []>} : vector<16x1152xbf16>, vector<1152x128xbf16>, vector<16x128xf32> -> vector<16x128xf32>
    %c0_202 = arith.constant 0 : index
    %c0_203 = arith.constant 0 : index
    %181 = vector.load %arg13[%c0_202, %c0_203] : memref<1x128xf32, #tpu.memory_space<vmem>>, vector<1x128xf32>
    %182 = vector.broadcast %181 : vector<1x128xf32> to vector<16x128xf32>
    %183 = arith.addf %180, %182 : vector<16x128xf32>
    %cst_204 = arith.constant 0.000000e+00 : f32
    %184 = vector.broadcast %cst_204 : f32 to vector<16x128xf32>
    %185 = arith.maximumf %183, %184 : vector<16x128xf32>
    %186 = vector.shape_cast %185 : vector<16x128xf32> to vector<1x2048xf32>
    %187 = arith.truncf %186 : vector<1x2048xf32> to vector<1x2048xbf16>
    %c0_205 = arith.constant 0 : index
    %c0_206 = arith.constant 0 : index
    %188 = vector.load %arg14[%c0_205, %c0_206] : memref<2048x10xbf16, #tpu.memory_space<vmem>>, vector<2048x10xbf16>
    %cst_207 = arith.constant dense<0.000000e+00> : vector<1x10xf32>
    %189 = tpu.matmul %187, %188, %cst_207 {dimension_numbers = #tpu.dot_dimension_numbers<[1], [0], [0], [1], [0, 0, 1, 1], [], []>} : vector<1x2048xbf16>, vector<2048x10xbf16>, vector<1x10xf32> -> vector<1x10xf32>
    %c0_208 = arith.constant 0 : index
    %c0_209 = arith.constant 0 : index
    %190 = vector.load %arg15[%c0_208, %c0_209] : memref<1x10xf32, #tpu.memory_space<vmem>>, vector<1x10xf32>
    %191 = arith.addf %189, %190 : vector<1x10xf32>
    %192 = vector.shape_cast %191 : vector<1x10xf32> to vector<1x1x10xf32>
    %c0_210 = arith.constant 0 : index
    %c0_211 = arith.constant 0 : index
    %c0_212 = arith.constant 0 : index
    %193 = vector.load %arg16[%c0_210, %c0_211, %c0_212] : memref<1x1x10xf32, #tpu.memory_space<vmem>>, vector<1x1x10xf32>
    tpu.vector_store %arg16[%c0_210, %c0_211, %c0_212], %192 {strides = array<i32>} : memref<1x1x10xf32, #tpu.memory_space<vmem>>, vector<1x1x10xf32>,
    return
  }
  func.func @transform_0(%arg0: i32) -> (i32, i32, i32) {
    %c0_i32 = arith.constant 0 : i32
    %c0_i32_0 = arith.constant 0 : i32
    %c0_i32_1 = arith.constant 0 : i32
    return %arg0, %c0_i32, %c0_i32_0 : i32, i32, i32
  }
  func.func @transform_1(%arg0: i32) -> (i32, i32) {
    %c0_i32 = arith.constant 0 : i32
    %c0_i32_0 = arith.constant 0 : i32
    %c0_i32_1 = arith.constant 0 : i32
    return %c0_i32, %c0_i32_0 : i32, i32
  }
  func.func @transform_2(%arg0: i32) -> (i32, i32) {
    %c0_i32 = arith.constant 0 : i32
    %c0_i32_0 = arith.constant 0 : i32
    %c0_i32_1 = arith.constant 0 : i32
    return %c0_i32, %c0_i32_0 : i32, i32
  }
  func.func @transform_3(%arg0: i32) -> (i32, i32) {
    %c0_i32 = arith.constant 0 : i32
    %c0_i32_0 = arith.constant 0 : i32
    %c0_i32_1 = arith.constant 0 : i32
    return %c0_i32, %c0_i32_0 : i32, i32
  }
  func.func @transform_4(%arg0: i32) -> (i32, i32) {
    %c0_i32 = arith.constant 0 : i32
    %c0_i32_0 = arith.constant 0 : i32
    %c0_i32_1 = arith.constant 0 : i32
    return %c0_i32, %c0_i32_0 : i32, i32
  }
  func.func @transform_5(%arg0: i32) -> (i32, i32) {
    %c0_i32 = arith.constant 0 : i32
    %c0_i32_0 = arith.constant 0 : i32
    %c0_i32_1 = arith.constant 0 : i32
    return %c0_i32, %c0_i32_0 : i32, i32
  }
  func.func @transform_6(%arg0: i32) -> (i32, i32) {
    %c0_i32 = arith.constant 0 : i32
    %c0_i32_0 = arith.constant 0 : i32
    %c0_i32_1 = arith.constant 0 : i32
    return %c0_i32, %c0_i32_0 : i32, i32
  }
  func.func @transform_7(%arg0: i32) -> (i32, i32) {
    %c0_i32 = arith.constant 0 : i32
    %c0_i32_0 = arith.constant 0 : i32
    %c0_i32_1 = arith.constant 0 : i32
    return %c0_i32, %c0_i32_0 : i32, i32
  }
  func.func @transform_8(%arg0: i32) -> (i32, i32) {
    %c0_i32 = arith.constant 0 : i32
    %c0_i32_0 = arith.constant 0 : i32
    %c0_i32_1 = arith.constant 0 : i32
    return %c0_i32, %c0_i32_0 : i32, i32
  }
  func.func @transform_9(%arg0: i32) -> (i32, i32) {
    %c0_i32 = arith.constant 0 : i32
    %c0_i32_0 = arith.constant 0 : i32
    %c0_i32_1 = arith.constant 0 : i32
    return %c0_i32, %c0_i32_0 : i32, i32
  }
  func.func @transform_10(%arg0: i32) -> (i32, i32) {
    %c0_i32 = arith.constant 0 : i32
    %c0_i32_0 = arith.constant 0 : i32
    %c0_i32_1 = arith.constant 0 : i32
    return %c0_i32, %c0_i32_0 : i32, i32
  }
  func.func @transform_11(%arg0: i32) -> (i32, i32) {
    %c0_i32 = arith.constant 0 : i32
    %c0_i32_0 = arith.constant 0 : i32
    %c0_i32_1 = arith.constant 0 : i32
    return %c0_i32, %c0_i32_0 : i32, i32
  }
  func.func @transform_12(%arg0: i32) -> (i32, i32) {
    %c0_i32 = arith.constant 0 : i32
    %c0_i32_0 = arith.constant 0 : i32
    %c0_i32_1 = arith.constant 0 : i32
    return %c0_i32, %c0_i32_0 : i32, i32
  }
  func.func @transform_13(%arg0: i32) -> (i32, i32) {
    %c0_i32 = arith.constant 0 : i32
    %c0_i32_0 = arith.constant 0 : i32
    %c0_i32_1 = arith.constant 0 : i32
    return %c0_i32, %c0_i32_0 : i32, i32
  }
  func.func @transform_14(%arg0: i32) -> (i32, i32) {
    %c0_i32 = arith.constant 0 : i32
    %c0_i32_0 = arith.constant 0 : i32
    %c0_i32_1 = arith.constant 0 : i32
    return %c0_i32, %c0_i32_0 : i32, i32
  }
  func.func @transform_15(%arg0: i32) -> (i32, i32, i32) {
    %c0_i32 = arith.constant 0 : i32
    %c0_i32_0 = arith.constant 0 : i32
    %c0_i32_1 = arith.constant 0 : i32
    return %arg0, %c0_i32, %c0_i32_0 : i32, i32, i32
  }
}

</mosaic_0001>

<llo_original>
// kernel: netv2_forward.1
$region0: #{netv2_forward.1}
  #allocation0 [shape = 'u32[]', space=smem, size = 0x4, offset = 0x4, fixed_abs, tag = 'smem constant byte address 0x4 - core index']
  #allocation1 [shape = 'u32[72,128]{1,0:T(1,128)}', space=vmem, size = 0x9000, scoped, tag = 'internal scratch']
  #allocation2 [shape = 'bf16[18,18,16]{2,1,0:T(8,128)(2,1)}', space=vmem, size = 0x1b000, scoped, tag = 'scratch operand']
  #allocation3 [shape = 'bf16[10,10,16]{2,1,0:T(8,128)(2,1)}', space=vmem, size = 0xa000, scoped, tag = 'scratch operand']
  #allocation4 [shape = 'bf16[10,10,32]{2,1,0:T(8,128)(2,1)}', space=vmem, size = 0xa000, scoped, tag = 'scratch operand']
  #allocation5 [shape = 'bf16[6,6,64]{2,1,0:T(8,128)(2,1)}', space=vmem, size = 0x3000, scoped, tag = 'scratch operand']
  #allocation6 [shape = 'bf16[6,6,128]{2,1,0:T(8,128)(2,1)}', space=vmem, size = 0x3000, scoped, tag = 'scratch operand']
  %s0 = inlined_call_operand.vmem [shape: bf16[2,256,27], index: 0, kind: input, shape index: {}]
  %s1 = inlined_call_operand.vmem [shape: bf16[27,16], index: 1, kind: input, shape index: {}]
  %s2 = inlined_call_operand.vmem [shape: f32[1,16], index: 2, kind: input, shape index: {}]
  %s3 = inlined_call_operand.vmem [shape: bf16[144,16], index: 3, kind: input, shape index: {}]
  %s4 = inlined_call_operand.vmem [shape: f32[1,16], index: 4, kind: input, shape index: {}]
  %s5 = inlined_call_operand.vmem [shape: bf16[144,32], index: 5, kind: input, shape index: {}]
  %s6 = inlined_call_operand.vmem [shape: f32[1,32], index: 6, kind: input, shape index: {}]
  %s7 = inlined_call_operand.vmem [shape: bf16[288,64], index: 7, kind: input, shape index: {}]
  %s8 = inlined_call_operand.vmem [shape: f32[1,64], index: 8, kind: input, shape index: {}]
  %s9 = inlined_call_operand.vmem [shape: bf16[576,128], index: 9, kind: input, shape index: {}]
  %s10 = inlined_call_operand.vmem [shape: f32[1,128], index: 10, kind: input, shape index: {}]
  %s11 = inlined_call_operand.vmem [shape: bf16[1152,128], index: 11, kind: input, shape index: {}]
  %s12 = inlined_call_operand.vmem [shape: f32[1,128], index: 12, kind: input, shape index: {}]
  %s13 = inlined_call_operand.vmem [shape: bf16[2048,10], index: 13, kind: input, shape index: {}]
  %s14 = inlined_call_operand.vmem [shape: f32[1,10], index: 14, kind: input, shape index: {}]
  %s15 = inlined_call_operand.hbm [shape: f32[2,1,10], index: 15, kind: output, shape index: {}]
  %s16 = sld [smem:[#allocation0]]
  $region93: #{netv2_forward.1} parent=0
    _
  %s18 = ssub.s32 1, %s16
  %s19 = scalar_select 0, %s18, %s16
  $region1: #{netv2_forward.1} parent=0
    #allocation7 [shape = 'u8[1024]{0}', space=vmem, size = 0x400, scoped, tag = 'output window, operand 0']
    #allocation8 [shape = 's32[2]{0}', space=sflag, size = 0x8, scoped, tag = 'scoped memory for netv2_forward.1']
    %20 = vsyncpa [#allocation8], 0
    %s21 = scalar_lea.sflag [#allocation8], 1
    %22 = vsyncpa %s21, 0
    loop: start=0, step=1, limit=4
    $region2: #{netv2_forward.1} parent=1 // loop_pre_header
      _
    $region3: #{netv2_forward.1} parent=1 // loop_header
      %s24 = sphi 0, %s28
      %p25 = scmp.ge.s32.totalorder %s24, 4
      %s34 = sphi 0, %s36
      %s37 = sphi 0, %s34
      %s38 = sphi 0, %s37
      %s54 = sphi 0, %s38
      %s58 = sphi 0, %s58
      %s60 = sphi 0, %s58
      %s61 = sphi 0, %s60
      %s75 = sphi 0, %s61
      %s79 = sphi 0, %s79
      %s81 = sphi 0, %s79
      %s82 = sphi 0, %s81
      %s96 = sphi 0, %s82
      %s100 = sphi 0, %s100
      %s102 = sphi 0, %s100
      %s103 = sphi 0, %s102
      %s117 = sphi 0, %s103
      %s121 = sphi 0, %s121
      %s123 = sphi 0, %s121
      %s124 = sphi 0, %s123
      %s138 = sphi 0, %s124
      %s142 = sphi 0, %s142
      %s144 = sphi 0, %s142
      %s145 = sphi 0, %s144
      %s159 = sphi 0, %s145
      %s163 = sphi 0, %s163
      %s165 = sphi 0, %s163
      %s166 = sphi 0, %s165
      %s180 = sphi 0, %s166
      %s184 = sphi 0, %s184
      %s186 = sphi 0, %s184
      %s187 = sphi 0, %s186
      %s201 = sphi 0, %s187
      %s205 = sphi 0, %s205
      %s207 = sphi 0, %s205
      %s208 = sphi 0, %s207
      %s222 = sphi 0, %s208
      %s226 = sphi 0, %s226
      %s228 = sphi 0, %s226
      %s229 = sphi 0, %s228
      %s243 = sphi 0, %s229
      %s247 = sphi 0, %s247
      %s249 = sphi 0, %s247
      %s250 = sphi 0, %s249
      %s264 = sphi 0, %s250
      %s268 = sphi 0, %s268
      %s270 = sphi 0, %s268
      %s271 = sphi 0, %s270
      %s285 = sphi 0, %s271
      %s289 = sphi 0, %s289
      %s291 = sphi 0, %s289
      %s292 = sphi 0, %s291
      %s306 = sphi 0, %s292
      %s310 = sphi 0, %s310
      %s312 = sphi 0, %s310
      %s313 = sphi 0, %s312
      %s327 = sphi 0, %s313
      %s331 = sphi 0, %s331
      %s333 = sphi 0, %s331
      %s334 = sphi 0, %s333
      %s348 = sphi 0, %s334
      %s354 = sphi 0, %s356
      %s357 = sphi 0, %s354
      %s358 = sphi 0, %s357
      %s374 = sphi 0, %s358
    $region4: #{netv2_forward.1} parent=1 // loop_header_branch
      %27 = sbr.rel (%p25) target = $region8
    $region5: #{netv2_forward.1} parent=1 // loop_body
      %s29 = ssub.s32 %s24, 1
      %s30 = ssub.s32 %s24, 2
      %s31 = sadd.s32 %s24, 1
      %s32 = ssub.s32 %s24, %s31
      %p33 = scmp.eq.s32.totalorder %s32, 0
      %s35 = sadd.s32 %s34, 1
      %s36 = scalar_select %p33, %s34, %s35
      %p39 = pneg %p33
      %p40 = scmp.eq.s32.totalorder %s24, 1
      %p41 = por %p39, %p40
      %p42 = scmp.ne.s32.totalorder %s34, %s37
      %p43 = scmp.eq.s32.totalorder %s24, 0
      %p44 = por %p42, %p43
      %p45 = scmp.ne.s32.totalorder %s34, %s37
      %p46 = scmp.eq.s32.totalorder %s29, 1
      %p47 = por %p45, %p46
      %p48 = scmp.ne.s32.totalorder %s37, %s38
      %p49 = scmp.eq.s32.totalorder %s29, 0
      %p50 = por %p48, %p49
      %p51 = scmp.ne.s32.totalorder %s37, %s38
      %p52 = scmp.eq.s32.totalorder %s30, 1
      %p53 = por %p51, %p52
      %p55 = scmp.ne.s32.totalorder %s38, %s54
      %p56 = scmp.eq.s32.totalorder %s30, 0
      %p57 = por %p55, %p56
      %s59 = sadd.s32 %s58, 1
      %p62 = scmp.eq.s32.totalorder %s24, 1
      %p63 = scmp.ne.s32.totalorder %s58, %s60
      %p64 = scmp.eq.s32.totalorder %s24, 0
      %p65 = por %p63, %p64
      %p66 = scmp.ne.s32.totalorder %s58, %s60
      %p67 = scmp.eq.s32.totalorder %s29, 1
      %p68 = por %p66, %p67
      %p69 = scmp.ne.s32.totalorder %s60, %s61
      %p70 = scmp.eq.s32.totalorder %s29, 0
      %p71 = por %p69, %p70
      %p72 = scmp.ne.s32.totalorder %s60, %s61
      %p73 = scmp.eq.s32.totalorder %s30, 1
      %p74 = por %p72, %p73
      %p76 = scmp.ne.s32.totalorder %s61, %s75
      %p77 = scmp.eq.s32.totalorder %s30, 0
      %p78 = por %p76, %p77
      %s80 = sadd.s32 %s79, 1
      %p83 = scmp.eq.s32.totalorder %s24, 1
      %p84 = scmp.ne.s32.totalorder %s79, %s81
      %p85 = scmp.eq.s32.totalorder %s24, 0
      %p86 = por %p84, %p85
      %p87 = scmp.ne.s32.totalorder %s79, %s81
      %p88 = scmp.eq.s32.totalorder %s29, 1
      %p89 = por %p87, %p88
      %p90 = scmp.ne.s32.totalorder %s81, %s82
      %p91 = scmp.eq.s32.totalorder %s29, 0
      %p92 = por %p90, %p91
      %p93 = scmp.ne.s32.totalorder %s81, %s82
      %p94 = scmp.eq.s32.totalorder %s30, 1
      %p95 = por %p93, %p94
      %p97 = scmp.ne.s32.totalorder %s82, %s96
      %p98 = scmp.eq.s32.totalorder %s30, 0
      %p99 = por %p97, %p98
      %s101 = sadd.s32 %s100, 1
      %p104 = scmp.eq.s32.totalorder %s24, 1
      %p105 = scmp.ne.s32.totalorder %s100, %s102
      %p106 = scmp.eq.s32.totalorder %s24, 0
      %p107 = por %p105, %p106
      %p108 = scmp.ne.s32.totalorder %s100, %s102
      %p109 = scmp.eq.s32.totalorder %s29, 1
      %p110 = por %p108, %p109
      %p111 = scmp.ne.s32.totalorder %s102, %s103
      %p112 = scmp.eq.s32.totalorder %s29, 0
      %p113 = por %p111, %p112
      %p114 = scmp.ne.s32.totalorder %s102, %s103
      %p115 = scmp.eq.s32.totalorder %s30, 1
      %p116 = por %p114, %p115
      %p118 = scmp.ne.s32.totalorder %s103, %s117
      %p119 = scmp.eq.s32.totalorder %s30, 0
      %p120 = por %p118, %p119
      %s122 = sadd.s32 %s121, 1
      %p125 = scmp.eq.s32.totalorder %s24, 1
      %p126 = scmp.ne.s32.totalorder %s121, %s123
      %p127 = scmp.eq.s32.totalorder %s24, 0
      %p128 = por %p126, %p127
      %p129 = scmp.ne.s32.totalorder %s121, %s123
      %p130 = scmp.eq.s32.totalorder %s29, 1
      %p131 = por %p129, %p130
      %p132 = scmp.ne.s32.totalorder %s123, %s124
      %p133 = scmp.eq.s32.totalorder %s29, 0
      %p134 = por %p132, %p133
      %p135 = scmp.ne.s32.totalorder %s123, %s124
      %p136 = scmp.eq.s32.totalorder %s30, 1
      %p137 = por %p135, %p136
      %p139 = scmp.ne.s32.totalorder %s124, %s138
      %p140 = scmp.eq.s32.totalorder %s30, 0
      %p141 = por %p139, %p140
      %s143 = sadd.s32 %s142, 1
      %p146 = scmp.eq.s32.totalorder %s24, 1
      %p147 = scmp.ne.s32.totalorder %s142, %s144
      %p148 = scmp.eq.s32.totalorder %s24, 0
      %p149 = por %p147, %p148
      %p150 = scmp.ne.s32.totalorder %s142, %s144
      %p151 = scmp.eq.s32.totalorder %s29, 1
      %p152 = por %p150, %p151
      %p153 = scmp.ne.s32.totalorder %s144, %s145
      %p154 = scmp.eq.s32.totalorder %s29, 0
      %p155 = por %p153, %p154
      %p156 = scmp.ne.s32.totalorder %s144, %s145
      %p157 = scmp.eq.s32.totalorder %s30, 1
      %p158 = por %p156, %p157
      %p160 = scmp.ne.s32.totalorder %s145, %s159
      %p161 = scmp.eq.s32.totalorder %s30, 0
      %p162 = por %p160, %p161
      %s164 = sadd.s32 %s163, 1
      %p167 = scmp.eq.s32.totalorder %s24, 1
      %p168 = scmp.ne.s32.totalorder %s163, %s165
      %p169 = scmp.eq.s32.totalorder %s24, 0
      %p170 = por %p168, %p169
      %p171 = scmp.ne.s32.totalorder %s163, %s165
      %p172 = scmp.eq.s32.totalorder %s29, 1
      %p173 = por %p171, %p172
      %p174 = scmp.ne.s32.totalorder %s165, %s166
      %p175 = scmp.eq.s32.totalorder %s29, 0
      %p176 = por %p174, %p175
      %p177 = scmp.ne.s32.totalorder %s165, %s166
      %p178 = scmp.eq.s32.totalorder %s30, 1
      %p179 = por %p177, %p178
      %p181 = scmp.ne.s32.totalorder %s166, %s180
      %p182 = scmp.eq.s32.totalorder %s30, 0
      %p183 = por %p181, %p182
      %s185 = sadd.s32 %s184, 1
      %p188 = scmp.eq.s32.totalorder %s24, 1
      %p189 = scmp.ne.s32.totalorder %s184, %s186
      %p190 = scmp.eq.s32.totalorder %s24, 0
      %p191 = por %p189, %p190
      %p192 = scmp.ne.s32.totalorder %s184, %s186
      %p193 = scmp.eq.s32.totalorder %s29, 1
      %p194 = por %p192, %p193
      %p195 = scmp.ne.s32.totalorder %s186, %s187
      %p196 = scmp.eq.s32.totalorder %s29, 0
      %p197 = por %p195, %p196
      %p198 = scmp.ne.s32.totalorder %s186, %s187
      %p199 = scmp.eq.s32.totalorder %s30, 1
      %p200 = por %p198, %p199
      %p202 = scmp.ne.s32.totalorder %s187, %s201
      %p203 = scmp.eq.s32.totalorder %s30, 0
      %p204 = por %p202, %p203
      %s206 = sadd.s32 %s205, 1
      %p209 = scmp.eq.s32.totalorder %s24, 1
      %p210 = scmp.ne.s32.totalorder %s205, %s207
      %p211 = scmp.eq.s32.totalorder %s24, 0
      %p212 = por %p210, %p211
      %p213 = scmp.ne.s32.totalorder %s205, %s207
      %p214 = scmp.eq.s32.totalorder %s29, 1
      %p215 = por %p213, %p214
      %p216 = scmp.ne.s32.totalorder %s207, %s208
      %p217 = scmp.eq.s32.totalorder %s29, 0
      %p218 = por %p216, %p217
      %p219 = scmp.ne.s32.totalorder %s207, %s208
      %p220 = scmp.eq.s32.totalorder %s30, 1
      %p221 = por %p219, %p220
      %p223 = scmp.ne.s32.totalorder %s208, %s222
      %p224 = scmp.eq.s32.totalorder %s30, 0
      %p225 = por %p223, %p224
      %s227 = sadd.s32 %s226, 1
      %p230 = scmp.eq.s32.totalorder %s24, 1
      %p231 = scmp.ne.s32.totalorder %s226, %s228
      %p232 = scmp.eq.s32.totalorder %s24, 0
      %p233 = por %p231, %p232
      %p234 = scmp.ne.s32.totalorder %s226, %s228
      %p235 = scmp.eq.s32.totalorder %s29, 1
      %p236 = por %p234, %p235
      %p237 = scmp.ne.s32.totalorder %s228, %s229
      %p238 = scmp.eq.s32.totalorder %s29, 0
      %p239 = por %p237, %p238
      %p240 = scmp.ne.s32.totalorder %s228, %s229
      %p241 = scmp.eq.s32.totalorder %s30, 1
      %p242 = por %p240, %p241
      %p244 = scmp.ne.s32.totalorder %s229, %s243
      %p245 = scmp.eq.s32.totalorder %s30, 0
      %p246 = por %p244, %p245
      %s248 = sadd.s32 %s247, 1
      %p251 = scmp.eq.s32.totalorder %s24, 1
      %p252 = scmp.ne.s32.totalorder %s247, %s249
      %p253 = scmp.eq.s32.totalorder %s24, 0
      %p254 = por %p252, %p253
      %p255 = scmp.ne.s32.totalorder %s247, %s249
      %p256 = scmp.eq.s32.totalorder %s29, 1
      %p257 = por %p255, %p256
      %p258 = scmp.ne.s32.totalorder %s249, %s250
      %p259 = scmp.eq.s32.totalorder %s29, 0
      %p260 = por %p258, %p259
      %p261 = scmp.ne.s32.totalorder %s249, %s250
      %p262 = scmp.eq.s32.totalorder %s30, 1
      %p263 = por %p261, %p262
      %p265 = scmp.ne.s32.totalorder %s250, %s264
      %p266 = scmp.eq.s32.totalorder %s30, 0
      %p267 = por %p265, %p266
      %s269 = sadd.s32 %s268, 1
      %p272 = scmp.eq.s32.totalorder %s24, 1
      %p273 = scmp.ne.s32.totalorder %s268, %s270
      %p274 = scmp.eq.s32.totalorder %s24, 0
      %p275 = por %p273, %p274
      %p276 = scmp.ne.s32.totalorder %s268, %s270
      %p277 = scmp.eq.s32.totalorder %s29, 1
      %p278 = por %p276, %p277
      %p279 = scmp.ne.s32.totalorder %s270, %s271
      %p280 = scmp.eq.s32.totalorder %s29, 0
      %p281 = por %p279, %p280
      %p282 = scmp.ne.s32.totalorder %s270, %s271
      %p283 = scmp.eq.s32.totalorder %s30, 1
      %p284 = por %p282, %p283
      %p286 = scmp.ne.s32.totalorder %s271, %s285
      %p287 = scmp.eq.s32.totalorder %s30, 0
      %p288 = por %p286, %p287
      %s290 = sadd.s32 %s289, 1
      %p293 = scmp.eq.s32.totalorder %s24, 1
      %p294 = scmp.ne.s32.totalorder %s289, %s291
      %p295 = scmp.eq.s32.totalorder %s24, 0
      %p296 = por %p294, %p295
      %p297 = scmp.ne.s32.totalorder %s289, %s291
      %p298 = scmp.eq.s32.totalorder %s29, 1
      %p299 = por %p297, %p298
      %p300 = scmp.ne.s32.totalorder %s291, %s292
      %p301 = scmp.eq.s32.totalorder %s29, 0
      %p302 = por %p300, %p301
      %p303 = scmp.ne.s32.totalorder %s291, %s292
      %p304 = scmp.eq.s32.totalorder %s30, 1
      %p305 = por %p303, %p304
      %p307 = scmp.ne.s32.totalorder %s292, %s306
      %p308 = scmp.eq.s32.totalorder %s30, 0
      %p309 = por %p307, %p308
      %s311 = sadd.s32 %s310, 1
      %p314 = scmp.eq.s32.totalorder %s24, 1
      %p315 = scmp.ne.s32.totalorder %s310, %s312
      %p316 = scmp.eq.s32.totalorder %s24, 0
      %p317 = por %p315, %p316
      %p318 = scmp.ne.s32.totalorder %s310, %s312
      %p319 = scmp.eq.s32.totalorder %s29, 1
      %p320 = por %p318, %p319
      %p321 = scmp.ne.s32.totalorder %s312, %s313
      %p322 = scmp.eq.s32.totalorder %s29, 0
      %p323 = por %p321, %p322
      %p324 = scmp.ne.s32.totalorder %s312, %s313
      %p325 = scmp.eq.s32.totalorder %s30, 1
      %p326 = por %p324, %p325
      %p328 = scmp.ne.s32.totalorder %s313, %s327
      %p329 = scmp.eq.s32.totalorder %s30, 0
      %p330 = por %p328, %p329
      %s332 = sadd.s32 %s331, 1
      %p335 = scmp.eq.s32.totalorder %s24, 1
      %p336 = scmp.ne.s32.totalorder %s331, %s333
      %p337 = scmp.eq.s32.totalorder %s24, 0
      %p338 = por %p336, %p337
      %p339 = scmp.ne.s32.totalorder %s331, %s333
      %p340 = scmp.eq.s32.totalorder %s29, 1
      %p341 = por %p339, %p340
      %p342 = scmp.ne.s32.totalorder %s333, %s334
      %p343 = scmp.eq.s32.totalorder %s29, 0
      %p344 = por %p342, %p343
      %p345 = scmp.ne.s32.totalorder %s333, %s334
      %p346 = scmp.eq.s32.totalorder %s30, 1
      %p347 = por %p345, %p346
      %p349 = scmp.ne.s32.totalorder %s334, %s348
      %p350 = scmp.eq.s32.totalorder %s30, 0
      %p351 = por %p349, %p350
      %s352 = ssub.s32 %s24, %s31
      %p353 = scmp.eq.s32.totalorder %s352, 0
      %s355 = sadd.s32 %s354, 1
      %s356 = scalar_select %p353, %s354, %s355
      %p359 = pneg %p353
      %p360 = scmp.eq.s32.totalorder %s24, 1
      %p361 = por %p359, %p360
      %p362 = scmp.ne.s32.totalorder %s354, %s357
      %p363 = scmp.eq.s32.totalorder %s24, 0
      %p364 = por %p362, %p363
      %p365 = scmp.ne.s32.totalorder %s354, %s357
      %p366 = scmp.eq.s32.totalorder %s29, 1
      %p367 = por %p365, %p366
      %p368 = scmp.ne.s32.totalorder %s357, %s358
      %p369 = scmp.eq.s32.totalorder %s29, 0
      %p370 = por %p368, %p369
      %p371 = scmp.ne.s32.totalorder %s357, %s358
      %p372 = scmp.eq.s32.totalorder %s30, 1
      %p373 = por %p371, %p372
      %p375 = scmp.ne.s32.totalorder %s358, %s374
      %p376 = scmp.eq.s32.totalorder %s30, 0
      %p377 = por %p375, %p376
      %p378 = scmp.le.s32.totalorder 1, %s24
      %p379 = scmp.lt.s32.totalorder %s24, 3
      %p380 = pnand %p378, %p379
      %p381 = pneg %p380
      // Predicated region
      $region9: #{netv2_forward.1} parent=5 // pred_check
        _
      $region10: #{netv2_forward.1} parent=5 // pred_check_branch
        %383 = sbr.rel (%p380) target = $region12
      $region11: #{netv2_forward.1} parent=5 // pred_region
        %s384 = ssub.s32 %s24, 1
        // Predicated region
        $region13: #{netv2_forward.1} parent=11 // pred_check
          %p385 = pneg %p71
        $region14: #{netv2_forward.1} parent=11 // pred_check_branch
          %387 = sbr.rel (%p385) target = $region16
        $region15: #{netv2_forward.1} parent=11 // pred_region
          _
        $region16: #{netv2_forward.1} parent=11 // pred_fallthru
          _
        // Predicated region
        $region17: #{netv2_forward.1} parent=11 // pred_check
          %p388 = pneg %p92
        $region18: #{netv2_forward.1} parent=11 // pred_check_branch
          %390 = sbr.rel (%p388) target = $region20
        $region19: #{netv2_forward.1} parent=11 // pred_region
          _
        $region20: #{netv2_forward.1} parent=11 // pred_fallthru
          _
        // Predicated region
        $region21: #{netv2_forward.1} parent=11 // pred_check
          %p391 = pneg %p113
        $region22: #{netv2_forward.1} parent=11 // pred_check_branch
          %393 = sbr.rel (%p391) target = $region24
        $region23: #{netv2_forward.1} parent=11 // pred_region
          _
        $region24: #{netv2_forward.1} parent=11 // pred_fallthru
          _
        // Predicated region
        $region25: #{netv2_forward.1} parent=11 // pred_check
          %p394 = pneg %p134
        $region26: #{netv2_forward.1} parent=11 // pred_check_branch
          %396 = sbr.rel (%p394) target = $region28
        $region27: #{netv2_forward.1} parent=11 // pred_region
          _
        $region28: #{netv2_forward.1} parent=11 // pred_fallthru
          _
        // Predicated region
        $region29: #{netv2_forward.1} parent=11 // pred_check
          %p397 = pneg %p155
        $region30: #{netv2_forward.1} parent=11 // pred_check_branch
          %399 = sbr.rel (%p397) target = $region32
        $region31: #{netv2_forward.1} parent=11 // pred_region
          _
        $region32: #{netv2_forward.1} parent=11 // pred_fallthru
          _
        // Predicated region
        $region33: #{netv2_forward.1} parent=11 // pred_check
          %p400 = pneg %p176
        $region34: #{netv2_forward.1} parent=11 // pred_check_branch
          %402 = sbr.rel (%p400) target = $region36
        $region35: #{netv2_forward.1} parent=11 // pred_region
          _
        $region36: #{netv2_forward.1} parent=11 // pred_fallthru
          _
        // Predicated region
        $region37: #{netv2_forward.1} parent=11 // pred_check
          %p403 = pneg %p197
        $region38: #{netv2_forward.1} parent=11 // pred_check_branch
          %405 = sbr.rel (%p403) target = $region40
        $region39: #{netv2_forward.1} parent=11 // pred_region
          _
        $region40: #{netv2_forward.1} parent=11 // pred_fallthru
          _
        // Predicated region
        $region41: #{netv2_forward.1} parent=11 // pred_check
          %p406 = pneg %p218
        $region42: #{netv2_forward.1} parent=11 // pred_check_branch
          %408 = sbr.rel (%p406) target = $region44
        $region43: #{netv2_forward.1} parent=11 // pred_region
          _
        $region44: #{netv2_forward.1} parent=11 // pred_fallthru
          _
        // Predicated region
        $region45: #{netv2_forward.1} parent=11 // pred_check
          %p409 = pneg %p239
        $region46: #{netv2_forward.1} parent=11 // pred_check_branch
          %411 = sbr.rel (%p409) target = $region48
        $region47: #{netv2_forward.1} parent=11 // pred_region
          _
        $region48: #{netv2_forward.1} parent=11 // pred_fallthru
          _
        // Predicated region
        $region49: #{netv2_forward.1} parent=11 // pred_check
          %p412 = pneg %p260
        $region50: #{netv2_forward.1} parent=11 // pred_check_branch
          %414 = sbr.rel (%p412) target = $region52
        $region51: #{netv2_forward.1} parent=11 // pred_region
          _
        $region52: #{netv2_forward.1} parent=11 // pred_fallthru
          _
        // Predicated region
        $region53: #{netv2_forward.1} parent=11 // pred_check
          %p415 = pneg %p281
        $region54: #{netv2_forward.1} parent=11 // pred_check_branch
          %417 = sbr.rel (%p415) target = $region56
        $region55: #{netv2_forward.1} parent=11 // pred_region
          _
        $region56: #{netv2_forward.1} parent=11 // pred_fallthru
          _
        // Predicated region
        $region57: #{netv2_forward.1} parent=11 // pred_check
          %p418 = pneg %p302
        $region58: #{netv2_forward.1} parent=11 // pred_check_branch
          %420 = sbr.rel (%p418) target = $region60
        $region59: #{netv2_forward.1} parent=11 // pred_region
          _
        $region60: #{netv2_forward.1} parent=11 // pred_fallthru
          _
        // Predicated region
        $region61: #{netv2_forward.1} parent=11 // pred_check
          %p421 = pneg %p323
        $region62: #{netv2_forward.1} parent=11 // pred_check_branch
          %423 = sbr.rel (%p421) target = $region64
        $region63: #{netv2_forward.1} parent=11 // pred_region
          _
        $region64: #{netv2_forward.1} parent=11 // pred_fallthru
          _
        // Predicated region
        $region65: #{netv2_forward.1} parent=11 // pred_check
          %p424 = pneg %p344
        $region66: #{netv2_forward.1} parent=11 // pred_check_branch
          %426 = sbr.rel (%p424) target = $region68
        $region67: #{netv2_forward.1} parent=11 // pred_region
          _
        $region68: #{netv2_forward.1} parent=11 // pred_fallthru
          _
      $region12: #{netv2_forward.1} parent=5 // pred_fallthru
        _
      %p427 = scmp.lt.s32.totalorder %s24, 2
      // Predicated region
      $region69: #{netv2_forward.1} parent=5 // pred_check
        %p428 = pneg %p427
      $region70: #{netv2_forward.1} parent=5 // pred_check_branch
        %430 = sbr.rel (%p428) target = $region72
      $region71: #{netv2_forward.1} parent=5 // pred_region
        // Predicated region
        $region73: #{netv2_forward.1} parent=71 // pred_check
          %p431 = pneg %p44
        $region74: #{netv2_forward.1} parent=71 // pred_check_branch
          %433 = sbr.rel (%p431) target = $region76
        $region75: #{netv2_forward.1} parent=71 // pred_region
          %p434 = scmp.lt.s32.totalorder %s24, 1
          %s435 = scalar_select %p434, %s24, 1
          %s436 = smul.addr %s435, 32
          %s437 = smul.addr %s436, 4
          %s438 = scalar_lea.vmem %s0, %s437
        $region76: #{netv2_forward.1} parent=71 // pred_fallthru
          _
      $region72: #{netv2_forward.1} parent=5 // pred_fallthru
        _
      %p439 = scmp.le.s32.totalorder 1, %s24
      %p440 = scmp.lt.s32.totalorder %s24, 3
      %p441 = pnand %p439, %p440
      %p442 = pneg %p441
      // Predicated region
      $region77: #{netv2_forward.1} parent=5 // pred_check
        _
      $region78: #{netv2_forward.1} parent=5 // pred_check_branch
        %444 = sbr.rel (%p441) target = $region80
      $region79: #{netv2_forward.1} parent=5 // pred_region
        %s445 = ssub.s32 %s24, 1
        %p446 = scmp.lt.s32.totalorder %s29, 1
        %s447 = scalar_select %p446, %s29, 1
        %s448 = smul.addr %s447, 32
        %s449 = smul.addr %s448, 4
        %s450 = scalar_lea.vmem %s0, %s449
        %p451 = pneg %p50
        %p452 = pneg %p47
        %p453 = pneg %p71
        %p454 = pneg %p68
        %p455 = pneg %p92
        %p456 = pneg %p89
        %p457 = pneg %p113
        %p458 = pneg %p110
        %p459 = pneg %p134
        %p460 = pneg %p131
        %p461 = pneg %p155
        %p462 = pneg %p152
        %p463 = pneg %p176
        %p464 = pneg %p173
        %p465 = pneg %p197
        %p466 = pneg %p194
        %p467 = pneg %p218
        %p468 = pneg %p215
        %p469 = pneg %p239
        %p470 = pneg %p236
        %p471 = pneg %p260
        %p472 = pneg %p257
        %p473 = pneg %p281
        %p474 = pneg %p278
        %p475 = pneg %p302
        %p476 = pneg %p299
        %p477 = pneg %p323
        %p478 = pneg %p320
        %p479 = pneg %p344
        %p480 = pneg %p341
        %p481 = pneg %p370
        %p482 = pneg %p367
        %s483 = sand.u32 %s357, 1
        %s484 = scalar_lea.sflag [#allocation8], %s483
        %s485 = sand.u32 %s357, 1
        %s486 = scalar_lea.vmem [#allocation7], %s485
        %p487 = scmp.lt.s32.totalorder %s29, 1
        %s488 = scalar_select %p487, %s29, 1
        %s489 = smul.addr %s488, 32
        %s490 = smul.addr %s489, 4
        %s491 = scalar_lea.vmem %s0, %s490
        %vm493 = vcmask 125952
        %494 = vst.msk [vmem:[#allocation2] sm:$0xf] %vm493, 0
        %495 = vst.msk [vmem:[#allocation2 + $0x4] sm:$0xf] %vm493, 0
        %vm496 = vcmask 122880
        %497 = vst.msk [vmem:[#allocation2 + $0x8] sm:$0x1] %vm496, 0
        %498 = vst.msk [vmem:[#allocation2 + $0xc] sm:$0xf] %vm493, 0
        %499 = vst.msk [vmem:[#allocation2 + $0x10] sm:$0xf] %vm493, 0
        %500 = vst.msk [vmem:[#allocation2 + $0x14] sm:$0x1] %vm496, 0
        %501 = vst.msk [vmem:[#allocation2 + $0x18] sm:$0xf] %vm493, 0
        %502 = vst.msk [vmem:[#allocation2 + $0x1c] sm:$0xf] %vm493, 0
        %503 = vst.msk [vmem:[#allocation2 + $0x20] sm:$0x1] %vm496, 0
        %504 = vst.msk [vmem:[#allocation2 + $0x24] sm:$0xf] %vm493, 0
        %505 = vst.msk [vmem:[#allocation2 + $0x28] sm:$0xf] %vm493, 0
        %506 = vst.msk [vmem:[#allocation2 + $0x2c] sm:$0x1] %vm496, 0
        %507 = vst.msk [vmem:[#allocation2 + $0x30] sm:$0xf] %vm493, 0
        %508 = vst.msk [vmem:[#allocation2 + $0x34] sm:$0xf] %vm493, 0
        %509 = vst.msk [vmem:[#allocation2 + $0x38] sm:$0x1] %vm496, 0
        %510 = vst.msk [vmem:[#allocation2 + $0x3c] sm:$0xf] %vm493, 0
        %511 = vst.msk [vmem:[#allocation2 + $0x40] sm:$0xf] %vm493, 0
        %512 = vst.msk [vmem:[#allocation2 + $0x44] sm:$0x1] %vm496, 0
        %513 = vst.msk [vmem:[#allocation2 + $0x48] sm:$0xf] %vm493, 0
        %514 = vst.msk [vmem:[#allocation2 + $0x4c] sm:$0xf] %vm493, 0
        %515 = vst.msk [vmem:[#allocation2 + $0x50] sm:$0x1] %vm496, 0
        %516 = vst.msk [vmem:[#allocation2 + $0x54] sm:$0xf] %vm493, 0
        %517 = vst.msk [vmem:[#allocation2 + $0x58] sm:$0xf] %vm493, 0
        %518 = vst.msk [vmem:[#allocation2 + $0x5c] sm:$0x1] %vm496, 0
        %519 = vst.msk [vmem:[#allocation2 + $0x60] sm:$0xf] %vm493, 0
        %520 = vst.msk [vmem:[#allocation2 + $0x64] sm:$0xf] %vm493, 0
        %521 = vst.msk [vmem:[#allocation2 + $0x68] sm:$0x1] %vm496, 0
        %522 = vst.msk [vmem:[#allocation2 + $0x6c] sm:$0xf] %vm493, 0
        %523 = vst.msk [vmem:[#allocation2 + $0x70] sm:$0xf] %vm493, 0
        %524 = vst.msk [vmem:[#allocation2 + $0x74] sm:$0x1] %vm496, 0
        %525 = vst.msk [vmem:[#allocation2 + $0x78] sm:$0xf] %vm493, 0
        %526 = vst.msk [vmem:[#allocation2 + $0x7c] sm:$0xf] %vm493, 0
        %527 = vst.msk [vmem:[#allocation2 + $0x80] sm:$0x1] %vm496, 0
        %528 = vst.msk [vmem:[#allocation2 + $0x84] sm:$0xf] %vm493, 0
        %529 = vst.msk [vmem:[#allocation2 + $0x88] sm:$0xf] %vm493, 0
        %530 = vst.msk [vmem:[#allocation2 + $0x8c] sm:$0x1] %vm496, 0
        %531 = vst.msk [vmem:[#allocation2 + $0x90] sm:$0xf] %vm493, 0
        %532 = vst.msk [vmem:[#allocation2 + $0x94] sm:$0xf] %vm493, 0
        %533 = vst.msk [vmem:[#allocation2 + $0x98] sm:$0x1] %vm496, 0
        %534 = vst.msk [vmem:[#allocation2 + $0x9c] sm:$0xf] %vm493, 0
        %535 = vst.msk [vmem:[#allocation2 + $0xa0] sm:$0xf] %vm493, 0
        %536 = vst.msk [vmem:[#allocation2 + $0xa4] sm:$0x1] %vm496, 0
        %537 = vst.msk [vmem:[#allocation2 + $0xa8] sm:$0xf] %vm493, 0
        %538 = vst.msk [vmem:[#allocation2 + $0xac] sm:$0xf] %vm493, 0
        %539 = vst.msk [vmem:[#allocation2 + $0xb0] sm:$0x1] %vm496, 0
        %540 = vst.msk [vmem:[#allocation2 + $0xb4] sm:$0xf] %vm493, 0
        %541 = vst.msk [vmem:[#allocation2 + $0xb8] sm:$0xf] %vm493, 0
        %542 = vst.msk [vmem:[#allocation2 + $0xbc] sm:$0x1] %vm496, 0
        %543 = vst.msk [vmem:[#allocation2 + $0xc0] sm:$0xf] %vm493, 0
        %544 = vst.msk [vmem:[#allocation2 + $0xc4] sm:$0xf] %vm493, 0
        %545 = vst.msk [vmem:[#allocation2 + $0xc8] sm:$0x1] %vm496, 0
        %546 = vst.msk [vmem:[#allocation2 + $0xcc] sm:$0xf] %vm493, 0
        %547 = vst.msk [vmem:[#allocation2 + $0xd0] sm:$0xf] %vm493, 0
        %548 = vst.msk [vmem:[#allocation2 + $0xd4] sm:$0x1] %vm496, 0
        %549 = vst.msk [vmem:[#allocation3] sm:$0xf] %vm493, 0
        %550 = vst.msk [vmem:[#allocation3 + $0x4] sm:$0x1] %vm496, 0
        %551 = vst.msk [vmem:[#allocation3 + $0x8] sm:$0xf] %vm493, 0
        %552 = vst.msk [vmem:[#allocation3 + $0xc] sm:$0x1] %vm496, 0
        %553 = vst.msk [vmem:[#allocation3 + $0x10] sm:$0xf] %vm493, 0
        %554 = vst.msk [vmem:[#allocation3 + $0x14] sm:$0x1] %vm496, 0
        %555 = vst.msk [vmem:[#allocation3 + $0x18] sm:$0xf] %vm493, 0
        %556 = vst.msk [vmem:[#allocation3 + $0x1c] sm:$0x1] %vm496, 0
        %557 = vst.msk [vmem:[#allocation3 + $0x20] sm:$0xf] %vm493, 0
        %558 = vst.msk [vmem:[#allocation3 + $0x24] sm:$0x1] %vm496, 0
        %559 = vst.msk [vmem:[#allocation3 + $0x28] sm:$0xf] %vm493, 0
        %560 = vst.msk [vmem:[#allocation3 + $0x2c] sm:$0x1] %vm496, 0
        %561 = vst.msk [vmem:[#allocation3 + $0x30] sm:$0xf] %vm493, 0
        %562 = vst.msk [vmem:[#allocation3 + $0x34] sm:$0x1] %vm496, 0
        %563 = vst.msk [vmem:[#allocation3 + $0x38] sm:$0xf] %vm493, 0
        %564 = vst.msk [vmem:[#allocation3 + $0x3c] sm:$0x1] %vm496, 0
        %565 = vst.msk [vmem:[#allocation3 + $0x40] sm:$0xf] %vm493, 0
        %566 = vst.msk [vmem:[#allocation3 + $0x44] sm:$0x1] %vm496, 0
        %567 = vst.msk [vmem:[#allocation3 + $0x48] sm:$0xf] %vm493, 0
        %568 = vst.msk [vmem:[#allocation3 + $0x4c] sm:$0x1] %vm496, 0
        %vm569 = vcmask 257024
        %570 = vst.msk [vmem:[#allocation4] sm:$0xf] %vm569, 0
        %vm571 = vcmask 253952
        %572 = vst.msk [vmem:[#allocation4 + $0x4] sm:$0x1] %vm571, 0
        %573 = vst.msk [vmem:[#allocation4 + $0x8] sm:$0xf] %vm569, 0
        %574 = vst.msk [vmem:[#allocation4 + $0xc] sm:$0x1] %vm571, 0
        %575 = vst.msk [vmem:[#allocation4 + $0x10] sm:$0xf] %vm569, 0
        %576 = vst.msk [vmem:[#allocation4 + $0x14] sm:$0x1] %vm571, 0
        %577 = vst.msk [vmem:[#allocation4 + $0x18] sm:$0xf] %vm569, 0
        %578 = vst.msk [vmem:[#allocation4 + $0x1c] sm:$0x1] %vm571, 0
        %579 = vst.msk [vmem:[#allocation4 + $0x20] sm:$0xf] %vm569, 0
        %580 = vst.msk [vmem:[#allocation4 + $0x24] sm:$0x1] %vm571, 0
        %581 = vst.msk [vmem:[#allocation4 + $0x28] sm:$0xf] %vm569, 0
        %582 = vst.msk [vmem:[#allocation4 + $0x2c] sm:$0x1] %vm571, 0
        %583 = vst.msk [vmem:[#allocation4 + $0x30] sm:$0xf] %vm569, 0
        %584 = vst.msk [vmem:[#allocation4 + $0x34] sm:$0x1] %vm571, 0
        %585 = vst.msk [vmem:[#allocation4 + $0x38] sm:$0xf] %vm569, 0
        %586 = vst.msk [vmem:[#allocation4 + $0x3c] sm:$0x1] %vm571, 0
        %587 = vst.msk [vmem:[#allocation4 + $0x40] sm:$0xf] %vm569, 0
        %588 = vst.msk [vmem:[#allocation4 + $0x44] sm:$0x1] %vm571, 0
        %589 = vst.msk [vmem:[#allocation4 + $0x48] sm:$0xf] %vm569, 0
        %590 = vst.msk [vmem:[#allocation4 + $0x4c] sm:$0x1] %vm571, 0
        %vm591 = vcmask 518144
        %592 = vst.msk [vmem:[#allocation5] sm:$0x7] %vm591, 0
        %593 = vst.msk [vmem:[#allocation5 + $0x4] sm:$0x7] %vm591, 0
        %594 = vst.msk [vmem:[#allocation5 + $0x8] sm:$0x7] %vm591, 0
        %595 = vst.msk [vmem:[#allocation5 + $0xc] sm:$0x7] %vm591, 0
        %596 = vst.msk [vmem:[#allocation5 + $0x10] sm:$0x7] %vm591, 0
        %597 = vst.msk [vmem:[#allocation5 + $0x14] sm:$0x7] %vm591, 0
        %598 = vst [vmem:[#allocation6] sm:$0x7] 0
        %599 = vst [vmem:[#allocation6 + $0x4] sm:$0x7] 0
        %600 = vst [vmem:[#allocation6 + $0x8] sm:$0x7] 0
        %601 = vst [vmem:[#allocation6 + $0xc] sm:$0x7] 0
        %602 = vst [vmem:[#allocation6 + $0x10] sm:$0x7] 0
        %603 = vst [vmem:[#allocation6 + $0x14] sm:$0x7] 0
        %v604 = vld [vmem:[%s491] sm:$0xf]
        %v605 = vld [vmem:[%s491 + $0x4] sm:$0xf]
        %v606 = vld [vmem:[%s491 + $0x8] sm:$0xf]
        %v607 = vld [vmem:[%s491 + $0xc] sm:$0xf]
        %v608 = vld [vmem:[%s491 + $0x10] sm:$0xf]
        %v609 = vld [vmem:[%s491 + $0x14] sm:$0xf]
        %v610 = vld [vmem:[%s491 + $0x18] sm:$0xf]
        %v611 = vld [vmem:[%s491 + $0x1c] sm:$0xf]
        %v612 = vld [vmem:[%s491 + $0x20] sm:$0xf]
        %v613 = vld [vmem:[%s491 + $0x24] sm:$0xf]
        %v614 = vld [vmem:[%s491 + $0x28] sm:$0xf]
        %v615 = vld [vmem:[%s491 + $0x2c] sm:$0xf]
        %v616 = vld [vmem:[%s491 + $0x30] sm:$0xf]
        %v617 = vld [vmem:[%s491 + $0x34] sm:$0xf]
        %v618 = vld [vmem:[%s491 + $0x38] sm:$0xf]
        %v619 = vld [vmem:[%s491 + $0x3c] sm:$0xf]
        %v620 = vld [vmem:[%s491 + $0x40] sm:$0xf]
        %v621 = vld [vmem:[%s491 + $0x44] sm:$0xf]
        %v622 = vld [vmem:[%s491 + $0x48] sm:$0xf]
        %v623 = vld [vmem:[%s491 + $0x4c] sm:$0xf]
        %v624 = vld [vmem:[%s491 + $0x50] sm:$0xf]
        %v625 = vld [vmem:[%s491 + $0x54] sm:$0xf]
        %v626 = vld [vmem:[%s491 + $0x58] sm:$0xf]
        %v627 = vld [vmem:[%s491 + $0x5c] sm:$0xf]
        %v628 = vld [vmem:[%s491 + $0x60] sm:$0xf]
        %v629 = vld [vmem:[%s491 + $0x64] sm:$0xf]
        %v630 = vld [vmem:[%s491 + $0x68] sm:$0xf]
        %v631 = vld [vmem:[%s491 + $0x6c] sm:$0xf]
        %v632 = vld [vmem:[%s491 + $0x70] sm:$0xf]
        %v633 = vld [vmem:[%s491 + $0x74] sm:$0xf]
        %v634 = vld [vmem:[%s491 + $0x78] sm:$0xf]
        %v635 = vld [vmem:[%s491 + $0x7c] sm:$0xf]
        %v636 = vld [vmem:[%s1] sm:$0xf]
        %v637 = vld [vmem:[%s1 + $0x4] sm:$0xf]
        %v638 = vld [vmem:[%s1 + $0x8] sm:$0xf]
        %v639 = vld [vmem:[%s1 + $0xc] sm:$0x3]
        %v640 = vld [vmem:[%s2] sm:$0x1]
        %v642 = vperm.slane %v640, 0
        %v676 = vunpack.c.l.b16 %v604
        %v677 = vunpack.c.l.b16 %v605
        %v678 = vunpack.c.l.b16 %v606
        %v679 = vunpack.c.l.b16 %v607
        %v680 = vunpack.c.l.b16 %v608
        %v681 = vunpack.c.l.b16 %v609
        %v682 = vunpack.c.l.b16 %v610
        %v683 = vunpack.c.l.b16 %v611
        %v684 = vunpack.c.l.b16 %v612
        %v685 = vunpack.c.l.b16 %v613
        %v686 = vunpack.c.l.b16 %v614
        %v687 = vunpack.c.l.b16 %v615
        %v688 = vunpack.c.l.b16 %v616
        %v689 = vunpack.c.l.b16 %v617
        %v690 = vunpack.c.l.b16 %v618
        %v691 = vunpack.c.l.b16 %v619
        %v692 = vunpack.c.l.b16 %v620
        %v693 = vunpack.c.l.b16 %v621
        %v694 = vunpack.c.l.b16 %v622
        %v695 = vunpack.c.l.b16 %v623
        %v696 = vunpack.c.l.b16 %v624
        %v697 = vunpack.c.l.b16 %v625
        %v698 = vunpack.c.l.b16 %v626
        %v699 = vunpack.c.l.b16 %v627
        %v700 = vunpack.c.l.b16 %v628
        %v701 = vunpack.c.l.b16 %v629
        %v702 = vunpack.c.l.b16 %v630
        %v703 = vunpack.c.l.b16 %v631
        %v704 = vunpack.c.l.b16 %v632
        %v705 = vunpack.c.l.b16 %v633
        %v706 = vunpack.c.l.b16 %v634
        %v707 = vunpack.c.l.b16 %v635
        %v708 = vpack.c.b16 %v677, %v676
        %v709 = vpack.c.b16 %v679, %v678
        %v710 = vpack.c.b16 %v681, %v680
        %v711 = vpack.c.b16 %v683, %v682
        %v712 = vpack.c.b16 %v685, %v684
        %v713 = vpack.c.b16 %v687, %v686
        %v714 = vpack.c.b16 %v689, %v688
        %v715 = vpack.c.b16 %v691, %v690
        %v716 = vpack.c.b16 %v693, %v692
        %v717 = vpack.c.b16 %v695, %v694
        %v718 = vpack.c.b16 %v697, %v696
        %v719 = vpack.c.b16 %v699, %v698
        %v720 = vpack.c.b16 %v701, %v700
        %v721 = vpack.c.b16 %v703, %v702
        %v722 = vpack.c.b16 %v705, %v704
        %v723 = vpack.c.b16 %v707, %v706
        %v728 = vunpack.c.l.b16 %v636
        %v729 = vunpack.c.l.b16 %v637
        %v730 = vunpack.c.l.b16 %v638
        %v731 = vunpack.c.l.b16 %v639
        %v732 = vpack.c.b16 %v729, %v728
        %v733 = vpack.c.b16 %v731, %v730
        %vm735 = vcmask 220160
        %v737 = vsel %vm735, %v708, 0
        %v740 = vsel %vm735, %v709, 0
        %v743 = vsel %vm735, %v710, 0
        %v746 = vsel %vm735, %v711, 0
        %v749 = vsel %vm735, %v712, 0
        %v752 = vsel %vm735, %v713, 0
        %v755 = vsel %vm735, %v714, 0
        %v758 = vsel %vm735, %v715, 0
        %v761 = vsel %vm735, %v716, 0
        %v764 = vsel %vm735, %v717, 0
        %v767 = vsel %vm735, %v718, 0
        %v770 = vsel %vm735, %v719, 0
        %v773 = vsel %vm735, %v720, 0
        %v776 = vsel %vm735, %v721, 0
        %v779 = vsel %vm735, %v722, 0
        %v782 = vsel %vm735, %v723, 0
        %vm784 = vcmask 1044480
        %vm785 = vcmask 1045504
        %v786 = vsel %vm784, 4294967295, 65535
        %v787 = vsel %vm785, %v786, 0
        %v789 = vand.u32 %v733, %v787
        %791 = vmatpush.bf16.msra.mxu0 0
        %792 = vmatpush.bf16.msra.mxu0 0
        %793 = vmatpush.bf16.msra.mxu0 0
        %794 = vmatpush.bf16.msra.mxu0 0
        %795 = vmatpush.bf16.msra.mxu0 0
        %796 = vmatpush.bf16.msra.mxu0 0
        %797 = vmatpush.bf16.msra.mxu0 %v789
        %798 = vmatpush.bf16.msra.mxu0 %v732
        %799 = vmatmul.bf16.gmra.mxu0 %v737
        %v800 = vpop.f32.mrf.mxu0
        %v801 = vadd.f32 %v642, %v800
        %v802 = vpop.f32.mrf.mxu0
        %v803 = vadd.f32 %v642, %v802
        %804 = vmatmul.bf16.gmra.mxu0 %v740
        %v805 = vpop.f32.mrf.mxu0
        %v806 = vadd.f32 %v642, %v805
        %v807 = vpop.f32.mrf.mxu0
        %v808 = vadd.f32 %v642, %v807
        %809 = vmatmul.bf16.gmra.mxu0 %v743
        %v810 = vpop.f32.mrf.mxu0
        %v811 = vadd.f32 %v642, %v810
        %v812 = vpop.f32.mrf.mxu0
        %v813 = vadd.f32 %v642, %v812
        %814 = vmatmul.bf16.gmra.mxu0 %v746
        %v815 = vpop.f32.mrf.mxu0
        %v816 = vadd.f32 %v642, %v815
        %v817 = vpop.f32.mrf.mxu0
        %v818 = vadd.f32 %v642, %v817
        %819 = vmatmul.bf16.gmra.mxu0 %v749
        %v820 = vpop.f32.mrf.mxu0
        %v821 = vadd.f32 %v642, %v820
        %v822 = vpop.f32.mrf.mxu0
        %v823 = vadd.f32 %v642, %v822
        %824 = vmatmul.bf16.gmra.mxu0 %v752
        %v825 = vpop.f32.mrf.mxu0
        %v826 = vadd.f32 %v642, %v825
        %v827 = vpop.f32.mrf.mxu0
        %v828 = vadd.f32 %v642, %v827
        %829 = vmatmul.bf16.gmra.mxu0 %v755
        %v830 = vpop.f32.mrf.mxu0
        %v831 = vadd.f32 %v642, %v830
        %v832 = vpop.f32.mrf.mxu0
        %v833 = vadd.f32 %v642, %v832
        %834 = vmatmul.bf16.gmra.mxu0 %v758
        %v835 = vpop.f32.mrf.mxu0
        %v836 = vadd.f32 %v642, %v835
        %v837 = vpop.f32.mrf.mxu0
        %v838 = vadd.f32 %v642, %v837
        %839 = vmatmul.bf16.gmra.mxu0 %v761
        %v840 = vpop.f32.mrf.mxu0
        %v841 = vadd.f32 %v642, %v840
        %v842 = vpop.f32.mrf.mxu0
        %v843 = vadd.f32 %v642, %v842
        %844 = vmatmul.bf16.gmra.mxu0 %v764
        %v845 = vpop.f32.mrf.mxu0
        %v846 = vadd.f32 %v642, %v845
        %v847 = vpop.f32.mrf.mxu0
        %v848 = vadd.f32 %v642, %v847
        %849 = vmatmul.bf16.gmra.mxu0 %v767
        %v850 = vpop.f32.mrf.mxu0
        %v851 = vadd.f32 %v642, %v850
        %v852 = vpop.f32.mrf.mxu0
        %v853 = vadd.f32 %v642, %v852
        %854 = vmatmul.bf16.gmra.mxu0 %v770
        %v855 = vpop.f32.mrf.mxu0
        %v856 = vadd.f32 %v642, %v855
        %v857 = vpop.f32.mrf.mxu0
        %v858 = vadd.f32 %v642, %v857
        %859 = vmatmul.bf16.gmra.mxu0 %v773
        %v860 = vpop.f32.mrf.mxu0
        %v861 = vadd.f32 %v642, %v860
        %v862 = vpop.f32.mrf.mxu0
        %v863 = vadd.f32 %v642, %v862
        %864 = vmatmul.bf16.gmra.mxu0 %v776
        %v865 = vpop.f32.mrf.mxu0
        %v866 = vadd.f32 %v642, %v865
        %v867 = vpop.f32.mrf.mxu0
        %v868 = vadd.f32 %v642, %v867
        %869 = vmatmul.bf16.gmra.mxu0 %v779
        %v870 = vpop.f32.mrf.mxu0
        %v871 = vadd.f32 %v642, %v870
        %v872 = vpop.f32.mrf.mxu0
        %v873 = vadd.f32 %v642, %v872
        %874 = vmatmul.bf16.gmra.mxu0 %v782
        %v875 = vpop.f32.mrf.mxu0
        %v876 = vadd.f32 %v642, %v875
        %v877 = vpop.f32.mrf.mxu0
        %v878 = vadd.f32 %v642, %v877
        %879 = vdwg.mxu0
        %v880 = vmax.f32 %v801, 0.0
        %v881 = vmax.f32 %v803, 0.0
        %v882 = vmax.f32 %v806, 0.0
        %v883 = vmax.f32 %v808, 0.0
        %v884 = vmax.f32 %v811, 0.0
        %v885 = vmax.f32 %v813, 0.0
        %v886 = vmax.f32 %v816, 0.0
        %v887 = vmax.f32 %v818, 0.0
        %v888 = vmax.f32 %v821, 0.0
        %v889 = vmax.f32 %v823, 0.0
        %v890 = vmax.f32 %v826, 0.0
        %v891 = vmax.f32 %v828, 0.0
        %v892 = vmax.f32 %v831, 0.0
        %v893 = vmax.f32 %v833, 0.0
        %v894 = vmax.f32 %v836, 0.0
        %v895 = vmax.f32 %v838, 0.0
        %v896 = vmax.f32 %v841, 0.0
        %v897 = vmax.f32 %v843, 0.0
        %v898 = vmax.f32 %v846, 0.0
        %v899 = vmax.f32 %v848, 0.0
        %v900 = vmax.f32 %v851, 0.0
        %v901 = vmax.f32 %v853, 0.0
        %v902 = vmax.f32 %v856, 0.0
        %v903 = vmax.f32 %v858, 0.0
        %v904 = vmax.f32 %v861, 0.0
        %v905 = vmax.f32 %v863, 0.0
        %v906 = vmax.f32 %v866, 0.0
        %v907 = vmax.f32 %v868, 0.0
        %v908 = vmax.f32 %v871, 0.0
        %v909 = vmax.f32 %v873, 0.0
        %v910 = vmax.f32 %v876, 0.0
        %v911 = vmax.f32 %v878, 0.0
        %v912 = vpack.c.bf16 %v880, %v880
        %v913 = vpack.c.bf16 %v881, %v881
        %v914 = vpack.c.bf16 %v882, %v882
        %v915 = vpack.c.bf16 %v883, %v883
        %v916 = vpack.c.bf16 %v884, %v884
        %v917 = vpack.c.bf16 %v885, %v885
        %v918 = vpack.c.bf16 %v886, %v886
        %v919 = vpack.c.bf16 %v887, %v887
        %v920 = vpack.c.bf16 %v888, %v888
        %v921 = vpack.c.bf16 %v889, %v889
        %v922 = vpack.c.bf16 %v890, %v890
        %v923 = vpack.c.bf16 %v891, %v891
        %v924 = vpack.c.bf16 %v892, %v892
        %v925 = vpack.c.bf16 %v893, %v893
        %v926 = vpack.c.bf16 %v894, %v894
        %v927 = vpack.c.bf16 %v895, %v895
        %v928 = vpack.c.bf16 %v896, %v896
        %v929 = vpack.c.bf16 %v897, %v897
        %v930 = vpack.c.bf16 %v898, %v898
        %v931 = vpack.c.bf16 %v899, %v899
        %v932 = vpack.c.bf16 %v900, %v900
        %v933 = vpack.c.bf16 %v901, %v901
        %v934 = vpack.c.bf16 %v902, %v902
        %v935 = vpack.c.bf16 %v903, %v903
        %v936 = vpack.c.bf16 %v904, %v904
        %v937 = vpack.c.bf16 %v905, %v905
        %v938 = vpack.c.bf16 %v906, %v906
        %v939 = vpack.c.bf16 %v907, %v907
        %v940 = vpack.c.bf16 %v908, %v908
        %v941 = vpack.c.bf16 %v909, %v909
        %v942 = vpack.c.bf16 %v910, %v910
        %v943 = vpack.c.bf16 %v911, %v911
        %vm944 = vsmask.f32 256
        %vm945 = vsmask.f32 4368
        %vm946 = vmor %vm944, %vm945
        %v948 = vshrl.u32 %v912, 16
        %v950 = vrot.slane %v948, 7
        %v951 = vshll.u32 %v912, 16
        %v953 = vor.u32 %v950, %v951
        %v954 = vrot.slane %v950, 4
        %v956 = vshrl.u32 %v913, 16
        %v958 = vrot.slane %v956, 7
        %v959 = vshll.u32 %v913, 16
        %v961 = vor.u32 %v958, %v959
        %v962 = vsel %vm946, %v954, %v961
        %v963 = vrot.slane %v958, 4
        %v965 = vshrl.u32 %v914, 16
        %v967 = vrot.slane %v965, 7
        %v968 = vshll.u32 %v914, 16
        %v970 = vor.u32 %v967, %v968
        %v971 = vrot.slane %v967, 4
        %v973 = vshrl.u32 %v915, 16
        %v975 = vrot.slane %v973, 7
        %v976 = vshll.u32 %v915, 16
        %v978 = vor.u32 %v975, %v976
        %v979 = vsel %vm946, %v971, %v978
        %v980 = vrot.slane %v975, 4
        %v982 = vshrl.u32 %v916, 16
        %v984 = vrot.slane %v982, 7
        %v985 = vshll.u32 %v916, 16
        %v987 = vor.u32 %v984, %v985
        %v988 = vrot.slane %v984, 4
        %v990 = vshrl.u32 %v917, 16
        %v992 = vrot.slane %v990, 7
        %v993 = vshll.u32 %v917, 16
        %v995 = vor.u32 %v992, %v993
        %v996 = vsel %vm946, %v988, %v995
        %v997 = vrot.slane %v992, 4
        %v999 = vshrl.u32 %v918, 16
        %v1001 = vrot.slane %v999, 7
        %v1002 = vshll.u32 %v918, 16
        %v1004 = vor.u32 %v1001, %v1002
        %v1005 = vrot.slane %v1001, 4
        %v1007 = vshrl.u32 %v919, 16
        %v1009 = vrot.slane %v1007, 7
        %v1010 = vshll.u32 %v919, 16
        %v1012 = vor.u32 %v1009, %v1010
        %v1013 = vsel %vm946, %v1005, %v1012
        %v1014 = vrot.slane %v1009, 4
        %v1016 = vshrl.u32 %v920, 16
        %v1018 = vrot.slane %v1016, 7
        %v1019 = vshll.u32 %v920, 16
        %v1021 = vor.u32 %v1018, %v1019
        %v1022 = vrot.slane %v1018, 4
        %v1024 = vshrl.u32 %v921, 16
        %v1026 = vrot.slane %v1024, 7
        %v1027 = vshll.u32 %v921, 16
        %v1029 = vor.u32 %v1026, %v1027
        %v1030 = vsel %vm946, %v1022, %v1029
        %v1031 = vrot.slane %v1026, 4
        %v1033 = vshrl.u32 %v922, 16
        %v1035 = vrot.slane %v1033, 7
        %v1036 = vshll.u32 %v922, 16
        %v1038 = vor.u32 %v1035, %v1036
        %v1039 = vrot.slane %v1035, 4
        %v1041 = vshrl.u32 %v923, 16
        %v1043 = vrot.slane %v1041, 7
        %v1044 = vshll.u32 %v923, 16
        %v1046 = vor.u32 %v1043, %v1044
        %v1047 = vsel %vm946, %v1039, %v1046
        %v1048 = vrot.slane %v1043, 4
        %v1050 = vshrl.u32 %v924, 16
        %v1052 = vrot.slane %v1050, 7
        %v1053 = vshll.u32 %v924, 16
        %v1055 = vor.u32 %v1052, %v1053
        %v1056 = vrot.slane %v1052, 4
        %v1058 = vshrl.u32 %v925, 16
        %v1060 = vrot.slane %v1058, 7
        %v1061 = vshll.u32 %v925, 16
        %v1063 = vor.u32 %v1060, %v1061
        %v1064 = vsel %vm946, %v1056, %v1063
        %v1065 = vrot.slane %v1060, 4
        %v1067 = vshrl.u32 %v926, 16
        %v1069 = vrot.slane %v1067, 7
        %v1070 = vshll.u32 %v926, 16
        %v1072 = vor.u32 %v1069, %v1070
        %v1073 = vrot.slane %v1069, 4
        %v1075 = vshrl.u32 %v927, 16
        %v1077 = vrot.slane %v1075, 7
        %v1078 = vshll.u32 %v927, 16
        %v1080 = vor.u32 %v1077, %v1078
        %v1081 = vsel %vm946, %v1073, %v1080
        %v1082 = vrot.slane %v1077, 4
        %v1084 = vshrl.u32 %v928, 16
        %v1086 = vrot.slane %v1084, 7
        %v1087 = vshll.u32 %v928, 16
        %v1089 = vor.u32 %v1086, %v1087
        %v1090 = vrot.slane %v1086, 4
        %v1092 = vshrl.u32 %v929, 16
        %v1094 = vrot.slane %v1092, 7
        %v1095 = vshll.u32 %v929, 16
        %v1097 = vor.u32 %v1094, %v1095
        %v1098 = vsel %vm946, %v1090, %v1097
        %v1099 = vrot.slane %v1094, 4
        %v1101 = vshrl.u32 %v930, 16
        %v1103 = vrot.slane %v1101, 7
        %v1104 = vshll.u32 %v930, 16
        %v1106 = vor.u32 %v1103, %v1104
        %v1107 = vrot.slane %v1103, 4
        %v1109 = vshrl.u32 %v931, 16
        %v1111 = vrot.slane %v1109, 7
        %v1112 = vshll.u32 %v931, 16
        %v1114 = vor.u32 %v1111, %v1112
        %v1115 = vsel %vm946, %v1107, %v1114
        %v1116 = vrot.slane %v1111, 4
        %v1118 = vshrl.u32 %v932, 16
        %v1120 = vrot.slane %v1118, 7
        %v1121 = vshll.u32 %v932, 16
        %v1123 = vor.u32 %v1120, %v1121
        %v1124 = vrot.slane %v1120, 4
        %v1126 = vshrl.u32 %v933, 16
        %v1128 = vrot.slane %v1126, 7
        %v1129 = vshll.u32 %v933, 16
        %v1131 = vor.u32 %v1128, %v1129
        %v1132 = vsel %vm946, %v1124, %v1131
        %v1133 = vrot.slane %v1128, 4
        %v1135 = vshrl.u32 %v934, 16
        %v1137 = vrot.slane %v1135, 7
        %v1138 = vshll.u32 %v934, 16
        %v1140 = vor.u32 %v1137, %v1138
        %v1141 = vrot.slane %v1137, 4
        %v1143 = vshrl.u32 %v935, 16
        %v1145 = vrot.slane %v1143, 7
        %v1146 = vshll.u32 %v935, 16
        %v1148 = vor.u32 %v1145, %v1146
        %v1149 = vsel %vm946, %v1141, %v1148
        %v1150 = vrot.slane %v1145, 4
        %v1152 = vshrl.u32 %v936, 16
        %v1154 = vrot.slane %v1152, 7
        %v1155 = vshll.u32 %v936, 16
        %v1157 = vor.u32 %v1154, %v1155
        %v1158 = vrot.slane %v1154, 4
        %v1160 = vshrl.u32 %v937, 16
        %v1162 = vrot.slane %v1160, 7
        %v1163 = vshll.u32 %v937, 16
        %v1165 = vor.u32 %v1162, %v1163
        %v1166 = vsel %vm946, %v1158, %v1165
        %v1167 = vrot.slane %v1162, 4
        %v1169 = vshrl.u32 %v938, 16
        %v1171 = vrot.slane %v1169, 7
        %v1172 = vshll.u32 %v938, 16
        %v1174 = vor.u32 %v1171, %v1172
        %v1175 = vrot.slane %v1171, 4
        %v1177 = vshrl.u32 %v939, 16
        %v1179 = vrot.slane %v1177, 7
        %v1180 = vshll.u32 %v939, 16
        %v1182 = vor.u32 %v1179, %v1180
        %v1183 = vsel %vm946, %v1175, %v1182
        %v1184 = vrot.slane %v1179, 4
        %v1186 = vshrl.u32 %v940, 16
        %v1188 = vrot.slane %v1186, 7
        %v1189 = vshll.u32 %v940, 16
        %v1191 = vor.u32 %v1188, %v1189
        %v1192 = vrot.slane %v1188, 4
        %v1194 = vshrl.u32 %v941, 16
        %v1196 = vrot.slane %v1194, 7
        %v1197 = vshll.u32 %v941, 16
        %v1199 = vor.u32 %v1196, %v1197
        %v1200 = vsel %vm946, %v1192, %v1199
        %v1201 = vrot.slane %v1196, 4
        %v1203 = vshrl.u32 %v942, 16
        %v1205 = vrot.slane %v1203, 7
        %v1206 = vshll.u32 %v942, 16
        %v1208 = vor.u32 %v1205, %v1206
        %v1209 = vrot.slane %v1205, 4
        %v1211 = vshrl.u32 %v943, 16
        %v1213 = vrot.slane %v1211, 7
        %v1214 = vshll.u32 %v943, 16
        %v1216 = vor.u32 %v1213, %v1214
        %v1217 = vsel %vm946, %v1209, %v1216
        %v1218 = vrot.slane %v1213, 4
        %s1267 = scalar_lea.vmem [#allocation2], 12
        %vm1268 = vcmask 125952
        %vm1269 = vsmask.f32 7938
        %vm1270 = vmand %vm1268, %vm1269
        %v1271 = vld [vmem:[%s1267] sm:$0xf]
        %v1272 = vsel %vm1270, %v953, %v1271
        %1273 = vst [vmem:[%s1267] sm:$0xf] %v1272
        %1274 = vst.msk [vmem:[%s1267 + $0x4] sm:$0xf] %vm493, %v962
        %vm1275 = vcmask 122880
        %vm1276 = vmand %vm1275, %vm944
        %v1277 = vld [vmem:[%s1267 + $0x8] sm:$0x1]
        %v1278 = vsel %vm1276, %v963, %v1277
        %1279 = vst [vmem:[%s1267 + $0x8] sm:$0x1] %v1278
        %v1280 = vld [vmem:[%s1267 + $0xc] sm:$0xf]
        %v1281 = vsel %vm1270, %v970, %v1280
        %1282 = vst [vmem:[%s1267 + $0xc] sm:$0xf] %v1281
        %1283 = vst.msk [vmem:[%s1267 + $0x10] sm:$0xf] %vm493, %v979
        %v1284 = vld [vmem:[%s1267 + $0x14] sm:$0x1]
        %v1285 = vsel %vm1276, %v980, %v1284
        %1286 = vst [vmem:[%s1267 + $0x14] sm:$0x1] %v1285
        %v1287 = vld [vmem:[%s1267 + $0x18] sm:$0xf]
        %v1288 = vsel %vm1270, %v987, %v1287
        %1289 = vst [vmem:[%s1267 + $0x18] sm:$0xf] %v1288
        %1290 = vst.msk [vmem:[%s1267 + $0x1c] sm:$0xf] %vm493, %v996
        %v1291 = vld [vmem:[%s1267 + $0x20] sm:$0x1]
        %v1292 = vsel %vm1276, %v997, %v1291
        %1293 = vst [vmem:[%s1267 + $0x20] sm:$0x1] %v1292
        %v1294 = vld [vmem:[%s1267 + $0x24] sm:$0xf]
        %v1295 = vsel %vm1270, %v1004, %v1294
        %1296 = vst [vmem:[%s1267 + $0x24] sm:$0xf] %v1295
        %1297 = vst.msk [vmem:[%s1267 + $0x28] sm:$0xf] %vm493, %v1013
        %v1298 = vld [vmem:[%s1267 + $0x2c] sm:$0x1]
        %v1299 = vsel %vm1276, %v1014, %v1298
        %1300 = vst [vmem:[%s1267 + $0x2c] sm:$0x1] %v1299
        %v1301 = vld [vmem:[%s1267 + $0x30] sm:$0xf]
        %v1302 = vsel %vm1270, %v1021, %v1301
        %1303 = vst [vmem:[%s1267 + $0x30] sm:$0xf] %v1302
        %1304 = vst.msk [vmem:[%s1267 + $0x34] sm:$0xf] %vm493, %v1030
        %v1305 = vld [vmem:[%s1267 + $0x38] sm:$0x1]
        %v1306 = vsel %vm1276, %v1031, %v1305
        %1307 = vst [vmem:[%s1267 + $0x38] sm:$0x1] %v1306
        %v1308 = vld [vmem:[%s1267 + $0x3c] sm:$0xf]
        %v1309 = vsel %vm1270, %v1038, %v1308
        %1310 = vst [vmem:[%s1267 + $0x3c] sm:$0xf] %v1309
        %1311 = vst.msk [vmem:[%s1267 + $0x40] sm:$0xf] %vm493, %v1047
        %v1312 = vld [vmem:[%s1267 + $0x44] sm:$0x1]
        %v1313 = vsel %vm1276, %v1048, %v1312
        %1314 = vst [vmem:[%s1267 + $0x44] sm:$0x1] %v1313
        %v1315 = vld [vmem:[%s1267 + $0x48] sm:$0xf]
        %v1316 = vsel %vm1270, %v1055, %v1315
        %1317 = vst [vmem:[%s1267 + $0x48] sm:$0xf] %v1316
        %1318 = vst.msk [vmem:[%s1267 + $0x4c] sm:$0xf] %vm493, %v1064
        %v1319 = vld [vmem:[%s1267 + $0x50] sm:$0x1]
        %v1320 = vsel %vm1276, %v1065, %v1319
        %1321 = vst [vmem:[%s1267 + $0x50] sm:$0x1] %v1320
        %v1322 = vld [vmem:[%s1267 + $0x54] sm:$0xf]
        %v1323 = vsel %vm1270, %v1072, %v1322
        %1324 = vst [vmem:[%s1267 + $0x54] sm:$0xf] %v1323
        %1325 = vst.msk [vmem:[%s1267 + $0x58] sm:$0xf] %vm493, %v1081
        %v1326 = vld [vmem:[%s1267 + $0x5c] sm:$0x1]
        %v1327 = vsel %vm1276, %v1082, %v1326
        %1328 = vst [vmem:[%s1267 + $0x5c] sm:$0x1] %v1327
        %v1329 = vld [vmem:[%s1267 + $0x60] sm:$0xf]
        %v1330 = vsel %vm1270, %v1089, %v1329
        %1331 = vst [vmem:[%s1267 + $0x60] sm:$0xf] %v1330
        %1332 = vst.msk [vmem:[%s1267 + $0x64] sm:$0xf] %vm493, %v1098
        %v1333 = vld [vmem:[%s1267 + $0x68] sm:$0x1]
        %v1334 = vsel %vm1276, %v1099, %v1333
        %1335 = vst [vmem:[%s1267 + $0x68] sm:$0x1] %v1334
        %v1336 = vld [vmem:[%s1267 + $0x6c] sm:$0xf]
        %v1337 = vsel %vm1270, %v1106, %v1336
        %1338 = vst [vmem:[%s1267 + $0x6c] sm:$0xf] %v1337
        %1339 = vst.msk [vmem:[%s1267 + $0x70] sm:$0xf] %vm493, %v1115
        %v1340 = vld [vmem:[%s1267 + $0x74] sm:$0x1]
        %v1341 = vsel %vm1276, %v1116, %v1340
        %1342 = vst [vmem:[%s1267 + $0x74] sm:$0x1] %v1341
        %v1343 = vld [vmem:[%s1267 + $0x78] sm:$0xf]
        %v1344 = vsel %vm1270, %v1123, %v1343
        %1345 = vst [vmem:[%s1267 + $0x78] sm:$0xf] %v1344
        %1346 = vst.msk [vmem:[%s1267 + $0x7c] sm:$0xf] %vm493, %v1132
        %v1347 = vld [vmem:[%s1267 + $0x80] sm:$0x1]
        %v1348 = vsel %vm1276, %v1133, %v1347
        %1349 = vst [vmem:[%s1267 + $0x80] sm:$0x1] %v1348
        %v1350 = vld [vmem:[%s1267 + $0x84] sm:$0xf]
        %v1351 = vsel %vm1270, %v1140, %v1350
        %1352 = vst [vmem:[%s1267 + $0x84] sm:$0xf] %v1351
        %1353 = vst.msk [vmem:[%s1267 + $0x88] sm:$0xf] %vm493, %v1149
        %v1354 = vld [vmem:[%s1267 + $0x8c] sm:$0x1]
        %v1355 = vsel %vm1276, %v1150, %v1354
        %1356 = vst [vmem:[%s1267 + $0x8c] sm:$0x1] %v1355
        %v1357 = vld [vmem:[%s1267 + $0x90] sm:$0xf]
        %v1358 = vsel %vm1270, %v1157, %v1357
        %1359 = vst [vmem:[%s1267 + $0x90] sm:$0xf] %v1358
        %1360 = vst.msk [vmem:[%s1267 + $0x94] sm:$0xf] %vm493, %v1166
        %v1361 = vld [vmem:[%s1267 + $0x98] sm:$0x1]
        %v1362 = vsel %vm1276, %v1167, %v1361
        %1363 = vst [vmem:[%s1267 + $0x98] sm:$0x1] %v1362
        %v1364 = vld [vmem:[%s1267 + $0x9c] sm:$0xf]
        %v1365 = vsel %vm1270, %v1174, %v1364
        %1366 = vst [vmem:[%s1267 + $0x9c] sm:$0xf] %v1365
        %1367 = vst.msk [vmem:[%s1267 + $0xa0] sm:$0xf] %vm493, %v1183
        %v1368 = vld [vmem:[%s1267 + $0xa4] sm:$0x1]
        %v1369 = vsel %vm1276, %v1184, %v1368
        %1370 = vst [vmem:[%s1267 + $0xa4] sm:$0x1] %v1369
        %v1371 = vld [vmem:[%s1267 + $0xa8] sm:$0xf]
        %v1372 = vsel %vm1270, %v1191, %v1371
        %1373 = vst [vmem:[%s1267 + $0xa8] sm:$0xf] %v1372
        %1374 = vst.msk [vmem:[%s1267 + $0xac] sm:$0xf] %vm493, %v1200
        %v1375 = vld [vmem:[%s1267 + $0xb0] sm:$0x1]
        %v1376 = vsel %vm1276, %v1201, %v1375
        %1377 = vst [vmem:[%s1267 + $0xb0] sm:$0x1] %v1376
        %v1378 = vld [vmem:[%s1267 + $0xb4] sm:$0xf]
        %v1379 = vsel %vm1270, %v1208, %v1378
        %1380 = vst [vmem:[%s1267 + $0xb4] sm:$0xf] %v1379
        %1381 = vst.msk [vmem:[%s1267 + $0xb8] sm:$0xf] %vm493, %v1217
        %v1382 = vld [vmem:[%s1267 + $0xbc] sm:$0x1]
        %v1383 = vsel %vm1276, %v1218, %v1382
        %1384 = vst [vmem:[%s1267 + $0xbc] sm:$0x1] %v1383
        %v1385 = vld [vmem:[#allocation2] sm:$0xf]
        %v1386 = vld [vmem:[#allocation2 + $0x4] sm:$0xf]
        %v1387 = vld [vmem:[#allocation2 + $0xc] sm:$0xf]
        %v1388 = vld [vmem:[#allocation2 + $0x10] sm:$0xf]
        %v1389 = vld [vmem:[#allocation2 + $0x18] sm:$0xf]
        %v1390 = vld [vmem:[#allocation2 + $0x1c] sm:$0xf]
        %v1391 = vld [vmem:[#allocation2 + $0x24] sm:$0xf]
        %v1392 = vld [vmem:[#allocation2 + $0x28] sm:$0xf]
        %v1393 = vld [vmem:[#allocation2 + $0x30] sm:$0xf]
        %v1394 = vld [vmem:[#allocation2 + $0x34] sm:$0xf]
        %v1395 = vld [vmem:[#allocation2 + $0x3c] sm:$0xf]
        %v1396 = vld [vmem:[#allocation2 + $0x40] sm:$0xf]
        %v1397 = vld [vmem:[#allocation2 + $0x48] sm:$0xf]
        %v1398 = vld [vmem:[#allocation2 + $0x4c] sm:$0xf]
        %v1399 = vld [vmem:[#allocation2 + $0x54] sm:$0xf]
        %v1400 = vld [vmem:[#allocation2 + $0x58] sm:$0xf]
        %v1401 = vld [vmem:[#allocation2 + $0x60] sm:$0xf]
        %v1402 = vld [vmem:[#allocation2 + $0x64] sm:$0xf]
        %v1403 = vld [vmem:[#allocation2 + $0x6c] sm:$0xf]
        %v1404 = vld [vmem:[#allocation2 + $0x70] sm:$0xf]
        %v1405 = vld [vmem:[#allocation2 + $0x78] sm:$0xf]
        %v1406 = vld [vmem:[#allocation2 + $0x7c] sm:$0xf]
        %v1407 = vld [vmem:[#allocation2 + $0x84] sm:$0xf]
        %v1408 = vld [vmem:[#allocation2 + $0x88] sm:$0xf]
        %v1409 = vld [vmem:[#allocation2 + $0x90] sm:$0xf]
        %v1410 = vld [vmem:[#allocation2 + $0x94] sm:$0xf]
        %v1411 = vld [vmem:[#allocation2 + $0x9c] sm:$0xf]
        %v1412 = vld [vmem:[#allocation2 + $0xa0] sm:$0xf]
        %v1413 = vld [vmem:[#allocation2 + $0xa8] sm:$0xf]
        %v1414 = vld [vmem:[#allocation2 + $0xac] sm:$0xf]
        %v1415 = vld [vmem:[#allocation2 + $0xb4] sm:$0xf]
        %v1416 = vld [vmem:[#allocation2 + $0xb8] sm:$0xf]
        %v1417 = vld [vmem:[#allocation2 + $0x8] sm:$0x1]
        %v1418 = vld [vmem:[#allocation2 + $0x14] sm:$0x1]
        %v1419 = vld [vmem:[#allocation2 + $0x20] sm:$0x1]
        %v1420 = vld [vmem:[#allocation2 + $0x2c] sm:$0x1]
        %v1421 = vld [vmem:[#allocation2 + $0x38] sm:$0x1]
        %v1422 = vld [vmem:[#allocation2 + $0x44] sm:$0x1]
        %v1423 = vld [vmem:[#allocation2 + $0x50] sm:$0x1]
        %v1424 = vld [vmem:[#allocation2 + $0x5c] sm:$0x1]
        %v1425 = vld [vmem:[#allocation2 + $0x68] sm:$0x1]
        %v1426 = vld [vmem:[#allocation2 + $0x74] sm:$0x1]
        %v1427 = vld [vmem:[#allocation2 + $0x80] sm:$0x1]
        %v1428 = vld [vmem:[#allocation2 + $0x8c] sm:$0x1]
        %v1429 = vld [vmem:[#allocation2 + $0x98] sm:$0x1]
        %v1430 = vld [vmem:[#allocation2 + $0xa4] sm:$0x1]
        %v1431 = vld [vmem:[#allocation2 + $0xb0] sm:$0x1]
        %v1432 = vld [vmem:[#allocation2 + $0xbc] sm:$0x1]
        %vm1433 = vsmask.f32 3328
        %vm1434 = vsmask.f32 7440
        %vm1435 = vmor %vm1433, %vm1434
        %v1437 = vshrl.u32 %v1385, 16
        %v1439 = vrot.slane %v1437, 4
        %v1440 = vshll.u32 %v1385, 16
        %v1442 = vrot.slane %v1440, 5
        %v1443 = vor.u32 %v1439, %v1442
        %v1444 = vrot.slane %v1443, 4
        %v1446 = vshll.u32 %v1386, 16
        %v1448 = vrot.slane %v1446, 5
        %v1449 = vsel %vm1435, %v1444, %v1448
        %v1450 = vshrl.u32 %v1386, 16
        %v1452 = vrot.slane %v1450, 4
        %v1453 = vor.u32 %v1452, %v1448
        %v1454 = vrot.slane %v1453, 4
        %v1456 = vshll.u32 %v1417, 16
        %v1458 = vrot.slane %v1456, 5
        %v1459 = vsel %vm1435, %v1454, %v1458
        %v1461 = vshrl.u32 %v1387, 16
        %v1463 = vrot.slane %v1461, 4
        %v1464 = vshll.u32 %v1387, 16
        %v1466 = vrot.slane %v1464, 5
        %v1467 = vor.u32 %v1463, %v1466
        %v1468 = vrot.slane %v1467, 4
        %v1470 = vshll.u32 %v1388, 16
        %v1472 = vrot.slane %v1470, 5
        %v1473 = vsel %vm1435, %v1468, %v1472
        %v1474 = vshrl.u32 %v1388, 16
        %v1476 = vrot.slane %v1474, 4
        %v1477 = vor.u32 %v1476, %v1472
        %v1478 = vrot.slane %v1477, 4
        %v1480 = vshll.u32 %v1418, 16
        %v1482 = vrot.slane %v1480, 5
        %v1483 = vsel %vm1435, %v1478, %v1482
        %v1485 = vshrl.u32 %v1389, 16
        %v1487 = vrot.slane %v1485, 4
        %v1488 = vshll.u32 %v1389, 16
        %v1490 = vrot.slane %v1488, 5
        %v1491 = vor.u32 %v1487, %v1490
        %v1492 = vrot.slane %v1491, 4
        %v1494 = vshll.u32 %v1390, 16
        %v1496 = vrot.slane %v1494, 5
        %v1497 = vsel %vm1435, %v1492, %v1496
        %v1498 = vshrl.u32 %v1390, 16
        %v1500 = vrot.slane %v1498, 4
        %v1501 = vor.u32 %v1500, %v1496
        %v1502 = vrot.slane %v1501, 4
        %v1504 = vshll.u32 %v1419, 16
        %v1506 = vrot.slane %v1504, 5
        %v1507 = vsel %vm1435, %v1502, %v1506
        %v1509 = vshrl.u32 %v1391, 16
        %v1511 = vrot.slane %v1509, 4
        %v1512 = vshll.u32 %v1391, 16
        %v1514 = vrot.slane %v1512, 5
        %v1515 = vor.u32 %v1511, %v1514
        %v1516 = vrot.slane %v1515, 4
        %v1518 = vshll.u32 %v1392, 16
        %v1520 = vrot.slane %v1518, 5
        %v1521 = vsel %vm1435, %v1516, %v1520
        %v1522 = vshrl.u32 %v1392, 16
        %v1524 = vrot.slane %v1522, 4
        %v1525 = vor.u32 %v1524, %v1520
        %v1526 = vrot.slane %v1525, 4
        %v1528 = vshll.u32 %v1420, 16
        %v1530 = vrot.slane %v1528, 5
        %v1531 = vsel %vm1435, %v1526, %v1530
        %v1533 = vshrl.u32 %v1393, 16
        %v1535 = vrot.slane %v1533, 4
        %v1536 = vshll.u32 %v1393, 16
        %v1538 = vrot.slane %v1536, 5
        %v1539 = vor.u32 %v1535, %v1538
        %v1540 = vrot.slane %v1539, 4
        %v1542 = vshll.u32 %v1394, 16
        %v1544 = vrot.slane %v1542, 5
        %v1545 = vsel %vm1435, %v1540, %v1544
        %v1546 = vshrl.u32 %v1394, 16
        %v1548 = vrot.slane %v1546, 4
        %v1549 = vor.u32 %v1548, %v1544
        %v1550 = vrot.slane %v1549, 4
        %v1552 = vshll.u32 %v1421, 16
        %v1554 = vrot.slane %v1552, 5
        %v1555 = vsel %vm1435, %v1550, %v1554
        %v1557 = vshrl.u32 %v1395, 16
        %v1559 = vrot.slane %v1557, 4
        %v1560 = vshll.u32 %v1395, 16
        %v1562 = vrot.slane %v1560, 5
        %v1563 = vor.u32 %v1559, %v1562
        %v1564 = vrot.slane %v1563, 4
        %v1566 = vshll.u32 %v1396, 16
        %v1568 = vrot.slane %v1566, 5
        %v1569 = vsel %vm1435, %v1564, %v1568
        %v1570 = vshrl.u32 %v1396, 16
        %v1572 = vrot.slane %v1570, 4
        %v1573 = vor.u32 %v1572, %v1568
        %v1574 = vrot.slane %v1573, 4
        %v1576 = vshll.u32 %v1422, 16
        %v1578 = vrot.slane %v1576, 5
        %v1579 = vsel %vm1435, %v1574, %v1578
        %v1581 = vshrl.u32 %v1397, 16
        %v1583 = vrot.slane %v1581, 4
        %v1584 = vshll.u32 %v1397, 16
        %v1586 = vrot.slane %v1584, 5
        %v1587 = vor.u32 %v1583, %v1586
        %v1588 = vrot.slane %v1587, 4
        %v1590 = vshll.u32 %v1398, 16
        %v1592 = vrot.slane %v1590, 5
        %v1593 = vsel %vm1435, %v1588, %v1592
        %v1594 = vshrl.u32 %v1398, 16
        %v1596 = vrot.slane %v1594, 4
        %v1597 = vor.u32 %v1596, %v1592
        %v1598 = vrot.slane %v1597, 4
        %v1600 = vshll.u32 %v1423, 16
        %v1602 = vrot.slane %v1600, 5
        %v1603 = vsel %vm1435, %v1598, %v1602
        %v1605 = vshrl.u32 %v1399, 16
        %v1607 = vrot.slane %v1605, 4
        %v1608 = vshll.u32 %v1399, 16
        %v1610 = vrot.slane %v1608, 5
        %v1611 = vor.u32 %v1607, %v1610
        %v1612 = vrot.slane %v1611, 4
        %v1614 = vshll.u32 %v1400, 16
        %v1616 = vrot.slane %v1614, 5
        %v1617 = vsel %vm1435, %v1612, %v1616
        %v1618 = vshrl.u32 %v1400, 16
        %v1620 = vrot.slane %v1618, 4
        %v1621 = vor.u32 %v1620, %v1616
        %v1622 = vrot.slane %v1621, 4
        %v1624 = vshll.u32 %v1424, 16
        %v1626 = vrot.slane %v1624, 5
        %v1627 = vsel %vm1435, %v1622, %v1626
        %v1629 = vshrl.u32 %v1401, 16
        %v1631 = vrot.slane %v1629, 4
        %v1632 = vshll.u32 %v1401, 16
        %v1634 = vrot.slane %v1632, 5
        %v1635 = vor.u32 %v1631, %v1634
        %v1636 = vrot.slane %v1635, 4
        %v1638 = vshll.u32 %v1402, 16
        %v1640 = vrot.slane %v1638, 5
        %v1641 = vsel %vm1435, %v1636, %v1640
        %v1642 = vshrl.u32 %v1402, 16
        %v1644 = vrot.slane %v1642, 4
        %v1645 = vor.u32 %v1644, %v1640
        %v1646 = vrot.slane %v1645, 4
        %v1648 = vshll.u32 %v1425, 16
        %v1650 = vrot.slane %v1648, 5
        %v1651 = vsel %vm1435, %v1646, %v1650
        %v1653 = vshrl.u32 %v1403, 16
        %v1655 = vrot.slane %v1653, 4
        %v1656 = vshll.u32 %v1403, 16
        %v1658 = vrot.slane %v1656, 5
        %v1659 = vor.u32 %v1655, %v1658
        %v1660 = vrot.slane %v1659, 4
        %v1662 = vshll.u32 %v1404, 16
        %v1664 = vrot.slane %v1662, 5
        %v1665 = vsel %vm1435, %v1660, %v1664
        %v1666 = vshrl.u32 %v1404, 16
        %v1668 = vrot.slane %v1666, 4
        %v1669 = vor.u32 %v1668, %v1664
        %v1670 = vrot.slane %v1669, 4
        %v1672 = vshll.u32 %v1426, 16
        %v1674 = vrot.slane %v1672, 5
        %v1675 = vsel %vm1435, %v1670, %v1674
        %v1677 = vshrl.u32 %v1405, 16
        %v1679 = vrot.slane %v1677, 4
        %v1680 = vshll.u32 %v1405, 16
        %v1682 = vrot.slane %v1680, 5
        %v1683 = vor.u32 %v1679, %v1682
        %v1684 = vrot.slane %v1683, 4
        %v1686 = vshll.u32 %v1406, 16
        %v1688 = vrot.slane %v1686, 5
        %v1689 = vsel %vm1435, %v1684, %v1688
        %v1690 = vshrl.u32 %v1406, 16
        %v1692 = vrot.slane %v1690, 4
        %v1693 = vor.u32 %v1692, %v1688
        %v1694 = vrot.slane %v1693, 4
        %v1696 = vshll.u32 %v1427, 16
        %v1698 = vrot.slane %v1696, 5
        %v1699 = vsel %vm1435, %v1694, %v1698
        %v1701 = vshrl.u32 %v1407, 16
        %v1703 = vrot.slane %v1701, 4
        %v1704 = vshll.u32 %v1407, 16
        %v1706 = vrot.slane %v1704, 5
        %v1707 = vor.u32 %v1703, %v1706
        %v1708 = vrot.slane %v1707, 4
        %v1710 = vshll.u32 %v1408, 16
        %v1712 = vrot.slane %v1710, 5
        %v1713 = vsel %vm1435, %v1708, %v1712
        %v1714 = vshrl.u32 %v1408, 16
        %v1716 = vrot.slane %v1714, 4
        %v1717 = vor.u32 %v1716, %v1712
        %v1718 = vrot.slane %v1717, 4
        %v1720 = vshll.u32 %v1428, 16
        %v1722 = vrot.slane %v1720, 5
        %v1723 = vsel %vm1435, %v1718, %v1722
        %v1725 = vshrl.u32 %v1409, 16
        %v1727 = vrot.slane %v1725, 4
        %v1728 = vshll.u32 %v1409, 16
        %v1730 = vrot.slane %v1728, 5
        %v1731 = vor.u32 %v1727, %v1730
        %v1732 = vrot.slane %v1731, 4
        %v1734 = vshll.u32 %v1410, 16
        %v1736 = vrot.slane %v1734, 5
        %v1737 = vsel %vm1435, %v1732, %v1736
        %v1738 = vshrl.u32 %v1410, 16
        %v1740 = vrot.slane %v1738, 4
        %v1741 = vor.u32 %v1740, %v1736
        %v1742 = vrot.slane %v1741, 4
        %v1744 = vshll.u32 %v1429, 16
        %v1746 = vrot.slane %v1744, 5
        %v1747 = vsel %vm1435, %v1742, %v1746
        %v1749 = vshrl.u32 %v1411, 16
        %v1751 = vrot.slane %v1749, 4
        %v1752 = vshll.u32 %v1411, 16
        %v1754 = vrot.slane %v1752, 5
        %v1755 = vor.u32 %v1751, %v1754
        %v1756 = vrot.slane %v1755, 4
        %v1758 = vshll.u32 %v1412, 16
        %v1760 = vrot.slane %v1758, 5
        %v1761 = vsel %vm1435, %v1756, %v1760
        %v1762 = vshrl.u32 %v1412, 16
        %v1764 = vrot.slane %v1762, 4
        %v1765 = vor.u32 %v1764, %v1760
        %v1766 = vrot.slane %v1765, 4
        %v1768 = vshll.u32 %v1430, 16
        %v1770 = vrot.slane %v1768, 5
        %v1771 = vsel %vm1435, %v1766, %v1770
        %v1773 = vshrl.u32 %v1413, 16
        %v1775 = vrot.slane %v1773, 4
        %v1776 = vshll.u32 %v1413, 16
        %v1778 = vrot.slane %v1776, 5
        %v1779 = vor.u32 %v1775, %v1778
        %v1780 = vrot.slane %v1779, 4
        %v1782 = vshll.u32 %v1414, 16
        %v1784 = vrot.slane %v1782, 5
        %v1785 = vsel %vm1435, %v1780, %v1784
        %v1786 = vshrl.u32 %v1414, 16
        %v1788 = vrot.slane %v1786, 4
        %v1789 = vor.u32 %v1788, %v1784
        %v1790 = vrot.slane %v1789, 4
        %v1792 = vshll.u32 %v1431, 16
        %v1794 = vrot.slane %v1792, 5
        %v1795 = vsel %vm1435, %v1790, %v1794
        %v1797 = vshrl.u32 %v1415, 16
        %v1799 = vrot.slane %v1797, 4
        %v1800 = vshll.u32 %v1415, 16
        %v1802 = vrot.slane %v1800, 5
        %v1803 = vor.u32 %v1799, %v1802
        %v1804 = vrot.slane %v1803, 4
        %v1806 = vshll.u32 %v1416, 16
        %v1808 = vrot.slane %v1806, 5
        %v1809 = vsel %vm1435, %v1804, %v1808
        %v1810 = vshrl.u32 %v1416, 16
        %v1812 = vrot.slane %v1810, 4
        %v1813 = vor.u32 %v1812, %v1808
        %v1814 = vrot.slane %v1813, 4
        %v1816 = vshll.u32 %v1432, 16
        %v1818 = vrot.slane %v1816, 5
        %v1819 = vsel %vm1435, %v1814, %v1818
        %v1820 = vld [vmem:[#allocation2] sm:$0xe]
        %v1821 = vld [vmem:[#allocation2 + $0xc] sm:$0xe]
        %v1822 = vld [vmem:[#allocation2 + $0x18] sm:$0xe]
        %v1823 = vld [vmem:[#allocation2 + $0x24] sm:$0xe]
        %v1824 = vld [vmem:[#allocation2 + $0x30] sm:$0xe]
        %v1825 = vld [vmem:[#allocation2 + $0x3c] sm:$0xe]
        %v1826 = vld [vmem:[#allocation2 + $0x48] sm:$0xe]
        %v1827 = vld [vmem:[#allocation2 + $0x54] sm:$0xe]
        %v1828 = vld [vmem:[#allocation2 + $0x60] sm:$0xe]
        %v1829 = vld [vmem:[#allocation2 + $0x6c] sm:$0xe]
        %v1830 = vld [vmem:[#allocation2 + $0x78] sm:$0xe]
        %v1831 = vld [vmem:[#allocation2 + $0x84] sm:$0xe]
        %v1832 = vld [vmem:[#allocation2 + $0x90] sm:$0xe]
        %v1833 = vld [vmem:[#allocation2 + $0x9c] sm:$0xe]
        %v1834 = vld [vmem:[#allocation2 + $0xa8] sm:$0xe]
        %v1835 = vld [vmem:[#allocation2 + $0xb4] sm:$0xe]
        %vm1884 = vcmask 1042432
        %vm1885 = vcmask 1046532
        %vm1886 = vmor %vm1884, %vm1885
        %v1887 = vrot.slane %v1820, 5
        %v1888 = vrot.slane %v1887, 4
        %v1889 = vrot.slane %v1386, 5
        %v1890 = vsel %vm1886, %v1888, %v1889
        %v1891 = vrot.slane %v1889, 4
        %v1892 = vrot.slane %v1417, 5
        %v1893 = vsel %vm1886, %v1891, %v1892
        %v1894 = vrot.slane %v1821, 5
        %v1895 = vrot.slane %v1894, 4
        %v1896 = vrot.slane %v1388, 5
        %v1897 = vsel %vm1886, %v1895, %v1896
        %v1898 = vrot.slane %v1896, 4
        %v1899 = vrot.slane %v1418, 5
        %v1900 = vsel %vm1886, %v1898, %v1899
        %v1901 = vrot.slane %v1822, 5
        %v1902 = vrot.slane %v1901, 4
        %v1903 = vrot.slane %v1390, 5
        %v1904 = vsel %vm1886, %v1902, %v1903
        %v1905 = vrot.slane %v1903, 4
        %v1906 = vrot.slane %v1419, 5
        %v1907 = vsel %vm1886, %v1905, %v1906
        %v1908 = vrot.slane %v1823, 5
        %v1909 = vrot.slane %v1908, 4
        %v1910 = vrot.slane %v1392, 5
        %v1911 = vsel %vm1886, %v1909, %v1910
        %v1912 = vrot.slane %v1910, 4
        %v1913 = vrot.slane %v1420, 5
        %v1914 = vsel %vm1886, %v1912, %v1913
        %v1915 = vrot.slane %v1824, 5
        %v1916 = vrot.slane %v1915, 4
        %v1917 = vrot.slane %v1394, 5
        %v1918 = vsel %vm1886, %v1916, %v1917
        %v1919 = vrot.slane %v1917, 4
        %v1920 = vrot.slane %v1421, 5
        %v1921 = vsel %vm1886, %v1919, %v1920
        %v1922 = vrot.slane %v1825, 5
        %v1923 = vrot.slane %v1922, 4
        %v1924 = vrot.slane %v1396, 5
        %v1925 = vsel %vm1886, %v1923, %v1924
        %v1926 = vrot.slane %v1924, 4
        %v1927 = vrot.slane %v1422, 5
        %v1928 = vsel %vm1886, %v1926, %v1927
        %v1929 = vrot.slane %v1826, 5
        %v1930 = vrot.slane %v1929, 4
        %v1931 = vrot.slane %v1398, 5
        %v1932 = vsel %vm1886, %v1930, %v1931
        %v1933 = vrot.slane %v1931, 4
        %v1934 = vrot.slane %v1423, 5
        %v1935 = vsel %vm1886, %v1933, %v1934
        %v1936 = vrot.slane %v1827, 5
        %v1937 = vrot.slane %v1936, 4
        %v1938 = vrot.slane %v1400, 5
        %v1939 = vsel %vm1886, %v1937, %v1938
        %v1940 = vrot.slane %v1938, 4
        %v1941 = vrot.slane %v1424, 5
        %v1942 = vsel %vm1886, %v1940, %v1941
        %v1943 = vrot.slane %v1828, 5
        %v1944 = vrot.slane %v1943, 4
        %v1945 = vrot.slane %v1402, 5
        %v1946 = vsel %vm1886, %v1944, %v1945
        %v1947 = vrot.slane %v1945, 4
        %v1948 = vrot.slane %v1425, 5
        %v1949 = vsel %vm1886, %v1947, %v1948
        %v1950 = vrot.slane %v1829, 5
        %v1951 = vrot.slane %v1950, 4
        %v1952 = vrot.slane %v1404, 5
        %v1953 = vsel %vm1886, %v1951, %v1952
        %v1954 = vrot.slane %v1952, 4
        %v1955 = vrot.slane %v1426, 5
        %v1956 = vsel %vm1886, %v1954, %v1955
        %v1957 = vrot.slane %v1830, 5
        %v1958 = vrot.slane %v1957, 4
        %v1959 = vrot.slane %v1406, 5
        %v1960 = vsel %vm1886, %v1958, %v1959
        %v1961 = vrot.slane %v1959, 4
        %v1962 = vrot.slane %v1427, 5
        %v1963 = vsel %vm1886, %v1961, %v1962
        %v1964 = vrot.slane %v1831, 5
        %v1965 = vrot.slane %v1964, 4
        %v1966 = vrot.slane %v1408, 5
        %v1967 = vsel %vm1886, %v1965, %v1966
        %v1968 = vrot.slane %v1966, 4
        %v1969 = vrot.slane %v1428, 5
        %v1970 = vsel %vm1886, %v1968, %v1969
        %v1971 = vrot.slane %v1832, 5
        %v1972 = vrot.slane %v1971, 4
        %v1973 = vrot.slane %v1410, 5
        %v1974 = vsel %vm1886, %v1972, %v1973
        %v1975 = vrot.slane %v1973, 4
        %v1976 = vrot.slane %v1429, 5
        %v1977 = vsel %vm1886, %v1975, %v1976
        %v1978 = vrot.slane %v1833, 5
        %v1979 = vrot.slane %v1978, 4
        %v1980 = vrot.slane %v1412, 5
        %v1981 = vsel %vm1886, %v1979, %v1980
        %v1982 = vrot.slane %v1980, 4
        %v1983 = vrot.slane %v1430, 5
        %v1984 = vsel %vm1886, %v1982, %v1983
        %v1985 = vrot.slane %v1834, 5
        %v1986 = vrot.slane %v1985, 4
        %v1987 = vrot.slane %v1414, 5
        %v1988 = vsel %vm1886, %v1986, %v1987
        %v1989 = vrot.slane %v1987, 4
        %v1990 = vrot.slane %v1431, 5
        %v1991 = vsel %vm1886, %v1989, %v1990
        %v1992 = vrot.slane %v1835, 5
        %v1993 = vrot.slane %v1992, 4
        %v1994 = vrot.slane %v1416, 5
        %v1995 = vsel %vm1886, %v1993, %v1994
        %v1996 = vrot.slane %v1994, 4
        %v1997 = vrot.slane %v1432, 5
        %v1998 = vsel %vm1886, %v1996, %v1997
        %v1999 = vld [vmem:[%s1267] sm:$0xf]
        %v2000 = vld [vmem:[%s1267 + $0x4] sm:$0xf]
        %v2001 = vld [vmem:[%s1267 + $0xc] sm:$0xf]
        %v2002 = vld [vmem:[%s1267 + $0x10] sm:$0xf]
        %v2003 = vld [vmem:[%s1267 + $0x18] sm:$0xf]
        %v2004 = vld [vmem:[%s1267 + $0x1c] sm:$0xf]
        %v2005 = vld [vmem:[%s1267 + $0x24] sm:$0xf]
        %v2006 = vld [vmem:[%s1267 + $0x28] sm:$0xf]
        %v2007 = vld [vmem:[%s1267 + $0x30] sm:$0xf]
        %v2008 = vld [vmem:[%s1267 + $0x34] sm:$0xf]
        %v2009 = vld [vmem:[%s1267 + $0x3c] sm:$0xf]
        %v2010 = vld [vmem:[%s1267 + $0x40] sm:$0xf]
        %v2011 = vld [vmem:[%s1267 + $0x48] sm:$0xf]
        %v2012 = vld [vmem:[%s1267 + $0x4c] sm:$0xf]
        %v2013 = vld [vmem:[%s1267 + $0x54] sm:$0xf]
        %v2014 = vld [vmem:[%s1267 + $0x58] sm:$0xf]
        %v2015 = vld [vmem:[%s1267 + $0x60] sm:$0xf]
        %v2016 = vld [vmem:[%s1267 + $0x64] sm:$0xf]
        %v2017 = vld [vmem:[%s1267 + $0x6c] sm:$0xf]
        %v2018 = vld [vmem:[%s1267 + $0x70] sm:$0xf]
        %v2019 = vld [vmem:[%s1267 + $0x78] sm:$0xf]
        %v2020 = vld [vmem:[%s1267 + $0x7c] sm:$0xf]
        %v2021 = vld [vmem:[%s1267 + $0x84] sm:$0xf]
        %v2022 = vld [vmem:[%s1267 + $0x88] sm:$0xf]
        %v2023 = vld [vmem:[%s1267 + $0x90] sm:$0xf]
        %v2024 = vld [vmem:[%s1267 + $0x94] sm:$0xf]
        %v2025 = vld [vmem:[%s1267 + $0x9c] sm:$0xf]
        %v2026 = vld [vmem:[%s1267 + $0xa0] sm:$0xf]
        %v2027 = vld [vmem:[%s1267 + $0xa8] sm:$0xf]
        %v2028 = vld [vmem:[%s1267 + $0xac] sm:$0xf]
        %v2029 = vld [vmem:[%s1267 + $0xb4] sm:$0xf]
        %v2030 = vld [vmem:[%s1267 + $0xb8] sm:$0xf]
        %v2031 = vld [vmem:[%s1267 + $0x8] sm:$0x1]
        %v2032 = vld [vmem:[%s1267 + $0x14] sm:$0x1]
        %v2033 = vld [vmem:[%s1267 + $0x20] sm:$0x1]
        %v2034 = vld [vmem:[%s1267 + $0x2c] sm:$0x1]
        %v2035 = vld [vmem:[%s1267 + $0x38] sm:$0x1]
        %v2036 = vld [vmem:[%s1267 + $0x44] sm:$0x1]
        %v2037 = vld [vmem:[%s1267 + $0x50] sm:$0x1]
        %v2038 = vld [vmem:[%s1267 + $0x5c] sm:$0x1]
        %v2039 = vld [vmem:[%s1267 + $0x68] sm:$0x1]
        %v2040 = vld [vmem:[%s1267 + $0x74] sm:$0x1]
        %v2041 = vld [vmem:[%s1267 + $0x80] sm:$0x1]
        %v2042 = vld [vmem:[%s1267 + $0x8c] sm:$0x1]
        %v2043 = vld [vmem:[%s1267 + $0x98] sm:$0x1]
        %v2044 = vld [vmem:[%s1267 + $0xa4] sm:$0x1]
        %v2045 = vld [vmem:[%s1267 + $0xb0] sm:$0x1]
        %v2046 = vld [vmem:[%s1267 + $0xbc] sm:$0x1]
        %v2048 = vshrl.u32 %v1999, 16
        %v2050 = vrot.slane %v2048, 4
        %v2051 = vshll.u32 %v1999, 16
        %v2053 = vrot.slane %v2051, 5
        %v2054 = vor.u32 %v2050, %v2053
        %v2055 = vrot.slane %v2054, 4
        %v2057 = vshll.u32 %v2000, 16
        %v2059 = vrot.slane %v2057, 5
        %v2060 = vsel %vm1435, %v2055, %v2059
        %v2061 = vshrl.u32 %v2000, 16
        %v2063 = vrot.slane %v2061, 4
        %v2064 = vor.u32 %v2063, %v2059
        %v2065 = vrot.slane %v2064, 4
        %v2067 = vshll.u32 %v2031, 16
        %v2069 = vrot.slane %v2067, 5
        %v2070 = vsel %vm1435, %v2065, %v2069
        %v2072 = vshrl.u32 %v2001, 16
        %v2074 = vrot.slane %v2072, 4
        %v2075 = vshll.u32 %v2001, 16
        %v2077 = vrot.slane %v2075, 5
        %v2078 = vor.u32 %v2074, %v2077
        %v2079 = vrot.slane %v2078, 4
        %v2081 = vshll.u32 %v2002, 16
        %v2083 = vrot.slane %v2081, 5
        %v2084 = vsel %vm1435, %v2079, %v2083
        %v2085 = vshrl.u32 %v2002, 16
        %v2087 = vrot.slane %v2085, 4
        %v2088 = vor.u32 %v2087, %v2083
        %v2089 = vrot.slane %v2088, 4
        %v2091 = vshll.u32 %v2032, 16
        %v2093 = vrot.slane %v2091, 5
        %v2094 = vsel %vm1435, %v2089, %v2093
        %v2096 = vshrl.u32 %v2003, 16
        %v2098 = vrot.slane %v2096, 4
        %v2099 = vshll.u32 %v2003, 16
        %v2101 = vrot.slane %v2099, 5
        %v2102 = vor.u32 %v2098, %v2101
        %v2103 = vrot.slane %v2102, 4
        %v2105 = vshll.u32 %v2004, 16
        %v2107 = vrot.slane %v2105, 5
        %v2108 = vsel %vm1435, %v2103, %v2107
        %v2109 = vshrl.u32 %v2004, 16
        %v2111 = vrot.slane %v2109, 4
        %v2112 = vor.u32 %v2111, %v2107
        %v2113 = vrot.slane %v2112, 4
        %v2115 = vshll.u32 %v2033, 16
        %v2117 = vrot.slane %v2115, 5
        %v2118 = vsel %vm1435, %v2113, %v2117
        %v2120 = vshrl.u32 %v2005, 16
        %v2122 = vrot.slane %v2120, 4
        %v2123 = vshll.u32 %v2005, 16
        %v2125 = vrot.slane %v2123, 5
        %v2126 = vor.u32 %v2122, %v2125
        %v2127 = vrot.slane %v2126, 4
        %v2129 = vshll.u32 %v2006, 16
        %v2131 = vrot.slane %v2129, 5
        %v2132 = vsel %vm1435, %v2127, %v2131
        %v2133 = vshrl.u32 %v2006, 16
        %v2135 = vrot.slane %v2133, 4
        %v2136 = vor.u32 %v2135, %v2131
        %v2137 = vrot.slane %v2136, 4
        %v2139 = vshll.u32 %v2034, 16
        %v2141 = vrot.slane %v2139, 5
        %v2142 = vsel %vm1435, %v2137, %v2141
        %v2144 = vshrl.u32 %v2007, 16
        %v2146 = vrot.slane %v2144, 4
        %v2147 = vshll.u32 %v2007, 16
        %v2149 = vrot.slane %v2147, 5
        %v2150 = vor.u32 %v2146, %v2149
        %v2151 = vrot.slane %v2150, 4
        %v2153 = vshll.u32 %v2008, 16
        %v2155 = vrot.slane %v2153, 5
        %v2156 = vsel %vm1435, %v2151, %v2155
        %v2157 = vshrl.u32 %v2008, 16
        %v2159 = vrot.slane %v2157, 4
        %v2160 = vor.u32 %v2159, %v2155
        %v2161 = vrot.slane %v2160, 4
        %v2163 = vshll.u32 %v2035, 16
        %v2165 = vrot.slane %v2163, 5
        %v2166 = vsel %vm1435, %v2161, %v2165
        %v2168 = vshrl.u32 %v2009, 16
        %v2170 = vrot.slane %v2168, 4
        %v2171 = vshll.u32 %v2009, 16
        %v2173 = vrot.slane %v2171, 5
        %v2174 = vor.u32 %v2170, %v2173
        %v2175 = vrot.slane %v2174, 4
        %v2177 = vshll.u32 %v2010, 16
        %v2179 = vrot.slane %v2177, 5
        %v2180 = vsel %vm1435, %v2175, %v2179
        %v2181 = vshrl.u32 %v2010, 16
        %v2183 = vrot.slane %v2181, 4
        %v2184 = vor.u32 %v2183, %v2179
        %v2185 = vrot.slane %v2184, 4
        %v2187 = vshll.u32 %v2036, 16
        %v2189 = vrot.slane %v2187, 5
        %v2190 = vsel %vm1435, %v2185, %v2189
        %v2192 = vshrl.u32 %v2011, 16
        %v2194 = vrot.slane %v2192, 4
        %v2195 = vshll.u32 %v2011, 16
        %v2197 = vrot.slane %v2195, 5
        %v2198 = vor.u32 %v2194, %v2197
        %v2199 = vrot.slane %v2198, 4
        %v2201 = vshll.u32 %v2012, 16
        %v2203 = vrot.slane %v2201, 5
        %v2204 = vsel %vm1435, %v2199, %v2203
        %v2205 = vshrl.u32 %v2012, 16
        %v2207 = vrot.slane %v2205, 4
        %v2208 = vor.u32 %v2207, %v2203
        %v2209 = vrot.slane %v2208, 4
        %v2211 = vshll.u32 %v2037, 16
        %v2213 = vrot.slane %v2211, 5
        %v2214 = vsel %vm1435, %v2209, %v2213
        %v2216 = vshrl.u32 %v2013, 16
        %v2218 = vrot.slane %v2216, 4
        %v2219 = vshll.u32 %v2013, 16
        %v2221 = vrot.slane %v2219, 5
        %v2222 = vor.u32 %v2218, %v2221
        %v2223 = vrot.slane %v2222, 4
        %v2225 = vshll.u32 %v2014, 16
        %v2227 = vrot.slane %v2225, 5
        %v2228 = vsel %vm1435, %v2223, %v2227
        %v2229 = vshrl.u32 %v2014, 16
        %v2231 = vrot.slane %v2229, 4
        %v2232 = vor.u32 %v2231, %v2227
        %v2233 = vrot.slane %v2232, 4
        %v2235 = vshll.u32 %v2038, 16
        %v2237 = vrot.slane %v2235, 5
        %v2238 = vsel %vm1435, %v2233, %v2237
        %v2240 = vshrl.u32 %v2015, 16
        %v2242 = vrot.slane %v2240, 4
        %v2243 = vshll.u32 %v2015, 16
        %v2245 = vrot.slane %v2243, 5
        %v2246 = vor.u32 %v2242, %v2245
        %v2247 = vrot.slane %v2246, 4
        %v2249 = vshll.u32 %v2016, 16
        %v2251 = vrot.slane %v2249, 5
        %v2252 = vsel %vm1435, %v2247, %v2251
        %v2253 = vshrl.u32 %v2016, 16
        %v2255 = vrot.slane %v2253, 4
        %v2256 = vor.u32 %v2255, %v2251
        %v2257 = vrot.slane %v2256, 4
        %v2259 = vshll.u32 %v2039, 16
        %v2261 = vrot.slane %v2259, 5
        %v2262 = vsel %vm1435, %v2257, %v2261
        %v2264 = vshrl.u32 %v2017, 16
        %v2266 = vrot.slane %v2264, 4
        %v2267 = vshll.u32 %v2017, 16
        %v2269 = vrot.slane %v2267, 5
        %v2270 = vor.u32 %v2266, %v2269
        %v2271 = vrot.slane %v2270, 4
        %v2273 = vshll.u32 %v2018, 16
        %v2275 = vrot.slane %v2273, 5
        %v2276 = vsel %vm1435, %v2271, %v2275
        %v2277 = vshrl.u32 %v2018, 16
        %v2279 = vrot.slane %v2277, 4
        %v2280 = vor.u32 %v2279, %v2275
        %v2281 = vrot.slane %v2280, 4
        %v2283 = vshll.u32 %v2040, 16
        %v2285 = vrot.slane %v2283, 5
        %v2286 = vsel %vm1435, %v2281, %v2285
        %v2288 = vshrl.u32 %v2019, 16
        %v2290 = vrot.slane %v2288, 4
        %v2291 = vshll.u32 %v2019, 16
        %v2293 = vrot.slane %v2291, 5
        %v2294 = vor.u32 %v2290, %v2293
        %v2295 = vrot.slane %v2294, 4
        %v2297 = vshll.u32 %v2020, 16
        %v2299 = vrot.slane %v2297, 5
        %v2300 = vsel %vm1435, %v2295, %v2299
        %v2301 = vshrl.u32 %v2020, 16
        %v2303 = vrot.slane %v2301, 4
        %v2304 = vor.u32 %v2303, %v2299
        %v2305 = vrot.slane %v2304, 4
        %v2307 = vshll.u32 %v2041, 16
        %v2309 = vrot.slane %v2307, 5
        %v2310 = vsel %vm1435, %v2305, %v2309
        %v2312 = vshrl.u32 %v2021, 16
        %v2314 = vrot.slane %v2312, 4
        %v2315 = vshll.u32 %v2021, 16
        %v2317 = vrot.slane %v2315, 5
        %v2318 = vor.u32 %v2314, %v2317
        %v2319 = vrot.slane %v2318, 4
        %v2321 = vshll.u32 %v2022, 16
        %v2323 = vrot.slane %v2321, 5
        %v2324 = vsel %vm1435, %v2319, %v2323
        %v2325 = vshrl.u32 %v2022, 16
        %v2327 = vrot.slane %v2325, 4
        %v2328 = vor.u32 %v2327, %v2323
        %v2329 = vrot.slane %v2328, 4
        %v2331 = vshll.u32 %v2042, 16
        %v2333 = vrot.slane %v2331, 5
        %v2334 = vsel %vm1435, %v2329, %v2333
        %v2336 = vshrl.u32 %v2023, 16
        %v2338 = vrot.slane %v2336, 4
        %v2339 = vshll.u32 %v2023, 16
        %v2341 = vrot.slane %v2339, 5
        %v2342 = vor.u32 %v2338, %v2341
        %v2343 = vrot.slane %v2342, 4
        %v2345 = vshll.u32 %v2024, 16
        %v2347 = vrot.slane %v2345, 5
        %v2348 = vsel %vm1435, %v2343, %v2347
        %v2349 = vshrl.u32 %v2024, 16
        %v2351 = vrot.slane %v2349, 4
        %v2352 = vor.u32 %v2351, %v2347
        %v2353 = vrot.slane %v2352, 4
        %v2355 = vshll.u32 %v2043, 16
        %v2357 = vrot.slane %v2355, 5
        %v2358 = vsel %vm1435, %v2353, %v2357
        %v2360 = vshrl.u32 %v2025, 16
        %v2362 = vrot.slane %v2360, 4
        %v2363 = vshll.u32 %v2025, 16
        %v2365 = vrot.slane %v2363, 5
        %v2366 = vor.u32 %v2362, %v2365
        %v2367 = vrot.slane %v2366, 4
        %v2369 = vshll.u32 %v2026, 16
        %v2371 = vrot.slane %v2369, 5
        %v2372 = vsel %vm1435, %v2367, %v2371
        %v2373 = vshrl.u32 %v2026, 16
        %v2375 = vrot.slane %v2373, 4
        %v2376 = vor.u32 %v2375, %v2371
        %v2377 = vrot.slane %v2376, 4
        %v2379 = vshll.u32 %v2044, 16
        %v2381 = vrot.slane %v2379, 5
        %v2382 = vsel %vm1435, %v2377, %v2381
        %v2384 = vshrl.u32 %v2027, 16
        %v2386 = vrot.slane %v2384, 4
        %v2387 = vshll.u32 %v2027, 16
        %v2389 = vrot.slane %v2387, 5
        %v2390 = vor.u32 %v2386, %v2389
        %v2391 = vrot.slane %v2390, 4
        %v2393 = vshll.u32 %v2028, 16
        %v2395 = vrot.slane %v2393, 5
        %v2396 = vsel %vm1435, %v2391, %v2395
        %v2397 = vshrl.u32 %v2028, 16
        %v2399 = vrot.slane %v2397, 4
        %v2400 = vor.u32 %v2399, %v2395
        %v2401 = vrot.slane %v2400, 4
        %v2403 = vshll.u32 %v2045, 16
        %v2405 = vrot.slane %v2403, 5
        %v2406 = vsel %vm1435, %v2401, %v2405
        %v2408 = vshrl.u32 %v2029, 16
        %v2410 = vrot.slane %v2408, 4
        %v2411 = vshll.u32 %v2029, 16
        %v2413 = vrot.slane %v2411, 5
        %v2414 = vor.u32 %v2410, %v2413
        %v2415 = vrot.slane %v2414, 4
        %v2417 = vshll.u32 %v2030, 16
        %v2419 = vrot.slane %v2417, 5
        %v2420 = vsel %vm1435, %v2415, %v2419
        %v2421 = vshrl.u32 %v2030, 16
        %v2423 = vrot.slane %v2421, 4
        %v2424 = vor.u32 %v2423, %v2419
        %v2425 = vrot.slane %v2424, 4
        %v2427 = vshll.u32 %v2046, 16
        %v2429 = vrot.slane %v2427, 5
        %v2430 = vsel %vm1435, %v2425, %v2429
        %v2431 = vld [vmem:[%s1267] sm:$0xe]
        %v2432 = vld [vmem:[%s1267 + $0xc] sm:$0xe]
        %v2433 = vld [vmem:[%s1267 + $0x18] sm:$0xe]
        %v2434 = vld [vmem:[%s1267 + $0x24] sm:$0xe]
        %v2435 = vld [vmem:[%s1267 + $0x30] sm:$0xe]
        %v2436 = vld [vmem:[%s1267 + $0x3c] sm:$0xe]
        %v2437 = vld [vmem:[%s1267 + $0x48] sm:$0xe]
        %v2438 = vld [vmem:[%s1267 + $0x54] sm:$0xe]
        %v2439 = vld [vmem:[%s1267 + $0x60] sm:$0xe]
        %v2440 = vld [vmem:[%s1267 + $0x6c] sm:$0xe]
        %v2441 = vld [vmem:[%s1267 + $0x78] sm:$0xe]
        %v2442 = vld [vmem:[%s1267 + $0x84] sm:$0xe]
        %v2443 = vld [vmem:[%s1267 + $0x90] sm:$0xe]
        %v2444 = vld [vmem:[%s1267 + $0x9c] sm:$0xe]
        %v2445 = vld [vmem:[%s1267 + $0xa8] sm:$0xe]
        %v2446 = vld [vmem:[%s1267 + $0xb4] sm:$0xe]
        %v2495 = vrot.slane %v2431, 5
        %v2496 = vrot.slane %v2495, 4
        %v2497 = vrot.slane %v2000, 5
        %v2498 = vsel %vm1886, %v2496, %v2497
        %v2499 = vrot.slane %v2497, 4
        %v2500 = vrot.slane %v2031, 5
        %v2501 = vsel %vm1886, %v2499, %v2500
        %v2502 = vrot.slane %v2432, 5
        %v2503 = vrot.slane %v2502, 4
        %v2504 = vrot.slane %v2002, 5
        %v2505 = vsel %vm1886, %v2503, %v2504
        %v2506 = vrot.slane %v2504, 4
        %v2507 = vrot.slane %v2032, 5
        %v2508 = vsel %vm1886, %v2506, %v2507
        %v2509 = vrot.slane %v2433, 5
        %v2510 = vrot.slane %v2509, 4
        %v2511 = vrot.slane %v2004, 5
        %v2512 = vsel %vm1886, %v2510, %v2511
        %v2513 = vrot.slane %v2511, 4
        %v2514 = vrot.slane %v2033, 5
        %v2515 = vsel %vm1886, %v2513, %v2514
        %v2516 = vrot.slane %v2434, 5
        %v2517 = vrot.slane %v2516, 4
        %v2518 = vrot.slane %v2006, 5
        %v2519 = vsel %vm1886, %v2517, %v2518
        %v2520 = vrot.slane %v2518, 4
        %v2521 = vrot.slane %v2034, 5
        %v2522 = vsel %vm1886, %v2520, %v2521
        %v2523 = vrot.slane %v2435, 5
        %v2524 = vrot.slane %v2523, 4
        %v2525 = vrot.slane %v2008, 5
        %v2526 = vsel %vm1886, %v2524, %v2525
        %v2527 = vrot.slane %v2525, 4
        %v2528 = vrot.slane %v2035, 5
        %v2529 = vsel %vm1886, %v2527, %v2528
        %v2530 = vrot.slane %v2436, 5
        %v2531 = vrot.slane %v2530, 4
        %v2532 = vrot.slane %v2010, 5
        %v2533 = vsel %vm1886, %v2531, %v2532
        %v2534 = vrot.slane %v2532, 4
        %v2535 = vrot.slane %v2036, 5
        %v2536 = vsel %vm1886, %v2534, %v2535
        %v2537 = vrot.slane %v2437, 5
        %v2538 = vrot.slane %v2537, 4
        %v2539 = vrot.slane %v2012, 5
        %v2540 = vsel %vm1886, %v2538, %v2539
        %v2541 = vrot.slane %v2539, 4
        %v2542 = vrot.slane %v2037, 5
        %v2543 = vsel %vm1886, %v2541, %v2542
        %v2544 = vrot.slane %v2438, 5
        %v2545 = vrot.slane %v2544, 4
        %v2546 = vrot.slane %v2014, 5
        %v2547 = vsel %vm1886, %v2545, %v2546
        %v2548 = vrot.slane %v2546, 4
        %v2549 = vrot.slane %v2038, 5
        %v2550 = vsel %vm1886, %v2548, %v2549
        %v2551 = vrot.slane %v2439, 5
        %v2552 = vrot.slane %v2551, 4
        %v2553 = vrot.slane %v2016, 5
        %v2554 = vsel %vm1886, %v2552, %v2553
        %v2555 = vrot.slane %v2553, 4
        %v2556 = vrot.slane %v2039, 5
        %v2557 = vsel %vm1886, %v2555, %v2556
        %v2558 = vrot.slane %v2440, 5
        %v2559 = vrot.slane %v2558, 4
        %v2560 = vrot.slane %v2018, 5
        %v2561 = vsel %vm1886, %v2559, %v2560
        %v2562 = vrot.slane %v2560, 4
        %v2563 = vrot.slane %v2040, 5
        %v2564 = vsel %vm1886, %v2562, %v2563
        %v2565 = vrot.slane %v2441, 5
        %v2566 = vrot.slane %v2565, 4
        %v2567 = vrot.slane %v2020, 5
        %v2568 = vsel %vm1886, %v2566, %v2567
        %v2569 = vrot.slane %v2567, 4
        %v2570 = vrot.slane %v2041, 5
        %v2571 = vsel %vm1886, %v2569, %v2570
        %v2572 = vrot.slane %v2442, 5
        %v2573 = vrot.slane %v2572, 4
        %v2574 = vrot.slane %v2022, 5
        %v2575 = vsel %vm1886, %v2573, %v2574
        %v2576 = vrot.slane %v2574, 4
        %v2577 = vrot.slane %v2042, 5
        %v2578 = vsel %vm1886, %v2576, %v2577
        %v2579 = vrot.slane %v2443, 5
        %v2580 = vrot.slane %v2579, 4
        %v2581 = vrot.slane %v2024, 5
        %v2582 = vsel %vm1886, %v2580, %v2581
        %v2583 = vrot.slane %v2581, 4
        %v2584 = vrot.slane %v2043, 5
        %v2585 = vsel %vm1886, %v2583, %v2584
        %v2586 = vrot.slane %v2444, 5
        %v2587 = vrot.slane %v2586, 4
        %v2588 = vrot.slane %v2026, 5
        %v2589 = vsel %vm1886, %v2587, %v2588
        %v2590 = vrot.slane %v2588, 4
        %v2591 = vrot.slane %v2044, 5
        %v2592 = vsel %vm1886, %v2590, %v2591
        %v2593 = vrot.slane %v2445, 5
        %v2594 = vrot.slane %v2593, 4
        %v2595 = vrot.slane %v2028, 5
        %v2596 = vsel %vm1886, %v2594, %v2595
        %v2597 = vrot.slane %v2595, 4
        %v2598 = vrot.slane %v2045, 5
        %v2599 = vsel %vm1886, %v2597, %v2598
        %v2600 = vrot.slane %v2446, 5
        %v2601 = vrot.slane %v2600, 4
        %v2602 = vrot.slane %v2030, 5
        %v2603 = vsel %vm1886, %v2601, %v2602
        %v2604 = vrot.slane %v2602, 4
        %v2605 = vrot.slane %v2046, 5
        %v2606 = vsel %vm1886, %v2604, %v2605
        %s2607 = scalar_lea.vmem [#allocation2], 24
        %v2608 = vld [vmem:[%s2607] sm:$0xf]
        %v2609 = vld [vmem:[%s2607 + $0x4] sm:$0xf]
        %v2610 = vld [vmem:[%s2607 + $0xc] sm:$0xf]
        %v2611 = vld [vmem:[%s2607 + $0x10] sm:$0xf]
        %v2612 = vld [vmem:[%s2607 + $0x18] sm:$0xf]
        %v2613 = vld [vmem:[%s2607 + $0x1c] sm:$0xf]
        %v2614 = vld [vmem:[%s2607 + $0x24] sm:$0xf]
        %v2615 = vld [vmem:[%s2607 + $0x28] sm:$0xf]
        %v2616 = vld [vmem:[%s2607 + $0x30] sm:$0xf]
        %v2617 = vld [vmem:[%s2607 + $0x34] sm:$0xf]
        %v2618 = vld [vmem:[%s2607 + $0x3c] sm:$0xf]
        %v2619 = vld [vmem:[%s2607 + $0x40] sm:$0xf]
        %v2620 = vld [vmem:[%s2607 + $0x48] sm:$0xf]
        %v2621 = vld [vmem:[%s2607 + $0x4c] sm:$0xf]
        %v2622 = vld [vmem:[%s2607 + $0x54] sm:$0xf]
        %v2623 = vld [vmem:[%s2607 + $0x58] sm:$0xf]
        %v2624 = vld [vmem:[%s2607 + $0x60] sm:$0xf]
        %v2625 = vld [vmem:[%s2607 + $0x64] sm:$0xf]
        %v2626 = vld [vmem:[%s2607 + $0x6c] sm:$0xf]
        %v2627 = vld [vmem:[%s2607 + $0x70] sm:$0xf]
        %v2628 = vld [vmem:[%s2607 + $0x78] sm:$0xf]
        %v2629 = vld [vmem:[%s2607 + $0x7c] sm:$0xf]
        %v2630 = vld [vmem:[%s2607 + $0x84] sm:$0xf]
        %v2631 = vld [vmem:[%s2607 + $0x88] sm:$0xf]
        %v2632 = vld [vmem:[%s2607 + $0x90] sm:$0xf]
        %v2633 = vld [vmem:[%s2607 + $0x94] sm:$0xf]
        %v2634 = vld [vmem:[%s2607 + $0x9c] sm:$0xf]
        %v2635 = vld [vmem:[%s2607 + $0xa0] sm:$0xf]
        %v2636 = vld [vmem:[%s2607 + $0xa8] sm:$0xf]
        %v2637 = vld [vmem:[%s2607 + $0xac] sm:$0xf]
        %v2638 = vld [vmem:[%s2607 + $0xb4] sm:$0xf]
        %v2639 = vld [vmem:[%s2607 + $0xb8] sm:$0xf]
        %v2640 = vld [vmem:[%s2607 + $0x8] sm:$0x1]
        %v2641 = vld [vmem:[%s2607 + $0x14] sm:$0x1]
        %v2642 = vld [vmem:[%s2607 + $0x20] sm:$0x1]
        %v2643 = vld [vmem:[%s2607 + $0x2c] sm:$0x1]
        %v2644 = vld [vmem:[%s2607 + $0x38] sm:$0x1]
        %v2645 = vld [vmem:[%s2607 + $0x44] sm:$0x1]
        %v2646 = vld [vmem:[%s2607 + $0x50] sm:$0x1]
        %v2647 = vld [vmem:[%s2607 + $0x5c] sm:$0x1]
        %v2648 = vld [vmem:[%s2607 + $0x68] sm:$0x1]
        %v2649 = vld [vmem:[%s2607 + $0x74] sm:$0x1]
        %v2650 = vld [vmem:[%s2607 + $0x80] sm:$0x1]
        %v2651 = vld [vmem:[%s2607 + $0x8c] sm:$0x1]
        %v2652 = vld [vmem:[%s2607 + $0x98] sm:$0x1]
        %v2653 = vld [vmem:[%s2607 + $0xa4] sm:$0x1]
        %v2654 = vld [vmem:[%s2607 + $0xb0] sm:$0x1]
        %v2655 = vld [vmem:[%s2607 + $0xbc] sm:$0x1]
        %v2657 = vshrl.u32 %v2608, 16
        %v2659 = vrot.slane %v2657, 4
        %v2660 = vshll.u32 %v2608, 16
        %v2662 = vrot.slane %v2660, 5
        %v2663 = vor.u32 %v2659, %v2662
        %v2664 = vrot.slane %v2663, 4
        %v2666 = vshll.u32 %v2609, 16
        %v2668 = vrot.slane %v2666, 5
        %v2669 = vsel %vm1435, %v2664, %v2668
        %v2670 = vshrl.u32 %v2609, 16
        %v2672 = vrot.slane %v2670, 4
        %v2673 = vor.u32 %v2672, %v2668
        %v2674 = vrot.slane %v2673, 4
        %v2676 = vshll.u32 %v2640, 16
        %v2678 = vrot.slane %v2676, 5
        %v2679 = vsel %vm1435, %v2674, %v2678
        %v2681 = vshrl.u32 %v2610, 16
        %v2683 = vrot.slane %v2681, 4
        %v2684 = vshll.u32 %v2610, 16
        %v2686 = vrot.slane %v2684, 5
        %v2687 = vor.u32 %v2683, %v2686
        %v2688 = vrot.slane %v2687, 4
        %v2690 = vshll.u32 %v2611, 16
        %v2692 = vrot.slane %v2690, 5
        %v2693 = vsel %vm1435, %v2688, %v2692
        %v2694 = vshrl.u32 %v2611, 16
        %v2696 = vrot.slane %v2694, 4
        %v2697 = vor.u32 %v2696, %v2692
        %v2698 = vrot.slane %v2697, 4
        %v2700 = vshll.u32 %v2641, 16
        %v2702 = vrot.slane %v2700, 5
        %v2703 = vsel %vm1435, %v2698, %v2702
        %v2705 = vshrl.u32 %v2612, 16
        %v2707 = vrot.slane %v2705, 4
        %v2708 = vshll.u32 %v2612, 16
        %v2710 = vrot.slane %v2708, 5
        %v2711 = vor.u32 %v2707, %v2710
        %v2712 = vrot.slane %v2711, 4
        %v2714 = vshll.u32 %v2613, 16
        %v2716 = vrot.slane %v2714, 5
        %v2717 = vsel %vm1435, %v2712, %v2716
        %v2718 = vshrl.u32 %v2613, 16
        %v2720 = vrot.slane %v2718, 4
        %v2721 = vor.u32 %v2720, %v2716
        %v2722 = vrot.slane %v2721, 4
        %v2724 = vshll.u32 %v2642, 16
        %v2726 = vrot.slane %v2724, 5
        %v2727 = vsel %vm1435, %v2722, %v2726
        %v2729 = vshrl.u32 %v2614, 16
        %v2731 = vrot.slane %v2729, 4
        %v2732 = vshll.u32 %v2614, 16
        %v2734 = vrot.slane %v2732, 5
        %v2735 = vor.u32 %v2731, %v2734
        %v2736 = vrot.slane %v2735, 4
        %v2738 = vshll.u32 %v2615, 16
        %v2740 = vrot.slane %v2738, 5
        %v2741 = vsel %vm1435, %v2736, %v2740
        %v2742 = vshrl.u32 %v2615, 16
        %v2744 = vrot.slane %v2742, 4
        %v2745 = vor.u32 %v2744, %v2740
        %v2746 = vrot.slane %v2745, 4
        %v2748 = vshll.u32 %v2643, 16
        %v2750 = vrot.slane %v2748, 5
        %v2751 = vsel %vm1435, %v2746, %v2750
        %v2753 = vshrl.u32 %v2616, 16
        %v2755 = vrot.slane %v2753, 4
        %v2756 = vshll.u32 %v2616, 16
        %v2758 = vrot.slane %v2756, 5
        %v2759 = vor.u32 %v2755, %v2758
        %v2760 = vrot.slane %v2759, 4
        %v2762 = vshll.u32 %v2617, 16
        %v2764 = vrot.slane %v2762, 5
        %v2765 = vsel %vm1435, %v2760, %v2764
        %v2766 = vshrl.u32 %v2617, 16
        %v2768 = vrot.slane %v2766, 4
        %v2769 = vor.u32 %v2768, %v2764
        %v2770 = vrot.slane %v2769, 4
        %v2772 = vshll.u32 %v2644, 16
        %v2774 = vrot.slane %v2772, 5
        %v2775 = vsel %vm1435, %v2770, %v2774
        %v2777 = vshrl.u32 %v2618, 16
        %v2779 = vrot.slane %v2777, 4
        %v2780 = vshll.u32 %v2618, 16
        %v2782 = vrot.slane %v2780, 5
        %v2783 = vor.u32 %v2779, %v2782
        %v2784 = vrot.slane %v2783, 4
        %v2786 = vshll.u32 %v2619, 16
        %v2788 = vrot.slane %v2786, 5
        %v2789 = vsel %vm1435, %v2784, %v2788
        %v2790 = vshrl.u32 %v2619, 16
        %v2792 = vrot.slane %v2790, 4
        %v2793 = vor.u32 %v2792, %v2788
        %v2794 = vrot.slane %v2793, 4
        %v2796 = vshll.u32 %v2645, 16
        %v2798 = vrot.slane %v2796, 5
        %v2799 = vsel %vm1435, %v2794, %v2798
        %v2801 = vshrl.u32 %v2620, 16
        %v2803 = vrot.slane %v2801, 4
        %v2804 = vshll.u32 %v2620, 16
        %v2806 = vrot.slane %v2804, 5
        %v2807 = vor.u32 %v2803, %v2806
        %v2808 = vrot.slane %v2807, 4
        %v2810 = vshll.u32 %v2621, 16
        %v2812 = vrot.slane %v2810, 5
        %v2813 = vsel %vm1435, %v2808, %v2812
        %v2814 = vshrl.u32 %v2621, 16
        %v2816 = vrot.slane %v2814, 4
        %v2817 = vor.u32 %v2816, %v2812
        %v2818 = vrot.slane %v2817, 4
        %v2820 = vshll.u32 %v2646, 16
        %v2822 = vrot.slane %v2820, 5
        %v2823 = vsel %vm1435, %v2818, %v2822
        %v2825 = vshrl.u32 %v2622, 16
        %v2827 = vrot.slane %v2825, 4
        %v2828 = vshll.u32 %v2622, 16
        %v2830 = vrot.slane %v2828, 5
        %v2831 = vor.u32 %v2827, %v2830
        %v2832 = vrot.slane %v2831, 4
        %v2834 = vshll.u32 %v2623, 16
        %v2836 = vrot.slane %v2834, 5
        %v2837 = vsel %vm1435, %v2832, %v2836
        %v2838 = vshrl.u32 %v2623, 16
        %v2840 = vrot.slane %v2838, 4
        %v2841 = vor.u32 %v2840, %v2836
        %v2842 = vrot.slane %v2841, 4
        %v2844 = vshll.u32 %v2647, 16
        %v2846 = vrot.slane %v2844, 5
        %v2847 = vsel %vm1435, %v2842, %v2846
        %v2849 = vshrl.u32 %v2624, 16
        %v2851 = vrot.slane %v2849, 4
        %v2852 = vshll.u32 %v2624, 16
        %v2854 = vrot.slane %v2852, 5
        %v2855 = vor.u32 %v2851, %v2854
        %v2856 = vrot.slane %v2855, 4
        %v2858 = vshll.u32 %v2625, 16
        %v2860 = vrot.slane %v2858, 5
        %v2861 = vsel %vm1435, %v2856, %v2860
        %v2862 = vshrl.u32 %v2625, 16
        %v2864 = vrot.slane %v2862, 4
        %v2865 = vor.u32 %v2864, %v2860
        %v2866 = vrot.slane %v2865, 4
        %v2868 = vshll.u32 %v2648, 16
        %v2870 = vrot.slane %v2868, 5
        %v2871 = vsel %vm1435, %v2866, %v2870
        %v2873 = vshrl.u32 %v2626, 16
        %v2875 = vrot.slane %v2873, 4
        %v2876 = vshll.u32 %v2626, 16
        %v2878 = vrot.slane %v2876, 5
        %v2879 = vor.u32 %v2875, %v2878
        %v2880 = vrot.slane %v2879, 4
        %v2882 = vshll.u32 %v2627, 16
        %v2884 = vrot.slane %v2882, 5
        %v2885 = vsel %vm1435, %v2880, %v2884
        %v2886 = vshrl.u32 %v2627, 16
        %v2888 = vrot.slane %v2886, 4
        %v2889 = vor.u32 %v2888, %v2884
        %v2890 = vrot.slane %v2889, 4
        %v2892 = vshll.u32 %v2649, 16
        %v2894 = vrot.slane %v2892, 5
        %v2895 = vsel %vm1435, %v2890, %v2894
        %v2897 = vshrl.u32 %v2628, 16
        %v2899 = vrot.slane %v2897, 4
        %v2900 = vshll.u32 %v2628, 16
        %v2902 = vrot.slane %v2900, 5
        %v2903 = vor.u32 %v2899, %v2902
        %v2904 = vrot.slane %v2903, 4
        %v2906 = vshll.u32 %v2629, 16
        %v2908 = vrot.slane %v2906, 5
        %v2909 = vsel %vm1435, %v2904, %v2908
        %v2910 = vshrl.u32 %v2629, 16
        %v2912 = vrot.slane %v2910, 4
        %v2913 = vor.u32 %v2912, %v2908
        %v2914 = vrot.slane %v2913, 4
        %v2916 = vshll.u32 %v2650, 16
        %v2918 = vrot.slane %v2916, 5
        %v2919 = vsel %vm1435, %v2914, %v2918
        %v2921 = vshrl.u32 %v2630, 16
        %v2923 = vrot.slane %v2921, 4
        %v2924 = vshll.u32 %v2630, 16
        %v2926 = vrot.slane %v2924, 5
        %v2927 = vor.u32 %v2923, %v2926
        %v2928 = vrot.slane %v2927, 4
        %v2930 = vshll.u32 %v2631, 16
        %v2932 = vrot.slane %v2930, 5
        %v2933 = vsel %vm1435, %v2928, %v2932
        %v2934 = vshrl.u32 %v2631, 16
        %v2936 = vrot.slane %v2934, 4
        %v2937 = vor.u32 %v2936, %v2932
        %v2938 = vrot.slane %v2937, 4
        %v2940 = vshll.u32 %v2651, 16
        %v2942 = vrot.slane %v2940, 5
        %v2943 = vsel %vm1435, %v2938, %v2942
        %v2945 = vshrl.u32 %v2632, 16
        %v2947 = vrot.slane %v2945, 4
        %v2948 = vshll.u32 %v2632, 16
        %v2950 = vrot.slane %v2948, 5
        %v2951 = vor.u32 %v2947, %v2950
        %v2952 = vrot.slane %v2951, 4
        %v2954 = vshll.u32 %v2633, 16
        %v2956 = vrot.slane %v2954, 5
        %v2957 = vsel %vm1435, %v2952, %v2956
        %v2958 = vshrl.u32 %v2633, 16
        %v2960 = vrot.slane %v2958, 4
        %v2961 = vor.u32 %v2960, %v2956
        %v2962 = vrot.slane %v2961, 4
        %v2964 = vshll.u32 %v2652, 16
        %v2966 = vrot.slane %v2964, 5
        %v2967 = vsel %vm1435, %v2962, %v2966
        %v2969 = vshrl.u32 %v2634, 16
        %v2971 = vrot.slane %v2969, 4
        %v2972 = vshll.u32 %v2634, 16
        %v2974 = vrot.slane %v2972, 5
        %v2975 = vor.u32 %v2971, %v2974
        %v2976 = vrot.slane %v2975, 4
        %v2978 = vshll.u32 %v2635, 16
        %v2980 = vrot.slane %v2978, 5
        %v2981 = vsel %vm1435, %v2976, %v2980
        %v2982 = vshrl.u32 %v2635, 16
        %v2984 = vrot.slane %v2982, 4
        %v2985 = vor.u32 %v2984, %v2980
        %v2986 = vrot.slane %v2985, 4
        %v2988 = vshll.u32 %v2653, 16
        %v2990 = vrot.slane %v2988, 5
        %v2991 = vsel %vm1435, %v2986, %v2990
        %v2993 = vshrl.u32 %v2636, 16
        %v2995 = vrot.slane %v2993, 4
        %v2996 = vshll.u32 %v2636, 16
        %v2998 = vrot.slane %v2996, 5
        %v2999 = vor.u32 %v2995, %v2998
        %v3000 = vrot.slane %v2999, 4
        %v3002 = vshll.u32 %v2637, 16
        %v3004 = vrot.slane %v3002, 5
        %v3005 = vsel %vm1435, %v3000, %v3004
        %v3006 = vshrl.u32 %v2637, 16
        %v3008 = vrot.slane %v3006, 4
        %v3009 = vor.u32 %v3008, %v3004
        %v3010 = vrot.slane %v3009, 4
        %v3012 = vshll.u32 %v2654, 16
        %v3014 = vrot.slane %v3012, 5
        %v3015 = vsel %vm1435, %v3010, %v3014
        %v3017 = vshrl.u32 %v2638, 16
        %v3019 = vrot.slane %v3017, 4
        %v3020 = vshll.u32 %v2638, 16
        %v3022 = vrot.slane %v3020, 5
        %v3023 = vor.u32 %v3019, %v3022
        %v3024 = vrot.slane %v3023, 4
        %v3026 = vshll.u32 %v2639, 16
        %v3028 = vrot.slane %v3026, 5
        %v3029 = vsel %vm1435, %v3024, %v3028
        %v3030 = vshrl.u32 %v2639, 16
        %v3032 = vrot.slane %v3030, 4
        %v3033 = vor.u32 %v3032, %v3028
        %v3034 = vrot.slane %v3033, 4
        %v3036 = vshll.u32 %v2655, 16
        %v3038 = vrot.slane %v3036, 5
        %v3039 = vsel %vm1435, %v3034, %v3038
        %v3040 = vld [vmem:[%s2607] sm:$0xe]
        %v3041 = vld [vmem:[%s2607 + $0xc] sm:$0xe]
        %v3042 = vld [vmem:[%s2607 + $0x18] sm:$0xe]
        %v3043 = vld [vmem:[%s2607 + $0x24] sm:$0xe]
        %v3044 = vld [vmem:[%s2607 + $0x30] sm:$0xe]
        %v3045 = vld [vmem:[%s2607 + $0x3c] sm:$0xe]
        %v3046 = vld [vmem:[%s2607 + $0x48] sm:$0xe]
        %v3047 = vld [vmem:[%s2607 + $0x54] sm:$0xe]
        %v3048 = vld [vmem:[%s2607 + $0x60] sm:$0xe]
        %v3049 = vld [vmem:[%s2607 + $0x6c] sm:$0xe]
        %v3050 = vld [vmem:[%s2607 + $0x78] sm:$0xe]
        %v3051 = vld [vmem:[%s2607 + $0x84] sm:$0xe]
        %v3052 = vld [vmem:[%s2607 + $0x90] sm:$0xe]
        %v3053 = vld [vmem:[%s2607 + $0x9c] sm:$0xe]
        %v3054 = vld [vmem:[%s2607 + $0xa8] sm:$0xe]
        %v3055 = vld [vmem:[%s2607 + $0xb4] sm:$0xe]
        %v3104 = vrot.slane %v3040, 5
        %v3105 = vrot.slane %v3104, 4
        %v3106 = vrot.slane %v2609, 5
        %v3107 = vsel %vm1886, %v3105, %v3106
        %v3108 = vrot.slane %v3106, 4
        %v3109 = vrot.slane %v2640, 5
        %v3110 = vsel %vm1886, %v3108, %v3109
        %v3111 = vrot.slane %v3041, 5
        %v3112 = vrot.slane %v3111, 4
        %v3113 = vrot.slane %v2611, 5
        %v3114 = vsel %vm1886, %v3112, %v3113
        %v3115 = vrot.slane %v3113, 4
        %v3116 = vrot.slane %v2641, 5
        %v3117 = vsel %vm1886, %v3115, %v3116
        %v3118 = vrot.slane %v3042, 5
        %v3119 = vrot.slane %v3118, 4
        %v3120 = vrot.slane %v2613, 5
        %v3121 = vsel %vm1886, %v3119, %v3120
        %v3122 = vrot.slane %v3120, 4
        %v3123 = vrot.slane %v2642, 5
        %v3124 = vsel %vm1886, %v3122, %v3123
        %v3125 = vrot.slane %v3043, 5
        %v3126 = vrot.slane %v3125, 4
        %v3127 = vrot.slane %v2615, 5
        %v3128 = vsel %vm1886, %v3126, %v3127
        %v3129 = vrot.slane %v3127, 4
        %v3130 = vrot.slane %v2643, 5
        %v3131 = vsel %vm1886, %v3129, %v3130
        %v3132 = vrot.slane %v3044, 5
        %v3133 = vrot.slane %v3132, 4
        %v3134 = vrot.slane %v2617, 5
        %v3135 = vsel %vm1886, %v3133, %v3134
        %v3136 = vrot.slane %v3134, 4
        %v3137 = vrot.slane %v2644, 5
        %v3138 = vsel %vm1886, %v3136, %v3137
        %v3139 = vrot.slane %v3045, 5
        %v3140 = vrot.slane %v3139, 4
        %v3141 = vrot.slane %v2619, 5
        %v3142 = vsel %vm1886, %v3140, %v3141
        %v3143 = vrot.slane %v3141, 4
        %v3144 = vrot.slane %v2645, 5
        %v3145 = vsel %vm1886, %v3143, %v3144
        %v3146 = vrot.slane %v3046, 5
        %v3147 = vrot.slane %v3146, 4
        %v3148 = vrot.slane %v2621, 5
        %v3149 = vsel %vm1886, %v3147, %v3148
        %v3150 = vrot.slane %v3148, 4
        %v3151 = vrot.slane %v2646, 5
        %v3152 = vsel %vm1886, %v3150, %v3151
        %v3153 = vrot.slane %v3047, 5
        %v3154 = vrot.slane %v3153, 4
        %v3155 = vrot.slane %v2623, 5
        %v3156 = vsel %vm1886, %v3154, %v3155
        %v3157 = vrot.slane %v3155, 4
        %v3158 = vrot.slane %v2647, 5
        %v3159 = vsel %vm1886, %v3157, %v3158
        %v3160 = vrot.slane %v3048, 5
        %v3161 = vrot.slane %v3160, 4
        %v3162 = vrot.slane %v2625, 5
        %v3163 = vsel %vm1886, %v3161, %v3162
        %v3164 = vrot.slane %v3162, 4
        %v3165 = vrot.slane %v2648, 5
        %v3166 = vsel %vm1886, %v3164, %v3165
        %v3167 = vrot.slane %v3049, 5
        %v3168 = vrot.slane %v3167, 4
        %v3169 = vrot.slane %v2627, 5
        %v3170 = vsel %vm1886, %v3168, %v3169
        %v3171 = vrot.slane %v3169, 4
        %v3172 = vrot.slane %v2649, 5
        %v3173 = vsel %vm1886, %v3171, %v3172
        %v3174 = vrot.slane %v3050, 5
        %v3175 = vrot.slane %v3174, 4
        %v3176 = vrot.slane %v2629, 5
        %v3177 = vsel %vm1886, %v3175, %v3176
        %v3178 = vrot.slane %v3176, 4
        %v3179 = vrot.slane %v2650, 5
        %v3180 = vsel %vm1886, %v3178, %v3179
        %v3181 = vrot.slane %v3051, 5
        %v3182 = vrot.slane %v3181, 4
        %v3183 = vrot.slane %v2631, 5
        %v3184 = vsel %vm1886, %v3182, %v3183
        %v3185 = vrot.slane %v3183, 4
        %v3186 = vrot.slane %v2651, 5
        %v3187 = vsel %vm1886, %v3185, %v3186
        %v3188 = vrot.slane %v3052, 5
        %v3189 = vrot.slane %v3188, 4
        %v3190 = vrot.slane %v2633, 5
        %v3191 = vsel %vm1886, %v3189, %v3190
        %v3192 = vrot.slane %v3190, 4
        %v3193 = vrot.slane %v2652, 5
        %v3194 = vsel %vm1886, %v3192, %v3193
        %v3195 = vrot.slane %v3053, 5
        %v3196 = vrot.slane %v3195, 4
        %v3197 = vrot.slane %v2635, 5
        %v3198 = vsel %vm1886, %v3196, %v3197
        %v3199 = vrot.slane %v3197, 4
        %v3200 = vrot.slane %v2653, 5
        %v3201 = vsel %vm1886, %v3199, %v3200
        %v3202 = vrot.slane %v3054, 5
        %v3203 = vrot.slane %v3202, 4
        %v3204 = vrot.slane %v2637, 5
        %v3205 = vsel %vm1886, %v3203, %v3204
        %v3206 = vrot.slane %v3204, 4
        %v3207 = vrot.slane %v2654, 5
        %v3208 = vsel %vm1886, %v3206, %v3207
        %v3209 = vrot.slane %v3055, 5
        %v3210 = vrot.slane %v3209, 4
        %v3211 = vrot.slane %v2639, 5
        %v3212 = vsel %vm1886, %v3210, %v3211
        %v3213 = vrot.slane %v3211, 4
        %v3214 = vrot.slane %v2655, 5
        %v3215 = vsel %vm1886, %v3213, %v3214
        %v3232 = vunpack.c.l.b16 %v1385
        %v3233 = vunpack.c.l.b16 %v1386
        %v3234 = vunpack.c.l.b16 %v1387
        %v3235 = vunpack.c.l.b16 %v1388
        %v3236 = vunpack.c.l.b16 %v1389
        %v3237 = vunpack.c.l.b16 %v1390
        %v3238 = vunpack.c.l.b16 %v1391
        %v3239 = vunpack.c.l.b16 %v1392
        %v3240 = vunpack.c.l.b16 %v1393
        %v3241 = vunpack.c.l.b16 %v1394
        %v3242 = vunpack.c.l.b16 %v1395
        %v3243 = vunpack.c.l.b16 %v1396
        %v3244 = vunpack.c.l.b16 %v1397
        %v3245 = vunpack.c.l.b16 %v1398
        %v3246 = vunpack.c.l.b16 %v1399
        %v3247 = vunpack.c.l.b16 %v1400
        %v3248 = vunpack.c.l.b16 %v1401
        %v3249 = vunpack.c.l.b16 %v1402
        %v3250 = vunpack.c.l.b16 %v1403
        %v3251 = vunpack.c.l.b16 %v1404
        %v3252 = vunpack.c.l.b16 %v1405
        %v3253 = vunpack.c.l.b16 %v1406
        %v3254 = vunpack.c.l.b16 %v1407
        %v3255 = vunpack.c.l.b16 %v1408
        %v3256 = vunpack.c.l.b16 %v1409
        %v3257 = vunpack.c.l.b16 %v1410
        %v3258 = vunpack.c.l.b16 %v1411
        %v3259 = vunpack.c.l.b16 %v1412
        %v3260 = vunpack.c.l.b16 %v1413
        %v3261 = vunpack.c.l.b16 %v1414
        %v3262 = vunpack.c.l.b16 %v1415
        %v3263 = vunpack.c.l.b16 %v1416
        %v3264 = vpack.c.b16 %v3233, %v3232
        %v3265 = vpack.c.b16 %v3235, %v3234
        %v3266 = vpack.c.b16 %v3237, %v3236
        %v3267 = vpack.c.b16 %v3239, %v3238
        %v3268 = vpack.c.b16 %v3241, %v3240
        %v3269 = vpack.c.b16 %v3243, %v3242
        %v3270 = vpack.c.b16 %v3245, %v3244
        %v3271 = vpack.c.b16 %v3247, %v3246
        %v3272 = vpack.c.b16 %v3249, %v3248
        %v3273 = vpack.c.b16 %v3251, %v3250
        %v3274 = vpack.c.b16 %v3253, %v3252
        %v3275 = vpack.c.b16 %v3255, %v3254
        %v3276 = vpack.c.b16 %v3257, %v3256
        %v3277 = vpack.c.b16 %v3259, %v3258
        %v3278 = vpack.c.b16 %v3261, %v3260
        %v3279 = vpack.c.b16 %v3263, %v3262
        %v3280 = vunpack.c.l.b16 %v1449
        %v3281 = vunpack.c.l.b16 %v1459
        %v3282 = vunpack.c.l.b16 %v1473
        %v3283 = vunpack.c.l.b16 %v1483
        %v3284 = vunpack.c.l.b16 %v1497
        %v3285 = vunpack.c.l.b16 %v1507
        %v3286 = vunpack.c.l.b16 %v1521
        %v3287 = vunpack.c.l.b16 %v1531
        %v3288 = vunpack.c.l.b16 %v1545
        %v3289 = vunpack.c.l.b16 %v1555
        %v3290 = vunpack.c.l.b16 %v1569
        %v3291 = vunpack.c.l.b16 %v1579
        %v3292 = vunpack.c.l.b16 %v1593
        %v3293 = vunpack.c.l.b16 %v1603
        %v3294 = vunpack.c.l.b16 %v1617
        %v3295 = vunpack.c.l.b16 %v1627
        %v3296 = vunpack.c.l.b16 %v1641
        %v3297 = vunpack.c.l.b16 %v1651
        %v3298 = vunpack.c.l.b16 %v1665
        %v3299 = vunpack.c.l.b16 %v1675
        %v3300 = vunpack.c.l.b16 %v1689
        %v3301 = vunpack.c.l.b16 %v1699
        %v3302 = vunpack.c.l.b16 %v1713
        %v3303 = vunpack.c.l.b16 %v1723
        %v3304 = vunpack.c.l.b16 %v1737
        %v3305 = vunpack.c.l.b16 %v1747
        %v3306 = vunpack.c.l.b16 %v1761
        %v3307 = vunpack.c.l.b16 %v1771
        %v3308 = vunpack.c.l.b16 %v1785
        %v3309 = vunpack.c.l.b16 %v1795
        %v3310 = vunpack.c.l.b16 %v1809
        %v3311 = vunpack.c.l.b16 %v1819
        %v3312 = vpack.c.b16 %v3281, %v3280
        %v3313 = vpack.c.b16 %v3283, %v3282
        %v3314 = vpack.c.b16 %v3285, %v3284
        %v3315 = vpack.c.b16 %v3287, %v3286
        %v3316 = vpack.c.b16 %v3289, %v3288
        %v3317 = vpack.c.b16 %v3291, %v3290
        %v3318 = vpack.c.b16 %v3293, %v3292
        %v3319 = vpack.c.b16 %v3295, %v3294
        %v3320 = vpack.c.b16 %v3297, %v3296
        %v3321 = vpack.c.b16 %v3299, %v3298
        %v3322 = vpack.c.b16 %v3301, %v3300
        %v3323 = vpack.c.b16 %v3303, %v3302
        %v3324 = vpack.c.b16 %v3305, %v3304
        %v3325 = vpack.c.b16 %v3307, %v3306
        %v3326 = vpack.c.b16 %v3309, %v3308
        %v3327 = vpack.c.b16 %v3311, %v3310
        %3328 = vrot.lane.b32.xlu0 %v3312, 16
        %v3329 = vpop.permute.xlu0 %3328
        %3330 = vrot.lane.b32.xlu0 %v3313, 16
        %v3331 = vpop.permute.xlu0 %3330
        %3332 = vrot.lane.b32.xlu0 %v3314, 16
        %v3333 = vpop.permute.xlu0 %3332
        %3334 = vrot.lane.b32.xlu0 %v3315, 16
        %v3335 = vpop.permute.xlu0 %3334
        %3336 = vrot.lane.b32.xlu0 %v3316, 16
        %v3337 = vpop.permute.xlu0 %3336
        %3338 = vrot.lane.b32.xlu0 %v3317, 16
        %v3339 = vpop.permute.xlu0 %3338
        %3340 = vrot.lane.b32.xlu0 %v3318, 16
        %v3341 = vpop.permute.xlu0 %3340
        %3342 = vrot.lane.b32.xlu0 %v3319, 16
        %v3343 = vpop.permute.xlu0 %3342
        %3344 = vrot.lane.b32.xlu0 %v3320, 16
        %v3345 = vpop.permute.xlu0 %3344
        %3346 = vrot.lane.b32.xlu0 %v3321, 16
        %v3347 = vpop.permute.xlu0 %3346
        %3348 = vrot.lane.b32.xlu0 %v3322, 16
        %v3349 = vpop.permute.xlu0 %3348
        %3350 = vrot.lane.b32.xlu0 %v3323, 16
        %v3351 = vpop.permute.xlu0 %3350
        %3352 = vrot.lane.b32.xlu0 %v3324, 16
        %v3353 = vpop.permute.xlu0 %3352
        %3354 = vrot.lane.b32.xlu0 %v3325, 16
        %v3355 = vpop.permute.xlu0 %3354
        %3356 = vrot.lane.b32.xlu0 %v3326, 16
        %v3357 = vpop.permute.xlu0 %3356
        %3358 = vrot.lane.b32.xlu0 %v3327, 16
        %v3359 = vpop.permute.xlu0 %3358
        %v3360 = vunpack.c.l.b16 %v1890
        %v3361 = vunpack.c.l.b16 %v1893
        %v3362 = vunpack.c.l.b16 %v1897
        %v3363 = vunpack.c.l.b16 %v1900
        %v3364 = vunpack.c.l.b16 %v1904
        %v3365 = vunpack.c.l.b16 %v1907
        %v3366 = vunpack.c.l.b16 %v1911
        %v3367 = vunpack.c.l.b16 %v1914
        %v3368 = vunpack.c.l.b16 %v1918
        %v3369 = vunpack.c.l.b16 %v1921
        %v3370 = vunpack.c.l.b16 %v1925
        %v3371 = vunpack.c.l.b16 %v1928
        %v3372 = vunpack.c.l.b16 %v1932
        %v3373 = vunpack.c.l.b16 %v1935
        %v3374 = vunpack.c.l.b16 %v1939
        %v3375 = vunpack.c.l.b16 %v1942
        %v3376 = vunpack.c.l.b16 %v1946
        %v3377 = vunpack.c.l.b16 %v1949
        %v3378 = vunpack.c.l.b16 %v1953
        %v3379 = vunpack.c.l.b16 %v1956
        %v3380 = vunpack.c.l.b16 %v1960
        %v3381 = vunpack.c.l.b16 %v1963
        %v3382 = vunpack.c.l.b16 %v1967
        %v3383 = vunpack.c.l.b16 %v1970
        %v3384 = vunpack.c.l.b16 %v1974
        %v3385 = vunpack.c.l.b16 %v1977
        %v3386 = vunpack.c.l.b16 %v1981
        %v3387 = vunpack.c.l.b16 %v1984
        %v3388 = vunpack.c.l.b16 %v1988
        %v3389 = vunpack.c.l.b16 %v1991
        %v3390 = vunpack.c.l.b16 %v1995
        %v3391 = vunpack.c.l.b16 %v1998
        %v3392 = vpack.c.b16 %v3361, %v3360
        %v3393 = vpack.c.b16 %v3363, %v3362
        %v3394 = vpack.c.b16 %v3365, %v3364
        %v3395 = vpack.c.b16 %v3367, %v3366
        %v3396 = vpack.c.b16 %v3369, %v3368
        %v3397 = vpack.c.b16 %v3371, %v3370
        %v3398 = vpack.c.b16 %v3373, %v3372
        %v3399 = vpack.c.b16 %v3375, %v3374
        %v3400 = vpack.c.b16 %v3377, %v3376
        %v3401 = vpack.c.b16 %v3379, %v3378
        %v3402 = vpack.c.b16 %v3381, %v3380
        %v3403 = vpack.c.b16 %v3383, %v3382
        %v3404 = vpack.c.b16 %v3385, %v3384
        %v3405 = vpack.c.b16 %v3387, %v3386
        %v3406 = vpack.c.b16 %v3389, %v3388
        %v3407 = vpack.c.b16 %v3391, %v3390
        %3408 = vrot.lane.b32.xlu0 %v3392, 32
        %v3409 = vpop.permute.xlu0 %3408
        %3410 = vrot.lane.b32.xlu0 %v3393, 32
        %v3411 = vpop.permute.xlu0 %3410
        %3412 = vrot.lane.b32.xlu0 %v3394, 32
        %v3413 = vpop.permute.xlu0 %3412
        %3414 = vrot.lane.b32.xlu0 %v3395, 32
        %v3415 = vpop.permute.xlu0 %3414
        %3416 = vrot.lane.b32.xlu0 %v3396, 32
        %v3417 = vpop.permute.xlu0 %3416
        %3418 = vrot.lane.b32.xlu0 %v3397, 32
        %v3419 = vpop.permute.xlu0 %3418
        %3420 = vrot.lane.b32.xlu0 %v3398, 32
        %v3421 = vpop.permute.xlu0 %3420
        %3422 = vrot.lane.b32.xlu0 %v3399, 32
        %v3423 = vpop.permute.xlu0 %3422
        %3424 = vrot.lane.b32.xlu0 %v3400, 32
        %v3425 = vpop.permute.xlu0 %3424
        %3426 = vrot.lane.b32.xlu0 %v3401, 32
        %v3427 = vpop.permute.xlu0 %3426
        %3428 = vrot.lane.b32.xlu0 %v3402, 32
        %v3429 = vpop.permute.xlu0 %3428
        %3430 = vrot.lane.b32.xlu0 %v3403, 32
        %v3431 = vpop.permute.xlu0 %3430
        %3432 = vrot.lane.b32.xlu0 %v3404, 32
        %v3433 = vpop.permute.xlu0 %3432
        %3434 = vrot.lane.b32.xlu0 %v3405, 32
        %v3435 = vpop.permute.xlu0 %3434
        %3436 = vrot.lane.b32.xlu0 %v3406, 32
        %v3437 = vpop.permute.xlu0 %3436
        %3438 = vrot.lane.b32.xlu0 %v3407, 32
        %v3439 = vpop.permute.xlu0 %3438
        %v3456 = vunpack.c.l.b16 %v1999
        %v3457 = vunpack.c.l.b16 %v2000
        %v3458 = vunpack.c.l.b16 %v2001
        %v3459 = vunpack.c.l.b16 %v2002
        %v3460 = vunpack.c.l.b16 %v2003
        %v3461 = vunpack.c.l.b16 %v2004
        %v3462 = vunpack.c.l.b16 %v2005
        %v3463 = vunpack.c.l.b16 %v2006
        %v3464 = vunpack.c.l.b16 %v2007
        %v3465 = vunpack.c.l.b16 %v2008
        %v3466 = vunpack.c.l.b16 %v2009
        %v3467 = vunpack.c.l.b16 %v2010
        %v3468 = vunpack.c.l.b16 %v2011
        %v3469 = vunpack.c.l.b16 %v2012
        %v3470 = vunpack.c.l.b16 %v2013
        %v3471 = vunpack.c.l.b16 %v2014
        %v3472 = vunpack.c.l.b16 %v2015
        %v3473 = vunpack.c.l.b16 %v2016
        %v3474 = vunpack.c.l.b16 %v2017
        %v3475 = vunpack.c.l.b16 %v2018
        %v3476 = vunpack.c.l.b16 %v2019
        %v3477 = vunpack.c.l.b16 %v2020
        %v3478 = vunpack.c.l.b16 %v2021
        %v3479 = vunpack.c.l.b16 %v2022
        %v3480 = vunpack.c.l.b16 %v2023
        %v3481 = vunpack.c.l.b16 %v2024
        %v3482 = vunpack.c.l.b16 %v2025
        %v3483 = vunpack.c.l.b16 %v2026
        %v3484 = vunpack.c.l.b16 %v2027
        %v3485 = vunpack.c.l.b16 %v2028
        %v3486 = vunpack.c.l.b16 %v2029
        %v3487 = vunpack.c.l.b16 %v2030
        %v3488 = vpack.c.b16 %v3457, %v3456
        %v3489 = vpack.c.b16 %v3459, %v3458
        %v3490 = vpack.c.b16 %v3461, %v3460
        %v3491 = vpack.c.b16 %v3463, %v3462
        %v3492 = vpack.c.b16 %v3465, %v3464
        %v3493 = vpack.c.b16 %v3467, %v3466
        %v3494 = vpack.c.b16 %v3469, %v3468
        %v3495 = vpack.c.b16 %v3471, %v3470
        %v3496 = vpack.c.b16 %v3473, %v3472
        %v3497 = vpack.c.b16 %v3475, %v3474
        %v3498 = vpack.c.b16 %v3477, %v3476
        %v3499 = vpack.c.b16 %v3479, %v3478
        %v3500 = vpack.c.b16 %v3481, %v3480
        %v3501 = vpack.c.b16 %v3483, %v3482
        %v3502 = vpack.c.b16 %v3485, %v3484
        %v3503 = vpack.c.b16 %v3487, %v3486
        %3504 = vrot.lane.b32.xlu0 %v3488, 48
        %v3505 = vpop.permute.xlu0 %3504
        %3506 = vrot.lane.b32.xlu0 %v3489, 48
        %v3507 = vpop.permute.xlu0 %3506
        %3508 = vrot.lane.b32.xlu0 %v3490, 48
        %v3509 = vpop.permute.xlu0 %3508
        %3510 = vrot.lane.b32.xlu0 %v3491, 48
        %v3511 = vpop.permute.xlu0 %3510
        %3512 = vrot.lane.b32.xlu0 %v3492, 48
        %v3513 = vpop.permute.xlu0 %3512
        %3514 = vrot.lane.b32.xlu0 %v3493, 48
        %v3515 = vpop.permute.xlu0 %3514
        %3516 = vrot.lane.b32.xlu0 %v3494, 48
        %v3517 = vpop.permute.xlu0 %3516
        %3518 = vrot.lane.b32.xlu0 %v3495, 48
        %v3519 = vpop.permute.xlu0 %3518
        %3520 = vrot.lane.b32.xlu0 %v3496, 48
        %v3521 = vpop.permute.xlu0 %3520
        %3522 = vrot.lane.b32.xlu0 %v3497, 48
        %v3523 = vpop.permute.xlu0 %3522
        %3524 = vrot.lane.b32.xlu0 %v3498, 48
        %v3525 = vpop.permute.xlu0 %3524
        %3526 = vrot.lane.b32.xlu0 %v3499, 48
        %v3527 = vpop.permute.xlu0 %3526
        %3528 = vrot.lane.b32.xlu0 %v3500, 48
        %v3529 = vpop.permute.xlu0 %3528
        %3530 = vrot.lane.b32.xlu0 %v3501, 48
        %v3531 = vpop.permute.xlu0 %3530
        %3532 = vrot.lane.b32.xlu0 %v3502, 48
        %v3533 = vpop.permute.xlu0 %3532
        %3534 = vrot.lane.b32.xlu0 %v3503, 48
        %v3535 = vpop.permute.xlu0 %3534
        %v3536 = vunpack.c.l.b16 %v2060
        %v3537 = vunpack.c.l.b16 %v2070
        %v3538 = vunpack.c.l.b16 %v2084
        %v3539 = vunpack.c.l.b16 %v2094
        %v3540 = vunpack.c.l.b16 %v2108
        %v3541 = vunpack.c.l.b16 %v2118
        %v3542 = vunpack.c.l.b16 %v2132
        %v3543 = vunpack.c.l.b16 %v2142
        %v3544 = vunpack.c.l.b16 %v2156
        %v3545 = vunpack.c.l.b16 %v2166
        %v3546 = vunpack.c.l.b16 %v2180
        %v3547 = vunpack.c.l.b16 %v2190
        %v3548 = vunpack.c.l.b16 %v2204
        %v3549 = vunpack.c.l.b16 %v2214
        %v3550 = vunpack.c.l.b16 %v2228
        %v3551 = vunpack.c.l.b16 %v2238
        %v3552 = vunpack.c.l.b16 %v2252
        %v3553 = vunpack.c.l.b16 %v2262
        %v3554 = vunpack.c.l.b16 %v2276
        %v3555 = vunpack.c.l.b16 %v2286
        %v3556 = vunpack.c.l.b16 %v2300
        %v3557 = vunpack.c.l.b16 %v2310
        %v3558 = vunpack.c.l.b16 %v2324
        %v3559 = vunpack.c.l.b16 %v2334
        %v3560 = vunpack.c.l.b16 %v2348
        %v3561 = vunpack.c.l.b16 %v2358
        %v3562 = vunpack.c.l.b16 %v2372
        %v3563 = vunpack.c.l.b16 %v2382
        %v3564 = vunpack.c.l.b16 %v2396
        %v3565 = vunpack.c.l.b16 %v2406
        %v3566 = vunpack.c.l.b16 %v2420
        %v3567 = vunpack.c.l.b16 %v2430
        %v3568 = vpack.c.b16 %v3537, %v3536
        %v3569 = vpack.c.b16 %v3539, %v3538
        %v3570 = vpack.c.b16 %v3541, %v3540
        %v3571 = vpack.c.b16 %v3543, %v3542
        %v3572 = vpack.c.b16 %v3545, %v3544
        %v3573 = vpack.c.b16 %v3547, %v3546
        %v3574 = vpack.c.b16 %v3549, %v3548
        %v3575 = vpack.c.b16 %v3551, %v3550
        %v3576 = vpack.c.b16 %v3553, %v3552
        %v3577 = vpack.c.b16 %v3555, %v3554
        %v3578 = vpack.c.b16 %v3557, %v3556
        %v3579 = vpack.c.b16 %v3559, %v3558
        %v3580 = vpack.c.b16 %v3561, %v3560
        %v3581 = vpack.c.b16 %v3563, %v3562
        %v3582 = vpack.c.b16 %v3565, %v3564
        %v3583 = vpack.c.b16 %v3567, %v3566
        %3584 = vrot.lane.b32.xlu0 %v3568, 64
        %v3585 = vpop.permute.xlu0 %3584
        %3586 = vrot.lane.b32.xlu0 %v3569, 64
        %v3587 = vpop.permute.xlu0 %3586
        %3588 = vrot.lane.b32.xlu0 %v3570, 64
        %v3589 = vpop.permute.xlu0 %3588
        %3590 = vrot.lane.b32.xlu0 %v3571, 64
        %v3591 = vpop.permute.xlu0 %3590
        %3592 = vrot.lane.b32.xlu0 %v3572, 64
        %v3593 = vpop.permute.xlu0 %3592
        %3594 = vrot.lane.b32.xlu0 %v3573, 64
        %v3595 = vpop.permute.xlu0 %3594
        %3596 = vrot.lane.b32.xlu0 %v3574, 64
        %v3597 = vpop.permute.xlu0 %3596
        %3598 = vrot.lane.b32.xlu0 %v3575, 64
        %v3599 = vpop.permute.xlu0 %3598
        %3600 = vrot.lane.b32.xlu0 %v3576, 64
        %v3601 = vpop.permute.xlu0 %3600
        %3602 = vrot.lane.b32.xlu0 %v3577, 64
        %v3603 = vpop.permute.xlu0 %3602
        %3604 = vrot.lane.b32.xlu0 %v3578, 64
        %v3605 = vpop.permute.xlu0 %3604
        %3606 = vrot.lane.b32.xlu0 %v3579, 64
        %v3607 = vpop.permute.xlu0 %3606
        %3608 = vrot.lane.b32.xlu0 %v3580, 64
        %v3609 = vpop.permute.xlu0 %3608
        %3610 = vrot.lane.b32.xlu0 %v3581, 64
        %v3611 = vpop.permute.xlu0 %3610
        %3612 = vrot.lane.b32.xlu0 %v3582, 64
        %v3613 = vpop.permute.xlu0 %3612
        %3614 = vrot.lane.b32.xlu0 %v3583, 64
        %v3615 = vpop.permute.xlu0 %3614
        %v3616 = vunpack.c.l.b16 %v2498
        %v3617 = vunpack.c.l.b16 %v2501
        %v3618 = vunpack.c.l.b16 %v2505
        %v3619 = vunpack.c.l.b16 %v2508
        %v3620 = vunpack.c.l.b16 %v2512
        %v3621 = vunpack.c.l.b16 %v2515
        %v3622 = vunpack.c.l.b16 %v2519
        %v3623 = vunpack.c.l.b16 %v2522
        %v3624 = vunpack.c.l.b16 %v2526
        %v3625 = vunpack.c.l.b16 %v2529
        %v3626 = vunpack.c.l.b16 %v2533
        %v3627 = vunpack.c.l.b16 %v2536
        %v3628 = vunpack.c.l.b16 %v2540
        %v3629 = vunpack.c.l.b16 %v2543
        %v3630 = vunpack.c.l.b16 %v2547
        %v3631 = vunpack.c.l.b16 %v2550
        %v3632 = vunpack.c.l.b16 %v2554
        %v3633 = vunpack.c.l.b16 %v2557
        %v3634 = vunpack.c.l.b16 %v2561
        %v3635 = vunpack.c.l.b16 %v2564
        %v3636 = vunpack.c.l.b16 %v2568
        %v3637 = vunpack.c.l.b16 %v2571
        %v3638 = vunpack.c.l.b16 %v2575
        %v3639 = vunpack.c.l.b16 %v2578
        %v3640 = vunpack.c.l.b16 %v2582
        %v3641 = vunpack.c.l.b16 %v2585
        %v3642 = vunpack.c.l.b16 %v2589
        %v3643 = vunpack.c.l.b16 %v2592
        %v3644 = vunpack.c.l.b16 %v2596
        %v3645 = vunpack.c.l.b16 %v2599
        %v3646 = vunpack.c.l.b16 %v2603
        %v3647 = vunpack.c.l.b16 %v2606
        %v3648 = vpack.c.b16 %v3617, %v3616
        %v3649 = vpack.c.b16 %v3619, %v3618
        %v3650 = vpack.c.b16 %v3621, %v3620
        %v3651 = vpack.c.b16 %v3623, %v3622
        %v3652 = vpack.c.b16 %v3625, %v3624
        %v3653 = vpack.c.b16 %v3627, %v3626
        %v3654 = vpack.c.b16 %v3629, %v3628
        %v3655 = vpack.c.b16 %v3631, %v3630
        %v3656 = vpack.c.b16 %v3633, %v3632
        %v3657 = vpack.c.b16 %v3635, %v3634
        %v3658 = vpack.c.b16 %v3637, %v3636
        %v3659 = vpack.c.b16 %v3639, %v3638
        %v3660 = vpack.c.b16 %v3641, %v3640
        %v3661 = vpack.c.b16 %v3643, %v3642
        %v3662 = vpack.c.b16 %v3645, %v3644
        %v3663 = vpack.c.b16 %v3647, %v3646
        %3664 = vrot.lane.b32.xlu0 %v3648, 80
        %v3665 = vpop.permute.xlu0 %3664
        %3666 = vrot.lane.b32.xlu0 %v3649, 80
        %v3667 = vpop.permute.xlu0 %3666
        %3668 = vrot.lane.b32.xlu0 %v3650, 80
        %v3669 = vpop.permute.xlu0 %3668
        %3670 = vrot.lane.b32.xlu0 %v3651, 80
        %v3671 = vpop.permute.xlu0 %3670
        %3672 = vrot.lane.b32.xlu0 %v3652, 80
        %v3673 = vpop.permute.xlu0 %3672
        %3674 = vrot.lane.b32.xlu0 %v3653, 80
        %v3675 = vpop.permute.xlu0 %3674
        %3676 = vrot.lane.b32.xlu0 %v3654, 80
        %v3677 = vpop.permute.xlu0 %3676
        %3678 = vrot.lane.b32.xlu0 %v3655, 80
        %v3679 = vpop.permute.xlu0 %3678
        %3680 = vrot.lane.b32.xlu0 %v3656, 80
        %v3681 = vpop.permute.xlu0 %3680
        %3682 = vrot.lane.b32.xlu0 %v3657, 80
        %v3683 = vpop.permute.xlu0 %3682
        %3684 = vrot.lane.b32.xlu0 %v3658, 80
        %v3685 = vpop.permute.xlu0 %3684
        %3686 = vrot.lane.b32.xlu0 %v3659, 80
        %v3687 = vpop.permute.xlu0 %3686
        %3688 = vrot.lane.b32.xlu0 %v3660, 80
        %v3689 = vpop.permute.xlu0 %3688
        %3690 = vrot.lane.b32.xlu0 %v3661, 80
        %v3691 = vpop.permute.xlu0 %3690
        %3692 = vrot.lane.b32.xlu0 %v3662, 80
        %v3693 = vpop.permute.xlu0 %3692
        %3694 = vrot.lane.b32.xlu0 %v3663, 80
        %v3695 = vpop.permute.xlu0 %3694
        %v3712 = vunpack.c.l.b16 %v2608
        %v3713 = vunpack.c.l.b16 %v2609
        %v3714 = vunpack.c.l.b16 %v2610
        %v3715 = vunpack.c.l.b16 %v2611
        %v3716 = vunpack.c.l.b16 %v2612
        %v3717 = vunpack.c.l.b16 %v2613
        %v3718 = vunpack.c.l.b16 %v2614
        %v3719 = vunpack.c.l.b16 %v2615
        %v3720 = vunpack.c.l.b16 %v2616
        %v3721 = vunpack.c.l.b16 %v2617
        %v3722 = vunpack.c.l.b16 %v2618
        %v3723 = vunpack.c.l.b16 %v2619
        %v3724 = vunpack.c.l.b16 %v2620
        %v3725 = vunpack.c.l.b16 %v2621
        %v3726 = vunpack.c.l.b16 %v2622
        %v3727 = vunpack.c.l.b16 %v2623
        %v3728 = vunpack.c.l.b16 %v2624
        %v3729 = vunpack.c.l.b16 %v2625
        %v3730 = vunpack.c.l.b16 %v2626
        %v3731 = vunpack.c.l.b16 %v2627
        %v3732 = vunpack.c.l.b16 %v2628
        %v3733 = vunpack.c.l.b16 %v2629
        %v3734 = vunpack.c.l.b16 %v2630
        %v3735 = vunpack.c.l.b16 %v2631
        %v3736 = vunpack.c.l.b16 %v2632
        %v3737 = vunpack.c.l.b16 %v2633
        %v3738 = vunpack.c.l.b16 %v2634
        %v3739 = vunpack.c.l.b16 %v2635
        %v3740 = vunpack.c.l.b16 %v2636
        %v3741 = vunpack.c.l.b16 %v2637
        %v3742 = vunpack.c.l.b16 %v2638
        %v3743 = vunpack.c.l.b16 %v2639
        %v3744 = vpack.c.b16 %v3713, %v3712
        %v3745 = vpack.c.b16 %v3715, %v3714
        %v3746 = vpack.c.b16 %v3717, %v3716
        %v3747 = vpack.c.b16 %v3719, %v3718
        %v3748 = vpack.c.b16 %v3721, %v3720
        %v3749 = vpack.c.b16 %v3723, %v3722
        %v3750 = vpack.c.b16 %v3725, %v3724
        %v3751 = vpack.c.b16 %v3727, %v3726
        %v3752 = vpack.c.b16 %v3729, %v3728
        %v3753 = vpack.c.b16 %v3731, %v3730
        %v3754 = vpack.c.b16 %v3733, %v3732
        %v3755 = vpack.c.b16 %v3735, %v3734
        %v3756 = vpack.c.b16 %v3737, %v3736
        %v3757 = vpack.c.b16 %v3739, %v3738
        %v3758 = vpack.c.b16 %v3741, %v3740
        %v3759 = vpack.c.b16 %v3743, %v3742
        %3760 = vrot.lane.b32.xlu0 %v3744, 96
        %v3761 = vpop.permute.xlu0 %3760
        %3762 = vrot.lane.b32.xlu0 %v3745, 96
        %v3763 = vpop.permute.xlu0 %3762
        %3764 = vrot.lane.b32.xlu0 %v3746, 96
        %v3765 = vpop.permute.xlu0 %3764
        %3766 = vrot.lane.b32.xlu0 %v3747, 96
        %v3767 = vpop.permute.xlu0 %3766
        %3768 = vrot.lane.b32.xlu0 %v3748, 96
        %v3769 = vpop.permute.xlu0 %3768
        %3770 = vrot.lane.b32.xlu0 %v3749, 96
        %v3771 = vpop.permute.xlu0 %3770
        %3772 = vrot.lane.b32.xlu0 %v3750, 96
        %v3773 = vpop.permute.xlu0 %3772
        %3774 = vrot.lane.b32.xlu0 %v3751, 96
        %v3775 = vpop.permute.xlu0 %3774
        %3776 = vrot.lane.b32.xlu0 %v3752, 96
        %v3777 = vpop.permute.xlu0 %3776
        %3778 = vrot.lane.b32.xlu0 %v3753, 96
        %v3779 = vpop.permute.xlu0 %3778
        %3780 = vrot.lane.b32.xlu0 %v3754, 96
        %v3781 = vpop.permute.xlu0 %3780
        %3782 = vrot.lane.b32.xlu0 %v3755, 96
        %v3783 = vpop.permute.xlu0 %3782
        %3784 = vrot.lane.b32.xlu0 %v3756, 96
        %v3785 = vpop.permute.xlu0 %3784
        %3786 = vrot.lane.b32.xlu0 %v3757, 96
        %v3787 = vpop.permute.xlu0 %3786
        %3788 = vrot.lane.b32.xlu0 %v3758, 96
        %v3789 = vpop.permute.xlu0 %3788
        %3790 = vrot.lane.b32.xlu0 %v3759, 96
        %v3791 = vpop.permute.xlu0 %3790
        %v3792 = vunpack.c.l.b16 %v2669
        %v3793 = vunpack.c.l.b16 %v2679
        %v3794 = vunpack.c.l.b16 %v2693
        %v3795 = vunpack.c.l.b16 %v2703
        %v3796 = vunpack.c.l.b16 %v2717
        %v3797 = vunpack.c.l.b16 %v2727
        %v3798 = vunpack.c.l.b16 %v2741
        %v3799 = vunpack.c.l.b16 %v2751
        %v3800 = vunpack.c.l.b16 %v2765
        %v3801 = vunpack.c.l.b16 %v2775
        %v3802 = vunpack.c.l.b16 %v2789
        %v3803 = vunpack.c.l.b16 %v2799
        %v3804 = vunpack.c.l.b16 %v2813
        %v3805 = vunpack.c.l.b16 %v2823
        %v3806 = vunpack.c.l.b16 %v2837
        %v3807 = vunpack.c.l.b16 %v2847
        %v3808 = vunpack.c.l.b16 %v2861
        %v3809 = vunpack.c.l.b16 %v2871
        %v3810 = vunpack.c.l.b16 %v2885
        %v3811 = vunpack.c.l.b16 %v2895
        %v3812 = vunpack.c.l.b16 %v2909
        %v3813 = vunpack.c.l.b16 %v2919
        %v3814 = vunpack.c.l.b16 %v2933
        %v3815 = vunpack.c.l.b16 %v2943
        %v3816 = vunpack.c.l.b16 %v2957
        %v3817 = vunpack.c.l.b16 %v2967
        %v3818 = vunpack.c.l.b16 %v2981
        %v3819 = vunpack.c.l.b16 %v2991
        %v3820 = vunpack.c.l.b16 %v3005
        %v3821 = vunpack.c.l.b16 %v3015
        %v3822 = vunpack.c.l.b16 %v3029
        %v3823 = vunpack.c.l.b16 %v3039
        %v3824 = vpack.c.b16 %v3793, %v3792
        %v3825 = vpack.c.b16 %v3795, %v3794
        %v3826 = vpack.c.b16 %v3797, %v3796
        %v3827 = vpack.c.b16 %v3799, %v3798
        %v3828 = vpack.c.b16 %v3801, %v3800
        %v3829 = vpack.c.b16 %v3803, %v3802
        %v3830 = vpack.c.b16 %v3805, %v3804
        %v3831 = vpack.c.b16 %v3807, %v3806
        %v3832 = vpack.c.b16 %v3809, %v3808
        %v3833 = vpack.c.b16 %v3811, %v3810
        %v3834 = vpack.c.b16 %v3813, %v3812
        %v3835 = vpack.c.b16 %v3815, %v3814
        %v3836 = vpack.c.b16 %v3817, %v3816
        %v3837 = vpack.c.b16 %v3819, %v3818
        %v3838 = vpack.c.b16 %v3821, %v3820
        %v3839 = vpack.c.b16 %v3823, %v3822
        %3840 = vrot.lane.b32.xlu0 %v3824, 112
        %v3841 = vpop.permute.xlu0 %3840
        %3842 = vrot.lane.b32.xlu0 %v3825, 112
        %v3843 = vpop.permute.xlu0 %3842
        %3844 = vrot.lane.b32.xlu0 %v3826, 112
        %v3845 = vpop.permute.xlu0 %3844
        %3846 = vrot.lane.b32.xlu0 %v3827, 112
        %v3847 = vpop.permute.xlu0 %3846
        %3848 = vrot.lane.b32.xlu0 %v3828, 112
        %v3849 = vpop.permute.xlu0 %3848
        %3850 = vrot.lane.b32.xlu0 %v3829, 112
        %v3851 = vpop.permute.xlu0 %3850
        %3852 = vrot.lane.b32.xlu0 %v3830, 112
        %v3853 = vpop.permute.xlu0 %3852
        %3854 = vrot.lane.b32.xlu0 %v3831, 112
        %v3855 = vpop.permute.xlu0 %3854
        %3856 = vrot.lane.b32.xlu0 %v3832, 112
        %v3857 = vpop.permute.xlu0 %3856
        %3858 = vrot.lane.b32.xlu0 %v3833, 112
        %v3859 = vpop.permute.xlu0 %3858
        %3860 = vrot.lane.b32.xlu0 %v3834, 112
        %v3861 = vpop.permute.xlu0 %3860
        %3862 = vrot.lane.b32.xlu0 %v3835, 112
        %v3863 = vpop.permute.xlu0 %3862
        %3864 = vrot.lane.b32.xlu0 %v3836, 112
        %v3865 = vpop.permute.xlu0 %3864
        %3866 = vrot.lane.b32.xlu0 %v3837, 112
        %v3867 = vpop.permute.xlu0 %3866
        %3868 = vrot.lane.b32.xlu0 %v3838, 112
        %v3869 = vpop.permute.xlu0 %3868
        %3870 = vrot.lane.b32.xlu0 %v3839, 112
        %v3871 = vpop.permute.xlu0 %3870
        %v3872 = vunpack.c.l.b16 %v3107
        %v3873 = vunpack.c.l.b16 %v3110
        %v3874 = vunpack.c.l.b16 %v3114
        %v3875 = vunpack.c.l.b16 %v3117
        %v3876 = vunpack.c.l.b16 %v3121
        %v3877 = vunpack.c.l.b16 %v3124
        %v3878 = vunpack.c.l.b16 %v3128
        %v3879 = vunpack.c.l.b16 %v3131
        %v3880 = vunpack.c.l.b16 %v3135
        %v3881 = vunpack.c.l.b16 %v3138
        %v3882 = vunpack.c.l.b16 %v3142
        %v3883 = vunpack.c.l.b16 %v3145
        %v3884 = vunpack.c.l.b16 %v3149
        %v3885 = vunpack.c.l.b16 %v3152
        %v3886 = vunpack.c.l.b16 %v3156
        %v3887 = vunpack.c.l.b16 %v3159
        %v3888 = vunpack.c.l.b16 %v3163
        %v3889 = vunpack.c.l.b16 %v3166
        %v3890 = vunpack.c.l.b16 %v3170
        %v3891 = vunpack.c.l.b16 %v3173
        %v3892 = vunpack.c.l.b16 %v3177
        %v3893 = vunpack.c.l.b16 %v3180
        %v3894 = vunpack.c.l.b16 %v3184
        %v3895 = vunpack.c.l.b16 %v3187
        %v3896 = vunpack.c.l.b16 %v3191
        %v3897 = vunpack.c.l.b16 %v3194
        %v3898 = vunpack.c.l.b16 %v3198
        %v3899 = vunpack.c.l.b16 %v3201
        %v3900 = vunpack.c.l.b16 %v3205
        %v3901 = vunpack.c.l.b16 %v3208
        %v3902 = vunpack.c.l.b16 %v3212
        %v3903 = vunpack.c.l.b16 %v3215
        %v3904 = vpack.c.b16 %v3873, %v3872
        %v3905 = vpack.c.b16 %v3875, %v3874
        %v3906 = vpack.c.b16 %v3877, %v3876
        %v3907 = vpack.c.b16 %v3879, %v3878
        %v3908 = vpack.c.b16 %v3881, %v3880
        %v3909 = vpack.c.b16 %v3883, %v3882
        %v3910 = vpack.c.b16 %v3885, %v3884
        %v3911 = vpack.c.b16 %v3887, %v3886
        %v3912 = vpack.c.b16 %v3889, %v3888
        %v3913 = vpack.c.b16 %v3891, %v3890
        %v3914 = vpack.c.b16 %v3893, %v3892
        %v3915 = vpack.c.b16 %v3895, %v3894
        %v3916 = vpack.c.b16 %v3897, %v3896
        %v3917 = vpack.c.b16 %v3899, %v3898
        %v3918 = vpack.c.b16 %v3901, %v3900
        %v3919 = vpack.c.b16 %v3903, %v3902
        %vm3920 = vcmask 130048
        %v3923 = vsel %vm3920, %v3264, %v3329
        %v3926 = vsel %vm3920, %v3265, %v3331
        %v3929 = vsel %vm3920, %v3266, %v3333
        %v3932 = vsel %vm3920, %v3267, %v3335
        %v3935 = vsel %vm3920, %v3268, %v3337
        %v3938 = vsel %vm3920, %v3269, %v3339
        %v3941 = vsel %vm3920, %v3270, %v3341
        %v3944 = vsel %vm3920, %v3271, %v3343
        %v3947 = vsel %vm3920, %v3272, %v3345
        %v3950 = vsel %vm3920, %v3273, %v3347
        %v3953 = vsel %vm3920, %v3274, %v3349
        %v3956 = vsel %vm3920, %v3275, %v3351
        %v3959 = vsel %vm3920, %v3276, %v3353
        %v3962 = vsel %vm3920, %v3277, %v3355
        %v3965 = vsel %vm3920, %v3278, %v3357
        %v3968 = vsel %vm3920, %v3279, %v3359
        %vm3969 = vcmask 261120
        %v3971 = vsel %vm3969, %v3923, %v3409
        %v3973 = vsel %vm3969, %v3926, %v3411
        %v3975 = vsel %vm3969, %v3929, %v3413
        %v3977 = vsel %vm3969, %v3932, %v3415
        %v3979 = vsel %vm3969, %v3935, %v3417
        %v3981 = vsel %vm3969, %v3938, %v3419
        %v3983 = vsel %vm3969, %v3941, %v3421
        %v3985 = vsel %vm3969, %v3944, %v3423
        %v3987 = vsel %vm3969, %v3947, %v3425
        %v3989 = vsel %vm3969, %v3950, %v3427
        %v3991 = vsel %vm3969, %v3953, %v3429
        %v3993 = vsel %vm3969, %v3956, %v3431
        %v3995 = vsel %vm3969, %v3959, %v3433
        %v3997 = vsel %vm3969, %v3962, %v3435
        %v3999 = vsel %vm3969, %v3965, %v3437
        %v4001 = vsel %vm3969, %v3968, %v3439
        %vm4002 = vcmask 392192
        %v4004 = vsel %vm4002, %v3971, %v3505
        %v4006 = vsel %vm4002, %v3973, %v3507
        %v4008 = vsel %vm4002, %v3975, %v3509
        %v4010 = vsel %vm4002, %v3977, %v3511
        %v4012 = vsel %vm4002, %v3979, %v3513
        %v4014 = vsel %vm4002, %v3981, %v3515
        %v4016 = vsel %vm4002, %v3983, %v3517
        %v4018 = vsel %vm4002, %v3985, %v3519
        %v4020 = vsel %vm4002, %v3987, %v3521
        %v4022 = vsel %vm4002, %v3989, %v3523
        %v4024 = vsel %vm4002, %v3991, %v3525
        %v4026 = vsel %vm4002, %v3993, %v3527
        %v4028 = vsel %vm4002, %v3995, %v3529
        %v4030 = vsel %vm4002, %v3997, %v3531
        %v4032 = vsel %vm4002, %v3999, %v3533
        %v4034 = vsel %vm4002, %v4001, %v3535
        %vm4035 = vcmask 523264
        %v4037 = vsel %vm4035, %v4004, %v3585
        %v4039 = vsel %vm4035, %v4006, %v3587
        %v4041 = vsel %vm4035, %v4008, %v3589
        %v4043 = vsel %vm4035, %v4010, %v3591
        %v4045 = vsel %vm4035, %v4012, %v3593
        %v4047 = vsel %vm4035, %v4014, %v3595
        %v4049 = vsel %vm4035, %v4016, %v3597
        %v4051 = vsel %vm4035, %v4018, %v3599
        %v4053 = vsel %vm4035, %v4020, %v3601
        %v4055 = vsel %vm4035, %v4022, %v3603
        %v4057 = vsel %vm4035, %v4024, %v3605
        %v4059 = vsel %vm4035, %v4026, %v3607
        %v4061 = vsel %vm4035, %v4028, %v3609
        %v4063 = vsel %vm4035, %v4030, %v3611
        %v4065 = vsel %vm4035, %v4032, %v3613
        %v4067 = vsel %vm4035, %v4034, %v3615
        %vm4068 = vcmask 654336
        %v4070 = vsel %vm4068, %v4037, %v3665
        %v4072 = vsel %vm4068, %v4039, %v3667
        %v4074 = vsel %vm4068, %v4041, %v3669
        %v4076 = vsel %vm4068, %v4043, %v3671
        %v4078 = vsel %vm4068, %v4045, %v3673
        %v4080 = vsel %vm4068, %v4047, %v3675
        %v4082 = vsel %vm4068, %v4049, %v3677
        %v4084 = vsel %vm4068, %v4051, %v3679
        %v4086 = vsel %vm4068, %v4053, %v3681
        %v4088 = vsel %vm4068, %v4055, %v3683
        %v4090 = vsel %vm4068, %v4057, %v3685
        %v4092 = vsel %vm4068, %v4059, %v3687
        %v4094 = vsel %vm4068, %v4061, %v3689
        %v4096 = vsel %vm4068, %v4063, %v3691
        %v4098 = vsel %vm4068, %v4065, %v3693
        %v4100 = vsel %vm4068, %v4067, %v3695
        %vm4101 = vcmask 785408
        %v4103 = vsel %vm4101, %v4070, %v3761
        %v4105 = vsel %vm4101, %v4072, %v3763
        %v4107 = vsel %vm4101, %v4074, %v3765
        %v4109 = vsel %vm4101, %v4076, %v3767
        %v4111 = vsel %vm4101, %v4078, %v3769
        %v4113 = vsel %vm4101, %v4080, %v3771
        %v4115 = vsel %vm4101, %v4082, %v3773
        %v4117 = vsel %vm4101, %v4084, %v3775
        %v4119 = vsel %vm4101, %v4086, %v3777
        %v4121 = vsel %vm4101, %v4088, %v3779
        %v4123 = vsel %vm4101, %v4090, %v3781
        %v4125 = vsel %vm4101, %v4092, %v3783
        %v4127 = vsel %vm4101, %v4094, %v3785
        %v4129 = vsel %vm4101, %v4096, %v3787
        %v4131 = vsel %vm4101, %v4098, %v3789
        %v4133 = vsel %vm4101, %v4100, %v3791
        %vm4134 = vcmask 916480
        %v4136 = vsel %vm4134, %v4103, %v3841
        %v4139 = vsel %vm4134, %v4105, %v3843
        %v4142 = vsel %vm4134, %v4107, %v3845
        %v4145 = vsel %vm4134, %v4109, %v3847
        %v4148 = vsel %vm4134, %v4111, %v3849
        %v4151 = vsel %vm4134, %v4113, %v3851
        %v4154 = vsel %vm4134, %v4115, %v3853
        %v4157 = vsel %vm4134, %v4117, %v3855
        %v4160 = vsel %vm4134, %v4119, %v3857
        %v4163 = vsel %vm4134, %v4121, %v3859
        %v4166 = vsel %vm4134, %v4123, %v3861
        %v4169 = vsel %vm4134, %v4125, %v3863
        %v4172 = vsel %vm4134, %v4127, %v3865
        %v4175 = vsel %vm4134, %v4129, %v3867
        %v4178 = vsel %vm4134, %v4131, %v3869
        %v4181 = vsel %vm4134, %v4133, %v3871
        %v4183 = vld [vmem:[%s3] sm:$0xf]
        %v4184 = vld [vmem:[%s3 + $0x4] sm:$0xf]
        %v4185 = vld [vmem:[%s3 + $0x8] sm:$0xf]
        %v4186 = vld [vmem:[%s3 + $0xc] sm:$0xf]
        %v4187 = vld [vmem:[%s3 + $0x10] sm:$0xf]
        %v4188 = vld [vmem:[%s3 + $0x14] sm:$0xf]
        %v4189 = vld [vmem:[%s3 + $0x18] sm:$0xf]
        %v4190 = vld [vmem:[%s3 + $0x1c] sm:$0xf]
        %v4191 = vld [vmem:[%s3 + $0x20] sm:$0xf]
        %v4192 = vld [vmem:[%s3 + $0x24] sm:$0xf]
        %v4193 = vld [vmem:[%s3 + $0x28] sm:$0xf]
        %v4194 = vld [vmem:[%s3 + $0x2c] sm:$0xf]
        %v4195 = vld [vmem:[%s3 + $0x30] sm:$0xf]
        %v4196 = vld [vmem:[%s3 + $0x34] sm:$0xf]
        %v4197 = vld [vmem:[%s3 + $0x38] sm:$0xf]
        %v4198 = vld [vmem:[%s3 + $0x3c] sm:$0xf]
        %v4199 = vld [vmem:[%s3 + $0x40] sm:$0xf]
        %v4200 = vld [vmem:[%s3 + $0x44] sm:$0xf]
        %v4201 = vld [vmem:[%s4] sm:$0x1]
        %v4203 = vperm.slane %v4201, 0
        %v4223 = vunpack.c.l.b16 %v4183
        %v4224 = vunpack.c.l.b16 %v4184
        %v4225 = vunpack.c.l.b16 %v4185
        %v4226 = vunpack.c.l.b16 %v4186
        %v4227 = vunpack.c.l.b16 %v4187
        %v4228 = vunpack.c.l.b16 %v4188
        %v4229 = vunpack.c.l.b16 %v4189
        %v4230 = vunpack.c.l.b16 %v4190
        %v4231 = vunpack.c.l.b16 %v4191
        %v4232 = vunpack.c.l.b16 %v4192
        %v4233 = vunpack.c.l.b16 %v4193
        %v4234 = vunpack.c.l.b16 %v4194
        %v4235 = vunpack.c.l.b16 %v4195
        %v4236 = vunpack.c.l.b16 %v4196
        %v4237 = vunpack.c.l.b16 %v4197
        %v4238 = vunpack.c.l.b16 %v4198
        %v4239 = vunpack.c.l.b16 %v4199
        %v4240 = vunpack.c.l.b16 %v4200
        %v4241 = vpack.c.b16 %v4224, %v4223
        %v4242 = vpack.c.b16 %v4226, %v4225
        %v4243 = vpack.c.b16 %v4228, %v4227
        %v4244 = vpack.c.b16 %v4230, %v4229
        %v4245 = vpack.c.b16 %v4232, %v4231
        %v4246 = vpack.c.b16 %v4234, %v4233
        %v4247 = vpack.c.b16 %v4236, %v4235
        %v4248 = vpack.c.b16 %v4238, %v4237
        %v4249 = vpack.c.b16 %v4240, %v4239
        %v4260 = vsel %vm3920, %v3904, 0
        %v4263 = vsel %vm3920, %v3905, 0
        %v4266 = vsel %vm3920, %v3906, 0
        %v4269 = vsel %vm3920, %v3907, 0
        %v4272 = vsel %vm3920, %v3908, 0
        %v4275 = vsel %vm3920, %v3909, 0
        %v4278 = vsel %vm3920, %v3910, 0
        %v4281 = vsel %vm3920, %v3911, 0
        %v4284 = vsel %vm3920, %v3912, 0
        %v4287 = vsel %vm3920, %v3913, 0
        %v4290 = vsel %vm3920, %v3914, 0
        %v4293 = vsel %vm3920, %v3915, 0
        %v4296 = vsel %vm3920, %v3916, 0
        %v4299 = vsel %vm3920, %v3917, 0
        %v4302 = vsel %vm3920, %v3918, 0
        %v4305 = vsel %vm3920, %v3919, 0
        %4307 = vmatpush.bf16.msra.mxu0 %v4248
        %4308 = vmatpush.bf16.msra.mxu0 %v4247
        %4309 = vmatpush.bf16.msra.mxu0 %v4246
        %4310 = vmatpush.bf16.msra.mxu0 %v4245
        %4311 = vmatpush.bf16.msra.mxu0 %v4244
        %4312 = vmatpush.bf16.msra.mxu0 %v4243
        %4313 = vmatpush.bf16.msra.mxu0 %v4242
        %4314 = vmatpush.bf16.msra.mxu0 %v4241
        %4315 = vmatmul.bf16.gmra.mxu0 %v4136
        %v4316 = vpop.f32.mrf.mxu0
        %v4317 = vadd.f32 %v4203, %v4316
        %v4318 = vpop.f32.mrf.mxu0
        %v4319 = vadd.f32 %v4203, %v4318
        %4320 = vmatmul.bf16.gmra.mxu0 %v4139
        %v4321 = vpop.f32.mrf.mxu0
        %v4322 = vadd.f32 %v4203, %v4321
        %v4323 = vpop.f32.mrf.mxu0
        %v4324 = vadd.f32 %v4203, %v4323
        %4325 = vmatmul.bf16.gmra.mxu0 %v4142
        %v4326 = vpop.f32.mrf.mxu0
        %v4327 = vadd.f32 %v4203, %v4326
        %v4328 = vpop.f32.mrf.mxu0
        %v4329 = vadd.f32 %v4203, %v4328
        %4330 = vmatmul.bf16.gmra.mxu0 %v4145
        %v4331 = vpop.f32.mrf.mxu0
        %v4332 = vadd.f32 %v4203, %v4331
        %v4333 = vpop.f32.mrf.mxu0
        %v4334 = vadd.f32 %v4203, %v4333
        %4335 = vmatmul.bf16.gmra.mxu0 %v4148
        %v4336 = vpop.f32.mrf.mxu0
        %v4337 = vadd.f32 %v4203, %v4336
        %v4338 = vpop.f32.mrf.mxu0
        %v4339 = vadd.f32 %v4203, %v4338
        %4340 = vmatmul.bf16.gmra.mxu0 %v4151
        %v4341 = vpop.f32.mrf.mxu0
        %v4342 = vadd.f32 %v4203, %v4341
        %v4343 = vpop.f32.mrf.mxu0
        %v4344 = vadd.f32 %v4203, %v4343
        %4345 = vmatmul.bf16.gmra.mxu0 %v4154
        %v4346 = vpop.f32.mrf.mxu0
        %v4347 = vadd.f32 %v4203, %v4346
        %v4348 = vpop.f32.mrf.mxu0
        %v4349 = vadd.f32 %v4203, %v4348
        %4350 = vmatmul.bf16.gmra.mxu0 %v4157
        %v4351 = vpop.f32.mrf.mxu0
        %v4352 = vadd.f32 %v4203, %v4351
        %v4353 = vpop.f32.mrf.mxu0
        %v4354 = vadd.f32 %v4203, %v4353
        %4355 = vmatmul.bf16.gmra.mxu0 %v4160
        %v4356 = vpop.f32.mrf.mxu0
        %v4357 = vadd.f32 %v4203, %v4356
        %v4358 = vpop.f32.mrf.mxu0
        %v4359 = vadd.f32 %v4203, %v4358
        %4360 = vmatmul.bf16.gmra.mxu0 %v4163
        %v4361 = vpop.f32.mrf.mxu0
        %v4362 = vadd.f32 %v4203, %v4361
        %v4363 = vpop.f32.mrf.mxu0
        %v4364 = vadd.f32 %v4203, %v4363
        %4365 = vmatmul.bf16.gmra.mxu0 %v4166
        %v4366 = vpop.f32.mrf.mxu0
        %v4367 = vadd.f32 %v4203, %v4366
        %v4368 = vpop.f32.mrf.mxu0
        %v4369 = vadd.f32 %v4203, %v4368
        %4370 = vmatmul.bf16.gmra.mxu0 %v4169
        %v4371 = vpop.f32.mrf.mxu0
        %v4372 = vadd.f32 %v4203, %v4371
        %v4373 = vpop.f32.mrf.mxu0
        %v4374 = vadd.f32 %v4203, %v4373
        %4375 = vmatmul.bf16.gmra.mxu0 %v4172
        %v4376 = vpop.f32.mrf.mxu0
        %v4377 = vadd.f32 %v4203, %v4376
        %v4378 = vpop.f32.mrf.mxu0
        %v4379 = vadd.f32 %v4203, %v4378
        %4380 = vmatmul.bf16.gmra.mxu0 %v4175
        %v4381 = vpop.f32.mrf.mxu0
        %v4382 = vadd.f32 %v4203, %v4381
        %v4383 = vpop.f32.mrf.mxu0
        %v4384 = vadd.f32 %v4203, %v4383
        %4385 = vmatmul.bf16.gmra.mxu0 %v4178
        %v4386 = vpop.f32.mrf.mxu0
        %v4387 = vadd.f32 %v4203, %v4386
        %v4388 = vpop.f32.mrf.mxu0
        %v4389 = vadd.f32 %v4203, %v4388
        %4390 = vmatmul.bf16.gmra.mxu0 %v4181
        %v4391 = vpop.f32.mrf.mxu0
        %v4392 = vadd.f32 %v4203, %v4391
        %v4393 = vpop.f32.mrf.mxu0
        %v4394 = vadd.f32 %v4203, %v4393
        %4395 = vdwg.mxu0
        %4396 = vmatpush.bf16.msra.mxu0 0
        %4397 = vmatpush.bf16.msra.mxu0 0
        %4398 = vmatpush.bf16.msra.mxu0 0
        %4399 = vmatpush.bf16.msra.mxu0 0
        %4400 = vmatpush.bf16.msra.mxu0 0
        %4401 = vmatpush.bf16.msra.mxu0 0
        %4402 = vmatpush.bf16.msra.mxu0 0
        %4403 = vmatpush.bf16.msra.mxu0 %v4249
        %4404 = vmatmul.bf16.gmra.mxu0 %v4260
        %v4405 = vpop.f32.mrf.mxu0
        %v4406 = vadd.f32 %v4317, %v4405
        %v4407 = vpop.f32.mrf.mxu0
        %v4408 = vadd.f32 %v4319, %v4407
        %4409 = vmatmul.bf16.gmra.mxu0 %v4263
        %v4410 = vpop.f32.mrf.mxu0
        %v4411 = vadd.f32 %v4322, %v4410
        %v4412 = vpop.f32.mrf.mxu0
        %v4413 = vadd.f32 %v4324, %v4412
        %4414 = vmatmul.bf16.gmra.mxu0 %v4266
        %v4415 = vpop.f32.mrf.mxu0
        %v4416 = vadd.f32 %v4327, %v4415
        %v4417 = vpop.f32.mrf.mxu0
        %v4418 = vadd.f32 %v4329, %v4417
        %4419 = vmatmul.bf16.gmra.mxu0 %v4269
        %v4420 = vpop.f32.mrf.mxu0
        %v4421 = vadd.f32 %v4332, %v4420
        %v4422 = vpop.f32.mrf.mxu0
        %v4423 = vadd.f32 %v4334, %v4422
        %4424 = vmatmul.bf16.gmra.mxu0 %v4272
        %v4425 = vpop.f32.mrf.mxu0
        %v4426 = vadd.f32 %v4337, %v4425
        %v4427 = vpop.f32.mrf.mxu0
        %v4428 = vadd.f32 %v4339, %v4427
        %4429 = vmatmul.bf16.gmra.mxu0 %v4275
        %v4430 = vpop.f32.mrf.mxu0
        %v4431 = vadd.f32 %v4342, %v4430
        %v4432 = vpop.f32.mrf.mxu0
        %v4433 = vadd.f32 %v4344, %v4432
        %4434 = vmatmul.bf16.gmra.mxu0 %v4278
        %v4435 = vpop.f32.mrf.mxu0
        %v4436 = vadd.f32 %v4347, %v4435
        %v4437 = vpop.f32.mrf.mxu0
        %v4438 = vadd.f32 %v4349, %v4437
        %4439 = vmatmul.bf16.gmra.mxu0 %v4281
        %v4440 = vpop.f32.mrf.mxu0
        %v4441 = vadd.f32 %v4352, %v4440
        %v4442 = vpop.f32.mrf.mxu0
        %v4443 = vadd.f32 %v4354, %v4442
        %4444 = vmatmul.bf16.gmra.mxu0 %v4284
        %v4445 = vpop.f32.mrf.mxu0
        %v4446 = vadd.f32 %v4357, %v4445
        %v4447 = vpop.f32.mrf.mxu0
        %v4448 = vadd.f32 %v4359, %v4447
        %4449 = vmatmul.bf16.gmra.mxu0 %v4287
        %v4450 = vpop.f32.mrf.mxu0
        %v4451 = vadd.f32 %v4362, %v4450
        %v4452 = vpop.f32.mrf.mxu0
        %v4453 = vadd.f32 %v4364, %v4452
        %4454 = vmatmul.bf16.gmra.mxu0 %v4290
        %v4455 = vpop.f32.mrf.mxu0
        %v4456 = vadd.f32 %v4367, %v4455
        %v4457 = vpop.f32.mrf.mxu0
        %v4458 = vadd.f32 %v4369, %v4457
        %4459 = vmatmul.bf16.gmra.mxu0 %v4293
        %v4460 = vpop.f32.mrf.mxu0
        %v4461 = vadd.f32 %v4372, %v4460
        %v4462 = vpop.f32.mrf.mxu0
        %v4463 = vadd.f32 %v4374, %v4462
        %4464 = vmatmul.bf16.gmra.mxu0 %v4296
        %v4465 = vpop.f32.mrf.mxu0
        %v4466 = vadd.f32 %v4377, %v4465
        %v4467 = vpop.f32.mrf.mxu0
        %v4468 = vadd.f32 %v4379, %v4467
        %4469 = vmatmul.bf16.gmra.mxu0 %v4299
        %v4470 = vpop.f32.mrf.mxu0
        %v4471 = vadd.f32 %v4382, %v4470
        %v4472 = vpop.f32.mrf.mxu0
        %v4473 = vadd.f32 %v4384, %v4472
        %4474 = vmatmul.bf16.gmra.mxu0 %v4302
        %v4475 = vpop.f32.mrf.mxu0
        %v4476 = vadd.f32 %v4387, %v4475
        %v4477 = vpop.f32.mrf.mxu0
        %v4478 = vadd.f32 %v4389, %v4477
        %4479 = vmatmul.bf16.gmra.mxu0 %v4305
        %v4480 = vpop.f32.mrf.mxu0
        %v4481 = vadd.f32 %v4392, %v4480
        %v4482 = vpop.f32.mrf.mxu0
        %v4483 = vadd.f32 %v4394, %v4482
        %4484 = vdwg.mxu0
        %v4485 = vmax.f32 %v4406, 0.0
        %v4486 = vmax.f32 %v4408, 0.0
        %v4487 = vmax.f32 %v4411, 0.0
        %v4488 = vmax.f32 %v4413, 0.0
        %v4489 = vmax.f32 %v4416, 0.0
        %v4490 = vmax.f32 %v4418, 0.0
        %v4491 = vmax.f32 %v4421, 0.0
        %v4492 = vmax.f32 %v4423, 0.0
        %v4493 = vmax.f32 %v4426, 0.0
        %v4494 = vmax.f32 %v4428, 0.0
        %v4495 = vmax.f32 %v4431, 0.0
        %v4496 = vmax.f32 %v4433, 0.0
        %v4497 = vmax.f32 %v4436, 0.0
        %v4498 = vmax.f32 %v4438, 0.0
        %v4499 = vmax.f32 %v4441, 0.0
        %v4500 = vmax.f32 %v4443, 0.0
        %v4501 = vmax.f32 %v4446, 0.0
        %v4502 = vmax.f32 %v4448, 0.0
        %v4503 = vmax.f32 %v4451, 0.0
        %v4504 = vmax.f32 %v4453, 0.0
        %v4505 = vmax.f32 %v4456, 0.0
        %v4506 = vmax.f32 %v4458, 0.0
        %v4507 = vmax.f32 %v4461, 0.0
        %v4508 = vmax.f32 %v4463, 0.0
        %v4509 = vmax.f32 %v4466, 0.0
        %v4510 = vmax.f32 %v4468, 0.0
        %v4511 = vmax.f32 %v4471, 0.0
        %v4512 = vmax.f32 %v4473, 0.0
        %v4513 = vmax.f32 %v4476, 0.0
        %v4514 = vmax.f32 %v4478, 0.0
        %v4515 = vmax.f32 %v4481, 0.0
        %v4516 = vmax.f32 %v4483, 0.0
        %v4517 = vmax.f32 %v4485, %v4487
        %v4518 = vmax.f32 %v4486, %v4488
        %v4519 = vmax.f32 %v4489, %v4491
        %v4520 = vmax.f32 %v4490, %v4492
        %v4521 = vmax.f32 %v4493, %v4495
        %v4522 = vmax.f32 %v4494, %v4496
        %v4523 = vmax.f32 %v4497, %v4499
        %v4524 = vmax.f32 %v4498, %v4500
        %v4525 = vmax.f32 %v4501, %v4503
        %v4526 = vmax.f32 %v4502, %v4504
        %v4527 = vmax.f32 %v4505, %v4507
        %v4528 = vmax.f32 %v4506, %v4508
        %v4529 = vmax.f32 %v4509, %v4511
        %v4530 = vmax.f32 %v4510, %v4512
        %v4531 = vmax.f32 %v4513, %v4515
        %v4532 = vmax.f32 %v4514, %v4516
        %v4549 = vrot.slane %v4517, 2
        %v4550 = vrot.slane %v4517, 4
        %v4551 = vrot.slane %v4517, 6
        %v4552 = vrot.slane %v4518, 2
        %v4553 = vrot.slane %v4518, 4
        %v4554 = vrot.slane %v4518, 6
        %v4555 = vrot.slane %v4519, 2
        %v4556 = vrot.slane %v4519, 4
        %v4557 = vrot.slane %v4519, 6
        %v4558 = vrot.slane %v4520, 2
        %v4559 = vrot.slane %v4520, 4
        %v4560 = vrot.slane %v4520, 6
        %v4561 = vrot.slane %v4521, 2
        %v4562 = vrot.slane %v4521, 4
        %v4563 = vrot.slane %v4521, 6
        %v4564 = vrot.slane %v4522, 2
        %v4565 = vrot.slane %v4522, 4
        %v4566 = vrot.slane %v4522, 6
        %v4567 = vrot.slane %v4523, 2
        %v4568 = vrot.slane %v4523, 4
        %v4569 = vrot.slane %v4523, 6
        %v4570 = vrot.slane %v4524, 2
        %v4571 = vrot.slane %v4524, 4
        %v4572 = vrot.slane %v4524, 6
        %v4573 = vrot.slane %v4525, 2
        %v4574 = vrot.slane %v4525, 4
        %v4575 = vrot.slane %v4525, 6
        %v4576 = vrot.slane %v4526, 2
        %v4577 = vrot.slane %v4526, 4
        %v4578 = vrot.slane %v4526, 6
        %v4579 = vrot.slane %v4527, 2
        %v4580 = vrot.slane %v4527, 4
        %v4581 = vrot.slane %v4527, 6
        %v4582 = vrot.slane %v4528, 2
        %v4583 = vrot.slane %v4528, 4
        %v4584 = vrot.slane %v4528, 6
        %v4585 = vrot.slane %v4529, 2
        %v4586 = vrot.slane %v4529, 4
        %v4587 = vrot.slane %v4529, 6
        %v4588 = vrot.slane %v4530, 2
        %v4589 = vrot.slane %v4530, 4
        %v4590 = vrot.slane %v4530, 6
        %v4591 = vrot.slane %v4531, 2
        %v4592 = vrot.slane %v4531, 4
        %v4593 = vrot.slane %v4531, 6
        %v4594 = vrot.slane %v4532, 2
        %v4595 = vrot.slane %v4532, 4
        %v4596 = vrot.slane %v4532, 6
        %v4645 = vrot.slane %v4517, 7
        %v4646 = vrot.slane %v4645, 2
        %v4647 = vrot.slane %v4549, 7
        %v4648 = vrot.slane %v4647, 2
        %v4649 = vrot.slane %v4550, 7
        %v4650 = vrot.slane %v4649, 2
        %v4651 = vrot.slane %v4551, 7
        %v4652 = vrot.slane %v4651, 2
        %v4653 = vrot.slane %v4518, 7
        %v4654 = vrot.slane %v4653, 2
        %v4655 = vrot.slane %v4552, 7
        %v4656 = vrot.slane %v4655, 2
        %v4657 = vrot.slane %v4553, 7
        %v4658 = vrot.slane %v4657, 2
        %v4659 = vrot.slane %v4554, 7
        %v4660 = vrot.slane %v4659, 2
        %v4661 = vrot.slane %v4519, 7
        %v4662 = vrot.slane %v4661, 2
        %v4663 = vrot.slane %v4555, 7
        %v4664 = vrot.slane %v4663, 2
        %v4665 = vrot.slane %v4556, 7
        %v4666 = vrot.slane %v4665, 2
        %v4667 = vrot.slane %v4557, 7
        %v4668 = vrot.slane %v4667, 2
        %v4669 = vrot.slane %v4520, 7
        %v4670 = vrot.slane %v4669, 2
        %v4671 = vrot.slane %v4558, 7
        %v4672 = vrot.slane %v4671, 2
        %v4673 = vrot.slane %v4559, 7
        %v4674 = vrot.slane %v4673, 2
        %v4675 = vrot.slane %v4560, 7
        %v4676 = vrot.slane %v4675, 2
        %v4677 = vrot.slane %v4521, 7
        %v4678 = vrot.slane %v4677, 2
        %v4679 = vrot.slane %v4561, 7
        %v4680 = vrot.slane %v4679, 2
        %v4681 = vrot.slane %v4562, 7
        %v4682 = vrot.slane %v4681, 2
        %v4683 = vrot.slane %v4563, 7
        %v4684 = vrot.slane %v4683, 2
        %v4685 = vrot.slane %v4522, 7
        %v4686 = vrot.slane %v4685, 2
        %v4687 = vrot.slane %v4564, 7
        %v4688 = vrot.slane %v4687, 2
        %v4689 = vrot.slane %v4565, 7
        %v4690 = vrot.slane %v4689, 2
        %v4691 = vrot.slane %v4566, 7
        %v4692 = vrot.slane %v4691, 2
        %v4693 = vrot.slane %v4523, 7
        %v4694 = vrot.slane %v4693, 2
        %v4695 = vrot.slane %v4567, 7
        %v4696 = vrot.slane %v4695, 2
        %v4697 = vrot.slane %v4568, 7
        %v4698 = vrot.slane %v4697, 2
        %v4699 = vrot.slane %v4569, 7
        %v4700 = vrot.slane %v4699, 2
        %v4701 = vrot.slane %v4524, 7
        %v4702 = vrot.slane %v4701, 2
        %v4703 = vrot.slane %v4570, 7
        %v4704 = vrot.slane %v4703, 2
        %v4705 = vrot.slane %v4571, 7
        %v4706 = vrot.slane %v4705, 2
        %v4707 = vrot.slane %v4572, 7
        %v4708 = vrot.slane %v4707, 2
        %v4709 = vrot.slane %v4525, 7
        %v4710 = vrot.slane %v4709, 2
        %v4711 = vrot.slane %v4573, 7
        %v4712 = vrot.slane %v4711, 2
        %v4713 = vrot.slane %v4574, 7
        %v4714 = vrot.slane %v4713, 2
        %v4715 = vrot.slane %v4575, 7
        %v4716 = vrot.slane %v4715, 2
        %v4717 = vrot.slane %v4526, 7
        %v4718 = vrot.slane %v4717, 2
        %v4719 = vrot.slane %v4576, 7
        %v4720 = vrot.slane %v4719, 2
        %v4721 = vrot.slane %v4577, 7
        %v4722 = vrot.slane %v4721, 2
        %v4723 = vrot.slane %v4578, 7
        %v4724 = vrot.slane %v4723, 2
        %v4725 = vrot.slane %v4527, 7
        %v4726 = vrot.slane %v4725, 2
        %v4727 = vrot.slane %v4579, 7
        %v4728 = vrot.slane %v4727, 2
        %v4729 = vrot.slane %v4580, 7
        %v4730 = vrot.slane %v4729, 2
        %v4731 = vrot.slane %v4581, 7
        %v4732 = vrot.slane %v4731, 2
        %v4733 = vrot.slane %v4528, 7
        %v4734 = vrot.slane %v4733, 2
        %v4735 = vrot.slane %v4582, 7
        %v4736 = vrot.slane %v4735, 2
        %v4737 = vrot.slane %v4583, 7
        %v4738 = vrot.slane %v4737, 2
        %v4739 = vrot.slane %v4584, 7
        %v4740 = vrot.slane %v4739, 2
        %v4741 = vrot.slane %v4529, 7
        %v4742 = vrot.slane %v4741, 2
        %v4743 = vrot.slane %v4585, 7
        %v4744 = vrot.slane %v4743, 2
        %v4745 = vrot.slane %v4586, 7
        %v4746 = vrot.slane %v4745, 2
        %v4747 = vrot.slane %v4587, 7
        %v4748 = vrot.slane %v4747, 2
        %v4749 = vrot.slane %v4530, 7
        %v4750 = vrot.slane %v4749, 2
        %v4751 = vrot.slane %v4588, 7
        %v4752 = vrot.slane %v4751, 2
        %v4753 = vrot.slane %v4589, 7
        %v4754 = vrot.slane %v4753, 2
        %v4755 = vrot.slane %v4590, 7
        %v4756 = vrot.slane %v4755, 2
        %v4757 = vrot.slane %v4531, 7
        %v4758 = vrot.slane %v4757, 2
        %v4759 = vrot.slane %v4591, 7
        %v4760 = vrot.slane %v4759, 2
        %v4761 = vrot.slane %v4592, 7
        %v4762 = vrot.slane %v4761, 2
        %v4763 = vrot.slane %v4593, 7
        %v4764 = vrot.slane %v4763, 2
        %v4765 = vrot.slane %v4532, 7
        %v4766 = vrot.slane %v4765, 2
        %v4767 = vrot.slane %v4594, 7
        %v4768 = vrot.slane %v4767, 2
        %v4769 = vrot.slane %v4595, 7
        %v4770 = vrot.slane %v4769, 2
        %v4771 = vrot.slane %v4596, 7
        %v4772 = vrot.slane %v4771, 2
        %v4837 = vmax.f32 %v4517, %v4646
        %v4838 = vmax.f32 %v4549, %v4648
        %v4839 = vmax.f32 %v4550, %v4650
        %v4840 = vmax.f32 %v4551, %v4652
        %v4841 = vmax.f32 %v4518, %v4654
        %v4842 = vmax.f32 %v4552, %v4656
        %v4843 = vmax.f32 %v4553, %v4658
        %v4844 = vmax.f32 %v4554, %v4660
        %v4845 = vmax.f32 %v4519, %v4662
        %v4846 = vmax.f32 %v4555, %v4664
        %v4847 = vmax.f32 %v4556, %v4666
        %v4848 = vmax.f32 %v4557, %v4668
        %v4849 = vmax.f32 %v4520, %v4670
        %v4850 = vmax.f32 %v4558, %v4672
        %v4851 = vmax.f32 %v4559, %v4674
        %v4852 = vmax.f32 %v4560, %v4676
        %v4853 = vmax.f32 %v4521, %v4678
        %v4854 = vmax.f32 %v4561, %v4680
        %v4855 = vmax.f32 %v4562, %v4682
        %v4856 = vmax.f32 %v4563, %v4684
        %v4857 = vmax.f32 %v4522, %v4686
        %v4858 = vmax.f32 %v4564, %v4688
        %v4859 = vmax.f32 %v4565, %v4690
        %v4860 = vmax.f32 %v4566, %v4692
        %v4861 = vmax.f32 %v4523, %v4694
        %v4862 = vmax.f32 %v4567, %v4696
        %v4863 = vmax.f32 %v4568, %v4698
        %v4864 = vmax.f32 %v4569, %v4700
        %v4865 = vmax.f32 %v4524, %v4702
        %v4866 = vmax.f32 %v4570, %v4704
        %v4867 = vmax.f32 %v4571, %v4706
        %v4868 = vmax.f32 %v4572, %v4708
        %v4869 = vmax.f32 %v4525, %v4710
        %v4870 = vmax.f32 %v4573, %v4712
        %v4871 = vmax.f32 %v4574, %v4714
        %v4872 = vmax.f32 %v4575, %v4716
        %v4873 = vmax.f32 %v4526, %v4718
        %v4874 = vmax.f32 %v4576, %v4720
        %v4875 = vmax.f32 %v4577, %v4722
        %v4876 = vmax.f32 %v4578, %v4724
        %v4877 = vmax.f32 %v4527, %v4726
        %v4878 = vmax.f32 %v4579, %v4728
        %v4879 = vmax.f32 %v4580, %v4730
        %v4880 = vmax.f32 %v4581, %v4732
        %v4881 = vmax.f32 %v4528, %v4734
        %v4882 = vmax.f32 %v4582, %v4736
        %v4883 = vmax.f32 %v4583, %v4738
        %v4884 = vmax.f32 %v4584, %v4740
        %v4885 = vmax.f32 %v4529, %v4742
        %v4886 = vmax.f32 %v4585, %v4744
        %v4887 = vmax.f32 %v4586, %v4746
        %v4888 = vmax.f32 %v4587, %v4748
        %v4889 = vmax.f32 %v4530, %v4750
        %v4890 = vmax.f32 %v4588, %v4752
        %v4891 = vmax.f32 %v4589, %v4754
        %v4892 = vmax.f32 %v4590, %v4756
        %v4893 = vmax.f32 %v4531, %v4758
        %v4894 = vmax.f32 %v4591, %v4760
        %v4895 = vmax.f32 %v4592, %v4762
        %v4896 = vmax.f32 %v4593, %v4764
        %v4897 = vmax.f32 %v4532, %v4766
        %v4898 = vmax.f32 %v4594, %v4768
        %v4899 = vmax.f32 %v4595, %v4770
        %v4900 = vmax.f32 %v4596, %v4772
        %v4901 = vpack.c.bf16 %v4837, %v4837
        %v4902 = vpack.c.bf16 %v4838, %v4838
        %v4903 = vpack.c.bf16 %v4839, %v4839
        %v4904 = vpack.c.bf16 %v4840, %v4840
        %v4905 = vpack.c.bf16 %v4841, %v4841
        %v4906 = vpack.c.bf16 %v4842, %v4842
        %v4907 = vpack.c.bf16 %v4843, %v4843
        %v4908 = vpack.c.bf16 %v4844, %v4844
        %v4909 = vpack.c.bf16 %v4845, %v4845
        %v4910 = vpack.c.bf16 %v4846, %v4846
        %v4911 = vpack.c.bf16 %v4847, %v4847
        %v4912 = vpack.c.bf16 %v4848, %v4848
        %v4913 = vpack.c.bf16 %v4849, %v4849
        %v4914 = vpack.c.bf16 %v4850, %v4850
        %v4915 = vpack.c.bf16 %v4851, %v4851
        %v4916 = vpack.c.bf16 %v4852, %v4852
        %v4917 = vpack.c.bf16 %v4853, %v4853
        %v4918 = vpack.c.bf16 %v4854, %v4854
        %v4919 = vpack.c.bf16 %v4855, %v4855
        %v4920 = vpack.c.bf16 %v4856, %v4856
        %v4921 = vpack.c.bf16 %v4857, %v4857
        %v4922 = vpack.c.bf16 %v4858, %v4858
        %v4923 = vpack.c.bf16 %v4859, %v4859
        %v4924 = vpack.c.bf16 %v4860, %v4860
        %v4925 = vpack.c.bf16 %v4861, %v4861
        %v4926 = vpack.c.bf16 %v4862, %v4862
        %v4927 = vpack.c.bf16 %v4863, %v4863
        %v4928 = vpack.c.bf16 %v4864, %v4864
        %v4929 = vpack.c.bf16 %v4865, %v4865
        %v4930 = vpack.c.bf16 %v4866, %v4866
        %v4931 = vpack.c.bf16 %v4867, %v4867
        %v4932 = vpack.c.bf16 %v4868, %v4868
        %v4933 = vpack.c.bf16 %v4869, %v4869
        %v4934 = vpack.c.bf16 %v4870, %v4870
        %v4935 = vpack.c.bf16 %v4871, %v4871
        %v4936 = vpack.c.bf16 %v4872, %v4872
        %v4937 = vpack.c.bf16 %v4873, %v4873
        %v4938 = vpack.c.bf16 %v4874, %v4874
        %v4939 = vpack.c.bf16 %v4875, %v4875
        %v4940 = vpack.c.bf16 %v4876, %v4876
        %v4941 = vpack.c.bf16 %v4877, %v4877
        %v4942 = vpack.c.bf16 %v4878, %v4878
        %v4943 = vpack.c.bf16 %v4879, %v4879
        %v4944 = vpack.c.bf16 %v4880, %v4880
        %v4945 = vpack.c.bf16 %v4881, %v4881
        %v4946 = vpack.c.bf16 %v4882, %v4882
        %v4947 = vpack.c.bf16 %v4883, %v4883
        %v4948 = vpack.c.bf16 %v4884, %v4884
        %v4949 = vpack.c.bf16 %v4885, %v4885
        %v4950 = vpack.c.bf16 %v4886, %v4886
        %v4951 = vpack.c.bf16 %v4887, %v4887
        %v4952 = vpack.c.bf16 %v4888, %v4888
        %v4953 = vpack.c.bf16 %v4889, %v4889
        %v4954 = vpack.c.bf16 %v4890, %v4890
        %v4955 = vpack.c.bf16 %v4891, %v4891
        %v4956 = vpack.c.bf16 %v4892, %v4892
        %v4957 = vpack.c.bf16 %v4893, %v4893
        %v4958 = vpack.c.bf16 %v4894, %v4894
        %v4959 = vpack.c.bf16 %v4895, %v4895
        %v4960 = vpack.c.bf16 %v4896, %v4896
        %v4961 = vpack.c.bf16 %v4897, %v4897
        %v4962 = vpack.c.bf16 %v4898, %v4898
        %v4963 = vpack.c.bf16 %v4899, %v4899
        %v4964 = vpack.c.bf16 %v4900, %v4900
        %v5029 = vunpack.c.l.b16 %v4901
        %v5030 = vunpack.c.l.b16 %v4902
        %v5031 = vunpack.c.l.b16 %v4903
        %v5032 = vunpack.c.l.b16 %v4904
        %v5033 = vunpack.c.l.b16 %v4905
        %v5034 = vunpack.c.l.b16 %v4906
        %v5035 = vunpack.c.l.b16 %v4907
        %v5036 = vunpack.c.l.b16 %v4908
        %v5037 = vunpack.c.l.b16 %v4909
        %v5038 = vunpack.c.l.b16 %v4910
        %v5039 = vunpack.c.l.b16 %v4911
        %v5040 = vunpack.c.l.b16 %v4912
        %v5041 = vunpack.c.l.b16 %v4913
        %v5042 = vunpack.c.l.b16 %v4914
        %v5043 = vunpack.c.l.b16 %v4915
        %v5044 = vunpack.c.l.b16 %v4916
        %v5045 = vunpack.c.l.b16 %v4917
        %v5046 = vunpack.c.l.b16 %v4918
        %v5047 = vunpack.c.l.b16 %v4919
        %v5048 = vunpack.c.l.b16 %v4920
        %v5049 = vunpack.c.l.b16 %v4921
        %v5050 = vunpack.c.l.b16 %v4922
        %v5051 = vunpack.c.l.b16 %v4923
        %v5052 = vunpack.c.l.b16 %v4924
        %v5053 = vunpack.c.l.b16 %v4925
        %v5054 = vunpack.c.l.b16 %v4926
        %v5055 = vunpack.c.l.b16 %v4927
        %v5056 = vunpack.c.l.b16 %v4928
        %v5057 = vunpack.c.l.b16 %v4929
        %v5058 = vunpack.c.l.b16 %v4930
        %v5059 = vunpack.c.l.b16 %v4931
        %v5060 = vunpack.c.l.b16 %v4932
        %v5061 = vunpack.c.l.b16 %v4933
        %v5062 = vunpack.c.l.b16 %v4934
        %v5063 = vunpack.c.l.b16 %v4935
        %v5064 = vunpack.c.l.b16 %v4936
        %v5065 = vunpack.c.l.b16 %v4937
        %v5066 = vunpack.c.l.b16 %v4938
        %v5067 = vunpack.c.l.b16 %v4939
        %v5068 = vunpack.c.l.b16 %v4940
        %v5069 = vunpack.c.l.b16 %v4941
        %v5070 = vunpack.c.l.b16 %v4942
        %v5071 = vunpack.c.l.b16 %v4943
        %v5072 = vunpack.c.l.b16 %v4944
        %v5073 = vunpack.c.l.b16 %v4945
        %v5074 = vunpack.c.l.b16 %v4946
        %v5075 = vunpack.c.l.b16 %v4947
        %v5076 = vunpack.c.l.b16 %v4948
        %v5077 = vunpack.c.l.b16 %v4949
        %v5078 = vunpack.c.l.b16 %v4950
        %v5079 = vunpack.c.l.b16 %v4951
        %v5080 = vunpack.c.l.b16 %v4952
        %v5081 = vunpack.c.l.b16 %v4953
        %v5082 = vunpack.c.l.b16 %v4954
        %v5083 = vunpack.c.l.b16 %v4955
        %v5084 = vunpack.c.l.b16 %v4956
        %v5085 = vunpack.c.l.b16 %v4957
        %v5086 = vunpack.c.l.b16 %v4958
        %v5087 = vunpack.c.l.b16 %v4959
        %v5088 = vunpack.c.l.b16 %v4960
        %v5089 = vunpack.c.l.b16 %v4961
        %v5090 = vunpack.c.l.b16 %v4962
        %v5091 = vunpack.c.l.b16 %v4963
        %v5092 = vunpack.c.l.b16 %v4964
        %v5093 = vrot.slane %v5029, 7
        %v5094 = vrot.slane %v5030, 6
        %vm5095 = vcmask 1042434
        %v5096 = vsel %vm5095, %v5094, %v5093
        %v5097 = vrot.slane %v5031, 5
        %vm5098 = vcmask 1043459
        %v5099 = vsel %vm5098, %v5097, %v5096
        %v5100 = vrot.slane %v5032, 4
        %vm5101 = vcmask 1044484
        %v5102 = vsel %vm5101, %v5100, %v5099
        %v5103 = vrot.slane %v5033, 3
        %vm5104 = vcmask 1045509
        %v5105 = vsel %vm5104, %v5103, %v5102
        %v5106 = vrot.slane %v5034, 2
        %vm5107 = vcmask 1046534
        %v5108 = vsel %vm5107, %v5106, %v5105
        %v5109 = vrot.slane %v5035, 1
        %vm5110 = vcmask 1047559
        %v5111 = vsel %vm5110, %v5109, %v5108
        %v5112 = vrot.slane %v5037, 7
        %v5113 = vrot.slane %v5038, 6
        %v5114 = vsel %vm5095, %v5113, %v5112
        %v5115 = vrot.slane %v5039, 5
        %v5116 = vsel %vm5098, %v5115, %v5114
        %v5117 = vrot.slane %v5040, 4
        %v5118 = vsel %vm5101, %v5117, %v5116
        %v5119 = vrot.slane %v5041, 3
        %v5120 = vsel %vm5104, %v5119, %v5118
        %v5121 = vrot.slane %v5042, 2
        %v5122 = vsel %vm5107, %v5121, %v5120
        %v5123 = vrot.slane %v5043, 1
        %v5124 = vsel %vm5110, %v5123, %v5122
        %v5125 = vrot.slane %v5045, 7
        %v5126 = vrot.slane %v5046, 6
        %v5127 = vsel %vm5095, %v5126, %v5125
        %v5128 = vrot.slane %v5047, 5
        %v5129 = vsel %vm5098, %v5128, %v5127
        %v5130 = vrot.slane %v5048, 4
        %v5131 = vsel %vm5101, %v5130, %v5129
        %v5132 = vrot.slane %v5049, 3
        %v5133 = vsel %vm5104, %v5132, %v5131
        %v5134 = vrot.slane %v5050, 2
        %v5135 = vsel %vm5107, %v5134, %v5133
        %v5136 = vrot.slane %v5051, 1
        %v5137 = vsel %vm5110, %v5136, %v5135
        %v5138 = vrot.slane %v5053, 7
        %v5139 = vrot.slane %v5054, 6
        %v5140 = vsel %vm5095, %v5139, %v5138
        %v5141 = vrot.slane %v5055, 5
        %v5142 = vsel %vm5098, %v5141, %v5140
        %v5143 = vrot.slane %v5056, 4
        %v5144 = vsel %vm5101, %v5143, %v5142
        %v5145 = vrot.slane %v5057, 3
        %v5146 = vsel %vm5104, %v5145, %v5144
        %v5147 = vrot.slane %v5058, 2
        %v5148 = vsel %vm5107, %v5147, %v5146
        %v5149 = vrot.slane %v5059, 1
        %v5150 = vsel %vm5110, %v5149, %v5148
        %v5151 = vrot.slane %v5061, 7
        %v5152 = vrot.slane %v5062, 6
        %v5153 = vsel %vm5095, %v5152, %v5151
        %v5154 = vrot.slane %v5063, 5
        %v5155 = vsel %vm5098, %v5154, %v5153
        %v5156 = vrot.slane %v5064, 4
        %v5157 = vsel %vm5101, %v5156, %v5155
        %v5158 = vrot.slane %v5065, 3
        %v5159 = vsel %vm5104, %v5158, %v5157
        %v5160 = vrot.slane %v5066, 2
        %v5161 = vsel %vm5107, %v5160, %v5159
        %v5162 = vrot.slane %v5067, 1
        %v5163 = vsel %vm5110, %v5162, %v5161
        %v5164 = vrot.slane %v5069, 7
        %v5165 = vrot.slane %v5070, 6
        %v5166 = vsel %vm5095, %v5165, %v5164
        %v5167 = vrot.slane %v5071, 5
        %v5168 = vsel %vm5098, %v5167, %v5166
        %v5169 = vrot.slane %v5072, 4
        %v5170 = vsel %vm5101, %v5169, %v5168
        %v5171 = vrot.slane %v5073, 3
        %v5172 = vsel %vm5104, %v5171, %v5170
        %v5173 = vrot.slane %v5074, 2
        %v5174 = vsel %vm5107, %v5173, %v5172
        %v5175 = vrot.slane %v5075, 1
        %v5176 = vsel %vm5110, %v5175, %v5174
        %v5177 = vrot.slane %v5077, 7
        %v5178 = vrot.slane %v5078, 6
        %v5179 = vsel %vm5095, %v5178, %v5177
        %v5180 = vrot.slane %v5079, 5
        %v5181 = vsel %vm5098, %v5180, %v5179
        %v5182 = vrot.slane %v5080, 4
        %v5183 = vsel %vm5101, %v5182, %v5181
        %v5184 = vrot.slane %v5081, 3
        %v5185 = vsel %vm5104, %v5184, %v5183
        %v5186 = vrot.slane %v5082, 2
        %v5187 = vsel %vm5107, %v5186, %v5185
        %v5188 = vrot.slane %v5083, 1
        %v5189 = vsel %vm5110, %v5188, %v5187
        %v5190 = vrot.slane %v5085, 7
        %v5191 = vrot.slane %v5086, 6
        %v5192 = vsel %vm5095, %v5191, %v5190
        %v5193 = vrot.slane %v5087, 5
        %v5194 = vsel %vm5098, %v5193, %v5192
        %v5195 = vrot.slane %v5088, 4
        %v5196 = vsel %vm5101, %v5195, %v5194
        %v5197 = vrot.slane %v5089, 3
        %v5198 = vsel %vm5104, %v5197, %v5196
        %v5199 = vrot.slane %v5090, 2
        %v5200 = vsel %vm5107, %v5199, %v5198
        %v5201 = vrot.slane %v5091, 1
        %v5202 = vsel %vm5110, %v5201, %v5200
        %v5203 = vpack.c.b16 %v5111, %v5111
        %v5204 = vpack.c.b16 %v5036, %v5036
        %v5205 = vpack.c.b16 %v5124, %v5124
        %v5206 = vpack.c.b16 %v5044, %v5044
        %v5207 = vpack.c.b16 %v5137, %v5137
        %v5208 = vpack.c.b16 %v5052, %v5052
        %v5209 = vpack.c.b16 %v5150, %v5150
        %v5210 = vpack.c.b16 %v5060, %v5060
        %v5211 = vpack.c.b16 %v5163, %v5163
        %v5212 = vpack.c.b16 %v5068, %v5068
        %v5213 = vpack.c.b16 %v5176, %v5176
        %v5214 = vpack.c.b16 %v5076, %v5076
        %v5215 = vpack.c.b16 %v5189, %v5189
        %v5216 = vpack.c.b16 %v5084, %v5084
        %v5217 = vpack.c.b16 %v5202, %v5202
        %v5218 = vpack.c.b16 %v5092, %v5092
        %s5235 = scalar_lea.vmem [#allocation3], 8
        %v5236 = vld [vmem:[%s5235] sm:$0xf]
        %v5237 = vsel %vm1270, %v5203, %v5236
        %5238 = vst [vmem:[%s5235] sm:$0xf] %v5237
        %v5239 = vld [vmem:[%s5235 + $0x4] sm:$0x1]
        %v5240 = vsel %vm1276, %v5204, %v5239
        %5241 = vst [vmem:[%s5235 + $0x4] sm:$0x1] %v5240
        %v5242 = vld [vmem:[%s5235 + $0x8] sm:$0xf]
        %v5243 = vsel %vm1270, %v5205, %v5242
        %5244 = vst [vmem:[%s5235 + $0x8] sm:$0xf] %v5243
        %v5245 = vld [vmem:[%s5235 + $0xc] sm:$0x1]
        %v5246 = vsel %vm1276, %v5206, %v5245
        %5247 = vst [vmem:[%s5235 + $0xc] sm:$0x1] %v5246
        %v5248 = vld [vmem:[%s5235 + $0x10] sm:$0xf]
        %v5249 = vsel %vm1270, %v5207, %v5248
        %5250 = vst [vmem:[%s5235 + $0x10] sm:$0xf] %v5249
        %v5251 = vld [vmem:[%s5235 + $0x14] sm:$0x1]
        %v5252 = vsel %vm1276, %v5208, %v5251
        %5253 = vst [vmem:[%s5235 + $0x14] sm:$0x1] %v5252
        %v5254 = vld [vmem:[%s5235 + $0x18] sm:$0xf]
        %v5255 = vsel %vm1270, %v5209, %v5254
        %5256 = vst [vmem:[%s5235 + $0x18] sm:$0xf] %v5255
        %v5257 = vld [vmem:[%s5235 + $0x1c] sm:$0x1]
        %v5258 = vsel %vm1276, %v5210, %v5257
        %5259 = vst [vmem:[%s5235 + $0x1c] sm:$0x1] %v5258
        %v5260 = vld [vmem:[%s5235 + $0x20] sm:$0xf]
        %v5261 = vsel %vm1270, %v5211, %v5260
        %5262 = vst [vmem:[%s5235 + $0x20] sm:$0xf] %v5261
        %v5263 = vld [vmem:[%s5235 + $0x24] sm:$0x1]
        %v5264 = vsel %vm1276, %v5212, %v5263
        %5265 = vst [vmem:[%s5235 + $0x24] sm:$0x1] %v5264
        %v5266 = vld [vmem:[%s5235 + $0x28] sm:$0xf]
        %v5267 = vsel %vm1270, %v5213, %v5266
        %5268 = vst [vmem:[%s5235 + $0x28] sm:$0xf] %v5267
        %v5269 = vld [vmem:[%s5235 + $0x2c] sm:$0x1]
        %v5270 = vsel %vm1276, %v5214, %v5269
        %5271 = vst [vmem:[%s5235 + $0x2c] sm:$0x1] %v5270
        %v5272 = vld [vmem:[%s5235 + $0x30] sm:$0xf]
        %v5273 = vsel %vm1270, %v5215, %v5272
        %5274 = vst [vmem:[%s5235 + $0x30] sm:$0xf] %v5273
        %v5275 = vld [vmem:[%s5235 + $0x34] sm:$0x1]
        %v5276 = vsel %vm1276, %v5216, %v5275
        %5277 = vst [vmem:[%s5235 + $0x34] sm:$0x1] %v5276
        %v5278 = vld [vmem:[%s5235 + $0x38] sm:$0xf]
        %v5279 = vsel %vm1270, %v5217, %v5278
        %5280 = vst [vmem:[%s5235 + $0x38] sm:$0xf] %v5279
        %v5281 = vld [vmem:[%s5235 + $0x3c] sm:$0x1]
        %v5282 = vsel %vm1276, %v5218, %v5281
        %5283 = vst [vmem:[%s5235 + $0x3c] sm:$0x1] %v5282
        %v5284 = vld [vmem:[#allocation3] sm:$0xf]
        %v5285 = vld [vmem:[#allocation3 + $0x8] sm:$0xf]
        %v5286 = vld [vmem:[#allocation3 + $0x10] sm:$0xf]
        %v5287 = vld [vmem:[#allocation3 + $0x18] sm:$0xf]
        %v5288 = vld [vmem:[#allocation3 + $0x20] sm:$0xf]
        %v5289 = vld [vmem:[#allocation3 + $0x28] sm:$0xf]
        %v5290 = vld [vmem:[#allocation3 + $0x30] sm:$0xf]
        %v5291 = vld [vmem:[#allocation3 + $0x38] sm:$0xf]
        %v5292 = vld [vmem:[#allocation3 + $0x4] sm:$0x1]
        %v5293 = vld [vmem:[#allocation3 + $0xc] sm:$0x1]
        %v5294 = vld [vmem:[#allocation3 + $0x14] sm:$0x1]
        %v5295 = vld [vmem:[#allocation3 + $0x1c] sm:$0x1]
        %v5296 = vld [vmem:[#allocation3 + $0x24] sm:$0x1]
        %v5297 = vld [vmem:[#allocation3 + $0x2c] sm:$0x1]
        %v5298 = vld [vmem:[#allocation3 + $0x34] sm:$0x1]
        %v5299 = vld [vmem:[#allocation3 + $0x3c] sm:$0x1]
        %v5301 = vshrl.u32 %v5284, 16
        %v5303 = vrot.slane %v5301, 4
        %v5304 = vshll.u32 %v5284, 16
        %v5306 = vrot.slane %v5304, 5
        %v5307 = vor.u32 %v5303, %v5306
        %v5308 = vrot.slane %v5307, 4
        %v5310 = vshll.u32 %v5292, 16
        %v5312 = vrot.slane %v5310, 5
        %v5313 = vsel %vm1435, %v5308, %v5312
        %v5315 = vshrl.u32 %v5285, 16
        %v5317 = vrot.slane %v5315, 4
        %v5318 = vshll.u32 %v5285, 16
        %v5320 = vrot.slane %v5318, 5
        %v5321 = vor.u32 %v5317, %v5320
        %v5322 = vrot.slane %v5321, 4
        %v5324 = vshll.u32 %v5293, 16
        %v5326 = vrot.slane %v5324, 5
        %v5327 = vsel %vm1435, %v5322, %v5326
        %v5329 = vshrl.u32 %v5286, 16
        %v5331 = vrot.slane %v5329, 4
        %v5332 = vshll.u32 %v5286, 16
        %v5334 = vrot.slane %v5332, 5
        %v5335 = vor.u32 %v5331, %v5334
        %v5336 = vrot.slane %v5335, 4
        %v5338 = vshll.u32 %v5294, 16
        %v5340 = vrot.slane %v5338, 5
        %v5341 = vsel %vm1435, %v5336, %v5340
        %v5343 = vshrl.u32 %v5287, 16
        %v5345 = vrot.slane %v5343, 4
        %v5346 = vshll.u32 %v5287, 16
        %v5348 = vrot.slane %v5346, 5
        %v5349 = vor.u32 %v5345, %v5348
        %v5350 = vrot.slane %v5349, 4
        %v5352 = vshll.u32 %v5295, 16
        %v5354 = vrot.slane %v5352, 5
        %v5355 = vsel %vm1435, %v5350, %v5354
        %v5357 = vshrl.u32 %v5288, 16
        %v5359 = vrot.slane %v5357, 4
        %v5360 = vshll.u32 %v5288, 16
        %v5362 = vrot.slane %v5360, 5
        %v5363 = vor.u32 %v5359, %v5362
        %v5364 = vrot.slane %v5363, 4
        %v5366 = vshll.u32 %v5296, 16
        %v5368 = vrot.slane %v5366, 5
        %v5369 = vsel %vm1435, %v5364, %v5368
        %v5371 = vshrl.u32 %v5289, 16
        %v5373 = vrot.slane %v5371, 4
        %v5374 = vshll.u32 %v5289, 16
        %v5376 = vrot.slane %v5374, 5
        %v5377 = vor.u32 %v5373, %v5376
        %v5378 = vrot.slane %v5377, 4
        %v5380 = vshll.u32 %v5297, 16
        %v5382 = vrot.slane %v5380, 5
        %v5383 = vsel %vm1435, %v5378, %v5382
        %v5385 = vshrl.u32 %v5290, 16
        %v5387 = vrot.slane %v5385, 4
        %v5388 = vshll.u32 %v5290, 16
        %v5390 = vrot.slane %v5388, 5
        %v5391 = vor.u32 %v5387, %v5390
        %v5392 = vrot.slane %v5391, 4
        %v5394 = vshll.u32 %v5298, 16
        %v5396 = vrot.slane %v5394, 5
        %v5397 = vsel %vm1435, %v5392, %v5396
        %v5399 = vshrl.u32 %v5291, 16
        %v5401 = vrot.slane %v5399, 4
        %v5402 = vshll.u32 %v5291, 16
        %v5404 = vrot.slane %v5402, 5
        %v5405 = vor.u32 %v5401, %v5404
        %v5406 = vrot.slane %v5405, 4
        %v5408 = vshll.u32 %v5299, 16
        %v5410 = vrot.slane %v5408, 5
        %v5411 = vsel %vm1435, %v5406, %v5410
        %v5412 = vld [vmem:[#allocation3] sm:$0xe]
        %v5413 = vld [vmem:[#allocation3 + $0x8] sm:$0xe]
        %v5414 = vld [vmem:[#allocation3 + $0x10] sm:$0xe]
        %v5415 = vld [vmem:[#allocation3 + $0x18] sm:$0xe]
        %v5416 = vld [vmem:[#allocation3 + $0x20] sm:$0xe]
        %v5417 = vld [vmem:[#allocation3 + $0x28] sm:$0xe]
        %v5418 = vld [vmem:[#allocation3 + $0x30] sm:$0xe]
        %v5419 = vld [vmem:[#allocation3 + $0x38] sm:$0xe]
        %v5436 = vrot.slane %v5412, 5
        %v5437 = vrot.slane %v5436, 4
        %v5438 = vrot.slane %v5292, 5
        %v5439 = vsel %vm1886, %v5437, %v5438
        %v5440 = vrot.slane %v5413, 5
        %v5441 = vrot.slane %v5440, 4
        %v5442 = vrot.slane %v5293, 5
        %v5443 = vsel %vm1886, %v5441, %v5442
        %v5444 = vrot.slane %v5414, 5
        %v5445 = vrot.slane %v5444, 4
        %v5446 = vrot.slane %v5294, 5
        %v5447 = vsel %vm1886, %v5445, %v5446
        %v5448 = vrot.slane %v5415, 5
        %v5449 = vrot.slane %v5448, 4
        %v5450 = vrot.slane %v5295, 5
        %v5451 = vsel %vm1886, %v5449, %v5450
        %v5452 = vrot.slane %v5416, 5
        %v5453 = vrot.slane %v5452, 4
        %v5454 = vrot.slane %v5296, 5
        %v5455 = vsel %vm1886, %v5453, %v5454
        %v5456 = vrot.slane %v5417, 5
        %v5457 = vrot.slane %v5456, 4
        %v5458 = vrot.slane %v5297, 5
        %v5459 = vsel %vm1886, %v5457, %v5458
        %v5460 = vrot.slane %v5418, 5
        %v5461 = vrot.slane %v5460, 4
        %v5462 = vrot.slane %v5298, 5
        %v5463 = vsel %vm1886, %v5461, %v5462
        %v5464 = vrot.slane %v5419, 5
        %v5465 = vrot.slane %v5464, 4
        %v5466 = vrot.slane %v5299, 5
        %v5467 = vsel %vm1886, %v5465, %v5466
        %v5468 = vld [vmem:[%s5235] sm:$0xf]
        %v5469 = vld [vmem:[%s5235 + $0x8] sm:$0xf]
        %v5470 = vld [vmem:[%s5235 + $0x10] sm:$0xf]
        %v5471 = vld [vmem:[%s5235 + $0x18] sm:$0xf]
        %v5472 = vld [vmem:[%s5235 + $0x20] sm:$0xf]
        %v5473 = vld [vmem:[%s5235 + $0x28] sm:$0xf]
        %v5474 = vld [vmem:[%s5235 + $0x30] sm:$0xf]
        %v5475 = vld [vmem:[%s5235 + $0x38] sm:$0xf]
        %v5476 = vld [vmem:[%s5235 + $0x4] sm:$0x1]
        %v5477 = vld [vmem:[%s5235 + $0xc] sm:$0x1]
        %v5478 = vld [vmem:[%s5235 + $0x14] sm:$0x1]
        %v5479 = vld [vmem:[%s5235 + $0x1c] sm:$0x1]
        %v5480 = vld [vmem:[%s5235 + $0x24] sm:$0x1]
        %v5481 = vld [vmem:[%s5235 + $0x2c] sm:$0x1]
        %v5482 = vld [vmem:[%s5235 + $0x34] sm:$0x1]
        %v5483 = vld [vmem:[%s5235 + $0x3c] sm:$0x1]
        %v5485 = vshrl.u32 %v5468, 16
        %v5487 = vrot.slane %v5485, 4
        %v5488 = vshll.u32 %v5468, 16
        %v5490 = vrot.slane %v5488, 5
        %v5491 = vor.u32 %v5487, %v5490
        %v5492 = vrot.slane %v5491, 4
        %v5494 = vshll.u32 %v5476, 16
        %v5496 = vrot.slane %v5494, 5
        %v5497 = vsel %vm1435, %v5492, %v5496
        %v5499 = vshrl.u32 %v5469, 16
        %v5501 = vrot.slane %v5499, 4
        %v5502 = vshll.u32 %v5469, 16
        %v5504 = vrot.slane %v5502, 5
        %v5505 = vor.u32 %v5501, %v5504
        %v5506 = vrot.slane %v5505, 4
        %v5508 = vshll.u32 %v5477, 16
        %v5510 = vrot.slane %v5508, 5
        %v5511 = vsel %vm1435, %v5506, %v5510
        %v5513 = vshrl.u32 %v5470, 16
        %v5515 = vrot.slane %v5513, 4
        %v5516 = vshll.u32 %v5470, 16
        %v5518 = vrot.slane %v5516, 5
        %v5519 = vor.u32 %v5515, %v5518
        %v5520 = vrot.slane %v5519, 4
        %v5522 = vshll.u32 %v5478, 16
        %v5524 = vrot.slane %v5522, 5
        %v5525 = vsel %vm1435, %v5520, %v5524
        %v5527 = vshrl.u32 %v5471, 16
        %v5529 = vrot.slane %v5527, 4
        %v5530 = vshll.u32 %v5471, 16
        %v5532 = vrot.slane %v5530, 5
        %v5533 = vor.u32 %v5529, %v5532
        %v5534 = vrot.slane %v5533, 4
        %v5536 = vshll.u32 %v5479, 16
        %v5538 = vrot.slane %v5536, 5
        %v5539 = vsel %vm1435, %v5534, %v5538
        %v5541 = vshrl.u32 %v5472, 16
        %v5543 = vrot.slane %v5541, 4
        %v5544 = vshll.u32 %v5472, 16
        %v5546 = vrot.slane %v5544, 5
        %v5547 = vor.u32 %v5543, %v5546
        %v5548 = vrot.slane %v5547, 4
        %v5550 = vshll.u32 %v5480, 16
        %v5552 = vrot.slane %v5550, 5
        %v5553 = vsel %vm1435, %v5548, %v5552
        %v5555 = vshrl.u32 %v5473, 16
        %v5557 = vrot.slane %v5555, 4
        %v5558 = vshll.u32 %v5473, 16
        %v5560 = vrot.slane %v5558, 5
        %v5561 = vor.u32 %v5557, %v5560
        %v5562 = vrot.slane %v5561, 4
        %v5564 = vshll.u32 %v5481, 16
        %v5566 = vrot.slane %v5564, 5
        %v5567 = vsel %vm1435, %v5562, %v5566
        %v5569 = vshrl.u32 %v5474, 16
        %v5571 = vrot.slane %v5569, 4
        %v5572 = vshll.u32 %v5474, 16
        %v5574 = vrot.slane %v5572, 5
        %v5575 = vor.u32 %v5571, %v5574
        %v5576 = vrot.slane %v5575, 4
        %v5578 = vshll.u32 %v5482, 16
        %v5580 = vrot.slane %v5578, 5
        %v5581 = vsel %vm1435, %v5576, %v5580
        %v5583 = vshrl.u32 %v5475, 16
        %v5585 = vrot.slane %v5583, 4
        %v5586 = vshll.u32 %v5475, 16
        %v5588 = vrot.slane %v5586, 5
        %v5589 = vor.u32 %v5585, %v5588
        %v5590 = vrot.slane %v5589, 4
        %v5592 = vshll.u32 %v5483, 16
        %v5594 = vrot.slane %v5592, 5
        %v5595 = vsel %vm1435, %v5590, %v5594
        %v5596 = vld [vmem:[%s5235] sm:$0xe]
        %v5597 = vld [vmem:[%s5235 + $0x8] sm:$0xe]
        %v5598 = vld [vmem:[%s5235 + $0x10] sm:$0xe]
        %v5599 = vld [vmem:[%s5235 + $0x18] sm:$0xe]
        %v5600 = vld [vmem:[%s5235 + $0x20] sm:$0xe]
        %v5601 = vld [vmem:[%s5235 + $0x28] sm:$0xe]
        %v5602 = vld [vmem:[%s5235 + $0x30] sm:$0xe]
        %v5603 = vld [vmem:[%s5235 + $0x38] sm:$0xe]
        %v5620 = vrot.slane %v5596, 5
        %v5621 = vrot.slane %v5620, 4
        %v5622 = vrot.slane %v5476, 5
        %v5623 = vsel %vm1886, %v5621, %v5622
        %v5624 = vrot.slane %v5597, 5
        %v5625 = vrot.slane %v5624, 4
        %v5626 = vrot.slane %v5477, 5
        %v5627 = vsel %vm1886, %v5625, %v5626
        %v5628 = vrot.slane %v5598, 5
        %v5629 = vrot.slane %v5628, 4
        %v5630 = vrot.slane %v5478, 5
        %v5631 = vsel %vm1886, %v5629, %v5630
        %v5632 = vrot.slane %v5599, 5
        %v5633 = vrot.slane %v5632, 4
        %v5634 = vrot.slane %v5479, 5
        %v5635 = vsel %vm1886, %v5633, %v5634
        %v5636 = vrot.slane %v5600, 5
        %v5637 = vrot.slane %v5636, 4
        %v5638 = vrot.slane %v5480, 5
        %v5639 = vsel %vm1886, %v5637, %v5638
        %v5640 = vrot.slane %v5601, 5
        %v5641 = vrot.slane %v5640, 4
        %v5642 = vrot.slane %v5481, 5
        %v5643 = vsel %vm1886, %v5641, %v5642
        %v5644 = vrot.slane %v5602, 5
        %v5645 = vrot.slane %v5644, 4
        %v5646 = vrot.slane %v5482, 5
        %v5647 = vsel %vm1886, %v5645, %v5646
        %v5648 = vrot.slane %v5603, 5
        %v5649 = vrot.slane %v5648, 4
        %v5650 = vrot.slane %v5483, 5
        %v5651 = vsel %vm1886, %v5649, %v5650
        %s5652 = scalar_lea.vmem [#allocation3], 16
        %v5653 = vld [vmem:[%s5652] sm:$0xf]
        %v5654 = vld [vmem:[%s5652 + $0x8] sm:$0xf]
        %v5655 = vld [vmem:[%s5652 + $0x10] sm:$0xf]
        %v5656 = vld [vmem:[%s5652 + $0x18] sm:$0xf]
        %v5657 = vld [vmem:[%s5652 + $0x20] sm:$0xf]
        %v5658 = vld [vmem:[%s5652 + $0x28] sm:$0xf]
        %v5659 = vld [vmem:[%s5652 + $0x30] sm:$0xf]
        %v5660 = vld [vmem:[%s5652 + $0x38] sm:$0xf]
        %v5661 = vld [vmem:[%s5652 + $0x4] sm:$0x1]
        %v5662 = vld [vmem:[%s5652 + $0xc] sm:$0x1]
        %v5663 = vld [vmem:[%s5652 + $0x14] sm:$0x1]
        %v5664 = vld [vmem:[%s5652 + $0x1c] sm:$0x1]
        %v5665 = vld [vmem:[%s5652 + $0x24] sm:$0x1]
        %v5666 = vld [vmem:[%s5652 + $0x2c] sm:$0x1]
        %v5667 = vld [vmem:[%s5652 + $0x34] sm:$0x1]
        %v5668 = vld [vmem:[%s5652 + $0x3c] sm:$0x1]
        %v5670 = vshrl.u32 %v5653, 16
        %v5672 = vrot.slane %v5670, 4
        %v5673 = vshll.u32 %v5653, 16
        %v5675 = vrot.slane %v5673, 5
        %v5676 = vor.u32 %v5672, %v5675
        %v5677 = vrot.slane %v5676, 4
        %v5679 = vshll.u32 %v5661, 16
        %v5681 = vrot.slane %v5679, 5
        %v5682 = vsel %vm1435, %v5677, %v5681
        %v5684 = vshrl.u32 %v5654, 16
        %v5686 = vrot.slane %v5684, 4
        %v5687 = vshll.u32 %v5654, 16
        %v5689 = vrot.slane %v5687, 5
        %v5690 = vor.u32 %v5686, %v5689
        %v5691 = vrot.slane %v5690, 4
        %v5693 = vshll.u32 %v5662, 16
        %v5695 = vrot.slane %v5693, 5
        %v5696 = vsel %vm1435, %v5691, %v5695
        %v5698 = vshrl.u32 %v5655, 16
        %v5700 = vrot.slane %v5698, 4
        %v5701 = vshll.u32 %v5655, 16
        %v5703 = vrot.slane %v5701, 5
        %v5704 = vor.u32 %v5700, %v5703
        %v5705 = vrot.slane %v5704, 4
        %v5707 = vshll.u32 %v5663, 16
        %v5709 = vrot.slane %v5707, 5
        %v5710 = vsel %vm1435, %v5705, %v5709
        %v5712 = vshrl.u32 %v5656, 16
        %v5714 = vrot.slane %v5712, 4
        %v5715 = vshll.u32 %v5656, 16
        %v5717 = vrot.slane %v5715, 5
        %v5718 = vor.u32 %v5714, %v5717
        %v5719 = vrot.slane %v5718, 4
        %v5721 = vshll.u32 %v5664, 16
        %v5723 = vrot.slane %v5721, 5
        %v5724 = vsel %vm1435, %v5719, %v5723
        %v5726 = vshrl.u32 %v5657, 16
        %v5728 = vrot.slane %v5726, 4
        %v5729 = vshll.u32 %v5657, 16
        %v5731 = vrot.slane %v5729, 5
        %v5732 = vor.u32 %v5728, %v5731
        %v5733 = vrot.slane %v5732, 4
        %v5735 = vshll.u32 %v5665, 16
        %v5737 = vrot.slane %v5735, 5
        %v5738 = vsel %vm1435, %v5733, %v5737
        %v5740 = vshrl.u32 %v5658, 16
        %v5742 = vrot.slane %v5740, 4
        %v5743 = vshll.u32 %v5658, 16
        %v5745 = vrot.slane %v5743, 5
        %v5746 = vor.u32 %v5742, %v5745
        %v5747 = vrot.slane %v5746, 4
        %v5749 = vshll.u32 %v5666, 16
        %v5751 = vrot.slane %v5749, 5
        %v5752 = vsel %vm1435, %v5747, %v5751
        %v5754 = vshrl.u32 %v5659, 16
        %v5756 = vrot.slane %v5754, 4
        %v5757 = vshll.u32 %v5659, 16
        %v5759 = vrot.slane %v5757, 5
        %v5760 = vor.u32 %v5756, %v5759
        %v5761 = vrot.slane %v5760, 4
        %v5763 = vshll.u32 %v5667, 16
        %v5765 = vrot.slane %v5763, 5
        %v5766 = vsel %vm1435, %v5761, %v5765
        %v5768 = vshrl.u32 %v5660, 16
        %v5770 = vrot.slane %v5768, 4
        %v5771 = vshll.u32 %v5660, 16
        %v5773 = vrot.slane %v5771, 5
        %v5774 = vor.u32 %v5770, %v5773
        %v5775 = vrot.slane %v5774, 4
        %v5777 = vshll.u32 %v5668, 16
        %v5779 = vrot.slane %v5777, 5
        %v5780 = vsel %vm1435, %v5775, %v5779
        %v5781 = vld [vmem:[%s5652] sm:$0xe]
        %v5782 = vld [vmem:[%s5652 + $0x8] sm:$0xe]
        %v5783 = vld [vmem:[%s5652 + $0x10] sm:$0xe]
        %v5784 = vld [vmem:[%s5652 + $0x18] sm:$0xe]
        %v5785 = vld [vmem:[%s5652 + $0x20] sm:$0xe]
        %v5786 = vld [vmem:[%s5652 + $0x28] sm:$0xe]
        %v5787 = vld [vmem:[%s5652 + $0x30] sm:$0xe]
        %v5788 = vld [vmem:[%s5652 + $0x38] sm:$0xe]
        %v5805 = vrot.slane %v5781, 5
        %v5806 = vrot.slane %v5805, 4
        %v5807 = vrot.slane %v5661, 5
        %v5808 = vsel %vm1886, %v5806, %v5807
        %v5809 = vrot.slane %v5782, 5
        %v5810 = vrot.slane %v5809, 4
        %v5811 = vrot.slane %v5662, 5
        %v5812 = vsel %vm1886, %v5810, %v5811
        %v5813 = vrot.slane %v5783, 5
        %v5814 = vrot.slane %v5813, 4
        %v5815 = vrot.slane %v5663, 5
        %v5816 = vsel %vm1886, %v5814, %v5815
        %v5817 = vrot.slane %v5784, 5
        %v5818 = vrot.slane %v5817, 4
        %v5819 = vrot.slane %v5664, 5
        %v5820 = vsel %vm1886, %v5818, %v5819
        %v5821 = vrot.slane %v5785, 5
        %v5822 = vrot.slane %v5821, 4
        %v5823 = vrot.slane %v5665, 5
        %v5824 = vsel %vm1886, %v5822, %v5823
        %v5825 = vrot.slane %v5786, 5
        %v5826 = vrot.slane %v5825, 4
        %v5827 = vrot.slane %v5666, 5
        %v5828 = vsel %vm1886, %v5826, %v5827
        %v5829 = vrot.slane %v5787, 5
        %v5830 = vrot.slane %v5829, 4
        %v5831 = vrot.slane %v5667, 5
        %v5832 = vsel %vm1886, %v5830, %v5831
        %v5833 = vrot.slane %v5788, 5
        %v5834 = vrot.slane %v5833, 4
        %v5835 = vrot.slane %v5668, 5
        %v5836 = vsel %vm1886, %v5834, %v5835
        %v5845 = vunpack.c.l.b16 %v5284
        %v5846 = vunpack.c.l.b16 %v5285
        %v5847 = vunpack.c.l.b16 %v5286
        %v5848 = vunpack.c.l.b16 %v5287
        %v5849 = vunpack.c.l.b16 %v5288
        %v5850 = vunpack.c.l.b16 %v5289
        %v5851 = vunpack.c.l.b16 %v5290
        %v5852 = vunpack.c.l.b16 %v5291
        %v5853 = vpack.c.b16 %v5846, %v5845
        %v5854 = vpack.c.b16 %v5848, %v5847
        %v5855 = vpack.c.b16 %v5850, %v5849
        %v5856 = vpack.c.b16 %v5852, %v5851
        %v5857 = vunpack.c.l.b16 %v5313
        %v5858 = vunpack.c.l.b16 %v5327
        %v5859 = vunpack.c.l.b16 %v5341
        %v5860 = vunpack.c.l.b16 %v5355
        %v5861 = vunpack.c.l.b16 %v5369
        %v5862 = vunpack.c.l.b16 %v5383
        %v5863 = vunpack.c.l.b16 %v5397
        %v5864 = vunpack.c.l.b16 %v5411
        %v5865 = vpack.c.b16 %v5858, %v5857
        %v5866 = vpack.c.b16 %v5860, %v5859
        %v5867 = vpack.c.b16 %v5862, %v5861
        %v5868 = vpack.c.b16 %v5864, %v5863
        %5869 = vrot.lane.b32.xlu0 %v5865, 16
        %v5870 = vpop.permute.xlu0 %5869
        %5871 = vrot.lane.b32.xlu0 %v5866, 16
        %v5872 = vpop.permute.xlu0 %5871
        %5873 = vrot.lane.b32.xlu0 %v5867, 16
        %v5874 = vpop.permute.xlu0 %5873
        %5875 = vrot.lane.b32.xlu0 %v5868, 16
        %v5876 = vpop.permute.xlu0 %5875
        %v5877 = vunpack.c.l.b16 %v5439
        %v5878 = vunpack.c.l.b16 %v5443
        %v5879 = vunpack.c.l.b16 %v5447
        %v5880 = vunpack.c.l.b16 %v5451
        %v5881 = vunpack.c.l.b16 %v5455
        %v5882 = vunpack.c.l.b16 %v5459
        %v5883 = vunpack.c.l.b16 %v5463
        %v5884 = vunpack.c.l.b16 %v5467
        %v5885 = vpack.c.b16 %v5878, %v5877
        %v5886 = vpack.c.b16 %v5880, %v5879
        %v5887 = vpack.c.b16 %v5882, %v5881
        %v5888 = vpack.c.b16 %v5884, %v5883
        %5889 = vrot.lane.b32.xlu0 %v5885, 32
        %v5890 = vpop.permute.xlu0 %5889
        %5891 = vrot.lane.b32.xlu0 %v5886, 32
        %v5892 = vpop.permute.xlu0 %5891
        %5893 = vrot.lane.b32.xlu0 %v5887, 32
        %v5894 = vpop.permute.xlu0 %5893
        %5895 = vrot.lane.b32.xlu0 %v5888, 32
        %v5896 = vpop.permute.xlu0 %5895
        %v5905 = vunpack.c.l.b16 %v5468
        %v5906 = vunpack.c.l.b16 %v5469
        %v5907 = vunpack.c.l.b16 %v5470
        %v5908 = vunpack.c.l.b16 %v5471
        %v5909 = vunpack.c.l.b16 %v5472
        %v5910 = vunpack.c.l.b16 %v5473
        %v5911 = vunpack.c.l.b16 %v5474
        %v5912 = vunpack.c.l.b16 %v5475
        %v5913 = vpack.c.b16 %v5906, %v5905
        %v5914 = vpack.c.b16 %v5908, %v5907
        %v5915 = vpack.c.b16 %v5910, %v5909
        %v5916 = vpack.c.b16 %v5912, %v5911
        %5917 = vrot.lane.b32.xlu0 %v5913, 48
        %v5918 = vpop.permute.xlu0 %5917
        %5919 = vrot.lane.b32.xlu0 %v5914, 48
        %v5920 = vpop.permute.xlu0 %5919
        %5921 = vrot.lane.b32.xlu0 %v5915, 48
        %v5922 = vpop.permute.xlu0 %5921
        %5923 = vrot.lane.b32.xlu0 %v5916, 48
        %v5924 = vpop.permute.xlu0 %5923
        %v5925 = vunpack.c.l.b16 %v5497
        %v5926 = vunpack.c.l.b16 %v5511
        %v5927 = vunpack.c.l.b16 %v5525
        %v5928 = vunpack.c.l.b16 %v5539
        %v5929 = vunpack.c.l.b16 %v5553
        %v5930 = vunpack.c.l.b16 %v5567
        %v5931 = vunpack.c.l.b16 %v5581
        %v5932 = vunpack.c.l.b16 %v5595
        %v5933 = vpack.c.b16 %v5926, %v5925
        %v5934 = vpack.c.b16 %v5928, %v5927
        %v5935 = vpack.c.b16 %v5930, %v5929
        %v5936 = vpack.c.b16 %v5932, %v5931
        %5937 = vrot.lane.b32.xlu0 %v5933, 64
        %v5938 = vpop.permute.xlu0 %5937
        %5939 = vrot.lane.b32.xlu0 %v5934, 64
        %v5940 = vpop.permute.xlu0 %5939
        %5941 = vrot.lane.b32.xlu0 %v5935, 64
        %v5942 = vpop.permute.xlu0 %5941
        %5943 = vrot.lane.b32.xlu0 %v5936, 64
        %v5944 = vpop.permute.xlu0 %5943
        %v5945 = vunpack.c.l.b16 %v5623
        %v5946 = vunpack.c.l.b16 %v5627
        %v5947 = vunpack.c.l.b16 %v5631
        %v5948 = vunpack.c.l.b16 %v5635
        %v5949 = vunpack.c.l.b16 %v5639
        %v5950 = vunpack.c.l.b16 %v5643
        %v5951 = vunpack.c.l.b16 %v5647
        %v5952 = vunpack.c.l.b16 %v5651
        %v5953 = vpack.c.b16 %v5946, %v5945
        %v5954 = vpack.c.b16 %v5948, %v5947
        %v5955 = vpack.c.b16 %v5950, %v5949
        %v5956 = vpack.c.b16 %v5952, %v5951
        %5957 = vrot.lane.b32.xlu0 %v5953, 80
        %v5958 = vpop.permute.xlu0 %5957
        %5959 = vrot.lane.b32.xlu0 %v5954, 80
        %v5960 = vpop.permute.xlu0 %5959
        %5961 = vrot.lane.b32.xlu0 %v5955, 80
        %v5962 = vpop.permute.xlu0 %5961
        %5963 = vrot.lane.b32.xlu0 %v5956, 80
        %v5964 = vpop.permute.xlu0 %5963
        %v5973 = vunpack.c.l.b16 %v5653
        %v5974 = vunpack.c.l.b16 %v5654
        %v5975 = vunpack.c.l.b16 %v5655
        %v5976 = vunpack.c.l.b16 %v5656
        %v5977 = vunpack.c.l.b16 %v5657
        %v5978 = vunpack.c.l.b16 %v5658
        %v5979 = vunpack.c.l.b16 %v5659
        %v5980 = vunpack.c.l.b16 %v5660
        %v5981 = vpack.c.b16 %v5974, %v5973
        %v5982 = vpack.c.b16 %v5976, %v5975
        %v5983 = vpack.c.b16 %v5978, %v5977
        %v5984 = vpack.c.b16 %v5980, %v5979
        %5985 = vrot.lane.b32.xlu0 %v5981, 96
        %v5986 = vpop.permute.xlu0 %5985
        %5987 = vrot.lane.b32.xlu0 %v5982, 96
        %v5988 = vpop.permute.xlu0 %5987
        %5989 = vrot.lane.b32.xlu0 %v5983, 96
        %v5990 = vpop.permute.xlu0 %5989
        %5991 = vrot.lane.b32.xlu0 %v5984, 96
        %v5992 = vpop.permute.xlu0 %5991
        %v5993 = vunpack.c.l.b16 %v5682
        %v5994 = vunpack.c.l.b16 %v5696
        %v5995 = vunpack.c.l.b16 %v5710
        %v5996 = vunpack.c.l.b16 %v5724
        %v5997 = vunpack.c.l.b16 %v5738
        %v5998 = vunpack.c.l.b16 %v5752
        %v5999 = vunpack.c.l.b16 %v5766
        %v6000 = vunpack.c.l.b16 %v5780
        %v6001 = vpack.c.b16 %v5994, %v5993
        %v6002 = vpack.c.b16 %v5996, %v5995
        %v6003 = vpack.c.b16 %v5998, %v5997
        %v6004 = vpack.c.b16 %v6000, %v5999
        %6005 = vrot.lane.b32.xlu0 %v6001, 112
        %v6006 = vpop.permute.xlu0 %6005
        %6007 = vrot.lane.b32.xlu0 %v6002, 112
        %v6008 = vpop.permute.xlu0 %6007
        %6009 = vrot.lane.b32.xlu0 %v6003, 112
        %v6010 = vpop.permute.xlu0 %6009
        %6011 = vrot.lane.b32.xlu0 %v6004, 112
        %v6012 = vpop.permute.xlu0 %6011
        %v6013 = vunpack.c.l.b16 %v5808
        %v6014 = vunpack.c.l.b16 %v5812
        %v6015 = vunpack.c.l.b16 %v5816
        %v6016 = vunpack.c.l.b16 %v5820
        %v6017 = vunpack.c.l.b16 %v5824
        %v6018 = vunpack.c.l.b16 %v5828
        %v6019 = vunpack.c.l.b16 %v5832
        %v6020 = vunpack.c.l.b16 %v5836
        %v6021 = vpack.c.b16 %v6014, %v6013
        %v6022 = vpack.c.b16 %v6016, %v6015
        %v6023 = vpack.c.b16 %v6018, %v6017
        %v6024 = vpack.c.b16 %v6020, %v6019
        %v6027 = vsel %vm3920, %v5853, %v5870
        %v6030 = vsel %vm3920, %v5854, %v5872
        %v6033 = vsel %vm3920, %v5855, %v5874
        %v6036 = vsel %vm3920, %v5856, %v5876
        %v6038 = vsel %vm3969, %v6027, %v5890
        %v6040 = vsel %vm3969, %v6030, %v5892
        %v6042 = vsel %vm3969, %v6033, %v5894
        %v6044 = vsel %vm3969, %v6036, %v5896
        %v6046 = vsel %vm4002, %v6038, %v5918
        %v6048 = vsel %vm4002, %v6040, %v5920
        %v6050 = vsel %vm4002, %v6042, %v5922
        %v6052 = vsel %vm4002, %v6044, %v5924
        %v6054 = vsel %vm4035, %v6046, %v5938
        %v6056 = vsel %vm4035, %v6048, %v5940
        %v6058 = vsel %vm4035, %v6050, %v5942
        %v6060 = vsel %vm4035, %v6052, %v5944
        %v6062 = vsel %vm4068, %v6054, %v5958
        %v6064 = vsel %vm4068, %v6056, %v5960
        %v6066 = vsel %vm4068, %v6058, %v5962
        %v6068 = vsel %vm4068, %v6060, %v5964
        %v6070 = vsel %vm4101, %v6062, %v5986
        %v6072 = vsel %vm4101, %v6064, %v5988
        %v6074 = vsel %vm4101, %v6066, %v5990
        %v6076 = vsel %vm4101, %v6068, %v5992
        %v6078 = vsel %vm4134, %v6070, %v6006
        %v6081 = vsel %vm4134, %v6072, %v6008
        %v6084 = vsel %vm4134, %v6074, %v6010
        %v6087 = vsel %vm4134, %v6076, %v6012
        %v6089 = vld [vmem:[%s5] sm:$0xf]
        %v6090 = vld [vmem:[%s5 + $0x4] sm:$0xf]
        %v6091 = vld [vmem:[%s5 + $0x8] sm:$0xf]
        %v6092 = vld [vmem:[%s5 + $0xc] sm:$0xf]
        %v6093 = vld [vmem:[%s5 + $0x10] sm:$0xf]
        %v6094 = vld [vmem:[%s5 + $0x14] sm:$0xf]
        %v6095 = vld [vmem:[%s5 + $0x18] sm:$0xf]
        %v6096 = vld [vmem:[%s5 + $0x1c] sm:$0xf]
        %v6097 = vld [vmem:[%s5 + $0x20] sm:$0xf]
        %v6098 = vld [vmem:[%s5 + $0x24] sm:$0xf]
        %v6099 = vld [vmem:[%s5 + $0x28] sm:$0xf]
        %v6100 = vld [vmem:[%s5 + $0x2c] sm:$0xf]
        %v6101 = vld [vmem:[%s5 + $0x30] sm:$0xf]
        %v6102 = vld [vmem:[%s5 + $0x34] sm:$0xf]
        %v6103 = vld [vmem:[%s5 + $0x38] sm:$0xf]
        %v6104 = vld [vmem:[%s5 + $0x3c] sm:$0xf]
        %v6105 = vld [vmem:[%s5 + $0x40] sm:$0xf]
        %v6106 = vld [vmem:[%s5 + $0x44] sm:$0xf]
        %v6107 = vld [vmem:[%s6] sm:$0x1]
        %v6109 = vperm.slane %v6107, 0
        %v6129 = vunpack.c.l.b16 %v6089
        %v6130 = vunpack.c.l.b16 %v6090
        %v6131 = vunpack.c.l.b16 %v6091
        %v6132 = vunpack.c.l.b16 %v6092
        %v6133 = vunpack.c.l.b16 %v6093
        %v6134 = vunpack.c.l.b16 %v6094
        %v6135 = vunpack.c.l.b16 %v6095
        %v6136 = vunpack.c.l.b16 %v6096
        %v6137 = vunpack.c.l.b16 %v6097
        %v6138 = vunpack.c.l.b16 %v6098
        %v6139 = vunpack.c.l.b16 %v6099
        %v6140 = vunpack.c.l.b16 %v6100
        %v6141 = vunpack.c.l.b16 %v6101
        %v6142 = vunpack.c.l.b16 %v6102
        %v6143 = vunpack.c.l.b16 %v6103
        %v6144 = vunpack.c.l.b16 %v6104
        %v6145 = vunpack.c.l.b16 %v6105
        %v6146 = vunpack.c.l.b16 %v6106
        %v6147 = vpack.c.b16 %v6130, %v6129
        %v6148 = vpack.c.b16 %v6132, %v6131
        %v6149 = vpack.c.b16 %v6134, %v6133
        %v6150 = vpack.c.b16 %v6136, %v6135
        %v6151 = vpack.c.b16 %v6138, %v6137
        %v6152 = vpack.c.b16 %v6140, %v6139
        %v6153 = vpack.c.b16 %v6142, %v6141
        %v6154 = vpack.c.b16 %v6144, %v6143
        %v6155 = vpack.c.b16 %v6146, %v6145
        %v6166 = vsel %vm3920, %v6021, 0
        %v6169 = vsel %vm3920, %v6022, 0
        %v6172 = vsel %vm3920, %v6023, 0
        %v6175 = vsel %vm3920, %v6024, 0
        %6177 = vmatpush.bf16.msra.mxu0 %v6154
        %6178 = vmatpush.bf16.msra.mxu0 %v6153
        %6179 = vmatpush.bf16.msra.mxu0 %v6152
        %6180 = vmatpush.bf16.msra.mxu0 %v6151
        %6181 = vmatpush.bf16.msra.mxu0 %v6150
        %6182 = vmatpush.bf16.msra.mxu0 %v6149
        %6183 = vmatpush.bf16.msra.mxu0 %v6148
        %6184 = vmatpush.bf16.msra.mxu0 %v6147
        %6185 = vmatmul.bf16.gmra.mxu0 %v6078
        %v6186 = vpop.f32.mrf.mxu0
        %v6187 = vadd.f32 %v6109, %v6186
        %v6188 = vpop.f32.mrf.mxu0
        %v6189 = vadd.f32 %v6109, %v6188
        %6190 = vmatmul.bf16.gmra.mxu0 %v6081
        %v6191 = vpop.f32.mrf.mxu0
        %v6192 = vadd.f32 %v6109, %v6191
        %v6193 = vpop.f32.mrf.mxu0
        %v6194 = vadd.f32 %v6109, %v6193
        %6195 = vmatmul.bf16.gmra.mxu0 %v6084
        %v6196 = vpop.f32.mrf.mxu0
        %v6197 = vadd.f32 %v6109, %v6196
        %v6198 = vpop.f32.mrf.mxu0
        %v6199 = vadd.f32 %v6109, %v6198
        %6200 = vmatmul.bf16.gmra.mxu0 %v6087
        %v6201 = vpop.f32.mrf.mxu0
        %v6202 = vadd.f32 %v6109, %v6201
        %v6203 = vpop.f32.mrf.mxu0
        %v6204 = vadd.f32 %v6109, %v6203
        %6205 = vdwg.mxu0
        %6206 = vmatpush.bf16.msra.mxu0 0
        %6207 = vmatpush.bf16.msra.mxu0 0
        %6208 = vmatpush.bf16.msra.mxu0 0
        %6209 = vmatpush.bf16.msra.mxu0 0
        %6210 = vmatpush.bf16.msra.mxu0 0
        %6211 = vmatpush.bf16.msra.mxu0 0
        %6212 = vmatpush.bf16.msra.mxu0 0
        %6213 = vmatpush.bf16.msra.mxu0 %v6155
        %6214 = vmatmul.bf16.gmra.mxu0 %v6166
        %v6215 = vpop.f32.mrf.mxu0
        %v6216 = vadd.f32 %v6187, %v6215
        %v6217 = vpop.f32.mrf.mxu0
        %v6218 = vadd.f32 %v6189, %v6217
        %6219 = vmatmul.bf16.gmra.mxu0 %v6169
        %v6220 = vpop.f32.mrf.mxu0
        %v6221 = vadd.f32 %v6192, %v6220
        %v6222 = vpop.f32.mrf.mxu0
        %v6223 = vadd.f32 %v6194, %v6222
        %6224 = vmatmul.bf16.gmra.mxu0 %v6172
        %v6225 = vpop.f32.mrf.mxu0
        %v6226 = vadd.f32 %v6197, %v6225
        %v6227 = vpop.f32.mrf.mxu0
        %v6228 = vadd.f32 %v6199, %v6227
        %6229 = vmatmul.bf16.gmra.mxu0 %v6175
        %v6230 = vpop.f32.mrf.mxu0
        %v6231 = vadd.f32 %v6202, %v6230
        %v6232 = vpop.f32.mrf.mxu0
        %v6233 = vadd.f32 %v6204, %v6232
        %6234 = vdwg.mxu0
        %v6235 = vmax.f32 %v6216, 0.0
        %v6236 = vmax.f32 %v6218, 0.0
        %v6237 = vmax.f32 %v6221, 0.0
        %v6238 = vmax.f32 %v6223, 0.0
        %v6239 = vmax.f32 %v6226, 0.0
        %v6240 = vmax.f32 %v6228, 0.0
        %v6241 = vmax.f32 %v6231, 0.0
        %v6242 = vmax.f32 %v6233, 0.0
        %v6243 = vpack.c.bf16 %v6235, %v6235
        %v6244 = vpack.c.bf16 %v6236, %v6236
        %v6245 = vpack.c.bf16 %v6237, %v6237
        %v6246 = vpack.c.bf16 %v6238, %v6238
        %v6247 = vpack.c.bf16 %v6239, %v6239
        %v6248 = vpack.c.bf16 %v6240, %v6240
        %v6249 = vpack.c.bf16 %v6241, %v6241
        %v6250 = vpack.c.bf16 %v6242, %v6242
        %v6252 = vshrl.u32 %v6243, 16
        %v6254 = vrot.slane %v6252, 7
        %v6255 = vshll.u32 %v6243, 16
        %v6257 = vor.u32 %v6254, %v6255
        %v6258 = vrot.slane %v6254, 4
        %v6260 = vshrl.u32 %v6244, 16
        %v6262 = vrot.slane %v6260, 7
        %v6263 = vshll.u32 %v6244, 16
        %v6265 = vor.u32 %v6262, %v6263
        %v6266 = vrot.slane %v6262, 4
        %v6268 = vshrl.u32 %v6245, 16
        %v6270 = vrot.slane %v6268, 7
        %v6271 = vshll.u32 %v6245, 16
        %v6273 = vor.u32 %v6270, %v6271
        %v6274 = vrot.slane %v6270, 4
        %v6276 = vshrl.u32 %v6246, 16
        %v6278 = vrot.slane %v6276, 7
        %v6279 = vshll.u32 %v6246, 16
        %v6281 = vor.u32 %v6278, %v6279
        %v6282 = vrot.slane %v6278, 4
        %v6284 = vshrl.u32 %v6247, 16
        %v6286 = vrot.slane %v6284, 7
        %v6287 = vshll.u32 %v6247, 16
        %v6289 = vor.u32 %v6286, %v6287
        %v6290 = vrot.slane %v6286, 4
        %v6292 = vshrl.u32 %v6248, 16
        %v6294 = vrot.slane %v6292, 7
        %v6295 = vshll.u32 %v6248, 16
        %v6297 = vor.u32 %v6294, %v6295
        %v6298 = vrot.slane %v6294, 4
        %v6300 = vshrl.u32 %v6249, 16
        %v6302 = vrot.slane %v6300, 7
        %v6303 = vshll.u32 %v6249, 16
        %v6305 = vor.u32 %v6302, %v6303
        %v6306 = vrot.slane %v6302, 4
        %v6308 = vshrl.u32 %v6250, 16
        %v6310 = vrot.slane %v6308, 7
        %v6311 = vshll.u32 %v6250, 16
        %v6313 = vor.u32 %v6310, %v6311
        %v6314 = vrot.slane %v6310, 4
        %s6331 = scalar_lea.vmem [#allocation4], 8
        %vm6332 = vcmask 257024
        %vm6333 = vmand %vm6332, %vm1269
        %v6334 = vld [vmem:[%s6331] sm:$0xf]
        %v6335 = vsel %vm6333, %v6257, %v6334
        %6336 = vst [vmem:[%s6331] sm:$0xf] %v6335
        %vm6337 = vcmask 253952
        %vm6338 = vmand %vm6337, %vm944
        %v6339 = vld [vmem:[%s6331 + $0x4] sm:$0x1]
        %v6340 = vsel %vm6338, %v6258, %v6339
        %6341 = vst [vmem:[%s6331 + $0x4] sm:$0x1] %v6340
        %v6342 = vld [vmem:[%s6331 + $0x8] sm:$0xf]
        %v6343 = vsel %vm6333, %v6265, %v6342
        %6344 = vst [vmem:[%s6331 + $0x8] sm:$0xf] %v6343
        %v6345 = vld [vmem:[%s6331 + $0xc] sm:$0x1]
        %v6346 = vsel %vm6338, %v6266, %v6345
        %6347 = vst [vmem:[%s6331 + $0xc] sm:$0x1] %v6346
        %v6348 = vld [vmem:[%s6331 + $0x10] sm:$0xf]
        %v6349 = vsel %vm6333, %v6273, %v6348
        %6350 = vst [vmem:[%s6331 + $0x10] sm:$0xf] %v6349
        %v6351 = vld [vmem:[%s6331 + $0x14] sm:$0x1]
        %v6352 = vsel %vm6338, %v6274, %v6351
        %6353 = vst [vmem:[%s6331 + $0x14] sm:$0x1] %v6352
        %v6354 = vld [vmem:[%s6331 + $0x18] sm:$0xf]
        %v6355 = vsel %vm6333, %v6281, %v6354
        %6356 = vst [vmem:[%s6331 + $0x18] sm:$0xf] %v6355
        %v6357 = vld [vmem:[%s6331 + $0x1c] sm:$0x1]
        %v6358 = vsel %vm6338, %v6282, %v6357
        %6359 = vst [vmem:[%s6331 + $0x1c] sm:$0x1] %v6358
        %v6360 = vld [vmem:[%s6331 + $0x20] sm:$0xf]
        %v6361 = vsel %vm6333, %v6289, %v6360
        %6362 = vst [vmem:[%s6331 + $0x20] sm:$0xf] %v6361
        %v6363 = vld [vmem:[%s6331 + $0x24] sm:$0x1]
        %v6364 = vsel %vm6338, %v6290, %v6363
        %6365 = vst [vmem:[%s6331 + $0x24] sm:$0x1] %v6364
        %v6366 = vld [vmem:[%s6331 + $0x28] sm:$0xf]
        %v6367 = vsel %vm6333, %v6297, %v6366
        %6368 = vst [vmem:[%s6331 + $0x28] sm:$0xf] %v6367
        %v6369 = vld [vmem:[%s6331 + $0x2c] sm:$0x1]
        %v6370 = vsel %vm6338, %v6298, %v6369
        %6371 = vst [vmem:[%s6331 + $0x2c] sm:$0x1] %v6370
        %v6372 = vld [vmem:[%s6331 + $0x30] sm:$0xf]
        %v6373 = vsel %vm6333, %v6305, %v6372
        %6374 = vst [vmem:[%s6331 + $0x30] sm:$0xf] %v6373
        %v6375 = vld [vmem:[%s6331 + $0x34] sm:$0x1]
        %v6376 = vsel %vm6338, %v6306, %v6375
        %6377 = vst [vmem:[%s6331 + $0x34] sm:$0x1] %v6376
        %v6378 = vld [vmem:[%s6331 + $0x38] sm:$0xf]
        %v6379 = vsel %vm6333, %v6313, %v6378
        %6380 = vst [vmem:[%s6331 + $0x38] sm:$0xf] %v6379
        %v6381 = vld [vmem:[%s6331 + $0x3c] sm:$0x1]
        %v6382 = vsel %vm6338, %v6314, %v6381
        %6383 = vst [vmem:[%s6331 + $0x3c] sm:$0x1] %v6382
        %v6384 = vld [vmem:[#allocation4] sm:$0xf]
        %v6385 = vld [vmem:[#allocation4 + $0x8] sm:$0xf]
        %v6386 = vld [vmem:[#allocation4 + $0x10] sm:$0xf]
        %v6387 = vld [vmem:[#allocation4 + $0x18] sm:$0xf]
        %v6388 = vld [vmem:[#allocation4 + $0x20] sm:$0xf]
        %v6389 = vld [vmem:[#allocation4 + $0x28] sm:$0xf]
        %v6390 = vld [vmem:[#allocation4 + $0x30] sm:$0xf]
        %v6391 = vld [vmem:[#allocation4 + $0x38] sm:$0xf]
        %v6392 = vld [vmem:[#allocation4 + $0x4] sm:$0x1]
        %v6393 = vld [vmem:[#allocation4 + $0xc] sm:$0x1]
        %v6394 = vld [vmem:[#allocation4 + $0x14] sm:$0x1]
        %v6395 = vld [vmem:[#allocation4 + $0x1c] sm:$0x1]
        %v6396 = vld [vmem:[#allocation4 + $0x24] sm:$0x1]
        %v6397 = vld [vmem:[#allocation4 + $0x2c] sm:$0x1]
        %v6398 = vld [vmem:[#allocation4 + $0x34] sm:$0x1]
        %v6399 = vld [vmem:[#allocation4 + $0x3c] sm:$0x1]
        %v6401 = vshrl.u32 %v6384, 16
        %v6403 = vrot.slane %v6401, 4
        %v6404 = vshll.u32 %v6384, 16
        %v6406 = vrot.slane %v6404, 5
        %v6407 = vor.u32 %v6403, %v6406
        %v6408 = vrot.slane %v6407, 4
        %v6410 = vshll.u32 %v6392, 16
        %v6412 = vrot.slane %v6410, 5
        %v6413 = vsel %vm1435, %v6408, %v6412
        %v6415 = vshrl.u32 %v6385, 16
        %v6417 = vrot.slane %v6415, 4
        %v6418 = vshll.u32 %v6385, 16
        %v6420 = vrot.slane %v6418, 5
        %v6421 = vor.u32 %v6417, %v6420
        %v6422 = vrot.slane %v6421, 4
        %v6424 = vshll.u32 %v6393, 16
        %v6426 = vrot.slane %v6424, 5
        %v6427 = vsel %vm1435, %v6422, %v6426
        %v6429 = vshrl.u32 %v6386, 16
        %v6431 = vrot.slane %v6429, 4
        %v6432 = vshll.u32 %v6386, 16
        %v6434 = vrot.slane %v6432, 5
        %v6435 = vor.u32 %v6431, %v6434
        %v6436 = vrot.slane %v6435, 4
        %v6438 = vshll.u32 %v6394, 16
        %v6440 = vrot.slane %v6438, 5
        %v6441 = vsel %vm1435, %v6436, %v6440
        %v6443 = vshrl.u32 %v6387, 16
        %v6445 = vrot.slane %v6443, 4
        %v6446 = vshll.u32 %v6387, 16
        %v6448 = vrot.slane %v6446, 5
        %v6449 = vor.u32 %v6445, %v6448
        %v6450 = vrot.slane %v6449, 4
        %v6452 = vshll.u32 %v6395, 16
        %v6454 = vrot.slane %v6452, 5
        %v6455 = vsel %vm1435, %v6450, %v6454
        %v6457 = vshrl.u32 %v6388, 16
        %v6459 = vrot.slane %v6457, 4
        %v6460 = vshll.u32 %v6388, 16
        %v6462 = vrot.slane %v6460, 5
        %v6463 = vor.u32 %v6459, %v6462
        %v6464 = vrot.slane %v6463, 4
        %v6466 = vshll.u32 %v6396, 16
        %v6468 = vrot.slane %v6466, 5
        %v6469 = vsel %vm1435, %v6464, %v6468
        %v6471 = vshrl.u32 %v6389, 16
        %v6473 = vrot.slane %v6471, 4
        %v6474 = vshll.u32 %v6389, 16
        %v6476 = vrot.slane %v6474, 5
        %v6477 = vor.u32 %v6473, %v6476
        %v6478 = vrot.slane %v6477, 4
        %v6480 = vshll.u32 %v6397, 16
        %v6482 = vrot.slane %v6480, 5
        %v6483 = vsel %vm1435, %v6478, %v6482
        %v6485 = vshrl.u32 %v6390, 16
        %v6487 = vrot.slane %v6485, 4
        %v6488 = vshll.u32 %v6390, 16
        %v6490 = vrot.slane %v6488, 5
        %v6491 = vor.u32 %v6487, %v6490
        %v6492 = vrot.slane %v6491, 4
        %v6494 = vshll.u32 %v6398, 16
        %v6496 = vrot.slane %v6494, 5
        %v6497 = vsel %vm1435, %v6492, %v6496
        %v6499 = vshrl.u32 %v6391, 16
        %v6501 = vrot.slane %v6499, 4
        %v6502 = vshll.u32 %v6391, 16
        %v6504 = vrot.slane %v6502, 5
        %v6505 = vor.u32 %v6501, %v6504
        %v6506 = vrot.slane %v6505, 4
        %v6508 = vshll.u32 %v6399, 16
        %v6510 = vrot.slane %v6508, 5
        %v6511 = vsel %vm1435, %v6506, %v6510
        %v6512 = vld [vmem:[#allocation4] sm:$0xe]
        %v6513 = vld [vmem:[#allocation4 + $0x8] sm:$0xe]
        %v6514 = vld [vmem:[#allocation4 + $0x10] sm:$0xe]
        %v6515 = vld [vmem:[#allocation4 + $0x18] sm:$0xe]
        %v6516 = vld [vmem:[#allocation4 + $0x20] sm:$0xe]
        %v6517 = vld [vmem:[#allocation4 + $0x28] sm:$0xe]
        %v6518 = vld [vmem:[#allocation4 + $0x30] sm:$0xe]
        %v6519 = vld [vmem:[#allocation4 + $0x38] sm:$0xe]
        %v6536 = vrot.slane %v6512, 5
        %v6537 = vrot.slane %v6536, 4
        %v6538 = vrot.slane %v6392, 5
        %v6539 = vsel %vm1886, %v6537, %v6538
        %v6540 = vrot.slane %v6513, 5
        %v6541 = vrot.slane %v6540, 4
        %v6542 = vrot.slane %v6393, 5
        %v6543 = vsel %vm1886, %v6541, %v6542
        %v6544 = vrot.slane %v6514, 5
        %v6545 = vrot.slane %v6544, 4
        %v6546 = vrot.slane %v6394, 5
        %v6547 = vsel %vm1886, %v6545, %v6546
        %v6548 = vrot.slane %v6515, 5
        %v6549 = vrot.slane %v6548, 4
        %v6550 = vrot.slane %v6395, 5
        %v6551 = vsel %vm1886, %v6549, %v6550
        %v6552 = vrot.slane %v6516, 5
        %v6553 = vrot.slane %v6552, 4
        %v6554 = vrot.slane %v6396, 5
        %v6555 = vsel %vm1886, %v6553, %v6554
        %v6556 = vrot.slane %v6517, 5
        %v6557 = vrot.slane %v6556, 4
        %v6558 = vrot.slane %v6397, 5
        %v6559 = vsel %vm1886, %v6557, %v6558
        %v6560 = vrot.slane %v6518, 5
        %v6561 = vrot.slane %v6560, 4
        %v6562 = vrot.slane %v6398, 5
        %v6563 = vsel %vm1886, %v6561, %v6562
        %v6564 = vrot.slane %v6519, 5
        %v6565 = vrot.slane %v6564, 4
        %v6566 = vrot.slane %v6399, 5
        %v6567 = vsel %vm1886, %v6565, %v6566
        %v6568 = vld [vmem:[%s6331] sm:$0xf]
        %v6569 = vld [vmem:[%s6331 + $0x8] sm:$0xf]
        %v6570 = vld [vmem:[%s6331 + $0x10] sm:$0xf]
        %v6571 = vld [vmem:[%s6331 + $0x18] sm:$0xf]
        %v6572 = vld [vmem:[%s6331 + $0x20] sm:$0xf]
        %v6573 = vld [vmem:[%s6331 + $0x28] sm:$0xf]
        %v6574 = vld [vmem:[%s6331 + $0x30] sm:$0xf]
        %v6575 = vld [vmem:[%s6331 + $0x38] sm:$0xf]
        %v6576 = vld [vmem:[%s6331 + $0x4] sm:$0x1]
        %v6577 = vld [vmem:[%s6331 + $0xc] sm:$0x1]
        %v6578 = vld [vmem:[%s6331 + $0x14] sm:$0x1]
        %v6579 = vld [vmem:[%s6331 + $0x1c] sm:$0x1]
        %v6580 = vld [vmem:[%s6331 + $0x24] sm:$0x1]
        %v6581 = vld [vmem:[%s6331 + $0x2c] sm:$0x1]
        %v6582 = vld [vmem:[%s6331 + $0x34] sm:$0x1]
        %v6583 = vld [vmem:[%s6331 + $0x3c] sm:$0x1]
        %v6585 = vshrl.u32 %v6568, 16
        %v6587 = vrot.slane %v6585, 4
        %v6588 = vshll.u32 %v6568, 16
        %v6590 = vrot.slane %v6588, 5
        %v6591 = vor.u32 %v6587, %v6590
        %v6592 = vrot.slane %v6591, 4
        %v6594 = vshll.u32 %v6576, 16
        %v6596 = vrot.slane %v6594, 5
        %v6597 = vsel %vm1435, %v6592, %v6596
        %v6599 = vshrl.u32 %v6569, 16
        %v6601 = vrot.slane %v6599, 4
        %v6602 = vshll.u32 %v6569, 16
        %v6604 = vrot.slane %v6602, 5
        %v6605 = vor.u32 %v6601, %v6604
        %v6606 = vrot.slane %v6605, 4
        %v6608 = vshll.u32 %v6577, 16
        %v6610 = vrot.slane %v6608, 5
        %v6611 = vsel %vm1435, %v6606, %v6610
        %v6613 = vshrl.u32 %v6570, 16
        %v6615 = vrot.slane %v6613, 4
        %v6616 = vshll.u32 %v6570, 16
        %v6618 = vrot.slane %v6616, 5
        %v6619 = vor.u32 %v6615, %v6618
        %v6620 = vrot.slane %v6619, 4
        %v6622 = vshll.u32 %v6578, 16
        %v6624 = vrot.slane %v6622, 5
        %v6625 = vsel %vm1435, %v6620, %v6624
        %v6627 = vshrl.u32 %v6571, 16
        %v6629 = vrot.slane %v6627, 4
        %v6630 = vshll.u32 %v6571, 16
        %v6632 = vrot.slane %v6630, 5
        %v6633 = vor.u32 %v6629, %v6632
        %v6634 = vrot.slane %v6633, 4
        %v6636 = vshll.u32 %v6579, 16
        %v6638 = vrot.slane %v6636, 5
        %v6639 = vsel %vm1435, %v6634, %v6638
        %v6641 = vshrl.u32 %v6572, 16
        %v6643 = vrot.slane %v6641, 4
        %v6644 = vshll.u32 %v6572, 16
        %v6646 = vrot.slane %v6644, 5
        %v6647 = vor.u32 %v6643, %v6646
        %v6648 = vrot.slane %v6647, 4
        %v6650 = vshll.u32 %v6580, 16
        %v6652 = vrot.slane %v6650, 5
        %v6653 = vsel %vm1435, %v6648, %v6652
        %v6655 = vshrl.u32 %v6573, 16
        %v6657 = vrot.slane %v6655, 4
        %v6658 = vshll.u32 %v6573, 16
        %v6660 = vrot.slane %v6658, 5
        %v6661 = vor.u32 %v6657, %v6660
        %v6662 = vrot.slane %v6661, 4
        %v6664 = vshll.u32 %v6581, 16
        %v6666 = vrot.slane %v6664, 5
        %v6667 = vsel %vm1435, %v6662, %v6666
        %v6669 = vshrl.u32 %v6574, 16
        %v6671 = vrot.slane %v6669, 4
        %v6672 = vshll.u32 %v6574, 16
        %v6674 = vrot.slane %v6672, 5
        %v6675 = vor.u32 %v6671, %v6674
        %v6676 = vrot.slane %v6675, 4
        %v6678 = vshll.u32 %v6582, 16
        %v6680 = vrot.slane %v6678, 5
        %v6681 = vsel %vm1435, %v6676, %v6680
        %v6683 = vshrl.u32 %v6575, 16
        %v6685 = vrot.slane %v6683, 4
        %v6686 = vshll.u32 %v6575, 16
        %v6688 = vrot.slane %v6686, 5
        %v6689 = vor.u32 %v6685, %v6688
        %v6690 = vrot.slane %v6689, 4
        %v6692 = vshll.u32 %v6583, 16
        %v6694 = vrot.slane %v6692, 5
        %v6695 = vsel %vm1435, %v6690, %v6694
        %v6696 = vld [vmem:[%s6331] sm:$0xe]
        %v6697 = vld [vmem:[%s6331 + $0x8] sm:$0xe]
        %v6698 = vld [vmem:[%s6331 + $0x10] sm:$0xe]
        %v6699 = vld [vmem:[%s6331 + $0x18] sm:$0xe]
        %v6700 = vld [vmem:[%s6331 + $0x20] sm:$0xe]
        %v6701 = vld [vmem:[%s6331 + $0x28] sm:$0xe]
        %v6702 = vld [vmem:[%s6331 + $0x30] sm:$0xe]
        %v6703 = vld [vmem:[%s6331 + $0x38] sm:$0xe]
        %v6720 = vrot.slane %v6696, 5
        %v6721 = vrot.slane %v6720, 4
        %v6722 = vrot.slane %v6576, 5
        %v6723 = vsel %vm1886, %v6721, %v6722
        %v6724 = vrot.slane %v6697, 5
        %v6725 = vrot.slane %v6724, 4
        %v6726 = vrot.slane %v6577, 5
        %v6727 = vsel %vm1886, %v6725, %v6726
        %v6728 = vrot.slane %v6698, 5
        %v6729 = vrot.slane %v6728, 4
        %v6730 = vrot.slane %v6578, 5
        %v6731 = vsel %vm1886, %v6729, %v6730
        %v6732 = vrot.slane %v6699, 5
        %v6733 = vrot.slane %v6732, 4
        %v6734 = vrot.slane %v6579, 5
        %v6735 = vsel %vm1886, %v6733, %v6734
        %v6736 = vrot.slane %v6700, 5
        %v6737 = vrot.slane %v6736, 4
        %v6738 = vrot.slane %v6580, 5
        %v6739 = vsel %vm1886, %v6737, %v6738
        %v6740 = vrot.slane %v6701, 5
        %v6741 = vrot.slane %v6740, 4
        %v6742 = vrot.slane %v6581, 5
        %v6743 = vsel %vm1886, %v6741, %v6742
        %v6744 = vrot.slane %v6702, 5
        %v6745 = vrot.slane %v6744, 4
        %v6746 = vrot.slane %v6582, 5
        %v6747 = vsel %vm1886, %v6745, %v6746
        %v6748 = vrot.slane %v6703, 5
        %v6749 = vrot.slane %v6748, 4
        %v6750 = vrot.slane %v6583, 5
        %v6751 = vsel %vm1886, %v6749, %v6750
        %s6752 = scalar_lea.vmem [#allocation4], 16
        %v6753 = vld [vmem:[%s6752] sm:$0xf]
        %v6754 = vld [vmem:[%s6752 + $0x8] sm:$0xf]
        %v6755 = vld [vmem:[%s6752 + $0x10] sm:$0xf]
        %v6756 = vld [vmem:[%s6752 + $0x18] sm:$0xf]
        %v6757 = vld [vmem:[%s6752 + $0x20] sm:$0xf]
        %v6758 = vld [vmem:[%s6752 + $0x28] sm:$0xf]
        %v6759 = vld [vmem:[%s6752 + $0x30] sm:$0xf]
        %v6760 = vld [vmem:[%s6752 + $0x38] sm:$0xf]
        %v6761 = vld [vmem:[%s6752 + $0x4] sm:$0x1]
        %v6762 = vld [vmem:[%s6752 + $0xc] sm:$0x1]
        %v6763 = vld [vmem:[%s6752 + $0x14] sm:$0x1]
        %v6764 = vld [vmem:[%s6752 + $0x1c] sm:$0x1]
        %v6765 = vld [vmem:[%s6752 + $0x24] sm:$0x1]
        %v6766 = vld [vmem:[%s6752 + $0x2c] sm:$0x1]
        %v6767 = vld [vmem:[%s6752 + $0x34] sm:$0x1]
        %v6768 = vld [vmem:[%s6752 + $0x3c] sm:$0x1]
        %v6770 = vshrl.u32 %v6753, 16
        %v6772 = vrot.slane %v6770, 4
        %v6773 = vshll.u32 %v6753, 16
        %v6775 = vrot.slane %v6773, 5
        %v6776 = vor.u32 %v6772, %v6775
        %v6777 = vrot.slane %v6776, 4
        %v6779 = vshll.u32 %v6761, 16
        %v6781 = vrot.slane %v6779, 5
        %v6782 = vsel %vm1435, %v6777, %v6781
        %v6784 = vshrl.u32 %v6754, 16
        %v6786 = vrot.slane %v6784, 4
        %v6787 = vshll.u32 %v6754, 16
        %v6789 = vrot.slane %v6787, 5
        %v6790 = vor.u32 %v6786, %v6789
        %v6791 = vrot.slane %v6790, 4
        %v6793 = vshll.u32 %v6762, 16
        %v6795 = vrot.slane %v6793, 5
        %v6796 = vsel %vm1435, %v6791, %v6795
        %v6798 = vshrl.u32 %v6755, 16
        %v6800 = vrot.slane %v6798, 4
        %v6801 = vshll.u32 %v6755, 16
        %v6803 = vrot.slane %v6801, 5
        %v6804 = vor.u32 %v6800, %v6803
        %v6805 = vrot.slane %v6804, 4
        %v6807 = vshll.u32 %v6763, 16
        %v6809 = vrot.slane %v6807, 5
        %v6810 = vsel %vm1435, %v6805, %v6809
        %v6812 = vshrl.u32 %v6756, 16
        %v6814 = vrot.slane %v6812, 4
        %v6815 = vshll.u32 %v6756, 16
        %v6817 = vrot.slane %v6815, 5
        %v6818 = vor.u32 %v6814, %v6817
        %v6819 = vrot.slane %v6818, 4
        %v6821 = vshll.u32 %v6764, 16
        %v6823 = vrot.slane %v6821, 5
        %v6824 = vsel %vm1435, %v6819, %v6823
        %v6826 = vshrl.u32 %v6757, 16
        %v6828 = vrot.slane %v6826, 4
        %v6829 = vshll.u32 %v6757, 16
        %v6831 = vrot.slane %v6829, 5
        %v6832 = vor.u32 %v6828, %v6831
        %v6833 = vrot.slane %v6832, 4
        %v6835 = vshll.u32 %v6765, 16
        %v6837 = vrot.slane %v6835, 5
        %v6838 = vsel %vm1435, %v6833, %v6837
        %v6840 = vshrl.u32 %v6758, 16
        %v6842 = vrot.slane %v6840, 4
        %v6843 = vshll.u32 %v6758, 16
        %v6845 = vrot.slane %v6843, 5
        %v6846 = vor.u32 %v6842, %v6845
        %v6847 = vrot.slane %v6846, 4
        %v6849 = vshll.u32 %v6766, 16
        %v6851 = vrot.slane %v6849, 5
        %v6852 = vsel %vm1435, %v6847, %v6851
        %v6854 = vshrl.u32 %v6759, 16
        %v6856 = vrot.slane %v6854, 4
        %v6857 = vshll.u32 %v6759, 16
        %v6859 = vrot.slane %v6857, 5
        %v6860 = vor.u32 %v6856, %v6859
        %v6861 = vrot.slane %v6860, 4
        %v6863 = vshll.u32 %v6767, 16
        %v6865 = vrot.slane %v6863, 5
        %v6866 = vsel %vm1435, %v6861, %v6865
        %v6868 = vshrl.u32 %v6760, 16
        %v6870 = vrot.slane %v6868, 4
        %v6871 = vshll.u32 %v6760, 16
        %v6873 = vrot.slane %v6871, 5
        %v6874 = vor.u32 %v6870, %v6873
        %v6875 = vrot.slane %v6874, 4
        %v6877 = vshll.u32 %v6768, 16
        %v6879 = vrot.slane %v6877, 5
        %v6880 = vsel %vm1435, %v6875, %v6879
        %v6881 = vld [vmem:[%s6752] sm:$0xe]
        %v6882 = vld [vmem:[%s6752 + $0x8] sm:$0xe]
        %v6883 = vld [vmem:[%s6752 + $0x10] sm:$0xe]
        %v6884 = vld [vmem:[%s6752 + $0x18] sm:$0xe]
        %v6885 = vld [vmem:[%s6752 + $0x20] sm:$0xe]
        %v6886 = vld [vmem:[%s6752 + $0x28] sm:$0xe]
        %v6887 = vld [vmem:[%s6752 + $0x30] sm:$0xe]
        %v6888 = vld [vmem:[%s6752 + $0x38] sm:$0xe]
        %v6905 = vrot.slane %v6881, 5
        %v6906 = vrot.slane %v6905, 4
        %v6907 = vrot.slane %v6761, 5
        %v6908 = vsel %vm1886, %v6906, %v6907
        %v6909 = vrot.slane %v6882, 5
        %v6910 = vrot.slane %v6909, 4
        %v6911 = vrot.slane %v6762, 5
        %v6912 = vsel %vm1886, %v6910, %v6911
        %v6913 = vrot.slane %v6883, 5
        %v6914 = vrot.slane %v6913, 4
        %v6915 = vrot.slane %v6763, 5
        %v6916 = vsel %vm1886, %v6914, %v6915
        %v6917 = vrot.slane %v6884, 5
        %v6918 = vrot.slane %v6917, 4
        %v6919 = vrot.slane %v6764, 5
        %v6920 = vsel %vm1886, %v6918, %v6919
        %v6921 = vrot.slane %v6885, 5
        %v6922 = vrot.slane %v6921, 4
        %v6923 = vrot.slane %v6765, 5
        %v6924 = vsel %vm1886, %v6922, %v6923
        %v6925 = vrot.slane %v6886, 5
        %v6926 = vrot.slane %v6925, 4
        %v6927 = vrot.slane %v6766, 5
        %v6928 = vsel %vm1886, %v6926, %v6927
        %v6929 = vrot.slane %v6887, 5
        %v6930 = vrot.slane %v6929, 4
        %v6931 = vrot.slane %v6767, 5
        %v6932 = vsel %vm1886, %v6930, %v6931
        %v6933 = vrot.slane %v6888, 5
        %v6934 = vrot.slane %v6933, 4
        %v6935 = vrot.slane %v6768, 5
        %v6936 = vsel %vm1886, %v6934, %v6935
        %v6945 = vunpack.c.l.b16 %v6384
        %v6946 = vunpack.c.l.b16 %v6385
        %v6947 = vunpack.c.l.b16 %v6386
        %v6948 = vunpack.c.l.b16 %v6387
        %v6949 = vunpack.c.l.b16 %v6388
        %v6950 = vunpack.c.l.b16 %v6389
        %v6951 = vunpack.c.l.b16 %v6390
        %v6952 = vunpack.c.l.b16 %v6391
        %v6953 = vpack.c.b16 %v6946, %v6945
        %v6954 = vpack.c.b16 %v6948, %v6947
        %v6955 = vpack.c.b16 %v6950, %v6949
        %v6956 = vpack.c.b16 %v6952, %v6951
        %v6957 = vunpack.c.l.b16 %v6413
        %v6958 = vunpack.c.l.b16 %v6427
        %v6959 = vunpack.c.l.b16 %v6441
        %v6960 = vunpack.c.l.b16 %v6455
        %v6961 = vunpack.c.l.b16 %v6469
        %v6962 = vunpack.c.l.b16 %v6483
        %v6963 = vunpack.c.l.b16 %v6497
        %v6964 = vunpack.c.l.b16 %v6511
        %v6965 = vpack.c.b16 %v6958, %v6957
        %v6966 = vpack.c.b16 %v6960, %v6959
        %v6967 = vpack.c.b16 %v6962, %v6961
        %v6968 = vpack.c.b16 %v6964, %v6963
        %6969 = vrot.lane.b32.xlu0 %v6965, 32
        %v6970 = vpop.permute.xlu0 %6969
        %6971 = vrot.lane.b32.xlu0 %v6966, 32
        %v6972 = vpop.permute.xlu0 %6971
        %6973 = vrot.lane.b32.xlu0 %v6967, 32
        %v6974 = vpop.permute.xlu0 %6973
        %6975 = vrot.lane.b32.xlu0 %v6968, 32
        %v6976 = vpop.permute.xlu0 %6975
        %v6977 = vunpack.c.l.b16 %v6539
        %v6978 = vunpack.c.l.b16 %v6543
        %v6979 = vunpack.c.l.b16 %v6547
        %v6980 = vunpack.c.l.b16 %v6551
        %v6981 = vunpack.c.l.b16 %v6555
        %v6982 = vunpack.c.l.b16 %v6559
        %v6983 = vunpack.c.l.b16 %v6563
        %v6984 = vunpack.c.l.b16 %v6567
        %v6985 = vpack.c.b16 %v6978, %v6977
        %v6986 = vpack.c.b16 %v6980, %v6979
        %v6987 = vpack.c.b16 %v6982, %v6981
        %v6988 = vpack.c.b16 %v6984, %v6983
        %6989 = vrot.lane.b32.xlu0 %v6985, 64
        %v6990 = vpop.permute.xlu0 %6989
        %6991 = vrot.lane.b32.xlu0 %v6986, 64
        %v6992 = vpop.permute.xlu0 %6991
        %6993 = vrot.lane.b32.xlu0 %v6987, 64
        %v6994 = vpop.permute.xlu0 %6993
        %6995 = vrot.lane.b32.xlu0 %v6988, 64
        %v6996 = vpop.permute.xlu0 %6995
        %v7005 = vunpack.c.l.b16 %v6568
        %v7006 = vunpack.c.l.b16 %v6569
        %v7007 = vunpack.c.l.b16 %v6570
        %v7008 = vunpack.c.l.b16 %v6571
        %v7009 = vunpack.c.l.b16 %v6572
        %v7010 = vunpack.c.l.b16 %v6573
        %v7011 = vunpack.c.l.b16 %v6574
        %v7012 = vunpack.c.l.b16 %v6575
        %v7013 = vpack.c.b16 %v7006, %v7005
        %v7014 = vpack.c.b16 %v7008, %v7007
        %v7015 = vpack.c.b16 %v7010, %v7009
        %v7016 = vpack.c.b16 %v7012, %v7011
        %7017 = vrot.lane.b32.xlu0 %v7013, 96
        %v7018 = vpop.permute.xlu0 %7017
        %7019 = vrot.lane.b32.xlu0 %v7014, 96
        %v7020 = vpop.permute.xlu0 %7019
        %7021 = vrot.lane.b32.xlu0 %v7015, 96
        %v7022 = vpop.permute.xlu0 %7021
        %7023 = vrot.lane.b32.xlu0 %v7016, 96
        %v7024 = vpop.permute.xlu0 %7023
        %v7025 = vunpack.c.l.b16 %v6597
        %v7026 = vunpack.c.l.b16 %v6611
        %v7027 = vunpack.c.l.b16 %v6625
        %v7028 = vunpack.c.l.b16 %v6639
        %v7029 = vunpack.c.l.b16 %v6653
        %v7030 = vunpack.c.l.b16 %v6667
        %v7031 = vunpack.c.l.b16 %v6681
        %v7032 = vunpack.c.l.b16 %v6695
        %v7033 = vpack.c.b16 %v7026, %v7025
        %v7034 = vpack.c.b16 %v7028, %v7027
        %v7035 = vpack.c.b16 %v7030, %v7029
        %v7036 = vpack.c.b16 %v7032, %v7031
        %v7037 = vunpack.c.l.b16 %v6723
        %v7038 = vunpack.c.l.b16 %v6727
        %v7039 = vunpack.c.l.b16 %v6731
        %v7040 = vunpack.c.l.b16 %v6735
        %v7041 = vunpack.c.l.b16 %v6739
        %v7042 = vunpack.c.l.b16 %v6743
        %v7043 = vunpack.c.l.b16 %v6747
        %v7044 = vunpack.c.l.b16 %v6751
        %v7045 = vpack.c.b16 %v7038, %v7037
        %v7046 = vpack.c.b16 %v7040, %v7039
        %v7047 = vpack.c.b16 %v7042, %v7041
        %v7048 = vpack.c.b16 %v7044, %v7043
        %7049 = vrot.lane.b32.xlu0 %v7045, 32
        %v7050 = vpop.permute.xlu0 %7049
        %7051 = vrot.lane.b32.xlu0 %v7046, 32
        %v7052 = vpop.permute.xlu0 %7051
        %7053 = vrot.lane.b32.xlu0 %v7047, 32
        %v7054 = vpop.permute.xlu0 %7053
        %7055 = vrot.lane.b32.xlu0 %v7048, 32
        %v7056 = vpop.permute.xlu0 %7055
        %v7065 = vunpack.c.l.b16 %v6753
        %v7066 = vunpack.c.l.b16 %v6754
        %v7067 = vunpack.c.l.b16 %v6755
        %v7068 = vunpack.c.l.b16 %v6756
        %v7069 = vunpack.c.l.b16 %v6757
        %v7070 = vunpack.c.l.b16 %v6758
        %v7071 = vunpack.c.l.b16 %v6759
        %v7072 = vunpack.c.l.b16 %v6760
        %v7073 = vpack.c.b16 %v7066, %v7065
        %v7074 = vpack.c.b16 %v7068, %v7067
        %v7075 = vpack.c.b16 %v7070, %v7069
        %v7076 = vpack.c.b16 %v7072, %v7071
        %7077 = vrot.lane.b32.xlu0 %v7073, 64
        %v7078 = vpop.permute.xlu0 %7077
        %7079 = vrot.lane.b32.xlu0 %v7074, 64
        %v7080 = vpop.permute.xlu0 %7079
        %7081 = vrot.lane.b32.xlu0 %v7075, 64
        %v7082 = vpop.permute.xlu0 %7081
        %7083 = vrot.lane.b32.xlu0 %v7076, 64
        %v7084 = vpop.permute.xlu0 %7083
        %v7085 = vunpack.c.l.b16 %v6782
        %v7086 = vunpack.c.l.b16 %v6796
        %v7087 = vunpack.c.l.b16 %v6810
        %v7088 = vunpack.c.l.b16 %v6824
        %v7089 = vunpack.c.l.b16 %v6838
        %v7090 = vunpack.c.l.b16 %v6852
        %v7091 = vunpack.c.l.b16 %v6866
        %v7092 = vunpack.c.l.b16 %v6880
        %v7093 = vpack.c.b16 %v7086, %v7085
        %v7094 = vpack.c.b16 %v7088, %v7087
        %v7095 = vpack.c.b16 %v7090, %v7089
        %v7096 = vpack.c.b16 %v7092, %v7091
        %7097 = vrot.lane.b32.xlu0 %v7093, 96
        %v7098 = vpop.permute.xlu0 %7097
        %7099 = vrot.lane.b32.xlu0 %v7094, 96
        %v7100 = vpop.permute.xlu0 %7099
        %7101 = vrot.lane.b32.xlu0 %v7095, 96
        %v7102 = vpop.permute.xlu0 %7101
        %7103 = vrot.lane.b32.xlu0 %v7096, 96
        %v7104 = vpop.permute.xlu0 %7103
        %v7105 = vunpack.c.l.b16 %v6908
        %v7106 = vunpack.c.l.b16 %v6912
        %v7107 = vunpack.c.l.b16 %v6916
        %v7108 = vunpack.c.l.b16 %v6920
        %v7109 = vunpack.c.l.b16 %v6924
        %v7110 = vunpack.c.l.b16 %v6928
        %v7111 = vunpack.c.l.b16 %v6932
        %v7112 = vunpack.c.l.b16 %v6936
        %v7113 = vpack.c.b16 %v7106, %v7105
        %v7114 = vpack.c.b16 %v7108, %v7107
        %v7115 = vpack.c.b16 %v7110, %v7109
        %v7116 = vpack.c.b16 %v7112, %v7111
        %v7119 = vsel %vm3969, %v6953, %v6970
        %v7122 = vsel %vm3969, %v6954, %v6972
        %v7125 = vsel %vm3969, %v6955, %v6974
        %v7128 = vsel %vm3969, %v6956, %v6976
        %v7130 = vsel %vm4035, %v7119, %v6990
        %v7132 = vsel %vm4035, %v7122, %v6992
        %v7134 = vsel %vm4035, %v7125, %v6994
        %v7136 = vsel %vm4035, %v7128, %v6996
        %v7138 = vsel %vm4101, %v7130, %v7018
        %v7141 = vsel %vm4101, %v7132, %v7020
        %v7144 = vsel %vm4101, %v7134, %v7022
        %v7147 = vsel %vm4101, %v7136, %v7024
        %v7151 = vsel %vm3969, %v7033, %v7050
        %v7154 = vsel %vm3969, %v7034, %v7052
        %v7157 = vsel %vm3969, %v7035, %v7054
        %v7160 = vsel %vm3969, %v7036, %v7056
        %v7162 = vsel %vm4035, %v7151, %v7078
        %v7164 = vsel %vm4035, %v7154, %v7080
        %v7166 = vsel %vm4035, %v7157, %v7082
        %v7168 = vsel %vm4035, %v7160, %v7084
        %v7170 = vsel %vm4101, %v7162, %v7098
        %v7173 = vsel %vm4101, %v7164, %v7100
        %v7176 = vsel %vm4101, %v7166, %v7102
        %v7179 = vsel %vm4101, %v7168, %v7104
        %v7181 = vld [vmem:[%s7] sm:$0xf]
        %v7182 = vld [vmem:[%s7 + $0x4] sm:$0xf]
        %v7183 = vld [vmem:[%s7 + $0x8] sm:$0xf]
        %v7184 = vld [vmem:[%s7 + $0xc] sm:$0xf]
        %v7185 = vld [vmem:[%s7 + $0x10] sm:$0xf]
        %v7186 = vld [vmem:[%s7 + $0x14] sm:$0xf]
        %v7187 = vld [vmem:[%s7 + $0x18] sm:$0xf]
        %v7188 = vld [vmem:[%s7 + $0x1c] sm:$0xf]
        %v7189 = vld [vmem:[%s7 + $0x20] sm:$0xf]
        %v7190 = vld [vmem:[%s7 + $0x24] sm:$0xf]
        %v7191 = vld [vmem:[%s7 + $0x28] sm:$0xf]
        %v7192 = vld [vmem:[%s7 + $0x2c] sm:$0xf]
        %v7193 = vld [vmem:[%s7 + $0x30] sm:$0xf]
        %v7194 = vld [vmem:[%s7 + $0x34] sm:$0xf]
        %v7195 = vld [vmem:[%s7 + $0x38] sm:$0xf]
        %v7196 = vld [vmem:[%s7 + $0x3c] sm:$0xf]
        %v7197 = vld [vmem:[%s7 + $0x40] sm:$0xf]
        %v7198 = vld [vmem:[%s7 + $0x44] sm:$0xf]
        %v7199 = vld [vmem:[%s7 + $0x48] sm:$0xf]
        %v7200 = vld [vmem:[%s7 + $0x4c] sm:$0xf]
        %v7201 = vld [vmem:[%s7 + $0x50] sm:$0xf]
        %v7202 = vld [vmem:[%s7 + $0x54] sm:$0xf]
        %v7203 = vld [vmem:[%s7 + $0x58] sm:$0xf]
        %v7204 = vld [vmem:[%s7 + $0x5c] sm:$0xf]
        %v7205 = vld [vmem:[%s7 + $0x60] sm:$0xf]
        %v7206 = vld [vmem:[%s7 + $0x64] sm:$0xf]
        %v7207 = vld [vmem:[%s7 + $0x68] sm:$0xf]
        %v7208 = vld [vmem:[%s7 + $0x6c] sm:$0xf]
        %v7209 = vld [vmem:[%s7 + $0x70] sm:$0xf]
        %v7210 = vld [vmem:[%s7 + $0x74] sm:$0xf]
        %v7211 = vld [vmem:[%s7 + $0x78] sm:$0xf]
        %v7212 = vld [vmem:[%s7 + $0x7c] sm:$0xf]
        %v7213 = vld [vmem:[%s7 + $0x80] sm:$0xf]
        %v7214 = vld [vmem:[%s7 + $0x84] sm:$0xf]
        %v7215 = vld [vmem:[%s7 + $0x88] sm:$0xf]
        %v7216 = vld [vmem:[%s7 + $0x8c] sm:$0xf]
        %v7217 = vld [vmem:[%s8] sm:$0x1]
        %v7219 = vperm.slane %v7217, 0
        %v7257 = vunpack.c.l.b16 %v7181
        %v7258 = vunpack.c.l.b16 %v7182
        %v7259 = vunpack.c.l.b16 %v7183
        %v7260 = vunpack.c.l.b16 %v7184
        %v7261 = vunpack.c.l.b16 %v7185
        %v7262 = vunpack.c.l.b16 %v7186
        %v7263 = vunpack.c.l.b16 %v7187
        %v7264 = vunpack.c.l.b16 %v7188
        %v7265 = vunpack.c.l.b16 %v7189
        %v7266 = vunpack.c.l.b16 %v7190
        %v7267 = vunpack.c.l.b16 %v7191
        %v7268 = vunpack.c.l.b16 %v7192
        %v7269 = vunpack.c.l.b16 %v7193
        %v7270 = vunpack.c.l.b16 %v7194
        %v7271 = vunpack.c.l.b16 %v7195
        %v7272 = vunpack.c.l.b16 %v7196
        %v7273 = vunpack.c.l.b16 %v7197
        %v7274 = vunpack.c.l.b16 %v7198
        %v7275 = vunpack.c.l.b16 %v7199
        %v7276 = vunpack.c.l.b16 %v7200
        %v7277 = vunpack.c.l.b16 %v7201
        %v7278 = vunpack.c.l.b16 %v7202
        %v7279 = vunpack.c.l.b16 %v7203
        %v7280 = vunpack.c.l.b16 %v7204
        %v7281 = vunpack.c.l.b16 %v7205
        %v7282 = vunpack.c.l.b16 %v7206
        %v7283 = vunpack.c.l.b16 %v7207
        %v7284 = vunpack.c.l.b16 %v7208
        %v7285 = vunpack.c.l.b16 %v7209
        %v7286 = vunpack.c.l.b16 %v7210
        %v7287 = vunpack.c.l.b16 %v7211
        %v7288 = vunpack.c.l.b16 %v7212
        %v7289 = vunpack.c.l.b16 %v7213
        %v7290 = vunpack.c.l.b16 %v7214
        %v7291 = vunpack.c.l.b16 %v7215
        %v7292 = vunpack.c.l.b16 %v7216
        %v7293 = vpack.c.b16 %v7258, %v7257
        %v7294 = vpack.c.b16 %v7260, %v7259
        %v7295 = vpack.c.b16 %v7262, %v7261
        %v7296 = vpack.c.b16 %v7264, %v7263
        %v7297 = vpack.c.b16 %v7266, %v7265
        %v7298 = vpack.c.b16 %v7268, %v7267
        %v7299 = vpack.c.b16 %v7270, %v7269
        %v7300 = vpack.c.b16 %v7272, %v7271
        %v7301 = vpack.c.b16 %v7274, %v7273
        %v7302 = vpack.c.b16 %v7276, %v7275
        %v7303 = vpack.c.b16 %v7278, %v7277
        %v7304 = vpack.c.b16 %v7280, %v7279
        %v7305 = vpack.c.b16 %v7282, %v7281
        %v7306 = vpack.c.b16 %v7284, %v7283
        %v7307 = vpack.c.b16 %v7286, %v7285
        %v7308 = vpack.c.b16 %v7288, %v7287
        %v7309 = vpack.c.b16 %v7290, %v7289
        %v7310 = vpack.c.b16 %v7292, %v7291
        %v7330 = vsel %vm3969, %v7113, 0
        %v7333 = vsel %vm3969, %v7114, 0
        %v7336 = vsel %vm3969, %v7115, 0
        %v7339 = vsel %vm3969, %v7116, 0
        %7341 = vmatpush.bf16.msra.mxu0 %v7300
        %7342 = vmatpush.bf16.msra.mxu0 %v7299
        %7343 = vmatpush.bf16.msra.mxu0 %v7298
        %7344 = vmatpush.bf16.msra.mxu0 %v7297
        %7345 = vmatpush.bf16.msra.mxu0 %v7296
        %7346 = vmatpush.bf16.msra.mxu0 %v7295
        %7347 = vmatpush.bf16.msra.mxu0 %v7294
        %7348 = vmatpush.bf16.msra.mxu0 %v7293
        %7349 = vmatmul.bf16.gmra.mxu0 %v7138
        %v7350 = vpop.f32.mrf.mxu0
        %v7351 = vadd.f32 %v7219, %v7350
        %v7352 = vpop.f32.mrf.mxu0
        %v7353 = vadd.f32 %v7219, %v7352
        %7354 = vmatmul.bf16.gmra.mxu0 %v7141
        %v7355 = vpop.f32.mrf.mxu0
        %v7356 = vadd.f32 %v7219, %v7355
        %v7357 = vpop.f32.mrf.mxu0
        %v7358 = vadd.f32 %v7219, %v7357
        %7359 = vmatmul.bf16.gmra.mxu0 %v7144
        %v7360 = vpop.f32.mrf.mxu0
        %v7361 = vadd.f32 %v7219, %v7360
        %v7362 = vpop.f32.mrf.mxu0
        %v7363 = vadd.f32 %v7219, %v7362
        %7364 = vmatmul.bf16.gmra.mxu0 %v7147
        %v7365 = vpop.f32.mrf.mxu0
        %v7366 = vadd.f32 %v7219, %v7365
        %v7367 = vpop.f32.mrf.mxu0
        %v7368 = vadd.f32 %v7219, %v7367
        %7369 = vdwg.mxu0
        %7370 = vmatpush.bf16.msra.mxu0 %v7308
        %7371 = vmatpush.bf16.msra.mxu0 %v7307
        %7372 = vmatpush.bf16.msra.mxu0 %v7306
        %7373 = vmatpush.bf16.msra.mxu0 %v7305
        %7374 = vmatpush.bf16.msra.mxu0 %v7304
        %7375 = vmatpush.bf16.msra.mxu0 %v7303
        %7376 = vmatpush.bf16.msra.mxu0 %v7302
        %7377 = vmatpush.bf16.msra.mxu0 %v7301
        %7378 = vmatmul.bf16.gmra.mxu0 %v7170
        %v7379 = vpop.f32.mrf.mxu0
        %v7380 = vadd.f32 %v7351, %v7379
        %v7381 = vpop.f32.mrf.mxu0
        %v7382 = vadd.f32 %v7353, %v7381
        %7383 = vmatmul.bf16.gmra.mxu0 %v7173
        %v7384 = vpop.f32.mrf.mxu0
        %v7385 = vadd.f32 %v7356, %v7384
        %v7386 = vpop.f32.mrf.mxu0
        %v7387 = vadd.f32 %v7358, %v7386
        %7388 = vmatmul.bf16.gmra.mxu0 %v7176
        %v7389 = vpop.f32.mrf.mxu0
        %v7390 = vadd.f32 %v7361, %v7389
        %v7391 = vpop.f32.mrf.mxu0
        %v7392 = vadd.f32 %v7363, %v7391
        %7393 = vmatmul.bf16.gmra.mxu0 %v7179
        %v7394 = vpop.f32.mrf.mxu0
        %v7395 = vadd.f32 %v7366, %v7394
        %v7396 = vpop.f32.mrf.mxu0
        %v7397 = vadd.f32 %v7368, %v7396
        %7398 = vdwg.mxu0
        %7399 = vmatpush.bf16.msra.mxu0 0
        %7400 = vmatpush.bf16.msra.mxu0 0
        %7401 = vmatpush.bf16.msra.mxu0 0
        %7402 = vmatpush.bf16.msra.mxu0 0
        %7403 = vmatpush.bf16.msra.mxu0 0
        %7404 = vmatpush.bf16.msra.mxu0 0
        %7405 = vmatpush.bf16.msra.mxu0 %v7310
        %7406 = vmatpush.bf16.msra.mxu0 %v7309
        %7407 = vmatmul.bf16.gmra.mxu0 %v7330
        %v7408 = vpop.f32.mrf.mxu0
        %v7409 = vadd.f32 %v7380, %v7408
        %v7410 = vpop.f32.mrf.mxu0
        %v7411 = vadd.f32 %v7382, %v7410
        %7412 = vmatmul.bf16.gmra.mxu0 %v7333
        %v7413 = vpop.f32.mrf.mxu0
        %v7414 = vadd.f32 %v7385, %v7413
        %v7415 = vpop.f32.mrf.mxu0
        %v7416 = vadd.f32 %v7387, %v7415
        %7417 = vmatmul.bf16.gmra.mxu0 %v7336
        %v7418 = vpop.f32.mrf.mxu0
        %v7419 = vadd.f32 %v7390, %v7418
        %v7420 = vpop.f32.mrf.mxu0
        %v7421 = vadd.f32 %v7392, %v7420
        %7422 = vmatmul.bf16.gmra.mxu0 %v7339
        %v7423 = vpop.f32.mrf.mxu0
        %v7424 = vadd.f32 %v7395, %v7423
        %v7425 = vpop.f32.mrf.mxu0
        %v7426 = vadd.f32 %v7397, %v7425
        %7427 = vdwg.mxu0
        %v7428 = vmax.f32 %v7409, 0.0
        %v7429 = vmax.f32 %v7411, 0.0
        %v7430 = vmax.f32 %v7414, 0.0
        %v7431 = vmax.f32 %v7416, 0.0
        %v7432 = vmax.f32 %v7419, 0.0
        %v7433 = vmax.f32 %v7421, 0.0
        %v7434 = vmax.f32 %v7424, 0.0
        %v7435 = vmax.f32 %v7426, 0.0
        %v7436 = vmax.f32 %v7428, %v7429
        %v7437 = vmax.f32 %v7430, %v7431
        %v7438 = vmax.f32 %v7432, %v7433
        %v7439 = vmax.f32 %v7434, %v7435
        %v7444 = vrot.slane %v7436, 2
        %v7445 = vrot.slane %v7436, 4
        %v7446 = vrot.slane %v7436, 6
        %v7447 = vrot.slane %v7437, 2
        %v7448 = vrot.slane %v7437, 4
        %v7449 = vrot.slane %v7437, 6
        %v7450 = vrot.slane %v7438, 2
        %v7451 = vrot.slane %v7438, 4
        %v7452 = vrot.slane %v7438, 6
        %v7453 = vrot.slane %v7439, 2
        %v7454 = vrot.slane %v7439, 4
        %v7455 = vrot.slane %v7439, 6
        %v7468 = vrot.slane %v7436, 7
        %v7469 = vrot.slane %v7468, 2
        %v7470 = vrot.slane %v7444, 7
        %v7471 = vrot.slane %v7470, 2
        %v7472 = vrot.slane %v7445, 7
        %v7473 = vrot.slane %v7472, 2
        %v7474 = vrot.slane %v7446, 7
        %v7475 = vrot.slane %v7474, 2
        %v7476 = vrot.slane %v7437, 7
        %v7477 = vrot.slane %v7476, 2
        %v7478 = vrot.slane %v7447, 7
        %v7479 = vrot.slane %v7478, 2
        %v7480 = vrot.slane %v7448, 7
        %v7481 = vrot.slane %v7480, 2
        %v7482 = vrot.slane %v7449, 7
        %v7483 = vrot.slane %v7482, 2
        %v7484 = vrot.slane %v7438, 7
        %v7485 = vrot.slane %v7484, 2
        %v7486 = vrot.slane %v7450, 7
        %v7487 = vrot.slane %v7486, 2
        %v7488 = vrot.slane %v7451, 7
        %v7489 = vrot.slane %v7488, 2
        %v7490 = vrot.slane %v7452, 7
        %v7491 = vrot.slane %v7490, 2
        %v7492 = vrot.slane %v7439, 7
        %v7493 = vrot.slane %v7492, 2
        %v7494 = vrot.slane %v7453, 7
        %v7495 = vrot.slane %v7494, 2
        %v7496 = vrot.slane %v7454, 7
        %v7497 = vrot.slane %v7496, 2
        %v7498 = vrot.slane %v7455, 7
        %v7499 = vrot.slane %v7498, 2
        %v7516 = vmax.f32 %v7436, %v7469
        %v7517 = vmax.f32 %v7444, %v7471
        %v7518 = vmax.f32 %v7445, %v7473
        %v7519 = vmax.f32 %v7446, %v7475
        %v7520 = vmax.f32 %v7437, %v7477
        %v7521 = vmax.f32 %v7447, %v7479
        %v7522 = vmax.f32 %v7448, %v7481
        %v7523 = vmax.f32 %v7449, %v7483
        %v7524 = vmax.f32 %v7438, %v7485
        %v7525 = vmax.f32 %v7450, %v7487
        %v7526 = vmax.f32 %v7451, %v7489
        %v7527 = vmax.f32 %v7452, %v7491
        %v7528 = vmax.f32 %v7439, %v7493
        %v7529 = vmax.f32 %v7453, %v7495
        %v7530 = vmax.f32 %v7454, %v7497
        %v7531 = vmax.f32 %v7455, %v7499
        %v7532 = vpack.c.bf16 %v7516, %v7516
        %v7533 = vpack.c.bf16 %v7517, %v7517
        %v7534 = vpack.c.bf16 %v7518, %v7518
        %v7535 = vpack.c.bf16 %v7519, %v7519
        %v7536 = vpack.c.bf16 %v7520, %v7520
        %v7537 = vpack.c.bf16 %v7521, %v7521
        %v7538 = vpack.c.bf16 %v7522, %v7522
        %v7539 = vpack.c.bf16 %v7523, %v7523
        %v7540 = vpack.c.bf16 %v7524, %v7524
        %v7541 = vpack.c.bf16 %v7525, %v7525
        %v7542 = vpack.c.bf16 %v7526, %v7526
        %v7543 = vpack.c.bf16 %v7527, %v7527
        %v7544 = vpack.c.bf16 %v7528, %v7528
        %v7545 = vpack.c.bf16 %v7529, %v7529
        %v7546 = vpack.c.bf16 %v7530, %v7530
        %v7547 = vpack.c.bf16 %v7531, %v7531
        %v7564 = vunpack.c.l.b16 %v7532
        %v7565 = vunpack.c.l.b16 %v7533
        %v7566 = vunpack.c.l.b16 %v7534
        %v7567 = vunpack.c.l.b16 %v7535
        %v7568 = vunpack.c.l.b16 %v7536
        %v7569 = vunpack.c.l.b16 %v7537
        %v7570 = vunpack.c.l.b16 %v7538
        %v7571 = vunpack.c.l.b16 %v7539
        %v7572 = vunpack.c.l.b16 %v7540
        %v7573 = vunpack.c.l.b16 %v7541
        %v7574 = vunpack.c.l.b16 %v7542
        %v7575 = vunpack.c.l.b16 %v7543
        %v7576 = vunpack.c.l.b16 %v7544
        %v7577 = vunpack.c.l.b16 %v7545
        %v7578 = vunpack.c.l.b16 %v7546
        %v7579 = vunpack.c.l.b16 %v7547
        %v7580 = vrot.slane %v7564, 7
        %v7581 = vrot.slane %v7565, 6
        %v7582 = vsel %vm5095, %v7581, %v7580
        %v7583 = vrot.slane %v7566, 5
        %v7584 = vsel %vm5098, %v7583, %v7582
        %v7585 = vrot.slane %v7567, 4
        %v7586 = vsel %vm5101, %v7585, %v7584
        %v7587 = vrot.slane %v7568, 7
        %v7588 = vrot.slane %v7569, 6
        %v7589 = vsel %vm5095, %v7588, %v7587
        %v7590 = vrot.slane %v7570, 5
        %v7591 = vsel %vm5098, %v7590, %v7589
        %v7592 = vrot.slane %v7571, 4
        %v7593 = vsel %vm5101, %v7592, %v7591
        %v7594 = vrot.slane %v7572, 7
        %v7595 = vrot.slane %v7573, 6
        %v7596 = vsel %vm5095, %v7595, %v7594
        %v7597 = vrot.slane %v7574, 5
        %v7598 = vsel %vm5098, %v7597, %v7596
        %v7599 = vrot.slane %v7575, 4
        %v7600 = vsel %vm5101, %v7599, %v7598
        %v7601 = vrot.slane %v7576, 7
        %v7602 = vrot.slane %v7577, 6
        %v7603 = vsel %vm5095, %v7602, %v7601
        %v7604 = vrot.slane %v7578, 5
        %v7605 = vsel %vm5098, %v7604, %v7603
        %v7606 = vrot.slane %v7579, 4
        %v7607 = vsel %vm5101, %v7606, %v7605
        %v7608 = vpack.c.b16 %v7586, %v7586
        %v7609 = vpack.c.b16 %v7593, %v7593
        %v7610 = vpack.c.b16 %v7600, %v7600
        %v7611 = vpack.c.b16 %v7607, %v7607
        %s7616 = scalar_lea.vmem [#allocation5], 4
        %vm7617 = vcmask 518144
        %vm7618 = vsmask.f32 2306
        %vm7619 = vmand %vm7617, %vm7618
        %v7620 = vld [vmem:[%s7616] sm:$0x7]
        %v7621 = vsel %vm7619, %v7608, %v7620
        %7622 = vst [vmem:[%s7616] sm:$0x7] %v7621
        %v7623 = vld [vmem:[%s7616 + $0x4] sm:$0x7]
        %v7624 = vsel %vm7619, %v7609, %v7623
        %7625 = vst [vmem:[%s7616 + $0x4] sm:$0x7] %v7624
        %v7626 = vld [vmem:[%s7616 + $0x8] sm:$0x7]
        %v7627 = vsel %vm7619, %v7610, %v7626
        %7628 = vst [vmem:[%s7616 + $0x8] sm:$0x7] %v7627
        %v7629 = vld [vmem:[%s7616 + $0xc] sm:$0x7]
        %v7630 = vsel %vm7619, %v7611, %v7629
        %7631 = vst [vmem:[%s7616 + $0xc] sm:$0x7] %v7630
        %v7632 = vld [vmem:[#allocation5] sm:$0x3]
        %v7633 = vld [vmem:[#allocation5 + $0x4] sm:$0x3]
        %v7634 = vld [vmem:[#allocation5 + $0x8] sm:$0x3]
        %v7635 = vld [vmem:[#allocation5 + $0xc] sm:$0x3]
        %v7636 = vld [vmem:[#allocation5] sm:$0x7]
        %v7637 = vld [vmem:[#allocation5 + $0x4] sm:$0x7]
        %v7638 = vld [vmem:[#allocation5 + $0x8] sm:$0x7]
        %v7639 = vld [vmem:[#allocation5 + $0xc] sm:$0x7]
        %v7644 = vrot.slane %v7636, 2
        %v7645 = vrot.slane %v7637, 2
        %v7646 = vrot.slane %v7638, 2
        %v7647 = vrot.slane %v7639, 2
        %vm7648 = vcmask 1041408
        %v7651 = vsel %vm7648, %v7636, %v7644
        %vm7652 = vcmask 1043458
        %v7653 = vsel %vm7652, %v7636, %v7644
        %v7655 = vrot.slane %v7653, 2
        %v7658 = vsel %vm7648, %v7637, %v7645
        %v7659 = vsel %vm7652, %v7637, %v7645
        %v7661 = vrot.slane %v7659, 2
        %v7664 = vsel %vm7648, %v7638, %v7646
        %v7665 = vsel %vm7652, %v7638, %v7646
        %v7667 = vrot.slane %v7665, 2
        %v7670 = vsel %vm7648, %v7639, %v7647
        %v7671 = vsel %vm7652, %v7639, %v7647
        %v7673 = vrot.slane %v7671, 2
        %vm7674 = vsmask.f32 1280
        %vm7675 = vsmask.f32 3336
        %vm7676 = vmor %vm7674, %vm7675
        %vm7677 = vsmask.f32 5392
        %vm7678 = vmor %vm7676, %vm7677
        %vm7679 = vsmask.f32 7448
        %vm7680 = vmor %vm7678, %vm7679
        %v7681 = vshrl.u32 %v7651, 16
        %v7683 = vrot.slane %v7681, 6
        %v7684 = vshll.u32 %v7651, 16
        %v7686 = vrot.slane %v7684, 7
        %v7687 = vor.u32 %v7683, %v7686
        %v7688 = vrot.slane %v7687, 2
        %v7690 = vshll.u32 %v7655, 16
        %v7692 = vrot.slane %v7690, 7
        %v7693 = vsel %vm7680, %v7688, %v7692
        %v7694 = vshrl.u32 %v7658, 16
        %v7696 = vrot.slane %v7694, 6
        %v7697 = vshll.u32 %v7658, 16
        %v7699 = vrot.slane %v7697, 7
        %v7700 = vor.u32 %v7696, %v7699
        %v7701 = vrot.slane %v7700, 2
        %v7703 = vshll.u32 %v7661, 16
        %v7705 = vrot.slane %v7703, 7
        %v7706 = vsel %vm7680, %v7701, %v7705
        %v7707 = vshrl.u32 %v7664, 16
        %v7709 = vrot.slane %v7707, 6
        %v7710 = vshll.u32 %v7664, 16
        %v7712 = vrot.slane %v7710, 7
        %v7713 = vor.u32 %v7709, %v7712
        %v7714 = vrot.slane %v7713, 2
        %v7716 = vshll.u32 %v7667, 16
        %v7718 = vrot.slane %v7716, 7
        %v7719 = vsel %vm7680, %v7714, %v7718
        %v7720 = vshrl.u32 %v7670, 16
        %v7722 = vrot.slane %v7720, 6
        %v7723 = vshll.u32 %v7670, 16
        %v7725 = vrot.slane %v7723, 7
        %v7726 = vor.u32 %v7722, %v7725
        %v7727 = vrot.slane %v7726, 2
        %v7729 = vshll.u32 %v7673, 16
        %v7731 = vrot.slane %v7729, 7
        %v7732 = vsel %vm7680, %v7727, %v7731
        %v7733 = vld [vmem:[#allocation5] sm:$0x6]
        %v7734 = vld [vmem:[#allocation5 + $0x4] sm:$0x6]
        %v7735 = vld [vmem:[#allocation5 + $0x8] sm:$0x6]
        %v7736 = vld [vmem:[#allocation5 + $0xc] sm:$0x6]
        %v7741 = vrot.slane %v7733, 2
        %v7742 = vrot.slane %v7734, 2
        %v7743 = vrot.slane %v7735, 2
        %v7744 = vrot.slane %v7736, 2
        %v7747 = vsel %vm7648, %v7733, %v7741
        %v7749 = vsel %vm7652, %v7733, %v7741
        %v7751 = vrot.slane %v7749, 2
        %v7754 = vsel %vm7648, %v7734, %v7742
        %v7756 = vsel %vm7652, %v7734, %v7742
        %v7758 = vrot.slane %v7756, 2
        %v7761 = vsel %vm7648, %v7735, %v7743
        %v7763 = vsel %vm7652, %v7735, %v7743
        %v7765 = vrot.slane %v7763, 2
        %v7768 = vsel %vm7648, %v7736, %v7744
        %v7770 = vsel %vm7652, %v7736, %v7744
        %v7772 = vrot.slane %v7770, 2
        %vm7773 = vcmask 1040384
        %vm7774 = vcmask 1042434
        %vm7775 = vmor %vm7773, %vm7774
        %vm7776 = vcmask 1044484
        %vm7777 = vmor %vm7775, %vm7776
        %vm7778 = vcmask 1046534
        %vm7779 = vmor %vm7777, %vm7778
        %v7780 = vrot.slane %v7747, 7
        %v7781 = vrot.slane %v7780, 2
        %v7782 = vrot.slane %v7751, 7
        %v7783 = vsel %vm7779, %v7781, %v7782
        %v7784 = vrot.slane %v7754, 7
        %v7785 = vrot.slane %v7784, 2
        %v7786 = vrot.slane %v7758, 7
        %v7787 = vsel %vm7779, %v7785, %v7786
        %v7788 = vrot.slane %v7761, 7
        %v7789 = vrot.slane %v7788, 2
        %v7790 = vrot.slane %v7765, 7
        %v7791 = vsel %vm7779, %v7789, %v7790
        %v7792 = vrot.slane %v7768, 7
        %v7793 = vrot.slane %v7792, 2
        %v7794 = vrot.slane %v7772, 7
        %v7795 = vsel %vm7779, %v7793, %v7794
        %v7796 = vld [vmem:[%s7616] sm:$0x3]
        %v7797 = vld [vmem:[%s7616 + $0x4] sm:$0x3]
        %v7798 = vld [vmem:[%s7616 + $0x8] sm:$0x3]
        %v7799 = vld [vmem:[%s7616 + $0xc] sm:$0x3]
        %v7800 = vld [vmem:[%s7616] sm:$0x7]
        %v7801 = vld [vmem:[%s7616 + $0x4] sm:$0x7]
        %v7802 = vld [vmem:[%s7616 + $0x8] sm:$0x7]
        %v7803 = vld [vmem:[%s7616 + $0xc] sm:$0x7]
        %v7808 = vrot.slane %v7800, 2
        %v7809 = vrot.slane %v7801, 2
        %v7810 = vrot.slane %v7802, 2
        %v7811 = vrot.slane %v7803, 2
        %v7814 = vsel %vm7648, %v7800, %v7808
        %v7815 = vsel %vm7652, %v7800, %v7808
        %v7817 = vrot.slane %v7815, 2
        %v7820 = vsel %vm7648, %v7801, %v7809
        %v7821 = vsel %vm7652, %v7801, %v7809
        %v7823 = vrot.slane %v7821, 2
        %v7826 = vsel %vm7648, %v7802, %v7810
        %v7827 = vsel %vm7652, %v7802, %v7810
        %v7829 = vrot.slane %v7827, 2
        %v7832 = vsel %vm7648, %v7803, %v7811
        %v7833 = vsel %vm7652, %v7803, %v7811
        %v7835 = vrot.slane %v7833, 2
        %v7836 = vshrl.u32 %v7814, 16
        %v7838 = vrot.slane %v7836, 6
        %v7839 = vshll.u32 %v7814, 16
        %v7841 = vrot.slane %v7839, 7
        %v7842 = vor.u32 %v7838, %v7841
        %v7843 = vrot.slane %v7842, 2
        %v7845 = vshll.u32 %v7817, 16
        %v7847 = vrot.slane %v7845, 7
        %v7848 = vsel %vm7680, %v7843, %v7847
        %v7849 = vshrl.u32 %v7820, 16
        %v7851 = vrot.slane %v7849, 6
        %v7852 = vshll.u32 %v7820, 16
        %v7854 = vrot.slane %v7852, 7
        %v7855 = vor.u32 %v7851, %v7854
        %v7856 = vrot.slane %v7855, 2
        %v7858 = vshll.u32 %v7823, 16
        %v7860 = vrot.slane %v7858, 7
        %v7861 = vsel %vm7680, %v7856, %v7860
        %v7862 = vshrl.u32 %v7826, 16
        %v7864 = vrot.slane %v7862, 6
        %v7865 = vshll.u32 %v7826, 16
        %v7867 = vrot.slane %v7865, 7
        %v7868 = vor.u32 %v7864, %v7867
        %v7869 = vrot.slane %v7868, 2
        %v7871 = vshll.u32 %v7829, 16
        %v7873 = vrot.slane %v7871, 7
        %v7874 = vsel %vm7680, %v7869, %v7873
        %v7875 = vshrl.u32 %v7832, 16
        %v7877 = vrot.slane %v7875, 6
        %v7878 = vshll.u32 %v7832, 16
        %v7880 = vrot.slane %v7878, 7
        %v7881 = vor.u32 %v7877, %v7880
        %v7882 = vrot.slane %v7881, 2
        %v7884 = vshll.u32 %v7835, 16
        %v7886 = vrot.slane %v7884, 7
        %v7887 = vsel %vm7680, %v7882, %v7886
        %v7888 = vld [vmem:[%s7616] sm:$0x6]
        %v7889 = vld [vmem:[%s7616 + $0x4] sm:$0x6]
        %v7890 = vld [vmem:[%s7616 + $0x8] sm:$0x6]
        %v7891 = vld [vmem:[%s7616 + $0xc] sm:$0x6]
        %v7896 = vrot.slane %v7888, 2
        %v7897 = vrot.slane %v7889, 2
        %v7898 = vrot.slane %v7890, 2
        %v7899 = vrot.slane %v7891, 2
        %v7902 = vsel %vm7648, %v7888, %v7896
        %v7904 = vsel %vm7652, %v7888, %v7896
        %v7906 = vrot.slane %v7904, 2
        %v7909 = vsel %vm7648, %v7889, %v7897
        %v7911 = vsel %vm7652, %v7889, %v7897
        %v7913 = vrot.slane %v7911, 2
        %v7916 = vsel %vm7648, %v7890, %v7898
        %v7918 = vsel %vm7652, %v7890, %v7898
        %v7920 = vrot.slane %v7918, 2
        %v7923 = vsel %vm7648, %v7891, %v7899
        %v7925 = vsel %vm7652, %v7891, %v7899
        %v7927 = vrot.slane %v7925, 2
        %v7928 = vrot.slane %v7902, 7
        %v7929 = vrot.slane %v7928, 2
        %v7930 = vrot.slane %v7906, 7
        %v7931 = vsel %vm7779, %v7929, %v7930
        %v7932 = vrot.slane %v7909, 7
        %v7933 = vrot.slane %v7932, 2
        %v7934 = vrot.slane %v7913, 7
        %v7935 = vsel %vm7779, %v7933, %v7934
        %v7936 = vrot.slane %v7916, 7
        %v7937 = vrot.slane %v7936, 2
        %v7938 = vrot.slane %v7920, 7
        %v7939 = vsel %vm7779, %v7937, %v7938
        %v7940 = vrot.slane %v7923, 7
        %v7941 = vrot.slane %v7940, 2
        %v7942 = vrot.slane %v7927, 7
        %v7943 = vsel %vm7779, %v7941, %v7942
        %s7944 = scalar_lea.vmem [#allocation5], 8
        %v7945 = vld [vmem:[%s7944] sm:$0x3]
        %v7946 = vld [vmem:[%s7944 + $0x4] sm:$0x3]
        %v7947 = vld [vmem:[%s7944 + $0x8] sm:$0x3]
        %v7948 = vld [vmem:[%s7944 + $0xc] sm:$0x3]
        %v7949 = vld [vmem:[%s7944] sm:$0x7]
        %v7950 = vld [vmem:[%s7944 + $0x4] sm:$0x7]
        %v7951 = vld [vmem:[%s7944 + $0x8] sm:$0x7]
        %v7952 = vld [vmem:[%s7944 + $0xc] sm:$0x7]
        %v7957 = vrot.slane %v7949, 2
        %v7958 = vrot.slane %v7950, 2
        %v7959 = vrot.slane %v7951, 2
        %v7960 = vrot.slane %v7952, 2
        %v7963 = vsel %vm7648, %v7949, %v7957
        %v7964 = vsel %vm7652, %v7949, %v7957
        %v7966 = vrot.slane %v7964, 2
        %v7969 = vsel %vm7648, %v7950, %v7958
        %v7970 = vsel %vm7652, %v7950, %v7958
        %v7972 = vrot.slane %v7970, 2
        %v7975 = vsel %vm7648, %v7951, %v7959
        %v7976 = vsel %vm7652, %v7951, %v7959
        %v7978 = vrot.slane %v7976, 2
        %v7981 = vsel %vm7648, %v7952, %v7960
        %v7982 = vsel %vm7652, %v7952, %v7960
        %v7984 = vrot.slane %v7982, 2
        %v7985 = vshrl.u32 %v7963, 16
        %v7987 = vrot.slane %v7985, 6
        %v7988 = vshll.u32 %v7963, 16
        %v7990 = vrot.slane %v7988, 7
        %v7991 = vor.u32 %v7987, %v7990
        %v7992 = vrot.slane %v7991, 2
        %v7994 = vshll.u32 %v7966, 16
        %v7996 = vrot.slane %v7994, 7
        %v7997 = vsel %vm7680, %v7992, %v7996
        %v7998 = vshrl.u32 %v7969, 16
        %v8000 = vrot.slane %v7998, 6
        %v8001 = vshll.u32 %v7969, 16
        %v8003 = vrot.slane %v8001, 7
        %v8004 = vor.u32 %v8000, %v8003
        %v8005 = vrot.slane %v8004, 2
        %v8007 = vshll.u32 %v7972, 16
        %v8009 = vrot.slane %v8007, 7
        %v8010 = vsel %vm7680, %v8005, %v8009
        %v8011 = vshrl.u32 %v7975, 16
        %v8013 = vrot.slane %v8011, 6
        %v8014 = vshll.u32 %v7975, 16
        %v8016 = vrot.slane %v8014, 7
        %v8017 = vor.u32 %v8013, %v8016
        %v8018 = vrot.slane %v8017, 2
        %v8020 = vshll.u32 %v7978, 16
        %v8022 = vrot.slane %v8020, 7
        %v8023 = vsel %vm7680, %v8018, %v8022
        %v8024 = vshrl.u32 %v7981, 16
        %v8026 = vrot.slane %v8024, 6
        %v8027 = vshll.u32 %v7981, 16
        %v8029 = vrot.slane %v8027, 7
        %v8030 = vor.u32 %v8026, %v8029
        %v8031 = vrot.slane %v8030, 2
        %v8033 = vshll.u32 %v7984, 16
        %v8035 = vrot.slane %v8033, 7
        %v8036 = vsel %vm7680, %v8031, %v8035
        %v8037 = vld [vmem:[%s7944] sm:$0x6]
        %v8038 = vld [vmem:[%s7944 + $0x4] sm:$0x6]
        %v8039 = vld [vmem:[%s7944 + $0x8] sm:$0x6]
        %v8040 = vld [vmem:[%s7944 + $0xc] sm:$0x6]
        %v8045 = vrot.slane %v8037, 2
        %v8046 = vrot.slane %v8038, 2
        %v8047 = vrot.slane %v8039, 2
        %v8048 = vrot.slane %v8040, 2
        %v8051 = vsel %vm7648, %v8037, %v8045
        %v8053 = vsel %vm7652, %v8037, %v8045
        %v8055 = vrot.slane %v8053, 2
        %v8058 = vsel %vm7648, %v8038, %v8046
        %v8060 = vsel %vm7652, %v8038, %v8046
        %v8062 = vrot.slane %v8060, 2
        %v8065 = vsel %vm7648, %v8039, %v8047
        %v8067 = vsel %vm7652, %v8039, %v8047
        %v8069 = vrot.slane %v8067, 2
        %v8072 = vsel %vm7648, %v8040, %v8048
        %v8074 = vsel %vm7652, %v8040, %v8048
        %v8076 = vrot.slane %v8074, 2
        %v8077 = vrot.slane %v8051, 7
        %v8078 = vrot.slane %v8077, 2
        %v8079 = vrot.slane %v8055, 7
        %v8080 = vsel %vm7779, %v8078, %v8079
        %v8081 = vrot.slane %v8058, 7
        %v8082 = vrot.slane %v8081, 2
        %v8083 = vrot.slane %v8062, 7
        %v8084 = vsel %vm7779, %v8082, %v8083
        %v8085 = vrot.slane %v8065, 7
        %v8086 = vrot.slane %v8085, 2
        %v8087 = vrot.slane %v8069, 7
        %v8088 = vsel %vm7779, %v8086, %v8087
        %v8089 = vrot.slane %v8072, 7
        %v8090 = vrot.slane %v8089, 2
        %v8091 = vrot.slane %v8076, 7
        %v8092 = vsel %vm7779, %v8090, %v8091
        %8094 = vst [vmem:[#allocation1] ss:$4 sm:$0xff] %v7632
        %s8096 = scalar_lea.vmem [#allocation1], 1
        %8097 = vst [vmem:[%s8096] ss:$4 sm:$0xff] %v7633
        %s8099 = scalar_lea.vmem [#allocation1], 2
        %8100 = vst [vmem:[%s8099] ss:$4 sm:$0xff] %v7634
        %s8102 = scalar_lea.vmem [#allocation1], 3
        %8103 = vst [vmem:[%s8102] ss:$4 sm:$0xff] %v7635
        %v8104 = vld.sshfl [vmem:[#allocation1] sm:$0xff pattern:$0x73625140]
        %8106 = vst [vmem:[#allocation1] ss:$4 sm:$0xff] %v7693
        %s8108 = scalar_lea.vmem [#allocation1], 1
        %8109 = vst [vmem:[%s8108] ss:$4 sm:$0xff] %v7706
        %s8111 = scalar_lea.vmem [#allocation1], 2
        %8112 = vst [vmem:[%s8111] ss:$4 sm:$0xff] %v7719
        %s8114 = scalar_lea.vmem [#allocation1], 3
        %8115 = vst [vmem:[%s8114] ss:$4 sm:$0xff] %v7732
        %v8116 = vld.sshfl [vmem:[#allocation1] sm:$0xff pattern:$0x73625140]
        %8118 = vrot.lane.b32.xlu0 %v8116, 64
        %v8119 = vpop.permute.xlu0 %8118
        %8121 = vst [vmem:[#allocation1] ss:$4 sm:$0xff] %v7783
        %s8123 = scalar_lea.vmem [#allocation1], 1
        %8124 = vst [vmem:[%s8123] ss:$4 sm:$0xff] %v7787
        %s8126 = scalar_lea.vmem [#allocation1], 2
        %8127 = vst [vmem:[%s8126] ss:$4 sm:$0xff] %v7791
        %s8129 = scalar_lea.vmem [#allocation1], 3
        %8130 = vst [vmem:[%s8129] ss:$4 sm:$0xff] %v7795
        %v8131 = vld.sshfl [vmem:[#allocation1] sm:$0xff pattern:$0x73625140]
        %8133 = vst [vmem:[#allocation1] ss:$4 sm:$0xff] %v7796
        %s8135 = scalar_lea.vmem [#allocation1], 1
        %8136 = vst [vmem:[%s8135] ss:$4 sm:$0xff] %v7797
        %s8138 = scalar_lea.vmem [#allocation1], 2
        %8139 = vst [vmem:[%s8138] ss:$4 sm:$0xff] %v7798
        %s8141 = scalar_lea.vmem [#allocation1], 3
        %8142 = vst [vmem:[%s8141] ss:$4 sm:$0xff] %v7799
        %v8143 = vld.sshfl [vmem:[#allocation1] sm:$0xff pattern:$0x73625140]
        %8145 = vrot.lane.b32.xlu0 %v8143, 64
        %v8146 = vpop.permute.xlu0 %8145
        %8148 = vst [vmem:[#allocation1] ss:$4 sm:$0xff] %v7848
        %s8150 = scalar_lea.vmem [#allocation1], 1
        %8151 = vst [vmem:[%s8150] ss:$4 sm:$0xff] %v7861
        %s8153 = scalar_lea.vmem [#allocation1], 2
        %8154 = vst [vmem:[%s8153] ss:$4 sm:$0xff] %v7874
        %s8156 = scalar_lea.vmem [#allocation1], 3
        %8157 = vst [vmem:[%s8156] ss:$4 sm:$0xff] %v7887
        %v8158 = vld.sshfl [vmem:[#allocation1] sm:$0xff pattern:$0x73625140]
        %8160 = vst [vmem:[#allocation1] ss:$4 sm:$0xff] %v7931
        %s8162 = scalar_lea.vmem [#allocation1], 1
        %8163 = vst [vmem:[%s8162] ss:$4 sm:$0xff] %v7935
        %s8165 = scalar_lea.vmem [#allocation1], 2
        %8166 = vst [vmem:[%s8165] ss:$4 sm:$0xff] %v7939
        %s8168 = scalar_lea.vmem [#allocation1], 3
        %8169 = vst [vmem:[%s8168] ss:$4 sm:$0xff] %v7943
        %v8170 = vld.sshfl [vmem:[#allocation1] sm:$0xff pattern:$0x73625140]
        %8172 = vrot.lane.b32.xlu0 %v8170, 64
        %v8173 = vpop.permute.xlu0 %8172
        %8175 = vst [vmem:[#allocation1] ss:$4 sm:$0xff] %v7945
        %s8177 = scalar_lea.vmem [#allocation1], 1
        %8178 = vst [vmem:[%s8177] ss:$4 sm:$0xff] %v7946
        %s8180 = scalar_lea.vmem [#allocation1], 2
        %8181 = vst [vmem:[%s8180] ss:$4 sm:$0xff] %v7947
        %s8183 = scalar_lea.vmem [#allocation1], 3
        %8184 = vst [vmem:[%s8183] ss:$4 sm:$0xff] %v7948
        %v8185 = vld.sshfl [vmem:[#allocation1] sm:$0xff pattern:$0x73625140]
        %8187 = vst [vmem:[#allocation1] ss:$4 sm:$0xff] %v7997
        %s8189 = scalar_lea.vmem [#allocation1], 1
        %8190 = vst [vmem:[%s8189] ss:$4 sm:$0xff] %v8010
        %s8192 = scalar_lea.vmem [#allocation1], 2
        %8193 = vst [vmem:[%s8192] ss:$4 sm:$0xff] %v8023
        %s8195 = scalar_lea.vmem [#allocation1], 3
        %8196 = vst [vmem:[%s8195] ss:$4 sm:$0xff] %v8036
        %v8197 = vld.sshfl [vmem:[#allocation1] sm:$0xff pattern:$0x73625140]
        %8199 = vrot.lane.b32.xlu0 %v8197, 64
        %v8200 = vpop.permute.xlu0 %8199
        %8202 = vst [vmem:[#allocation1] ss:$4 sm:$0xff] %v8080
        %s8204 = scalar_lea.vmem [#allocation1], 1
        %8205 = vst [vmem:[%s8204] ss:$4 sm:$0xff] %v8084
        %s8207 = scalar_lea.vmem [#allocation1], 2
        %8208 = vst [vmem:[%s8207] ss:$4 sm:$0xff] %v8088
        %s8210 = scalar_lea.vmem [#allocation1], 3
        %8211 = vst [vmem:[%s8210] ss:$4 sm:$0xff] %v8092
        %v8212 = vld.sshfl [vmem:[#allocation1] sm:$0xff pattern:$0x73625140]
        %v8214 = vsel %vm4035, %v8104, %v8119
        %v8217 = vsel %vm4035, %v8131, %v8146
        %v8220 = vsel %vm4035, %v8158, %v8173
        %v8223 = vsel %vm4035, %v8185, %v8200
        %v8225 = vld [vmem:[%s9] sm:$0xf]
        %v8226 = vld [vmem:[%s9 + $0x4] sm:$0xf]
        %v8227 = vld [vmem:[%s9 + $0x8] sm:$0xf]
        %v8228 = vld [vmem:[%s9 + $0xc] sm:$0xf]
        %v8229 = vld [vmem:[%s9 + $0x10] sm:$0xf]
        %v8230 = vld [vmem:[%s9 + $0x14] sm:$0xf]
        %v8231 = vld [vmem:[%s9 + $0x18] sm:$0xf]
        %v8232 = vld [vmem:[%s9 + $0x1c] sm:$0xf]
        %v8233 = vld [vmem:[%s9 + $0x20] sm:$0xf]
        %v8234 = vld [vmem:[%s9 + $0x24] sm:$0xf]
        %v8235 = vld [vmem:[%s9 + $0x28] sm:$0xf]
        %v8236 = vld [vmem:[%s9 + $0x2c] sm:$0xf]
        %v8237 = vld [vmem:[%s9 + $0x30] sm:$0xf]
        %v8238 = vld [vmem:[%s9 + $0x34] sm:$0xf]
        %v8239 = vld [vmem:[%s9 + $0x38] sm:$0xf]
        %v8240 = vld [vmem:[%s9 + $0x3c] sm:$0xf]
        %v8241 = vld [vmem:[%s9 + $0x40] sm:$0xf]
        %v8242 = vld [vmem:[%s9 + $0x44] sm:$0xf]
        %v8243 = vld [vmem:[%s9 + $0x48] sm:$0xf]
        %v8244 = vld [vmem:[%s9 + $0x4c] sm:$0xf]
        %v8245 = vld [vmem:[%s9 + $0x50] sm:$0xf]
        %v8246 = vld [vmem:[%s9 + $0x54] sm:$0xf]
        %v8247 = vld [vmem:[%s9 + $0x58] sm:$0xf]
        %v8248 = vld [vmem:[%s9 + $0x5c] sm:$0xf]
        %v8249 = vld [vmem:[%s9 + $0x60] sm:$0xf]
        %v8250 = vld [vmem:[%s9 + $0x64] sm:$0xf]
        %v8251 = vld [vmem:[%s9 + $0x68] sm:$0xf]
        %v8252 = vld [vmem:[%s9 + $0x6c] sm:$0xf]
        %v8253 = vld [vmem:[%s9 + $0x70] sm:$0xf]
        %v8254 = vld [vmem:[%s9 + $0x74] sm:$0xf]
        %v8255 = vld [vmem:[%s9 + $0x78] sm:$0xf]
        %v8256 = vld [vmem:[%s9 + $0x7c] sm:$0xf]
        %v8257 = vld [vmem:[%s9 + $0x80] sm:$0xf]
        %v8258 = vld [vmem:[%s9 + $0x84] sm:$0xf]
        %v8259 = vld [vmem:[%s9 + $0x88] sm:$0xf]
        %v8260 = vld [vmem:[%s9 + $0x8c] sm:$0xf]
        %v8261 = vld [vmem:[%s9 + $0x90] sm:$0xf]
        %v8262 = vld [vmem:[%s9 + $0x94] sm:$0xf]
        %v8263 = vld [vmem:[%s9 + $0x98] sm:$0xf]
        %v8264 = vld [vmem:[%s9 + $0x9c] sm:$0xf]
        %v8265 = vld [vmem:[%s9 + $0xa0] sm:$0xf]
        %v8266 = vld [vmem:[%s9 + $0xa4] sm:$0xf]
        %v8267 = vld [vmem:[%s9 + $0xa8] sm:$0xf]
        %v8268 = vld [vmem:[%s9 + $0xac] sm:$0xf]
        %v8269 = vld [vmem:[%s9 + $0xb0] sm:$0xf]
        %v8270 = vld [vmem:[%s9 + $0xb4] sm:$0xf]
        %v8271 = vld [vmem:[%s9 + $0xb8] sm:$0xf]
        %v8272 = vld [vmem:[%s9 + $0xbc] sm:$0xf]
        %v8273 = vld [vmem:[%s9 + $0xc0] sm:$0xf]
        %v8274 = vld [vmem:[%s9 + $0xc4] sm:$0xf]
        %v8275 = vld [vmem:[%s9 + $0xc8] sm:$0xf]
        %v8276 = vld [vmem:[%s9 + $0xcc] sm:$0xf]
        %v8277 = vld [vmem:[%s9 + $0xd0] sm:$0xf]
        %v8278 = vld [vmem:[%s9 + $0xd4] sm:$0xf]
        %v8279 = vld [vmem:[%s9 + $0xd8] sm:$0xf]
        %v8280 = vld [vmem:[%s9 + $0xdc] sm:$0xf]
        %v8281 = vld [vmem:[%s9 + $0xe0] sm:$0xf]
        %v8282 = vld [vmem:[%s9 + $0xe4] sm:$0xf]
        %v8283 = vld [vmem:[%s9 + $0xe8] sm:$0xf]
        %v8284 = vld [vmem:[%s9 + $0xec] sm:$0xf]
        %v8285 = vld [vmem:[%s9 + $0xf0] sm:$0xf]
        %v8286 = vld [vmem:[%s9 + $0xf4] sm:$0xf]
        %v8287 = vld [vmem:[%s9 + $0xf8] sm:$0xf]
        %v8288 = vld [vmem:[%s9 + $0xfc] sm:$0xf]
        %v8289 = vld [vmem:[%s9 + $0x100] sm:$0xf]
        %v8290 = vld [vmem:[%s9 + $0x104] sm:$0xf]
        %v8291 = vld [vmem:[%s9 + $0x108] sm:$0xf]
        %v8292 = vld [vmem:[%s9 + $0x10c] sm:$0xf]
        %v8293 = vld [vmem:[%s9 + $0x110] sm:$0xf]
        %v8294 = vld [vmem:[%s9 + $0x114] sm:$0xf]
        %v8295 = vld [vmem:[%s9 + $0x118] sm:$0xf]
        %v8296 = vld [vmem:[%s9 + $0x11c] sm:$0xf]
        %v8297 = vld [vmem:[%s10] sm:$0x1]
        %v8299 = vperm.slane %v8297, 0
        %v8373 = vunpack.c.l.b16 %v8225
        %v8374 = vunpack.c.l.b16 %v8226
        %v8375 = vunpack.c.l.b16 %v8227
        %v8376 = vunpack.c.l.b16 %v8228
        %v8377 = vunpack.c.l.b16 %v8229
        %v8378 = vunpack.c.l.b16 %v8230
        %v8379 = vunpack.c.l.b16 %v8231
        %v8380 = vunpack.c.l.b16 %v8232
        %v8381 = vunpack.c.l.b16 %v8233
        %v8382 = vunpack.c.l.b16 %v8234
        %v8383 = vunpack.c.l.b16 %v8235
        %v8384 = vunpack.c.l.b16 %v8236
        %v8385 = vunpack.c.l.b16 %v8237
        %v8386 = vunpack.c.l.b16 %v8238
        %v8387 = vunpack.c.l.b16 %v8239
        %v8388 = vunpack.c.l.b16 %v8240
        %v8389 = vunpack.c.l.b16 %v8241
        %v8390 = vunpack.c.l.b16 %v8242
        %v8391 = vunpack.c.l.b16 %v8243
        %v8392 = vunpack.c.l.b16 %v8244
        %v8393 = vunpack.c.l.b16 %v8245
        %v8394 = vunpack.c.l.b16 %v8246
        %v8395 = vunpack.c.l.b16 %v8247
        %v8396 = vunpack.c.l.b16 %v8248
        %v8397 = vunpack.c.l.b16 %v8249
        %v8398 = vunpack.c.l.b16 %v8250
        %v8399 = vunpack.c.l.b16 %v8251
        %v8400 = vunpack.c.l.b16 %v8252
        %v8401 = vunpack.c.l.b16 %v8253
        %v8402 = vunpack.c.l.b16 %v8254
        %v8403 = vunpack.c.l.b16 %v8255
        %v8404 = vunpack.c.l.b16 %v8256
        %v8405 = vunpack.c.l.b16 %v8257
        %v8406 = vunpack.c.l.b16 %v8258
        %v8407 = vunpack.c.l.b16 %v8259
        %v8408 = vunpack.c.l.b16 %v8260
        %v8409 = vunpack.c.l.b16 %v8261
        %v8410 = vunpack.c.l.b16 %v8262
        %v8411 = vunpack.c.l.b16 %v8263
        %v8412 = vunpack.c.l.b16 %v8264
        %v8413 = vunpack.c.l.b16 %v8265
        %v8414 = vunpack.c.l.b16 %v8266
        %v8415 = vunpack.c.l.b16 %v8267
        %v8416 = vunpack.c.l.b16 %v8268
        %v8417 = vunpack.c.l.b16 %v8269
        %v8418 = vunpack.c.l.b16 %v8270
        %v8419 = vunpack.c.l.b16 %v8271
        %v8420 = vunpack.c.l.b16 %v8272
        %v8421 = vunpack.c.l.b16 %v8273
        %v8422 = vunpack.c.l.b16 %v8274
        %v8423 = vunpack.c.l.b16 %v8275
        %v8424 = vunpack.c.l.b16 %v8276
        %v8425 = vunpack.c.l.b16 %v8277
        %v8426 = vunpack.c.l.b16 %v8278
        %v8427 = vunpack.c.l.b16 %v8279
        %v8428 = vunpack.c.l.b16 %v8280
        %v8429 = vunpack.c.l.b16 %v8281
        %v8430 = vunpack.c.l.b16 %v8282
        %v8431 = vunpack.c.l.b16 %v8283
        %v8432 = vunpack.c.l.b16 %v8284
        %v8433 = vunpack.c.l.b16 %v8285
        %v8434 = vunpack.c.l.b16 %v8286
        %v8435 = vunpack.c.l.b16 %v8287
        %v8436 = vunpack.c.l.b16 %v8288
        %v8437 = vunpack.c.l.b16 %v8289
        %v8438 = vunpack.c.l.b16 %v8290
        %v8439 = vunpack.c.l.b16 %v8291
        %v8440 = vunpack.c.l.b16 %v8292
        %v8441 = vunpack.c.l.b16 %v8293
        %v8442 = vunpack.c.l.b16 %v8294
        %v8443 = vunpack.c.l.b16 %v8295
        %v8444 = vunpack.c.l.b16 %v8296
        %v8445 = vpack.c.b16 %v8374, %v8373
        %v8446 = vpack.c.b16 %v8376, %v8375
        %v8447 = vpack.c.b16 %v8378, %v8377
        %v8448 = vpack.c.b16 %v8380, %v8379
        %v8449 = vpack.c.b16 %v8382, %v8381
        %v8450 = vpack.c.b16 %v8384, %v8383
        %v8451 = vpack.c.b16 %v8386, %v8385
        %v8452 = vpack.c.b16 %v8388, %v8387
        %v8453 = vpack.c.b16 %v8390, %v8389
        %v8454 = vpack.c.b16 %v8392, %v8391
        %v8455 = vpack.c.b16 %v8394, %v8393
        %v8456 = vpack.c.b16 %v8396, %v8395
        %v8457 = vpack.c.b16 %v8398, %v8397
        %v8458 = vpack.c.b16 %v8400, %v8399
        %v8459 = vpack.c.b16 %v8402, %v8401
        %v8460 = vpack.c.b16 %v8404, %v8403
        %v8461 = vpack.c.b16 %v8406, %v8405
        %v8462 = vpack.c.b16 %v8408, %v8407
        %v8463 = vpack.c.b16 %v8410, %v8409
        %v8464 = vpack.c.b16 %v8412, %v8411
        %v8465 = vpack.c.b16 %v8414, %v8413
        %v8466 = vpack.c.b16 %v8416, %v8415
        %v8467 = vpack.c.b16 %v8418, %v8417
        %v8468 = vpack.c.b16 %v8420, %v8419
        %v8469 = vpack.c.b16 %v8422, %v8421
        %v8470 = vpack.c.b16 %v8424, %v8423
        %v8471 = vpack.c.b16 %v8426, %v8425
        %v8472 = vpack.c.b16 %v8428, %v8427
        %v8473 = vpack.c.b16 %v8430, %v8429
        %v8474 = vpack.c.b16 %v8432, %v8431
        %v8475 = vpack.c.b16 %v8434, %v8433
        %v8476 = vpack.c.b16 %v8436, %v8435
        %v8477 = vpack.c.b16 %v8438, %v8437
        %v8478 = vpack.c.b16 %v8440, %v8439
        %v8479 = vpack.c.b16 %v8442, %v8441
        %v8480 = vpack.c.b16 %v8444, %v8443
        %v8517 = vsel %vm4035, %v8212, 0
        %8519 = vmatpush.bf16.msra.mxu0 %v8452
        %8520 = vmatpush.bf16.msra.mxu0 %v8451
        %8521 = vmatpush.bf16.msra.mxu0 %v8450
        %8522 = vmatpush.bf16.msra.mxu0 %v8449
        %8523 = vmatpush.bf16.msra.mxu0 %v8448
        %8524 = vmatpush.bf16.msra.mxu0 %v8447
        %8525 = vmatpush.bf16.msra.mxu0 %v8446
        %8526 = vmatpush.bf16.msra.mxu0 %v8445
        %8527 = vmatmul.bf16.gmra.mxu0 %v8214
        %v8528 = vpop.f32.mrf.mxu0
        %v8529 = vadd.f32 %v8299, %v8528
        %v8530 = vpop.f32.mrf.mxu0
        %v8531 = vadd.f32 %v8299, %v8530
        %8532 = vdwg.mxu0
        %8533 = vmatpush.bf16.msra.mxu0 %v8460
        %8534 = vmatpush.bf16.msra.mxu0 %v8459
        %8535 = vmatpush.bf16.msra.mxu0 %v8458
        %8536 = vmatpush.bf16.msra.mxu0 %v8457
        %8537 = vmatpush.bf16.msra.mxu0 %v8456
        %8538 = vmatpush.bf16.msra.mxu0 %v8455
        %8539 = vmatpush.bf16.msra.mxu0 %v8454
        %8540 = vmatpush.bf16.msra.mxu0 %v8453
        %8541 = vmatmul.bf16.gmra.mxu0 %v8217
        %v8542 = vpop.f32.mrf.mxu0
        %v8543 = vadd.f32 %v8529, %v8542
        %v8544 = vpop.f32.mrf.mxu0
        %v8545 = vadd.f32 %v8531, %v8544
        %8546 = vdwg.mxu0
        %8547 = vmatpush.bf16.msra.mxu0 %v8468
        %8548 = vmatpush.bf16.msra.mxu0 %v8467
        %8549 = vmatpush.bf16.msra.mxu0 %v8466
        %8550 = vmatpush.bf16.msra.mxu0 %v8465
        %8551 = vmatpush.bf16.msra.mxu0 %v8464
        %8552 = vmatpush.bf16.msra.mxu0 %v8463
        %8553 = vmatpush.bf16.msra.mxu0 %v8462
        %8554 = vmatpush.bf16.msra.mxu0 %v8461
        %8555 = vmatmul.bf16.gmra.mxu0 %v8220
        %v8556 = vpop.f32.mrf.mxu0
        %v8557 = vadd.f32 %v8543, %v8556
        %v8558 = vpop.f32.mrf.mxu0
        %v8559 = vadd.f32 %v8545, %v8558
        %8560 = vdwg.mxu0
        %8561 = vmatpush.bf16.msra.mxu0 %v8476
        %8562 = vmatpush.bf16.msra.mxu0 %v8475
        %8563 = vmatpush.bf16.msra.mxu0 %v8474
        %8564 = vmatpush.bf16.msra.mxu0 %v8473
        %8565 = vmatpush.bf16.msra.mxu0 %v8472
        %8566 = vmatpush.bf16.msra.mxu0 %v8471
        %8567 = vmatpush.bf16.msra.mxu0 %v8470
        %8568 = vmatpush.bf16.msra.mxu0 %v8469
        %8569 = vmatmul.bf16.gmra.mxu0 %v8223
        %v8570 = vpop.f32.mrf.mxu0
        %v8571 = vadd.f32 %v8557, %v8570
        %v8572 = vpop.f32.mrf.mxu0
        %v8573 = vadd.f32 %v8559, %v8572
        %8574 = vdwg.mxu0
        %8575 = vmatpush.bf16.msra.mxu0 0
        %8576 = vmatpush.bf16.msra.mxu0 0
        %8577 = vmatpush.bf16.msra.mxu0 0
        %8578 = vmatpush.bf16.msra.mxu0 0
        %8579 = vmatpush.bf16.msra.mxu0 %v8480
        %8580 = vmatpush.bf16.msra.mxu0 %v8479
        %8581 = vmatpush.bf16.msra.mxu0 %v8478
        %8582 = vmatpush.bf16.msra.mxu0 %v8477
        %8583 = vmatmul.bf16.gmra.mxu0 %v8517
        %v8584 = vpop.f32.mrf.mxu0
        %v8585 = vadd.f32 %v8571, %v8584
        %v8586 = vpop.f32.mrf.mxu0
        %v8587 = vadd.f32 %v8573, %v8586
        %8588 = vdwg.mxu0
        %v8589 = vmax.f32 %v8585, 0.0
        %v8590 = vmax.f32 %v8587, 0.0
        %v8591 = vpack.c.bf16 %v8589, %v8589
        %v8592 = vpack.c.bf16 %v8590, %v8590
        %v8595 = vrot.slane %v8591, 2
        %v8596 = vrot.slane %v8592, 2
        %v8599 = vsel %vm7648, %v8591, %v8595
        %v8600 = vsel %vm7652, %v8591, %v8595
        %v8602 = vrot.slane %v8600, 2
        %v8605 = vsel %vm7648, %v8592, %v8596
        %v8606 = vsel %vm7652, %v8592, %v8596
        %v8608 = vrot.slane %v8606, 2
        %8609 = vst [vmem:[#allocation1] ss:$2 sm:$0xff] %v8599
        %v8610 = vld.sshfl [vmem:[#allocation1] sm:$0xff pattern:$0x75643120]
        %s8612 = scalar_lea.vmem [#allocation1], 16
        %8613 = vst [vmem:[%s8612] ss:$2 sm:$0xff] %v8602
        %v8614 = vld.sshfl [vmem:[#allocation1 + $0x10] sm:$0xff pattern:$0x75643120]
        %s8615 = scalar_lea.vmem [#allocation1], 32
        %8616 = vst [vmem:[%s8615] ss:$2 sm:$0xff] %v8605
        %v8617 = vld.sshfl [vmem:[#allocation1 + $0x20] sm:$0xff pattern:$0x75643120]
        %s8619 = scalar_lea.vmem [#allocation1], 48
        %8620 = vst [vmem:[%s8619] ss:$2 sm:$0xff] %v8608
        %v8621 = vld.sshfl [vmem:[#allocation1 + $0x30] sm:$0xff pattern:$0x75643120]
        %v8622 = vshrl.u32 %v8610, 16
        %v8624 = vrot.slane %v8622, 7
        %v8625 = vshll.u32 %v8610, 16
        %v8627 = vor.u32 %v8624, %v8625
        %v8628 = vshrl.u32 %v8614, 16
        %v8630 = vrot.slane %v8628, 7
        %v8631 = vshll.u32 %v8614, 16
        %v8633 = vor.u32 %v8630, %v8631
        %v8634 = vshrl.u32 %v8617, 16
        %v8636 = vrot.slane %v8634, 7
        %v8637 = vshll.u32 %v8617, 16
        %v8639 = vor.u32 %v8636, %v8637
        %v8640 = vshrl.u32 %v8621, 16
        %v8642 = vrot.slane %v8640, 7
        %v8643 = vshll.u32 %v8621, 16
        %v8645 = vor.u32 %v8642, %v8643
        %s8650 = scalar_lea.vmem [#allocation6], 4
        %vm8651 = vmand %vm1884, %vm7618
        %v8652 = vld [vmem:[%s8650] sm:$0x7]
        %v8653 = vsel %vm8651, %v8627, %v8652
        %8654 = vst [vmem:[%s8650] sm:$0x7] %v8653
        %v8655 = vld [vmem:[%s8650 + $0x4] sm:$0x7]
        %v8656 = vsel %vm8651, %v8633, %v8655
        %8657 = vst [vmem:[%s8650 + $0x4] sm:$0x7] %v8656
        %v8658 = vld [vmem:[%s8650 + $0x8] sm:$0x7]
        %v8659 = vsel %vm8651, %v8639, %v8658
        %8660 = vst [vmem:[%s8650 + $0x8] sm:$0x7] %v8659
        %v8661 = vld [vmem:[%s8650 + $0xc] sm:$0x7]
        %v8662 = vsel %vm8651, %v8645, %v8661
        %8663 = vst [vmem:[%s8650 + $0xc] sm:$0x7] %v8662
        %v8664 = vld [vmem:[#allocation6] sm:$0x3]
        %v8665 = vld [vmem:[#allocation6 + $0x4] sm:$0x3]
        %v8666 = vld [vmem:[#allocation6 + $0x8] sm:$0x3]
        %v8667 = vld [vmem:[#allocation6 + $0xc] sm:$0x3]
        %v8668 = vld [vmem:[#allocation6] sm:$0x7]
        %v8669 = vld [vmem:[#allocation6 + $0x4] sm:$0x7]
        %v8670 = vld [vmem:[#allocation6 + $0x8] sm:$0x7]
        %v8671 = vld [vmem:[#allocation6 + $0xc] sm:$0x7]
        %v8676 = vrot.slane %v8668, 2
        %v8677 = vrot.slane %v8669, 2
        %v8678 = vrot.slane %v8670, 2
        %v8679 = vrot.slane %v8671, 2
        %v8682 = vsel %vm7648, %v8668, %v8676
        %v8683 = vsel %vm7652, %v8668, %v8676
        %v8685 = vrot.slane %v8683, 2
        %v8688 = vsel %vm7648, %v8669, %v8677
        %v8689 = vsel %vm7652, %v8669, %v8677
        %v8691 = vrot.slane %v8689, 2
        %v8694 = vsel %vm7648, %v8670, %v8678
        %v8695 = vsel %vm7652, %v8670, %v8678
        %v8697 = vrot.slane %v8695, 2
        %v8700 = vsel %vm7648, %v8671, %v8679
        %v8701 = vsel %vm7652, %v8671, %v8679
        %v8703 = vrot.slane %v8701, 2
        %v8704 = vshrl.u32 %v8682, 16
        %v8706 = vrot.slane %v8704, 6
        %v8707 = vshll.u32 %v8682, 16
        %v8709 = vrot.slane %v8707, 7
        %v8710 = vor.u32 %v8706, %v8709
        %v8711 = vrot.slane %v8710, 2
        %v8713 = vshll.u32 %v8685, 16
        %v8715 = vrot.slane %v8713, 7
        %v8716 = vsel %vm7680, %v8711, %v8715
        %v8717 = vshrl.u32 %v8688, 16
        %v8719 = vrot.slane %v8717, 6
        %v8720 = vshll.u32 %v8688, 16
        %v8722 = vrot.slane %v8720, 7
        %v8723 = vor.u32 %v8719, %v8722
        %v8724 = vrot.slane %v8723, 2
        %v8726 = vshll.u32 %v8691, 16
        %v8728 = vrot.slane %v8726, 7
        %v8729 = vsel %vm7680, %v8724, %v8728
        %v8730 = vshrl.u32 %v8694, 16
        %v8732 = vrot.slane %v8730, 6
        %v8733 = vshll.u32 %v8694, 16
        %v8735 = vrot.slane %v8733, 7
        %v8736 = vor.u32 %v8732, %v8735
        %v8737 = vrot.slane %v8736, 2
        %v8739 = vshll.u32 %v8697, 16
        %v8741 = vrot.slane %v8739, 7
        %v8742 = vsel %vm7680, %v8737, %v8741
        %v8743 = vshrl.u32 %v8700, 16
        %v8745 = vrot.slane %v8743, 6
        %v8746 = vshll.u32 %v8700, 16
        %v8748 = vrot.slane %v8746, 7
        %v8749 = vor.u32 %v8745, %v8748
        %v8750 = vrot.slane %v8749, 2
        %v8752 = vshll.u32 %v8703, 16
        %v8754 = vrot.slane %v8752, 7
        %v8755 = vsel %vm7680, %v8750, %v8754
        %v8756 = vld [vmem:[#allocation6] sm:$0x6]
        %v8757 = vld [vmem:[#allocation6 + $0x4] sm:$0x6]
        %v8758 = vld [vmem:[#allocation6 + $0x8] sm:$0x6]
        %v8759 = vld [vmem:[#allocation6 + $0xc] sm:$0x6]
        %v8764 = vrot.slane %v8756, 2
        %v8765 = vrot.slane %v8757, 2
        %v8766 = vrot.slane %v8758, 2
        %v8767 = vrot.slane %v8759, 2
        %v8770 = vsel %vm7648, %v8756, %v8764
        %v8772 = vsel %vm7652, %v8756, %v8764
        %v8774 = vrot.slane %v8772, 2
        %v8777 = vsel %vm7648, %v8757, %v8765
        %v8779 = vsel %vm7652, %v8757, %v8765
        %v8781 = vrot.slane %v8779, 2
        %v8784 = vsel %vm7648, %v8758, %v8766
        %v8786 = vsel %vm7652, %v8758, %v8766
        %v8788 = vrot.slane %v8786, 2
        %v8791 = vsel %vm7648, %v8759, %v8767
        %v8793 = vsel %vm7652, %v8759, %v8767
        %v8795 = vrot.slane %v8793, 2
        %v8796 = vrot.slane %v8770, 7
        %v8797 = vrot.slane %v8796, 2
        %v8798 = vrot.slane %v8774, 7
        %v8799 = vsel %vm7779, %v8797, %v8798
        %v8800 = vrot.slane %v8777, 7
        %v8801 = vrot.slane %v8800, 2
        %v8802 = vrot.slane %v8781, 7
        %v8803 = vsel %vm7779, %v8801, %v8802
        %v8804 = vrot.slane %v8784, 7
        %v8805 = vrot.slane %v8804, 2
        %v8806 = vrot.slane %v8788, 7
        %v8807 = vsel %vm7779, %v8805, %v8806
        %v8808 = vrot.slane %v8791, 7
        %v8809 = vrot.slane %v8808, 2
        %v8810 = vrot.slane %v8795, 7
        %v8811 = vsel %vm7779, %v8809, %v8810
        %v8812 = vld [vmem:[%s8650] sm:$0x3]
        %v8813 = vld [vmem:[%s8650 + $0x4] sm:$0x3]
        %v8814 = vld [vmem:[%s8650 + $0x8] sm:$0x3]
        %v8815 = vld [vmem:[%s8650 + $0xc] sm:$0x3]
        %v8816 = vld [vmem:[%s8650] sm:$0x7]
        %v8817 = vld [vmem:[%s8650 + $0x4] sm:$0x7]
        %v8818 = vld [vmem:[%s8650 + $0x8] sm:$0x7]
        %v8819 = vld [vmem:[%s8650 + $0xc] sm:$0x7]
        %v8824 = vrot.slane %v8816, 2
        %v8825 = vrot.slane %v8817, 2
        %v8826 = vrot.slane %v8818, 2
        %v8827 = vrot.slane %v8819, 2
        %v8830 = vsel %vm7648, %v8816, %v8824
        %v8831 = vsel %vm7652, %v8816, %v8824
        %v8833 = vrot.slane %v8831, 2
        %v8836 = vsel %vm7648, %v8817, %v8825
        %v8837 = vsel %vm7652, %v8817, %v8825
        %v8839 = vrot.slane %v8837, 2
        %v8842 = vsel %vm7648, %v8818, %v8826
        %v8843 = vsel %vm7652, %v8818, %v8826
        %v8845 = vrot.slane %v8843, 2
        %v8848 = vsel %vm7648, %v8819, %v8827
        %v8849 = vsel %vm7652, %v8819, %v8827
        %v8851 = vrot.slane %v8849, 2
        %v8852 = vshrl.u32 %v8830, 16
        %v8854 = vrot.slane %v8852, 6
        %v8855 = vshll.u32 %v8830, 16
        %v8857 = vrot.slane %v8855, 7
        %v8858 = vor.u32 %v8854, %v8857
        %v8859 = vrot.slane %v8858, 2
        %v8861 = vshll.u32 %v8833, 16
        %v8863 = vrot.slane %v8861, 7
        %v8864 = vsel %vm7680, %v8859, %v8863
        %v8865 = vshrl.u32 %v8836, 16
        %v8867 = vrot.slane %v8865, 6
        %v8868 = vshll.u32 %v8836, 16
        %v8870 = vrot.slane %v8868, 7
        %v8871 = vor.u32 %v8867, %v8870
        %v8872 = vrot.slane %v8871, 2
        %v8874 = vshll.u32 %v8839, 16
        %v8876 = vrot.slane %v8874, 7
        %v8877 = vsel %vm7680, %v8872, %v8876
        %v8878 = vshrl.u32 %v8842, 16
        %v8880 = vrot.slane %v8878, 6
        %v8881 = vshll.u32 %v8842, 16
        %v8883 = vrot.slane %v8881, 7
        %v8884 = vor.u32 %v8880, %v8883
        %v8885 = vrot.slane %v8884, 2
        %v8887 = vshll.u32 %v8845, 16
        %v8889 = vrot.slane %v8887, 7
        %v8890 = vsel %vm7680, %v8885, %v8889
        %v8891 = vshrl.u32 %v8848, 16
        %v8893 = vrot.slane %v8891, 6
        %v8894 = vshll.u32 %v8848, 16
        %v8896 = vrot.slane %v8894, 7
        %v8897 = vor.u32 %v8893, %v8896
        %v8898 = vrot.slane %v8897, 2
        %v8900 = vshll.u32 %v8851, 16
        %v8902 = vrot.slane %v8900, 7
        %v8903 = vsel %vm7680, %v8898, %v8902
        %v8904 = vld [vmem:[%s8650] sm:$0x6]
        %v8905 = vld [vmem:[%s8650 + $0x4] sm:$0x6]
        %v8906 = vld [vmem:[%s8650 + $0x8] sm:$0x6]
        %v8907 = vld [vmem:[%s8650 + $0xc] sm:$0x6]
        %v8912 = vrot.slane %v8904, 2
        %v8913 = vrot.slane %v8905, 2
        %v8914 = vrot.slane %v8906, 2
        %v8915 = vrot.slane %v8907, 2
        %v8918 = vsel %vm7648, %v8904, %v8912
        %v8920 = vsel %vm7652, %v8904, %v8912
        %v8922 = vrot.slane %v8920, 2
        %v8925 = vsel %vm7648, %v8905, %v8913
        %v8927 = vsel %vm7652, %v8905, %v8913
        %v8929 = vrot.slane %v8927, 2
        %v8932 = vsel %vm7648, %v8906, %v8914
        %v8934 = vsel %vm7652, %v8906, %v8914
        %v8936 = vrot.slane %v8934, 2
        %v8939 = vsel %vm7648, %v8907, %v8915
        %v8941 = vsel %vm7652, %v8907, %v8915
        %v8943 = vrot.slane %v8941, 2
        %v8944 = vrot.slane %v8918, 7
        %v8945 = vrot.slane %v8944, 2
        %v8946 = vrot.slane %v8922, 7
        %v8947 = vsel %vm7779, %v8945, %v8946
        %v8948 = vrot.slane %v8925, 7
        %v8949 = vrot.slane %v8948, 2
        %v8950 = vrot.slane %v8929, 7
        %v8951 = vsel %vm7779, %v8949, %v8950
        %v8952 = vrot.slane %v8932, 7
        %v8953 = vrot.slane %v8952, 2
        %v8954 = vrot.slane %v8936, 7
        %v8955 = vsel %vm7779, %v8953, %v8954
        %v8956 = vrot.slane %v8939, 7
        %v8957 = vrot.slane %v8956, 2
        %v8958 = vrot.slane %v8943, 7
        %v8959 = vsel %vm7779, %v8957, %v8958
        %s8960 = scalar_lea.vmem [#allocation6], 8
        %v8961 = vld [vmem:[%s8960] sm:$0x3]
        %v8962 = vld [vmem:[%s8960 + $0x4] sm:$0x3]
        %v8963 = vld [vmem:[%s8960 + $0x8] sm:$0x3]
        %v8964 = vld [vmem:[%s8960 + $0xc] sm:$0x3]
        %v8965 = vld [vmem:[%s8960] sm:$0x7]
        %v8966 = vld [vmem:[%s8960 + $0x4] sm:$0x7]
        %v8967 = vld [vmem:[%s8960 + $0x8] sm:$0x7]
        %v8968 = vld [vmem:[%s8960 + $0xc] sm:$0x7]
        %v8973 = vrot.slane %v8965, 2
        %v8974 = vrot.slane %v8966, 2
        %v8975 = vrot.slane %v8967, 2
        %v8976 = vrot.slane %v8968, 2
        %v8979 = vsel %vm7648, %v8965, %v8973
        %v8980 = vsel %vm7652, %v8965, %v8973
        %v8982 = vrot.slane %v8980, 2
        %v8985 = vsel %vm7648, %v8966, %v8974
        %v8986 = vsel %vm7652, %v8966, %v8974
        %v8988 = vrot.slane %v8986, 2
        %v8991 = vsel %vm7648, %v8967, %v8975
        %v8992 = vsel %vm7652, %v8967, %v8975
        %v8994 = vrot.slane %v8992, 2
        %v8997 = vsel %vm7648, %v8968, %v8976
        %v8998 = vsel %vm7652, %v8968, %v8976
        %v9000 = vrot.slane %v8998, 2
        %v9001 = vshrl.u32 %v8979, 16
        %v9003 = vrot.slane %v9001, 6
        %v9004 = vshll.u32 %v8979, 16
        %v9006 = vrot.slane %v9004, 7
        %v9007 = vor.u32 %v9003, %v9006
        %v9008 = vrot.slane %v9007, 2
        %v9010 = vshll.u32 %v8982, 16
        %v9012 = vrot.slane %v9010, 7
        %v9013 = vsel %vm7680, %v9008, %v9012
        %v9014 = vshrl.u32 %v8985, 16
        %v9016 = vrot.slane %v9014, 6
        %v9017 = vshll.u32 %v8985, 16
        %v9019 = vrot.slane %v9017, 7
        %v9020 = vor.u32 %v9016, %v9019
        %v9021 = vrot.slane %v9020, 2
        %v9023 = vshll.u32 %v8988, 16
        %v9025 = vrot.slane %v9023, 7
        %v9026 = vsel %vm7680, %v9021, %v9025
        %v9027 = vshrl.u32 %v8991, 16
        %v9029 = vrot.slane %v9027, 6
        %v9030 = vshll.u32 %v8991, 16
        %v9032 = vrot.slane %v9030, 7
        %v9033 = vor.u32 %v9029, %v9032
        %v9034 = vrot.slane %v9033, 2
        %v9036 = vshll.u32 %v8994, 16
        %v9038 = vrot.slane %v9036, 7
        %v9039 = vsel %vm7680, %v9034, %v9038
        %v9040 = vshrl.u32 %v8997, 16
        %v9042 = vrot.slane %v9040, 6
        %v9043 = vshll.u32 %v8997, 16
        %v9045 = vrot.slane %v9043, 7
        %v9046 = vor.u32 %v9042, %v9045
        %v9047 = vrot.slane %v9046, 2
        %v9049 = vshll.u32 %v9000, 16
        %v9051 = vrot.slane %v9049, 7
        %v9052 = vsel %vm7680, %v9047, %v9051
        %v9053 = vld [vmem:[%s8960] sm:$0x6]
        %v9054 = vld [vmem:[%s8960 + $0x4] sm:$0x6]
        %v9055 = vld [vmem:[%s8960 + $0x8] sm:$0x6]
        %v9056 = vld [vmem:[%s8960 + $0xc] sm:$0x6]
        %v9061 = vrot.slane %v9053, 2
        %v9062 = vrot.slane %v9054, 2
        %v9063 = vrot.slane %v9055, 2
        %v9064 = vrot.slane %v9056, 2
        %v9067 = vsel %vm7648, %v9053, %v9061
        %v9069 = vsel %vm7652, %v9053, %v9061
        %v9071 = vrot.slane %v9069, 2
        %v9074 = vsel %vm7648, %v9054, %v9062
        %v9076 = vsel %vm7652, %v9054, %v9062
        %v9078 = vrot.slane %v9076, 2
        %v9081 = vsel %vm7648, %v9055, %v9063
        %v9083 = vsel %vm7652, %v9055, %v9063
        %v9085 = vrot.slane %v9083, 2
        %v9088 = vsel %vm7648, %v9056, %v9064
        %v9090 = vsel %vm7652, %v9056, %v9064
        %v9092 = vrot.slane %v9090, 2
        %v9093 = vrot.slane %v9067, 7
        %v9094 = vrot.slane %v9093, 2
        %v9095 = vrot.slane %v9071, 7
        %v9096 = vsel %vm7779, %v9094, %v9095
        %v9097 = vrot.slane %v9074, 7
        %v9098 = vrot.slane %v9097, 2
        %v9099 = vrot.slane %v9078, 7
        %v9100 = vsel %vm7779, %v9098, %v9099
        %v9101 = vrot.slane %v9081, 7
        %v9102 = vrot.slane %v9101, 2
        %v9103 = vrot.slane %v9085, 7
        %v9104 = vsel %vm7779, %v9102, %v9103
        %v9105 = vrot.slane %v9088, 7
        %v9106 = vrot.slane %v9105, 2
        %v9107 = vrot.slane %v9092, 7
        %v9108 = vsel %vm7779, %v9106, %v9107
        %9110 = vst [vmem:[#allocation1] ss:$4 sm:$0xff] %v8664
        %s9112 = scalar_lea.vmem [#allocation1], 1
        %9113 = vst [vmem:[%s9112] ss:$4 sm:$0xff] %v8665
        %s9115 = scalar_lea.vmem [#allocation1], 2
        %9116 = vst [vmem:[%s9115] ss:$4 sm:$0xff] %v8666
        %s9118 = scalar_lea.vmem [#allocation1], 3
        %9119 = vst [vmem:[%s9118] ss:$4 sm:$0xff] %v8667
        %v9120 = vld.sshfl [vmem:[#allocation1] sm:$0xff pattern:$0x73625140]
        %9123 = vst [vmem:[#allocation1] ss:$4 sm:$0xff] %v8716
        %s9125 = scalar_lea.vmem [#allocation1], 1
        %9126 = vst [vmem:[%s9125] ss:$4 sm:$0xff] %v8729
        %s9128 = scalar_lea.vmem [#allocation1], 2
        %9129 = vst [vmem:[%s9128] ss:$4 sm:$0xff] %v8742
        %s9131 = scalar_lea.vmem [#allocation1], 3
        %9132 = vst [vmem:[%s9131] ss:$4 sm:$0xff] %v8755
        %v9133 = vld.sshfl [vmem:[#allocation1] sm:$0xff pattern:$0x73625140]
        %9136 = vst [vmem:[#allocation1] ss:$4 sm:$0xff] %v8799
        %s9138 = scalar_lea.vmem [#allocation1], 1
        %9139 = vst [vmem:[%s9138] ss:$4 sm:$0xff] %v8803
        %s9141 = scalar_lea.vmem [#allocation1], 2
        %9142 = vst [vmem:[%s9141] ss:$4 sm:$0xff] %v8807
        %s9144 = scalar_lea.vmem [#allocation1], 3
        %9145 = vst [vmem:[%s9144] ss:$4 sm:$0xff] %v8811
        %v9146 = vld.sshfl [vmem:[#allocation1] sm:$0xff pattern:$0x73625140]
        %9149 = vst [vmem:[#allocation1] ss:$4 sm:$0xff] %v8812
        %s9151 = scalar_lea.vmem [#allocation1], 1
        %9152 = vst [vmem:[%s9151] ss:$4 sm:$0xff] %v8813
        %s9154 = scalar_lea.vmem [#allocation1], 2
        %9155 = vst [vmem:[%s9154] ss:$4 sm:$0xff] %v8814
        %s9157 = scalar_lea.vmem [#allocation1], 3
        %9158 = vst [vmem:[%s9157] ss:$4 sm:$0xff] %v8815
        %v9159 = vld.sshfl [vmem:[#allocation1] sm:$0xff pattern:$0x73625140]
        %9162 = vst [vmem:[#allocation1] ss:$4 sm:$0xff] %v8864
        %s9164 = scalar_lea.vmem [#allocation1], 1
        %9165 = vst [vmem:[%s9164] ss:$4 sm:$0xff] %v8877
        %s9167 = scalar_lea.vmem [#allocation1], 2
        %9168 = vst [vmem:[%s9167] ss:$4 sm:$0xff] %v8890
        %s9170 = scalar_lea.vmem [#allocation1], 3
        %9171 = vst [vmem:[%s9170] ss:$4 sm:$0xff] %v8903
        %v9172 = vld.sshfl [vmem:[#allocation1] sm:$0xff pattern:$0x73625140]
        %9175 = vst [vmem:[#allocation1] ss:$4 sm:$0xff] %v8947
        %s9177 = scalar_lea.vmem [#allocation1], 1
        %9178 = vst [vmem:[%s9177] ss:$4 sm:$0xff] %v8951
        %s9180 = scalar_lea.vmem [#allocation1], 2
        %9181 = vst [vmem:[%s9180] ss:$4 sm:$0xff] %v8955
        %s9183 = scalar_lea.vmem [#allocation1], 3
        %9184 = vst [vmem:[%s9183] ss:$4 sm:$0xff] %v8959
        %v9185 = vld.sshfl [vmem:[#allocation1] sm:$0xff pattern:$0x73625140]
        %9188 = vst [vmem:[#allocation1] ss:$4 sm:$0xff] %v8961
        %s9190 = scalar_lea.vmem [#allocation1], 1
        %9191 = vst [vmem:[%s9190] ss:$4 sm:$0xff] %v8962
        %s9193 = scalar_lea.vmem [#allocation1], 2
        %9194 = vst [vmem:[%s9193] ss:$4 sm:$0xff] %v8963
        %s9196 = scalar_lea.vmem [#allocation1], 3
        %9197 = vst [vmem:[%s9196] ss:$4 sm:$0xff] %v8964
        %v9198 = vld.sshfl [vmem:[#allocation1] sm:$0xff pattern:$0x73625140]
        %9201 = vst [vmem:[#allocation1] ss:$4 sm:$0xff] %v9013
        %s9203 = scalar_lea.vmem [#allocation1], 1
        %9204 = vst [vmem:[%s9203] ss:$4 sm:$0xff] %v9026
        %s9206 = scalar_lea.vmem [#allocation1], 2
        %9207 = vst [vmem:[%s9206] ss:$4 sm:$0xff] %v9039
        %s9209 = scalar_lea.vmem [#allocation1], 3
        %9210 = vst [vmem:[%s9209] ss:$4 sm:$0xff] %v9052
        %v9211 = vld.sshfl [vmem:[#allocation1] sm:$0xff pattern:$0x73625140]
        %9214 = vst [vmem:[#allocation1] ss:$4 sm:$0xff] %v9096
        %s9216 = scalar_lea.vmem [#allocation1], 1
        %9217 = vst [vmem:[%s9216] ss:$4 sm:$0xff] %v9100
        %s9219 = scalar_lea.vmem [#allocation1], 2
        %9220 = vst [vmem:[%s9219] ss:$4 sm:$0xff] %v9104
        %s9222 = scalar_lea.vmem [#allocation1], 3
        %9223 = vst [vmem:[%s9222] ss:$4 sm:$0xff] %v9108
        %v9224 = vld.sshfl [vmem:[#allocation1] sm:$0xff pattern:$0x73625140]
        %v9226 = vld [vmem:[%s11] sm:$0xf]
        %v9227 = vld [vmem:[%s11 + $0x4] sm:$0xf]
        %v9228 = vld [vmem:[%s11 + $0x8] sm:$0xf]
        %v9229 = vld [vmem:[%s11 + $0xc] sm:$0xf]
        %v9230 = vld [vmem:[%s11 + $0x10] sm:$0xf]
        %v9231 = vld [vmem:[%s11 + $0x14] sm:$0xf]
        %v9232 = vld [vmem:[%s11 + $0x18] sm:$0xf]
        %v9233 = vld [vmem:[%s11 + $0x1c] sm:$0xf]
        %v9234 = vld [vmem:[%s11 + $0x20] sm:$0xf]
        %v9235 = vld [vmem:[%s11 + $0x24] sm:$0xf]
        %v9236 = vld [vmem:[%s11 + $0x28] sm:$0xf]
        %v9237 = vld [vmem:[%s11 + $0x2c] sm:$0xf]
        %v9238 = vld [vmem:[%s11 + $0x30] sm:$0xf]
        %v9239 = vld [vmem:[%s11 + $0x34] sm:$0xf]
        %v9240 = vld [vmem:[%s11 + $0x38] sm:$0xf]
        %v9241 = vld [vmem:[%s11 + $0x3c] sm:$0xf]
        %v9242 = vld [vmem:[%s11 + $0x40] sm:$0xf]
        %v9243 = vld [vmem:[%s11 + $0x44] sm:$0xf]
        %v9244 = vld [vmem:[%s11 + $0x48] sm:$0xf]
        %v9245 = vld [vmem:[%s11 + $0x4c] sm:$0xf]
        %v9246 = vld [vmem:[%s11 + $0x50] sm:$0xf]
        %v9247 = vld [vmem:[%s11 + $0x54] sm:$0xf]
        %v9248 = vld [vmem:[%s11 + $0x58] sm:$0xf]
        %v9249 = vld [vmem:[%s11 + $0x5c] sm:$0xf]
        %v9250 = vld [vmem:[%s11 + $0x60] sm:$0xf]
        %v9251 = vld [vmem:[%s11 + $0x64] sm:$0xf]
        %v9252 = vld [vmem:[%s11 + $0x68] sm:$0xf]
        %v9253 = vld [vmem:[%s11 + $0x6c] sm:$0xf]
        %v9254 = vld [vmem:[%s11 + $0x70] sm:$0xf]
        %v9255 = vld [vmem:[%s11 + $0x74] sm:$0xf]
        %v9256 = vld [vmem:[%s11 + $0x78] sm:$0xf]
        %v9257 = vld [vmem:[%s11 + $0x7c] sm:$0xf]
        %v9258 = vld [vmem:[%s11 + $0x80] sm:$0xf]
        %v9259 = vld [vmem:[%s11 + $0x84] sm:$0xf]
        %v9260 = vld [vmem:[%s11 + $0x88] sm:$0xf]
        %v9261 = vld [vmem:[%s11 + $0x8c] sm:$0xf]
        %v9262 = vld [vmem:[%s11 + $0x90] sm:$0xf]
        %v9263 = vld [vmem:[%s11 + $0x94] sm:$0xf]
        %v9264 = vld [vmem:[%s11 + $0x98] sm:$0xf]
        %v9265 = vld [vmem:[%s11 + $0x9c] sm:$0xf]
        %v9266 = vld [vmem:[%s11 + $0xa0] sm:$0xf]
        %v9267 = vld [vmem:[%s11 + $0xa4] sm:$0xf]
        %v9268 = vld [vmem:[%s11 + $0xa8] sm:$0xf]
        %v9269 = vld [vmem:[%s11 + $0xac] sm:$0xf]
        %v9270 = vld [vmem:[%s11 + $0xb0] sm:$0xf]
        %v9271 = vld [vmem:[%s11 + $0xb4] sm:$0xf]
        %v9272 = vld [vmem:[%s11 + $0xb8] sm:$0xf]
        %v9273 = vld [vmem:[%s11 + $0xbc] sm:$0xf]
        %v9274 = vld [vmem:[%s11 + $0xc0] sm:$0xf]
        %v9275 = vld [vmem:[%s11 + $0xc4] sm:$0xf]
        %v9276 = vld [vmem:[%s11 + $0xc8] sm:$0xf]
        %v9277 = vld [vmem:[%s11 + $0xcc] sm:$0xf]
        %v9278 = vld [vmem:[%s11 + $0xd0] sm:$0xf]
        %v9279 = vld [vmem:[%s11 + $0xd4] sm:$0xf]
        %v9280 = vld [vmem:[%s11 + $0xd8] sm:$0xf]
        %v9281 = vld [vmem:[%s11 + $0xdc] sm:$0xf]
        %v9282 = vld [vmem:[%s11 + $0xe0] sm:$0xf]
        %v9283 = vld [vmem:[%s11 + $0xe4] sm:$0xf]
        %v9284 = vld [vmem:[%s11 + $0xe8] sm:$0xf]
        %v9285 = vld [vmem:[%s11 + $0xec] sm:$0xf]
        %v9286 = vld [vmem:[%s11 + $0xf0] sm:$0xf]
        %v9287 = vld [vmem:[%s11 + $0xf4] sm:$0xf]
        %v9288 = vld [vmem:[%s11 + $0xf8] sm:$0xf]
        %v9289 = vld [vmem:[%s11 + $0xfc] sm:$0xf]
        %v9290 = vld [vmem:[%s11 + $0x100] sm:$0xf]
        %v9291 = vld [vmem:[%s11 + $0x104] sm:$0xf]
        %v9292 = vld [vmem:[%s11 + $0x108] sm:$0xf]
        %v9293 = vld [vmem:[%s11 + $0x10c] sm:$0xf]
        %v9294 = vld [vmem:[%s11 + $0x110] sm:$0xf]
        %v9295 = vld [vmem:[%s11 + $0x114] sm:$0xf]
        %v9296 = vld [vmem:[%s11 + $0x118] sm:$0xf]
        %v9297 = vld [vmem:[%s11 + $0x11c] sm:$0xf]
        %v9298 = vld [vmem:[%s11 + $0x120] sm:$0xf]
        %v9299 = vld [vmem:[%s11 + $0x124] sm:$0xf]
        %v9300 = vld [vmem:[%s11 + $0x128] sm:$0xf]
        %v9301 = vld [vmem:[%s11 + $0x12c] sm:$0xf]
        %v9302 = vld [vmem:[%s11 + $0x130] sm:$0xf]
        %v9303 = vld [vmem:[%s11 + $0x134] sm:$0xf]
        %v9304 = vld [vmem:[%s11 + $0x138] sm:$0xf]
        %v9305 = vld [vmem:[%s11 + $0x13c] sm:$0xf]
        %v9306 = vld [vmem:[%s11 + $0x140] sm:$0xf]
        %v9307 = vld [vmem:[%s11 + $0x144] sm:$0xf]
        %v9308 = vld [vmem:[%s11 + $0x148] sm:$0xf]
        %v9309 = vld [vmem:[%s11 + $0x14c] sm:$0xf]
        %v9310 = vld [vmem:[%s11 + $0x150] sm:$0xf]
        %v9311 = vld [vmem:[%s11 + $0x154] sm:$0xf]
        %v9312 = vld [vmem:[%s11 + $0x158] sm:$0xf]
        %v9313 = vld [vmem:[%s11 + $0x15c] sm:$0xf]
        %v9314 = vld [vmem:[%s11 + $0x160] sm:$0xf]
        %v9315 = vld [vmem:[%s11 + $0x164] sm:$0xf]
        %v9316 = vld [vmem:[%s11 + $0x168] sm:$0xf]
        %v9317 = vld [vmem:[%s11 + $0x16c] sm:$0xf]
        %v9318 = vld [vmem:[%s11 + $0x170] sm:$0xf]
        %v9319 = vld [vmem:[%s11 + $0x174] sm:$0xf]
        %v9320 = vld [vmem:[%s11 + $0x178] sm:$0xf]
        %v9321 = vld [vmem:[%s11 + $0x17c] sm:$0xf]
        %v9322 = vld [vmem:[%s11 + $0x180] sm:$0xf]
        %v9323 = vld [vmem:[%s11 + $0x184] sm:$0xf]
        %v9324 = vld [vmem:[%s11 + $0x188] sm:$0xf]
        %v9325 = vld [vmem:[%s11 + $0x18c] sm:$0xf]
        %v9326 = vld [vmem:[%s11 + $0x190] sm:$0xf]
        %v9327 = vld [vmem:[%s11 + $0x194] sm:$0xf]
        %v9328 = vld [vmem:[%s11 + $0x198] sm:$0xf]
        %v9329 = vld [vmem:[%s11 + $0x19c] sm:$0xf]
        %v9330 = vld [vmem:[%s11 + $0x1a0] sm:$0xf]
        %v9331 = vld [vmem:[%s11 + $0x1a4] sm:$0xf]
        %v9332 = vld [vmem:[%s11 + $0x1a8] sm:$0xf]
        %v9333 = vld [vmem:[%s11 + $0x1ac] sm:$0xf]
        %v9334 = vld [vmem:[%s11 + $0x1b0] sm:$0xf]
        %v9335 = vld [vmem:[%s11 + $0x1b4] sm:$0xf]
        %v9336 = vld [vmem:[%s11 + $0x1b8] sm:$0xf]
        %v9337 = vld [vmem:[%s11 + $0x1bc] sm:$0xf]
        %v9338 = vld [vmem:[%s11 + $0x1c0] sm:$0xf]
        %v9339 = vld [vmem:[%s11 + $0x1c4] sm:$0xf]
        %v9340 = vld [vmem:[%s11 + $0x1c8] sm:$0xf]
        %v9341 = vld [vmem:[%s11 + $0x1cc] sm:$0xf]
        %v9342 = vld [vmem:[%s11 + $0x1d0] sm:$0xf]
        %v9343 = vld [vmem:[%s11 + $0x1d4] sm:$0xf]
        %v9344 = vld [vmem:[%s11 + $0x1d8] sm:$0xf]
        %v9345 = vld [vmem:[%s11 + $0x1dc] sm:$0xf]
        %v9346 = vld [vmem:[%s11 + $0x1e0] sm:$0xf]
        %v9347 = vld [vmem:[%s11 + $0x1e4] sm:$0xf]
        %v9348 = vld [vmem:[%s11 + $0x1e8] sm:$0xf]
        %v9349 = vld [vmem:[%s11 + $0x1ec] sm:$0xf]
        %v9350 = vld [vmem:[%s11 + $0x1f0] sm:$0xf]
        %v9351 = vld [vmem:[%s11 + $0x1f4] sm:$0xf]
        %v9352 = vld [vmem:[%s11 + $0x1f8] sm:$0xf]
        %v9353 = vld [vmem:[%s11 + $0x1fc] sm:$0xf]
        %v9354 = vld [vmem:[%s11 + $0x200] sm:$0xf]
        %v9355 = vld [vmem:[%s11 + $0x204] sm:$0xf]
        %v9356 = vld [vmem:[%s11 + $0x208] sm:$0xf]
        %v9357 = vld [vmem:[%s11 + $0x20c] sm:$0xf]
        %v9358 = vld [vmem:[%s11 + $0x210] sm:$0xf]
        %v9359 = vld [vmem:[%s11 + $0x214] sm:$0xf]
        %v9360 = vld [vmem:[%s11 + $0x218] sm:$0xf]
        %v9361 = vld [vmem:[%s11 + $0x21c] sm:$0xf]
        %v9362 = vld [vmem:[%s11 + $0x220] sm:$0xf]
        %v9363 = vld [vmem:[%s11 + $0x224] sm:$0xf]
        %v9364 = vld [vmem:[%s11 + $0x228] sm:$0xf]
        %v9365 = vld [vmem:[%s11 + $0x22c] sm:$0xf]
        %v9366 = vld [vmem:[%s11 + $0x230] sm:$0xf]
        %v9367 = vld [vmem:[%s11 + $0x234] sm:$0xf]
        %v9368 = vld [vmem:[%s11 + $0x238] sm:$0xf]
        %v9369 = vld [vmem:[%s11 + $0x23c] sm:$0xf]
        %v9370 = vld [vmem:[%s12] sm:$0x1]
        %v9372 = vperm.slane %v9370, 0
        %v9518 = vunpack.c.l.b16 %v9226
        %v9519 = vunpack.c.l.b16 %v9227
        %v9520 = vunpack.c.l.b16 %v9228
        %v9521 = vunpack.c.l.b16 %v9229
        %v9522 = vunpack.c.l.b16 %v9230
        %v9523 = vunpack.c.l.b16 %v9231
        %v9524 = vunpack.c.l.b16 %v9232
        %v9525 = vunpack.c.l.b16 %v9233
        %v9526 = vunpack.c.l.b16 %v9234
        %v9527 = vunpack.c.l.b16 %v9235
        %v9528 = vunpack.c.l.b16 %v9236
        %v9529 = vunpack.c.l.b16 %v9237
        %v9530 = vunpack.c.l.b16 %v9238
        %v9531 = vunpack.c.l.b16 %v9239
        %v9532 = vunpack.c.l.b16 %v9240
        %v9533 = vunpack.c.l.b16 %v9241
        %v9534 = vunpack.c.l.b16 %v9242
        %v9535 = vunpack.c.l.b16 %v9243
        %v9536 = vunpack.c.l.b16 %v9244
        %v9537 = vunpack.c.l.b16 %v9245
        %v9538 = vunpack.c.l.b16 %v9246
        %v9539 = vunpack.c.l.b16 %v9247
        %v9540 = vunpack.c.l.b16 %v9248
        %v9541 = vunpack.c.l.b16 %v9249
        %v9542 = vunpack.c.l.b16 %v9250
        %v9543 = vunpack.c.l.b16 %v9251
        %v9544 = vunpack.c.l.b16 %v9252
        %v9545 = vunpack.c.l.b16 %v9253
        %v9546 = vunpack.c.l.b16 %v9254
        %v9547 = vunpack.c.l.b16 %v9255
        %v9548 = vunpack.c.l.b16 %v9256
        %v9549 = vunpack.c.l.b16 %v9257
        %v9550 = vunpack.c.l.b16 %v9258
        %v9551 = vunpack.c.l.b16 %v9259
        %v9552 = vunpack.c.l.b16 %v9260
        %v9553 = vunpack.c.l.b16 %v9261
        %v9554 = vunpack.c.l.b16 %v9262
        %v9555 = vunpack.c.l.b16 %v9263
        %v9556 = vunpack.c.l.b16 %v9264
        %v9557 = vunpack.c.l.b16 %v9265
        %v9558 = vunpack.c.l.b16 %v9266
        %v9559 = vunpack.c.l.b16 %v9267
        %v9560 = vunpack.c.l.b16 %v9268
        %v9561 = vunpack.c.l.b16 %v9269
        %v9562 = vunpack.c.l.b16 %v9270
        %v9563 = vunpack.c.l.b16 %v9271
        %v9564 = vunpack.c.l.b16 %v9272
        %v9565 = vunpack.c.l.b16 %v9273
        %v9566 = vunpack.c.l.b16 %v9274
        %v9567 = vunpack.c.l.b16 %v9275
        %v9568 = vunpack.c.l.b16 %v9276
        %v9569 = vunpack.c.l.b16 %v9277
        %v9570 = vunpack.c.l.b16 %v9278
        %v9571 = vunpack.c.l.b16 %v9279
        %v9572 = vunpack.c.l.b16 %v9280
        %v9573 = vunpack.c.l.b16 %v9281
        %v9574 = vunpack.c.l.b16 %v9282
        %v9575 = vunpack.c.l.b16 %v9283
        %v9576 = vunpack.c.l.b16 %v9284
        %v9577 = vunpack.c.l.b16 %v9285
        %v9578 = vunpack.c.l.b16 %v9286
        %v9579 = vunpack.c.l.b16 %v9287
        %v9580 = vunpack.c.l.b16 %v9288
        %v9581 = vunpack.c.l.b16 %v9289
        %v9582 = vunpack.c.l.b16 %v9290
        %v9583 = vunpack.c.l.b16 %v9291
        %v9584 = vunpack.c.l.b16 %v9292
        %v9585 = vunpack.c.l.b16 %v9293
        %v9586 = vunpack.c.l.b16 %v9294
        %v9587 = vunpack.c.l.b16 %v9295
        %v9588 = vunpack.c.l.b16 %v9296
        %v9589 = vunpack.c.l.b16 %v9297
        %v9590 = vunpack.c.l.b16 %v9298
        %v9591 = vunpack.c.l.b16 %v9299
        %v9592 = vunpack.c.l.b16 %v9300
        %v9593 = vunpack.c.l.b16 %v9301
        %v9594 = vunpack.c.l.b16 %v9302
        %v9595 = vunpack.c.l.b16 %v9303
        %v9596 = vunpack.c.l.b16 %v9304
        %v9597 = vunpack.c.l.b16 %v9305
        %v9598 = vunpack.c.l.b16 %v9306
        %v9599 = vunpack.c.l.b16 %v9307
        %v9600 = vunpack.c.l.b16 %v9308
        %v9601 = vunpack.c.l.b16 %v9309
        %v9602 = vunpack.c.l.b16 %v9310
        %v9603 = vunpack.c.l.b16 %v9311
        %v9604 = vunpack.c.l.b16 %v9312
        %v9605 = vunpack.c.l.b16 %v9313
        %v9606 = vunpack.c.l.b16 %v9314
        %v9607 = vunpack.c.l.b16 %v9315
        %v9608 = vunpack.c.l.b16 %v9316
        %v9609 = vunpack.c.l.b16 %v9317
        %v9610 = vunpack.c.l.b16 %v9318
        %v9611 = vunpack.c.l.b16 %v9319
        %v9612 = vunpack.c.l.b16 %v9320
        %v9613 = vunpack.c.l.b16 %v9321
        %v9614 = vunpack.c.l.b16 %v9322
        %v9615 = vunpack.c.l.b16 %v9323
        %v9616 = vunpack.c.l.b16 %v9324
        %v9617 = vunpack.c.l.b16 %v9325
        %v9618 = vunpack.c.l.b16 %v9326
        %v9619 = vunpack.c.l.b16 %v9327
        %v9620 = vunpack.c.l.b16 %v9328
        %v9621 = vunpack.c.l.b16 %v9329
        %v9622 = vunpack.c.l.b16 %v9330
        %v9623 = vunpack.c.l.b16 %v9331
        %v9624 = vunpack.c.l.b16 %v9332
        %v9625 = vunpack.c.l.b16 %v9333
        %v9626 = vunpack.c.l.b16 %v9334
        %v9627 = vunpack.c.l.b16 %v9335
        %v9628 = vunpack.c.l.b16 %v9336
        %v9629 = vunpack.c.l.b16 %v9337
        %v9630 = vunpack.c.l.b16 %v9338
        %v9631 = vunpack.c.l.b16 %v9339
        %v9632 = vunpack.c.l.b16 %v9340
        %v9633 = vunpack.c.l.b16 %v9341
        %v9634 = vunpack.c.l.b16 %v9342
        %v9635 = vunpack.c.l.b16 %v9343
        %v9636 = vunpack.c.l.b16 %v9344
        %v9637 = vunpack.c.l.b16 %v9345
        %v9638 = vunpack.c.l.b16 %v9346
        %v9639 = vunpack.c.l.b16 %v9347
        %v9640 = vunpack.c.l.b16 %v9348
        %v9641 = vunpack.c.l.b16 %v9349
        %v9642 = vunpack.c.l.b16 %v9350
        %v9643 = vunpack.c.l.b16 %v9351
        %v9644 = vunpack.c.l.b16 %v9352
        %v9645 = vunpack.c.l.b16 %v9353
        %v9646 = vunpack.c.l.b16 %v9354
        %v9647 = vunpack.c.l.b16 %v9355
        %v9648 = vunpack.c.l.b16 %v9356
        %v9649 = vunpack.c.l.b16 %v9357
        %v9650 = vunpack.c.l.b16 %v9358
        %v9651 = vunpack.c.l.b16 %v9359
        %v9652 = vunpack.c.l.b16 %v9360
        %v9653 = vunpack.c.l.b16 %v9361
        %v9654 = vunpack.c.l.b16 %v9362
        %v9655 = vunpack.c.l.b16 %v9363
        %v9656 = vunpack.c.l.b16 %v9364
        %v9657 = vunpack.c.l.b16 %v9365
        %v9658 = vunpack.c.l.b16 %v9366
        %v9659 = vunpack.c.l.b16 %v9367
        %v9660 = vunpack.c.l.b16 %v9368
        %v9661 = vunpack.c.l.b16 %v9369
        %v9662 = vpack.c.b16 %v9519, %v9518
        %v9663 = vpack.c.b16 %v9521, %v9520
        %v9664 = vpack.c.b16 %v9523, %v9522
        %v9665 = vpack.c.b16 %v9525, %v9524
        %v9666 = vpack.c.b16 %v9527, %v9526
        %v9667 = vpack.c.b16 %v9529, %v9528
        %v9668 = vpack.c.b16 %v9531, %v9530
        %v9669 = vpack.c.b16 %v9533, %v9532
        %v9670 = vpack.c.b16 %v9535, %v9534
        %v9671 = vpack.c.b16 %v9537, %v9536
        %v9672 = vpack.c.b16 %v9539, %v9538
        %v9673 = vpack.c.b16 %v9541, %v9540
        %v9674 = vpack.c.b16 %v9543, %v9542
        %v9675 = vpack.c.b16 %v9545, %v9544
        %v9676 = vpack.c.b16 %v9547, %v9546
        %v9677 = vpack.c.b16 %v9549, %v9548
        %v9678 = vpack.c.b16 %v9551, %v9550
        %v9679 = vpack.c.b16 %v9553, %v9552
        %v9680 = vpack.c.b16 %v9555, %v9554
        %v9681 = vpack.c.b16 %v9557, %v9556
        %v9682 = vpack.c.b16 %v9559, %v9558
        %v9683 = vpack.c.b16 %v9561, %v9560
        %v9684 = vpack.c.b16 %v9563, %v9562
        %v9685 = vpack.c.b16 %v9565, %v9564
        %v9686 = vpack.c.b16 %v9567, %v9566
        %v9687 = vpack.c.b16 %v9569, %v9568
        %v9688 = vpack.c.b16 %v9571, %v9570
        %v9689 = vpack.c.b16 %v9573, %v9572
        %v9690 = vpack.c.b16 %v9575, %v9574
        %v9691 = vpack.c.b16 %v9577, %v9576
        %v9692 = vpack.c.b16 %v9579, %v9578
        %v9693 = vpack.c.b16 %v9581, %v9580
        %v9694 = vpack.c.b16 %v9583, %v9582
        %v9695 = vpack.c.b16 %v9585, %v9584
        %v9696 = vpack.c.b16 %v9587, %v9586
        %v9697 = vpack.c.b16 %v9589, %v9588
        %v9698 = vpack.c.b16 %v9591, %v9590
        %v9699 = vpack.c.b16 %v9593, %v9592
        %v9700 = vpack.c.b16 %v9595, %v9594
        %v9701 = vpack.c.b16 %v9597, %v9596
        %v9702 = vpack.c.b16 %v9599, %v9598
        %v9703 = vpack.c.b16 %v9601, %v9600
        %v9704 = vpack.c.b16 %v9603, %v9602
        %v9705 = vpack.c.b16 %v9605, %v9604
        %v9706 = vpack.c.b16 %v9607, %v9606
        %v9707 = vpack.c.b16 %v9609, %v9608
        %v9708 = vpack.c.b16 %v9611, %v9610
        %v9709 = vpack.c.b16 %v9613, %v9612
        %v9710 = vpack.c.b16 %v9615, %v9614
        %v9711 = vpack.c.b16 %v9617, %v9616
        %v9712 = vpack.c.b16 %v9619, %v9618
        %v9713 = vpack.c.b16 %v9621, %v9620
        %v9714 = vpack.c.b16 %v9623, %v9622
        %v9715 = vpack.c.b16 %v9625, %v9624
        %v9716 = vpack.c.b16 %v9627, %v9626
        %v9717 = vpack.c.b16 %v9629, %v9628
        %v9718 = vpack.c.b16 %v9631, %v9630
        %v9719 = vpack.c.b16 %v9633, %v9632
        %v9720 = vpack.c.b16 %v9635, %v9634
        %v9721 = vpack.c.b16 %v9637, %v9636
        %v9722 = vpack.c.b16 %v9639, %v9638
        %v9723 = vpack.c.b16 %v9641, %v9640
        %v9724 = vpack.c.b16 %v9643, %v9642
        %v9725 = vpack.c.b16 %v9645, %v9644
        %v9726 = vpack.c.b16 %v9647, %v9646
        %v9727 = vpack.c.b16 %v9649, %v9648
        %v9728 = vpack.c.b16 %v9651, %v9650
        %v9729 = vpack.c.b16 %v9653, %v9652
        %v9730 = vpack.c.b16 %v9655, %v9654
        %v9731 = vpack.c.b16 %v9657, %v9656
        %v9732 = vpack.c.b16 %v9659, %v9658
        %v9733 = vpack.c.b16 %v9661, %v9660
        %9806 = vmatpush.bf16.msra.mxu0 %v9669
        %9807 = vmatpush.bf16.msra.mxu0 %v9668
        %9808 = vmatpush.bf16.msra.mxu0 %v9667
        %9809 = vmatpush.bf16.msra.mxu0 %v9666
        %9810 = vmatpush.bf16.msra.mxu0 %v9665
        %9811 = vmatpush.bf16.msra.mxu0 %v9664
        %9812 = vmatpush.bf16.msra.mxu0 %v9663
        %9813 = vmatpush.bf16.msra.mxu0 %v9662
        %9814 = vmatmul.bf16.gmra.mxu0 %v9120
        %v9815 = vpop.f32.mrf.mxu0
        %v9816 = vadd.f32 %v9372, %v9815
        %v9817 = vpop.f32.mrf.mxu0
        %v9818 = vadd.f32 %v9372, %v9817
        %9819 = vdwg.mxu0
        %9820 = vmatpush.bf16.msra.mxu0 %v9677
        %9821 = vmatpush.bf16.msra.mxu0 %v9676
        %9822 = vmatpush.bf16.msra.mxu0 %v9675
        %9823 = vmatpush.bf16.msra.mxu0 %v9674
        %9824 = vmatpush.bf16.msra.mxu0 %v9673
        %9825 = vmatpush.bf16.msra.mxu0 %v9672
        %9826 = vmatpush.bf16.msra.mxu0 %v9671
        %9827 = vmatpush.bf16.msra.mxu0 %v9670
        %9828 = vmatmul.bf16.gmra.mxu0 %v9133
        %v9829 = vpop.f32.mrf.mxu0
        %v9830 = vadd.f32 %v9816, %v9829
        %v9831 = vpop.f32.mrf.mxu0
        %v9832 = vadd.f32 %v9818, %v9831
        %9833 = vdwg.mxu0
        %9834 = vmatpush.bf16.msra.mxu0 %v9685
        %9835 = vmatpush.bf16.msra.mxu0 %v9684
        %9836 = vmatpush.bf16.msra.mxu0 %v9683
        %9837 = vmatpush.bf16.msra.mxu0 %v9682
        %9838 = vmatpush.bf16.msra.mxu0 %v9681
        %9839 = vmatpush.bf16.msra.mxu0 %v9680
        %9840 = vmatpush.bf16.msra.mxu0 %v9679
        %9841 = vmatpush.bf16.msra.mxu0 %v9678
        %9842 = vmatmul.bf16.gmra.mxu0 %v9146
        %v9843 = vpop.f32.mrf.mxu0
        %v9844 = vadd.f32 %v9830, %v9843
        %v9845 = vpop.f32.mrf.mxu0
        %v9846 = vadd.f32 %v9832, %v9845
        %9847 = vdwg.mxu0
        %9848 = vmatpush.bf16.msra.mxu0 %v9693
        %9849 = vmatpush.bf16.msra.mxu0 %v9692
        %9850 = vmatpush.bf16.msra.mxu0 %v9691
        %9851 = vmatpush.bf16.msra.mxu0 %v9690
        %9852 = vmatpush.bf16.msra.mxu0 %v9689
        %9853 = vmatpush.bf16.msra.mxu0 %v9688
        %9854 = vmatpush.bf16.msra.mxu0 %v9687
        %9855 = vmatpush.bf16.msra.mxu0 %v9686
        %9856 = vmatmul.bf16.gmra.mxu0 %v9159
        %v9857 = vpop.f32.mrf.mxu0
        %v9858 = vadd.f32 %v9844, %v9857
        %v9859 = vpop.f32.mrf.mxu0
        %v9860 = vadd.f32 %v9846, %v9859
        %9861 = vdwg.mxu0
        %9862 = vmatpush.bf16.msra.mxu0 %v9701
        %9863 = vmatpush.bf16.msra.mxu0 %v9700
        %9864 = vmatpush.bf16.msra.mxu0 %v9699
        %9865 = vmatpush.bf16.msra.mxu0 %v9698
        %9866 = vmatpush.bf16.msra.mxu0 %v9697
        %9867 = vmatpush.bf16.msra.mxu0 %v9696
        %9868 = vmatpush.bf16.msra.mxu0 %v9695
        %9869 = vmatpush.bf16.msra.mxu0 %v9694
        %9870 = vmatmul.bf16.gmra.mxu0 %v9172
        %v9871 = vpop.f32.mrf.mxu0
        %v9872 = vadd.f32 %v9858, %v9871
        %v9873 = vpop.f32.mrf.mxu0
        %v9874 = vadd.f32 %v9860, %v9873
        %9875 = vdwg.mxu0
        %9876 = vmatpush.bf16.msra.mxu0 %v9709
        %9877 = vmatpush.bf16.msra.mxu0 %v9708
        %9878 = vmatpush.bf16.msra.mxu0 %v9707
        %9879 = vmatpush.bf16.msra.mxu0 %v9706
        %9880 = vmatpush.bf16.msra.mxu0 %v9705
        %9881 = vmatpush.bf16.msra.mxu0 %v9704
        %9882 = vmatpush.bf16.msra.mxu0 %v9703
        %9883 = vmatpush.bf16.msra.mxu0 %v9702
        %9884 = vmatmul.bf16.gmra.mxu0 %v9185
        %v9885 = vpop.f32.mrf.mxu0
        %v9886 = vadd.f32 %v9872, %v9885
        %v9887 = vpop.f32.mrf.mxu0
        %v9888 = vadd.f32 %v9874, %v9887
        %9889 = vdwg.mxu0
        %9890 = vmatpush.bf16.msra.mxu0 %v9717
        %9891 = vmatpush.bf16.msra.mxu0 %v9716
        %9892 = vmatpush.bf16.msra.mxu0 %v9715
        %9893 = vmatpush.bf16.msra.mxu0 %v9714
        %9894 = vmatpush.bf16.msra.mxu0 %v9713
        %9895 = vmatpush.bf16.msra.mxu0 %v9712
        %9896 = vmatpush.bf16.msra.mxu0 %v9711
        %9897 = vmatpush.bf16.msra.mxu0 %v9710
        %9898 = vmatmul.bf16.gmra.mxu0 %v9198
        %v9899 = vpop.f32.mrf.mxu0
        %v9900 = vadd.f32 %v9886, %v9899
        %v9901 = vpop.f32.mrf.mxu0
        %v9902 = vadd.f32 %v9888, %v9901
        %9903 = vdwg.mxu0
        %9904 = vmatpush.bf16.msra.mxu0 %v9725
        %9905 = vmatpush.bf16.msra.mxu0 %v9724
        %9906 = vmatpush.bf16.msra.mxu0 %v9723
        %9907 = vmatpush.bf16.msra.mxu0 %v9722
        %9908 = vmatpush.bf16.msra.mxu0 %v9721
        %9909 = vmatpush.bf16.msra.mxu0 %v9720
        %9910 = vmatpush.bf16.msra.mxu0 %v9719
        %9911 = vmatpush.bf16.msra.mxu0 %v9718
        %9912 = vmatmul.bf16.gmra.mxu0 %v9211
        %v9913 = vpop.f32.mrf.mxu0
        %v9914 = vadd.f32 %v9900, %v9913
        %v9915 = vpop.f32.mrf.mxu0
        %v9916 = vadd.f32 %v9902, %v9915
        %9917 = vdwg.mxu0
        %9918 = vmatpush.bf16.msra.mxu0 %v9733
        %9919 = vmatpush.bf16.msra.mxu0 %v9732
        %9920 = vmatpush.bf16.msra.mxu0 %v9731
        %9921 = vmatpush.bf16.msra.mxu0 %v9730
        %9922 = vmatpush.bf16.msra.mxu0 %v9729
        %9923 = vmatpush.bf16.msra.mxu0 %v9728
        %9924 = vmatpush.bf16.msra.mxu0 %v9727
        %9925 = vmatpush.bf16.msra.mxu0 %v9726
        %9926 = vmatmul.bf16.gmra.mxu0 %v9224
        %v9927 = vpop.f32.mrf.mxu0
        %v9928 = vadd.f32 %v9914, %v9927
        %v9929 = vpop.f32.mrf.mxu0
        %v9930 = vadd.f32 %v9916, %v9929
        %9931 = vdwg.mxu0
        %v9932 = vmax.f32 %v9928, 0.0
        %v9933 = vmax.f32 %v9930, 0.0
        %v9936 = vperm.slane %v9932, 0
        %v9937 = vperm.slane %v9932, 1
        %v9938 = vperm.slane %v9932, 2
        %v9939 = vperm.slane %v9932, 3
        %v9940 = vperm.slane %v9932, 4
        %v9941 = vperm.slane %v9932, 5
        %v9942 = vperm.slane %v9932, 6
        %v9943 = vperm.slane %v9932, 7
        %v9944 = vperm.slane %v9933, 0
        %v9945 = vperm.slane %v9933, 1
        %v9946 = vperm.slane %v9933, 2
        %v9947 = vperm.slane %v9933, 3
        %v9948 = vperm.slane %v9933, 4
        %v9949 = vperm.slane %v9933, 5
        %v9950 = vperm.slane %v9933, 6
        %v9951 = vperm.slane %v9933, 7
        %v9968 = vpack.c.bf16 %v9936, %v9936
        %v9969 = vpack.c.bf16 %v9937, %v9937
        %v9970 = vpack.c.bf16 %v9938, %v9938
        %v9971 = vpack.c.bf16 %v9939, %v9939
        %v9972 = vpack.c.bf16 %v9940, %v9940
        %v9973 = vpack.c.bf16 %v9941, %v9941
        %v9974 = vpack.c.bf16 %v9942, %v9942
        %v9975 = vpack.c.bf16 %v9943, %v9943
        %v9976 = vpack.c.bf16 %v9944, %v9944
        %v9977 = vpack.c.bf16 %v9945, %v9945
        %v9978 = vpack.c.bf16 %v9946, %v9946
        %v9979 = vpack.c.bf16 %v9947, %v9947
        %v9980 = vpack.c.bf16 %v9948, %v9948
        %v9981 = vpack.c.bf16 %v9949, %v9949
        %v9982 = vpack.c.bf16 %v9950, %v9950
        %v9983 = vpack.c.bf16 %v9951, %v9951
        %v9984 = vld [vmem:[%s13] sm:$0xf]
        %v9985 = vld [vmem:[%s13 + $0x4] sm:$0xf]
        %v9986 = vld [vmem:[%s13 + $0x8] sm:$0xf]
        %v9987 = vld [vmem:[%s13 + $0xc] sm:$0xf]
        %v9988 = vld [vmem:[%s13 + $0x10] sm:$0xf]
        %v9989 = vld [vmem:[%s13 + $0x14] sm:$0xf]
        %v9990 = vld [vmem:[%s13 + $0x18] sm:$0xf]
        %v9991 = vld [vmem:[%s13 + $0x1c] sm:$0xf]
        %v9992 = vld [vmem:[%s13 + $0x20] sm:$0xf]
        %v9993 = vld [vmem:[%s13 + $0x24] sm:$0xf]
        %v9994 = vld [vmem:[%s13 + $0x28] sm:$0xf]
        %v9995 = vld [vmem:[%s13 + $0x2c] sm:$0xf]
        %v9996 = vld [vmem:[%s13 + $0x30] sm:$0xf]
        %v9997 = vld [vmem:[%s13 + $0x34] sm:$0xf]
        %v9998 = vld [vmem:[%s13 + $0x38] sm:$0xf]
        %v9999 = vld [vmem:[%s13 + $0x3c] sm:$0xf]
        %v10000 = vld [vmem:[%s13 + $0x40] sm:$0xf]
        %v10001 = vld [vmem:[%s13 + $0x44] sm:$0xf]
        %v10002 = vld [vmem:[%s13 + $0x48] sm:$0xf]
        %v10003 = vld [vmem:[%s13 + $0x4c] sm:$0xf]
        %v10004 = vld [vmem:[%s13 + $0x50] sm:$0xf]
        %v10005 = vld [vmem:[%s13 + $0x54] sm:$0xf]
        %v10006 = vld [vmem:[%s13 + $0x58] sm:$0xf]
        %v10007 = vld [vmem:[%s13 + $0x5c] sm:$0xf]
        %v10008 = vld [vmem:[%s13 + $0x60] sm:$0xf]
        %v10009 = vld [vmem:[%s13 + $0x64] sm:$0xf]
        %v10010 = vld [vmem:[%s13 + $0x68] sm:$0xf]
        %v10011 = vld [vmem:[%s13 + $0x6c] sm:$0xf]
        %v10012 = vld [vmem:[%s13 + $0x70] sm:$0xf]
        %v10013 = vld [vmem:[%s13 + $0x74] sm:$0xf]
        %v10014 = vld [vmem:[%s13 + $0x78] sm:$0xf]
        %v10015 = vld [vmem:[%s13 + $0x7c] sm:$0xf]
        %v10016 = vld [vmem:[%s13 + $0x80] sm:$0xf]
        %v10017 = vld [vmem:[%s13 + $0x84] sm:$0xf]
        %v10018 = vld [vmem:[%s13 + $0x88] sm:$0xf]
        %v10019 = vld [vmem:[%s13 + $0x8c] sm:$0xf]
        %v10020 = vld [vmem:[%s13 + $0x90] sm:$0xf]
        %v10021 = vld [vmem:[%s13 + $0x94] sm:$0xf]
        %v10022 = vld [vmem:[%s13 + $0x98] sm:$0xf]
        %v10023 = vld [vmem:[%s13 + $0x9c] sm:$0xf]
        %v10024 = vld [vmem:[%s13 + $0xa0] sm:$0xf]
        %v10025 = vld [vmem:[%s13 + $0xa4] sm:$0xf]
        %v10026 = vld [vmem:[%s13 + $0xa8] sm:$0xf]
        %v10027 = vld [vmem:[%s13 + $0xac] sm:$0xf]
        %v10028 = vld [vmem:[%s13 + $0xb0] sm:$0xf]
        %v10029 = vld [vmem:[%s13 + $0xb4] sm:$0xf]
        %v10030 = vld [vmem:[%s13 + $0xb8] sm:$0xf]
        %v10031 = vld [vmem:[%s13 + $0xbc] sm:$0xf]
        %v10032 = vld [vmem:[%s13 + $0xc0] sm:$0xf]
        %v10033 = vld [vmem:[%s13 + $0xc4] sm:$0xf]
        %v10034 = vld [vmem:[%s13 + $0xc8] sm:$0xf]
        %v10035 = vld [vmem:[%s13 + $0xcc] sm:$0xf]
        %v10036 = vld [vmem:[%s13 + $0xd0] sm:$0xf]
        %v10037 = vld [vmem:[%s13 + $0xd4] sm:$0xf]
        %v10038 = vld [vmem:[%s13 + $0xd8] sm:$0xf]
        %v10039 = vld [vmem:[%s13 + $0xdc] sm:$0xf]
        %v10040 = vld [vmem:[%s13 + $0xe0] sm:$0xf]
        %v10041 = vld [vmem:[%s13 + $0xe4] sm:$0xf]
        %v10042 = vld [vmem:[%s13 + $0xe8] sm:$0xf]
        %v10043 = vld [vmem:[%s13 + $0xec] sm:$0xf]
        %v10044 = vld [vmem:[%s13 + $0xf0] sm:$0xf]
        %v10045 = vld [vmem:[%s13 + $0xf4] sm:$0xf]
        %v10046 = vld [vmem:[%s13 + $0xf8] sm:$0xf]
        %v10047 = vld [vmem:[%s13 + $0xfc] sm:$0xf]
        %v10048 = vld [vmem:[%s13 + $0x100] sm:$0xf]
        %v10049 = vld [vmem:[%s13 + $0x104] sm:$0xf]
        %v10050 = vld [vmem:[%s13 + $0x108] sm:$0xf]
        %v10051 = vld [vmem:[%s13 + $0x10c] sm:$0xf]
        %v10052 = vld [vmem:[%s13 + $0x110] sm:$0xf]
        %v10053 = vld [vmem:[%s13 + $0x114] sm:$0xf]
        %v10054 = vld [vmem:[%s13 + $0x118] sm:$0xf]
        %v10055 = vld [vmem:[%s13 + $0x11c] sm:$0xf]
        %v10056 = vld [vmem:[%s13 + $0x120] sm:$0xf]
        %v10057 = vld [vmem:[%s13 + $0x124] sm:$0xf]
        %v10058 = vld [vmem:[%s13 + $0x128] sm:$0xf]
        %v10059 = vld [vmem:[%s13 + $0x12c] sm:$0xf]
        %v10060 = vld [vmem:[%s13 + $0x130] sm:$0xf]
        %v10061 = vld [vmem:[%s13 + $0x134] sm:$0xf]
        %v10062 = vld [vmem:[%s13 + $0x138] sm:$0xf]
        %v10063 = vld [vmem:[%s13 + $0x13c] sm:$0xf]
        %v10064 = vld [vmem:[%s13 + $0x140] sm:$0xf]
        %v10065 = vld [vmem:[%s13 + $0x144] sm:$0xf]
        %v10066 = vld [vmem:[%s13 + $0x148] sm:$0xf]
        %v10067 = vld [vmem:[%s13 + $0x14c] sm:$0xf]
        %v10068 = vld [vmem:[%s13 + $0x150] sm:$0xf]
        %v10069 = vld [vmem:[%s13 + $0x154] sm:$0xf]
        %v10070 = vld [vmem:[%s13 + $0x158] sm:$0xf]
        %v10071 = vld [vmem:[%s13 + $0x15c] sm:$0xf]
        %v10072 = vld [vmem:[%s13 + $0x160] sm:$0xf]
        %v10073 = vld [vmem:[%s13 + $0x164] sm:$0xf]
        %v10074 = vld [vmem:[%s13 + $0x168] sm:$0xf]
        %v10075 = vld [vmem:[%s13 + $0x16c] sm:$0xf]
        %v10076 = vld [vmem:[%s13 + $0x170] sm:$0xf]
        %v10077 = vld [vmem:[%s13 + $0x174] sm:$0xf]
        %v10078 = vld [vmem:[%s13 + $0x178] sm:$0xf]
        %v10079 = vld [vmem:[%s13 + $0x17c] sm:$0xf]
        %v10080 = vld [vmem:[%s13 + $0x180] sm:$0xf]
        %v10081 = vld [vmem:[%s13 + $0x184] sm:$0xf]
        %v10082 = vld [vmem:[%s13 + $0x188] sm:$0xf]
        %v10083 = vld [vmem:[%s13 + $0x18c] sm:$0xf]
        %v10084 = vld [vmem:[%s13 + $0x190] sm:$0xf]
        %v10085 = vld [vmem:[%s13 + $0x194] sm:$0xf]
        %v10086 = vld [vmem:[%s13 + $0x198] sm:$0xf]
        %v10087 = vld [vmem:[%s13 + $0x19c] sm:$0xf]
        %v10088 = vld [vmem:[%s13 + $0x1a0] sm:$0xf]
        %v10089 = vld [vmem:[%s13 + $0x1a4] sm:$0xf]
        %v10090 = vld [vmem:[%s13 + $0x1a8] sm:$0xf]
        %v10091 = vld [vmem:[%s13 + $0x1ac] sm:$0xf]
        %v10092 = vld [vmem:[%s13 + $0x1b0] sm:$0xf]
        %v10093 = vld [vmem:[%s13 + $0x1b4] sm:$0xf]
        %v10094 = vld [vmem:[%s13 + $0x1b8] sm:$0xf]
        %v10095 = vld [vmem:[%s13 + $0x1bc] sm:$0xf]
        %v10096 = vld [vmem:[%s13 + $0x1c0] sm:$0xf]
        %v10097 = vld [vmem:[%s13 + $0x1c4] sm:$0xf]
        %v10098 = vld [vmem:[%s13 + $0x1c8] sm:$0xf]
        %v10099 = vld [vmem:[%s13 + $0x1cc] sm:$0xf]
        %v10100 = vld [vmem:[%s13 + $0x1d0] sm:$0xf]
        %v10101 = vld [vmem:[%s13 + $0x1d4] sm:$0xf]
        %v10102 = vld [vmem:[%s13 + $0x1d8] sm:$0xf]
        %v10103 = vld [vmem:[%s13 + $0x1dc] sm:$0xf]
        %v10104 = vld [vmem:[%s13 + $0x1e0] sm:$0xf]
        %v10105 = vld [vmem:[%s13 + $0x1e4] sm:$0xf]
        %v10106 = vld [vmem:[%s13 + $0x1e8] sm:$0xf]
        %v10107 = vld [vmem:[%s13 + $0x1ec] sm:$0xf]
        %v10108 = vld [vmem:[%s13 + $0x1f0] sm:$0xf]
        %v10109 = vld [vmem:[%s13 + $0x1f4] sm:$0xf]
        %v10110 = vld [vmem:[%s13 + $0x1f8] sm:$0xf]
        %v10111 = vld [vmem:[%s13 + $0x1fc] sm:$0xf]
        %v10112 = vld [vmem:[%s13 + $0x200] sm:$0xf]
        %v10113 = vld [vmem:[%s13 + $0x204] sm:$0xf]
        %v10114 = vld [vmem:[%s13 + $0x208] sm:$0xf]
        %v10115 = vld [vmem:[%s13 + $0x20c] sm:$0xf]
        %v10116 = vld [vmem:[%s13 + $0x210] sm:$0xf]
        %v10117 = vld [vmem:[%s13 + $0x214] sm:$0xf]
        %v10118 = vld [vmem:[%s13 + $0x218] sm:$0xf]
        %v10119 = vld [vmem:[%s13 + $0x21c] sm:$0xf]
        %v10120 = vld [vmem:[%s13 + $0x220] sm:$0xf]
        %v10121 = vld [vmem:[%s13 + $0x224] sm:$0xf]
        %v10122 = vld [vmem:[%s13 + $0x228] sm:$0xf]
        %v10123 = vld [vmem:[%s13 + $0x22c] sm:$0xf]
        %v10124 = vld [vmem:[%s13 + $0x230] sm:$0xf]
        %v10125 = vld [vmem:[%s13 + $0x234] sm:$0xf]
        %v10126 = vld [vmem:[%s13 + $0x238] sm:$0xf]
        %v10127 = vld [vmem:[%s13 + $0x23c] sm:$0xf]
        %v10128 = vld [vmem:[%s13 + $0x240] sm:$0xf]
        %v10129 = vld [vmem:[%s13 + $0x244] sm:$0xf]
        %v10130 = vld [vmem:[%s13 + $0x248] sm:$0xf]
        %v10131 = vld [vmem:[%s13 + $0x24c] sm:$0xf]
        %v10132 = vld [vmem:[%s13 + $0x250] sm:$0xf]
        %v10133 = vld [vmem:[%s13 + $0x254] sm:$0xf]
        %v10134 = vld [vmem:[%s13 + $0x258] sm:$0xf]
        %v10135 = vld [vmem:[%s13 + $0x25c] sm:$0xf]
        %v10136 = vld [vmem:[%s13 + $0x260] sm:$0xf]
        %v10137 = vld [vmem:[%s13 + $0x264] sm:$0xf]
        %v10138 = vld [vmem:[%s13 + $0x268] sm:$0xf]
        %v10139 = vld [vmem:[%s13 + $0x26c] sm:$0xf]
        %v10140 = vld [vmem:[%s13 + $0x270] sm:$0xf]
        %v10141 = vld [vmem:[%s13 + $0x274] sm:$0xf]
        %v10142 = vld [vmem:[%s13 + $0x278] sm:$0xf]
        %v10143 = vld [vmem:[%s13 + $0x27c] sm:$0xf]
        %v10144 = vld [vmem:[%s13 + $0x280] sm:$0xf]
        %v10145 = vld [vmem:[%s13 + $0x284] sm:$0xf]
        %v10146 = vld [vmem:[%s13 + $0x288] sm:$0xf]
        %v10147 = vld [vmem:[%s13 + $0x28c] sm:$0xf]
        %v10148 = vld [vmem:[%s13 + $0x290] sm:$0xf]
        %v10149 = vld [vmem:[%s13 + $0x294] sm:$0xf]
        %v10150 = vld [vmem:[%s13 + $0x298] sm:$0xf]
        %v10151 = vld [vmem:[%s13 + $0x29c] sm:$0xf]
        %v10152 = vld [vmem:[%s13 + $0x2a0] sm:$0xf]
        %v10153 = vld [vmem:[%s13 + $0x2a4] sm:$0xf]
        %v10154 = vld [vmem:[%s13 + $0x2a8] sm:$0xf]
        %v10155 = vld [vmem:[%s13 + $0x2ac] sm:$0xf]
        %v10156 = vld [vmem:[%s13 + $0x2b0] sm:$0xf]
        %v10157 = vld [vmem:[%s13 + $0x2b4] sm:$0xf]
        %v10158 = vld [vmem:[%s13 + $0x2b8] sm:$0xf]
        %v10159 = vld [vmem:[%s13 + $0x2bc] sm:$0xf]
        %v10160 = vld [vmem:[%s13 + $0x2c0] sm:$0xf]
        %v10161 = vld [vmem:[%s13 + $0x2c4] sm:$0xf]
        %v10162 = vld [vmem:[%s13 + $0x2c8] sm:$0xf]
        %v10163 = vld [vmem:[%s13 + $0x2cc] sm:$0xf]
        %v10164 = vld [vmem:[%s13 + $0x2d0] sm:$0xf]
        %v10165 = vld [vmem:[%s13 + $0x2d4] sm:$0xf]
        %v10166 = vld [vmem:[%s13 + $0x2d8] sm:$0xf]
        %v10167 = vld [vmem:[%s13 + $0x2dc] sm:$0xf]
        %v10168 = vld [vmem:[%s13 + $0x2e0] sm:$0xf]
        %v10169 = vld [vmem:[%s13 + $0x2e4] sm:$0xf]
        %v10170 = vld [vmem:[%s13 + $0x2e8] sm:$0xf]
        %v10171 = vld [vmem:[%s13 + $0x2ec] sm:$0xf]
        %v10172 = vld [vmem:[%s13 + $0x2f0] sm:$0xf]
        %v10173 = vld [vmem:[%s13 + $0x2f4] sm:$0xf]
        %v10174 = vld [vmem:[%s13 + $0x2f8] sm:$0xf]
        %v10175 = vld [vmem:[%s13 + $0x2fc] sm:$0xf]
        %v10176 = vld [vmem:[%s13 + $0x300] sm:$0xf]
        %v10177 = vld [vmem:[%s13 + $0x304] sm:$0xf]
        %v10178 = vld [vmem:[%s13 + $0x308] sm:$0xf]
        %v10179 = vld [vmem:[%s13 + $0x30c] sm:$0xf]
        %v10180 = vld [vmem:[%s13 + $0x310] sm:$0xf]
        %v10181 = vld [vmem:[%s13 + $0x314] sm:$0xf]
        %v10182 = vld [vmem:[%s13 + $0x318] sm:$0xf]
        %v10183 = vld [vmem:[%s13 + $0x31c] sm:$0xf]
        %v10184 = vld [vmem:[%s13 + $0x320] sm:$0xf]
        %v10185 = vld [vmem:[%s13 + $0x324] sm:$0xf]
        %v10186 = vld [vmem:[%s13 + $0x328] sm:$0xf]
        %v10187 = vld [vmem:[%s13 + $0x32c] sm:$0xf]
        %v10188 = vld [vmem:[%s13 + $0x330] sm:$0xf]
        %v10189 = vld [vmem:[%s13 + $0x334] sm:$0xf]
        %v10190 = vld [vmem:[%s13 + $0x338] sm:$0xf]
        %v10191 = vld [vmem:[%s13 + $0x33c] sm:$0xf]
        %v10192 = vld [vmem:[%s13 + $0x340] sm:$0xf]
        %v10193 = vld [vmem:[%s13 + $0x344] sm:$0xf]
        %v10194 = vld [vmem:[%s13 + $0x348] sm:$0xf]
        %v10195 = vld [vmem:[%s13 + $0x34c] sm:$0xf]
        %v10196 = vld [vmem:[%s13 + $0x350] sm:$0xf]
        %v10197 = vld [vmem:[%s13 + $0x354] sm:$0xf]
        %v10198 = vld [vmem:[%s13 + $0x358] sm:$0xf]
        %v10199 = vld [vmem:[%s13 + $0x35c] sm:$0xf]
        %v10200 = vld [vmem:[%s13 + $0x360] sm:$0xf]
        %v10201 = vld [vmem:[%s13 + $0x364] sm:$0xf]
        %v10202 = vld [vmem:[%s13 + $0x368] sm:$0xf]
        %v10203 = vld [vmem:[%s13 + $0x36c] sm:$0xf]
        %v10204 = vld [vmem:[%s13 + $0x370] sm:$0xf]
        %v10205 = vld [vmem:[%s13 + $0x374] sm:$0xf]
        %v10206 = vld [vmem:[%s13 + $0x378] sm:$0xf]
        %v10207 = vld [vmem:[%s13 + $0x37c] sm:$0xf]
        %v10208 = vld [vmem:[%s13 + $0x380] sm:$0xf]
        %v10209 = vld [vmem:[%s13 + $0x384] sm:$0xf]
        %v10210 = vld [vmem:[%s13 + $0x388] sm:$0xf]
        %v10211 = vld [vmem:[%s13 + $0x38c] sm:$0xf]
        %v10212 = vld [vmem:[%s13 + $0x390] sm:$0xf]
        %v10213 = vld [vmem:[%s13 + $0x394] sm:$0xf]
        %v10214 = vld [vmem:[%s13 + $0x398] sm:$0xf]
        %v10215 = vld [vmem:[%s13 + $0x39c] sm:$0xf]
        %v10216 = vld [vmem:[%s13 + $0x3a0] sm:$0xf]
        %v10217 = vld [vmem:[%s13 + $0x3a4] sm:$0xf]
        %v10218 = vld [vmem:[%s13 + $0x3a8] sm:$0xf]
        %v10219 = vld [vmem:[%s13 + $0x3ac] sm:$0xf]
        %v10220 = vld [vmem:[%s13 + $0x3b0] sm:$0xf]
        %v10221 = vld [vmem:[%s13 + $0x3b4] sm:$0xf]
        %v10222 = vld [vmem:[%s13 + $0x3b8] sm:$0xf]
        %v10223 = vld [vmem:[%s13 + $0x3bc] sm:$0xf]
        %v10224 = vld [vmem:[%s13 + $0x3c0] sm:$0xf]
        %v10225 = vld [vmem:[%s13 + $0x3c4] sm:$0xf]
        %v10226 = vld [vmem:[%s13 + $0x3c8] sm:$0xf]
        %v10227 = vld [vmem:[%s13 + $0x3cc] sm:$0xf]
        %v10228 = vld [vmem:[%s13 + $0x3d0] sm:$0xf]
        %v10229 = vld [vmem:[%s13 + $0x3d4] sm:$0xf]
        %v10230 = vld [vmem:[%s13 + $0x3d8] sm:$0xf]
        %v10231 = vld [vmem:[%s13 + $0x3dc] sm:$0xf]
        %v10232 = vld [vmem:[%s13 + $0x3e0] sm:$0xf]
        %v10233 = vld [vmem:[%s13 + $0x3e4] sm:$0xf]
        %v10234 = vld [vmem:[%s13 + $0x3e8] sm:$0xf]
        %v10235 = vld [vmem:[%s13 + $0x3ec] sm:$0xf]
        %v10236 = vld [vmem:[%s13 + $0x3f0] sm:$0xf]
        %v10237 = vld [vmem:[%s13 + $0x3f4] sm:$0xf]
        %v10238 = vld [vmem:[%s13 + $0x3f8] sm:$0xf]
        %v10239 = vld [vmem:[%s13 + $0x3fc] sm:$0xf]
        %v10240 = vld [vmem:[%s14] sm:$0x1]
        %v10497 = vunpack.c.l.b16 %v9984
        %v10498 = vunpack.c.l.b16 %v9985
        %v10499 = vunpack.c.l.b16 %v9986
        %v10500 = vunpack.c.l.b16 %v9987
        %v10501 = vunpack.c.l.b16 %v9988
        %v10502 = vunpack.c.l.b16 %v9989
        %v10503 = vunpack.c.l.b16 %v9990
        %v10504 = vunpack.c.l.b16 %v9991
        %v10505 = vunpack.c.l.b16 %v9992
        %v10506 = vunpack.c.l.b16 %v9993
        %v10507 = vunpack.c.l.b16 %v9994
        %v10508 = vunpack.c.l.b16 %v9995
        %v10509 = vunpack.c.l.b16 %v9996
        %v10510 = vunpack.c.l.b16 %v9997
        %v10511 = vunpack.c.l.b16 %v9998
        %v10512 = vunpack.c.l.b16 %v9999
        %v10513 = vunpack.c.l.b16 %v10000
        %v10514 = vunpack.c.l.b16 %v10001
        %v10515 = vunpack.c.l.b16 %v10002
        %v10516 = vunpack.c.l.b16 %v10003
        %v10517 = vunpack.c.l.b16 %v10004
        %v10518 = vunpack.c.l.b16 %v10005
        %v10519 = vunpack.c.l.b16 %v10006
        %v10520 = vunpack.c.l.b16 %v10007
        %v10521 = vunpack.c.l.b16 %v10008
        %v10522 = vunpack.c.l.b16 %v10009
        %v10523 = vunpack.c.l.b16 %v10010
        %v10524 = vunpack.c.l.b16 %v10011
        %v10525 = vunpack.c.l.b16 %v10012
        %v10526 = vunpack.c.l.b16 %v10013
        %v10527 = vunpack.c.l.b16 %v10014
        %v10528 = vunpack.c.l.b16 %v10015
        %v10529 = vunpack.c.l.b16 %v10016
        %v10530 = vunpack.c.l.b16 %v10017
        %v10531 = vunpack.c.l.b16 %v10018
        %v10532 = vunpack.c.l.b16 %v10019
        %v10533 = vunpack.c.l.b16 %v10020
        %v10534 = vunpack.c.l.b16 %v10021
        %v10535 = vunpack.c.l.b16 %v10022
        %v10536 = vunpack.c.l.b16 %v10023
        %v10537 = vunpack.c.l.b16 %v10024
        %v10538 = vunpack.c.l.b16 %v10025
        %v10539 = vunpack.c.l.b16 %v10026
        %v10540 = vunpack.c.l.b16 %v10027
        %v10541 = vunpack.c.l.b16 %v10028
        %v10542 = vunpack.c.l.b16 %v10029
        %v10543 = vunpack.c.l.b16 %v10030
        %v10544 = vunpack.c.l.b16 %v10031
        %v10545 = vunpack.c.l.b16 %v10032
        %v10546 = vunpack.c.l.b16 %v10033
        %v10547 = vunpack.c.l.b16 %v10034
        %v10548 = vunpack.c.l.b16 %v10035
        %v10549 = vunpack.c.l.b16 %v10036
        %v10550 = vunpack.c.l.b16 %v10037
        %v10551 = vunpack.c.l.b16 %v10038
        %v10552 = vunpack.c.l.b16 %v10039
        %v10553 = vunpack.c.l.b16 %v10040
        %v10554 = vunpack.c.l.b16 %v10041
        %v10555 = vunpack.c.l.b16 %v10042
        %v10556 = vunpack.c.l.b16 %v10043
        %v10557 = vunpack.c.l.b16 %v10044
        %v10558 = vunpack.c.l.b16 %v10045
        %v10559 = vunpack.c.l.b16 %v10046
        %v10560 = vunpack.c.l.b16 %v10047
        %v10561 = vunpack.c.l.b16 %v10048
        %v10562 = vunpack.c.l.b16 %v10049
        %v10563 = vunpack.c.l.b16 %v10050
        %v10564 = vunpack.c.l.b16 %v10051
        %v10565 = vunpack.c.l.b16 %v10052
        %v10566 = vunpack.c.l.b16 %v10053
        %v10567 = vunpack.c.l.b16 %v10054
        %v10568 = vunpack.c.l.b16 %v10055
        %v10569 = vunpack.c.l.b16 %v10056
        %v10570 = vunpack.c.l.b16 %v10057
        %v10571 = vunpack.c.l.b16 %v10058
        %v10572 = vunpack.c.l.b16 %v10059
        %v10573 = vunpack.c.l.b16 %v10060
        %v10574 = vunpack.c.l.b16 %v10061
        %v10575 = vunpack.c.l.b16 %v10062
        %v10576 = vunpack.c.l.b16 %v10063
        %v10577 = vunpack.c.l.b16 %v10064
        %v10578 = vunpack.c.l.b16 %v10065
        %v10579 = vunpack.c.l.b16 %v10066
        %v10580 = vunpack.c.l.b16 %v10067
        %v10581 = vunpack.c.l.b16 %v10068
        %v10582 = vunpack.c.l.b16 %v10069
        %v10583 = vunpack.c.l.b16 %v10070
        %v10584 = vunpack.c.l.b16 %v10071
        %v10585 = vunpack.c.l.b16 %v10072
        %v10586 = vunpack.c.l.b16 %v10073
        %v10587 = vunpack.c.l.b16 %v10074
        %v10588 = vunpack.c.l.b16 %v10075
        %v10589 = vunpack.c.l.b16 %v10076
        %v10590 = vunpack.c.l.b16 %v10077
        %v10591 = vunpack.c.l.b16 %v10078
        %v10592 = vunpack.c.l.b16 %v10079
        %v10593 = vunpack.c.l.b16 %v10080
        %v10594 = vunpack.c.l.b16 %v10081
        %v10595 = vunpack.c.l.b16 %v10082
        %v10596 = vunpack.c.l.b16 %v10083
        %v10597 = vunpack.c.l.b16 %v10084
        %v10598 = vunpack.c.l.b16 %v10085
        %v10599 = vunpack.c.l.b16 %v10086
        %v10600 = vunpack.c.l.b16 %v10087
        %v10601 = vunpack.c.l.b16 %v10088
        %v10602 = vunpack.c.l.b16 %v10089
        %v10603 = vunpack.c.l.b16 %v10090
        %v10604 = vunpack.c.l.b16 %v10091
        %v10605 = vunpack.c.l.b16 %v10092
        %v10606 = vunpack.c.l.b16 %v10093
        %v10607 = vunpack.c.l.b16 %v10094
        %v10608 = vunpack.c.l.b16 %v10095
        %v10609 = vunpack.c.l.b16 %v10096
        %v10610 = vunpack.c.l.b16 %v10097
        %v10611 = vunpack.c.l.b16 %v10098
        %v10612 = vunpack.c.l.b16 %v10099
        %v10613 = vunpack.c.l.b16 %v10100
        %v10614 = vunpack.c.l.b16 %v10101
        %v10615 = vunpack.c.l.b16 %v10102
        %v10616 = vunpack.c.l.b16 %v10103
        %v10617 = vunpack.c.l.b16 %v10104
        %v10618 = vunpack.c.l.b16 %v10105
        %v10619 = vunpack.c.l.b16 %v10106
        %v10620 = vunpack.c.l.b16 %v10107
        %v10621 = vunpack.c.l.b16 %v10108
        %v10622 = vunpack.c.l.b16 %v10109
        %v10623 = vunpack.c.l.b16 %v10110
        %v10624 = vunpack.c.l.b16 %v10111
        %v10625 = vunpack.c.l.b16 %v10112
        %v10626 = vunpack.c.l.b16 %v10113
        %v10627 = vunpack.c.l.b16 %v10114
        %v10628 = vunpack.c.l.b16 %v10115
        %v10629 = vunpack.c.l.b16 %v10116
        %v10630 = vunpack.c.l.b16 %v10117
        %v10631 = vunpack.c.l.b16 %v10118
        %v10632 = vunpack.c.l.b16 %v10119
        %v10633 = vunpack.c.l.b16 %v10120
        %v10634 = vunpack.c.l.b16 %v10121
        %v10635 = vunpack.c.l.b16 %v10122
        %v10636 = vunpack.c.l.b16 %v10123
        %v10637 = vunpack.c.l.b16 %v10124
        %v10638 = vunpack.c.l.b16 %v10125
        %v10639 = vunpack.c.l.b16 %v10126
        %v10640 = vunpack.c.l.b16 %v10127
        %v10641 = vunpack.c.l.b16 %v10128
        %v10642 = vunpack.c.l.b16 %v10129
        %v10643 = vunpack.c.l.b16 %v10130
        %v10644 = vunpack.c.l.b16 %v10131
        %v10645 = vunpack.c.l.b16 %v10132
        %v10646 = vunpack.c.l.b16 %v10133
        %v10647 = vunpack.c.l.b16 %v10134
        %v10648 = vunpack.c.l.b16 %v10135
        %v10649 = vunpack.c.l.b16 %v10136
        %v10650 = vunpack.c.l.b16 %v10137
        %v10651 = vunpack.c.l.b16 %v10138
        %v10652 = vunpack.c.l.b16 %v10139
        %v10653 = vunpack.c.l.b16 %v10140
        %v10654 = vunpack.c.l.b16 %v10141
        %v10655 = vunpack.c.l.b16 %v10142
        %v10656 = vunpack.c.l.b16 %v10143
        %v10657 = vunpack.c.l.b16 %v10144
        %v10658 = vunpack.c.l.b16 %v10145
        %v10659 = vunpack.c.l.b16 %v10146
        %v10660 = vunpack.c.l.b16 %v10147
        %v10661 = vunpack.c.l.b16 %v10148
        %v10662 = vunpack.c.l.b16 %v10149
        %v10663 = vunpack.c.l.b16 %v10150
        %v10664 = vunpack.c.l.b16 %v10151
        %v10665 = vunpack.c.l.b16 %v10152
        %v10666 = vunpack.c.l.b16 %v10153
        %v10667 = vunpack.c.l.b16 %v10154
        %v10668 = vunpack.c.l.b16 %v10155
        %v10669 = vunpack.c.l.b16 %v10156
        %v10670 = vunpack.c.l.b16 %v10157
        %v10671 = vunpack.c.l.b16 %v10158
        %v10672 = vunpack.c.l.b16 %v10159
        %v10673 = vunpack.c.l.b16 %v10160
        %v10674 = vunpack.c.l.b16 %v10161
        %v10675 = vunpack.c.l.b16 %v10162
        %v10676 = vunpack.c.l.b16 %v10163
        %v10677 = vunpack.c.l.b16 %v10164
        %v10678 = vunpack.c.l.b16 %v10165
        %v10679 = vunpack.c.l.b16 %v10166
        %v10680 = vunpack.c.l.b16 %v10167
        %v10681 = vunpack.c.l.b16 %v10168
        %v10682 = vunpack.c.l.b16 %v10169
        %v10683 = vunpack.c.l.b16 %v10170
        %v10684 = vunpack.c.l.b16 %v10171
        %v10685 = vunpack.c.l.b16 %v10172
        %v10686 = vunpack.c.l.b16 %v10173
        %v10687 = vunpack.c.l.b16 %v10174
        %v10688 = vunpack.c.l.b16 %v10175
        %v10689 = vunpack.c.l.b16 %v10176
        %v10690 = vunpack.c.l.b16 %v10177
        %v10691 = vunpack.c.l.b16 %v10178
        %v10692 = vunpack.c.l.b16 %v10179
        %v10693 = vunpack.c.l.b16 %v10180
        %v10694 = vunpack.c.l.b16 %v10181
        %v10695 = vunpack.c.l.b16 %v10182
        %v10696 = vunpack.c.l.b16 %v10183
        %v10697 = vunpack.c.l.b16 %v10184
        %v10698 = vunpack.c.l.b16 %v10185
        %v10699 = vunpack.c.l.b16 %v10186
        %v10700 = vunpack.c.l.b16 %v10187
        %v10701 = vunpack.c.l.b16 %v10188
        %v10702 = vunpack.c.l.b16 %v10189
        %v10703 = vunpack.c.l.b16 %v10190
        %v10704 = vunpack.c.l.b16 %v10191
        %v10705 = vunpack.c.l.b16 %v10192
        %v10706 = vunpack.c.l.b16 %v10193
        %v10707 = vunpack.c.l.b16 %v10194
        %v10708 = vunpack.c.l.b16 %v10195
        %v10709 = vunpack.c.l.b16 %v10196
        %v10710 = vunpack.c.l.b16 %v10197
        %v10711 = vunpack.c.l.b16 %v10198
        %v10712 = vunpack.c.l.b16 %v10199
        %v10713 = vunpack.c.l.b16 %v10200
        %v10714 = vunpack.c.l.b16 %v10201
        %v10715 = vunpack.c.l.b16 %v10202
        %v10716 = vunpack.c.l.b16 %v10203
        %v10717 = vunpack.c.l.b16 %v10204
        %v10718 = vunpack.c.l.b16 %v10205
        %v10719 = vunpack.c.l.b16 %v10206
        %v10720 = vunpack.c.l.b16 %v10207
        %v10721 = vunpack.c.l.b16 %v10208
        %v10722 = vunpack.c.l.b16 %v10209
        %v10723 = vunpack.c.l.b16 %v10210
        %v10724 = vunpack.c.l.b16 %v10211
        %v10725 = vunpack.c.l.b16 %v10212
        %v10726 = vunpack.c.l.b16 %v10213
        %v10727 = vunpack.c.l.b16 %v10214
        %v10728 = vunpack.c.l.b16 %v10215
        %v10729 = vunpack.c.l.b16 %v10216
        %v10730 = vunpack.c.l.b16 %v10217
        %v10731 = vunpack.c.l.b16 %v10218
        %v10732 = vunpack.c.l.b16 %v10219
        %v10733 = vunpack.c.l.b16 %v10220
        %v10734 = vunpack.c.l.b16 %v10221
        %v10735 = vunpack.c.l.b16 %v10222
        %v10736 = vunpack.c.l.b16 %v10223
        %v10737 = vunpack.c.l.b16 %v10224
        %v10738 = vunpack.c.l.b16 %v10225
        %v10739 = vunpack.c.l.b16 %v10226
        %v10740 = vunpack.c.l.b16 %v10227
        %v10741 = vunpack.c.l.b16 %v10228
        %v10742 = vunpack.c.l.b16 %v10229
        %v10743 = vunpack.c.l.b16 %v10230
        %v10744 = vunpack.c.l.b16 %v10231
        %v10745 = vunpack.c.l.b16 %v10232
        %v10746 = vunpack.c.l.b16 %v10233
        %v10747 = vunpack.c.l.b16 %v10234
        %v10748 = vunpack.c.l.b16 %v10235
        %v10749 = vunpack.c.l.b16 %v10236
        %v10750 = vunpack.c.l.b16 %v10237
        %v10751 = vunpack.c.l.b16 %v10238
        %v10752 = vunpack.c.l.b16 %v10239
        %v10753 = vpack.c.b16 %v10498, %v10497
        %v10754 = vpack.c.b16 %v10500, %v10499
        %v10755 = vpack.c.b16 %v10502, %v10501
        %v10756 = vpack.c.b16 %v10504, %v10503
        %v10757 = vpack.c.b16 %v10506, %v10505
        %v10758 = vpack.c.b16 %v10508, %v10507
        %v10759 = vpack.c.b16 %v10510, %v10509
        %v10760 = vpack.c.b16 %v10512, %v10511
        %v10761 = vpack.c.b16 %v10514, %v10513
        %v10762 = vpack.c.b16 %v10516, %v10515
        %v10763 = vpack.c.b16 %v10518, %v10517
        %v10764 = vpack.c.b16 %v10520, %v10519
        %v10765 = vpack.c.b16 %v10522, %v10521
        %v10766 = vpack.c.b16 %v10524, %v10523
        %v10767 = vpack.c.b16 %v10526, %v10525
        %v10768 = vpack.c.b16 %v10528, %v10527
        %v10769 = vpack.c.b16 %v10530, %v10529
        %v10770 = vpack.c.b16 %v10532, %v10531
        %v10771 = vpack.c.b16 %v10534, %v10533
        %v10772 = vpack.c.b16 %v10536, %v10535
        %v10773 = vpack.c.b16 %v10538, %v10537
        %v10774 = vpack.c.b16 %v10540, %v10539
        %v10775 = vpack.c.b16 %v10542, %v10541
        %v10776 = vpack.c.b16 %v10544, %v10543
        %v10777 = vpack.c.b16 %v10546, %v10545
        %v10778 = vpack.c.b16 %v10548, %v10547
        %v10779 = vpack.c.b16 %v10550, %v10549
        %v10780 = vpack.c.b16 %v10552, %v10551
        %v10781 = vpack.c.b16 %v10554, %v10553
        %v10782 = vpack.c.b16 %v10556, %v10555
        %v10783 = vpack.c.b16 %v10558, %v10557
        %v10784 = vpack.c.b16 %v10560, %v10559
        %v10785 = vpack.c.b16 %v10562, %v10561
        %v10786 = vpack.c.b16 %v10564, %v10563
        %v10787 = vpack.c.b16 %v10566, %v10565
        %v10788 = vpack.c.b16 %v10568, %v10567
        %v10789 = vpack.c.b16 %v10570, %v10569
        %v10790 = vpack.c.b16 %v10572, %v10571
        %v10791 = vpack.c.b16 %v10574, %v10573
        %v10792 = vpack.c.b16 %v10576, %v10575
        %v10793 = vpack.c.b16 %v10578, %v10577
        %v10794 = vpack.c.b16 %v10580, %v10579
        %v10795 = vpack.c.b16 %v10582, %v10581
        %v10796 = vpack.c.b16 %v10584, %v10583
        %v10797 = vpack.c.b16 %v10586, %v10585
        %v10798 = vpack.c.b16 %v10588, %v10587
        %v10799 = vpack.c.b16 %v10590, %v10589
        %v10800 = vpack.c.b16 %v10592, %v10591
        %v10801 = vpack.c.b16 %v10594, %v10593
        %v10802 = vpack.c.b16 %v10596, %v10595
        %v10803 = vpack.c.b16 %v10598, %v10597
        %v10804 = vpack.c.b16 %v10600, %v10599
        %v10805 = vpack.c.b16 %v10602, %v10601
        %v10806 = vpack.c.b16 %v10604, %v10603
        %v10807 = vpack.c.b16 %v10606, %v10605
        %v10808 = vpack.c.b16 %v10608, %v10607
        %v10809 = vpack.c.b16 %v10610, %v10609
        %v10810 = vpack.c.b16 %v10612, %v10611
        %v10811 = vpack.c.b16 %v10614, %v10613
        %v10812 = vpack.c.b16 %v10616, %v10615
        %v10813 = vpack.c.b16 %v10618, %v10617
        %v10814 = vpack.c.b16 %v10620, %v10619
        %v10815 = vpack.c.b16 %v10622, %v10621
        %v10816 = vpack.c.b16 %v10624, %v10623
        %v10817 = vpack.c.b16 %v10626, %v10625
        %v10818 = vpack.c.b16 %v10628, %v10627
        %v10819 = vpack.c.b16 %v10630, %v10629
        %v10820 = vpack.c.b16 %v10632, %v10631
        %v10821 = vpack.c.b16 %v10634, %v10633
        %v10822 = vpack.c.b16 %v10636, %v10635
        %v10823 = vpack.c.b16 %v10638, %v10637
        %v10824 = vpack.c.b16 %v10640, %v10639
        %v10825 = vpack.c.b16 %v10642, %v10641
        %v10826 = vpack.c.b16 %v10644, %v10643
        %v10827 = vpack.c.b16 %v10646, %v10645
        %v10828 = vpack.c.b16 %v10648, %v10647
        %v10829 = vpack.c.b16 %v10650, %v10649
        %v10830 = vpack.c.b16 %v10652, %v10651
        %v10831 = vpack.c.b16 %v10654, %v10653
        %v10832 = vpack.c.b16 %v10656, %v10655
        %v10833 = vpack.c.b16 %v10658, %v10657
        %v10834 = vpack.c.b16 %v10660, %v10659
        %v10835 = vpack.c.b16 %v10662, %v10661
        %v10836 = vpack.c.b16 %v10664, %v10663
        %v10837 = vpack.c.b16 %v10666, %v10665
        %v10838 = vpack.c.b16 %v10668, %v10667
        %v10839 = vpack.c.b16 %v10670, %v10669
        %v10840 = vpack.c.b16 %v10672, %v10671
        %v10841 = vpack.c.b16 %v10674, %v10673
        %v10842 = vpack.c.b16 %v10676, %v10675
        %v10843 = vpack.c.b16 %v10678, %v10677
        %v10844 = vpack.c.b16 %v10680, %v10679
        %v10845 = vpack.c.b16 %v10682, %v10681
        %v10846 = vpack.c.b16 %v10684, %v10683
        %v10847 = vpack.c.b16 %v10686, %v10685
        %v10848 = vpack.c.b16 %v10688, %v10687
        %v10849 = vpack.c.b16 %v10690, %v10689
        %v10850 = vpack.c.b16 %v10692, %v10691
        %v10851 = vpack.c.b16 %v10694, %v10693
        %v10852 = vpack.c.b16 %v10696, %v10695
        %v10853 = vpack.c.b16 %v10698, %v10697
        %v10854 = vpack.c.b16 %v10700, %v10699
        %v10855 = vpack.c.b16 %v10702, %v10701
        %v10856 = vpack.c.b16 %v10704, %v10703
        %v10857 = vpack.c.b16 %v10706, %v10705
        %v10858 = vpack.c.b16 %v10708, %v10707
        %v10859 = vpack.c.b16 %v10710, %v10709
        %v10860 = vpack.c.b16 %v10712, %v10711
        %v10861 = vpack.c.b16 %v10714, %v10713
        %v10862 = vpack.c.b16 %v10716, %v10715
        %v10863 = vpack.c.b16 %v10718, %v10717
        %v10864 = vpack.c.b16 %v10720, %v10719
        %v10865 = vpack.c.b16 %v10722, %v10721
        %v10866 = vpack.c.b16 %v10724, %v10723
        %v10867 = vpack.c.b16 %v10726, %v10725
        %v10868 = vpack.c.b16 %v10728, %v10727
        %v10869 = vpack.c.b16 %v10730, %v10729
        %v10870 = vpack.c.b16 %v10732, %v10731
        %v10871 = vpack.c.b16 %v10734, %v10733
        %v10872 = vpack.c.b16 %v10736, %v10735
        %v10873 = vpack.c.b16 %v10738, %v10737
        %v10874 = vpack.c.b16 %v10740, %v10739
        %v10875 = vpack.c.b16 %v10742, %v10741
        %v10876 = vpack.c.b16 %v10744, %v10743
        %v10877 = vpack.c.b16 %v10746, %v10745
        %v10878 = vpack.c.b16 %v10748, %v10747
        %v10879 = vpack.c.b16 %v10750, %v10749
        %v10880 = vpack.c.b16 %v10752, %v10751
        %11009 = vmatpush.bf16.msra.mxu0 %v10760
        %11010 = vmatpush.bf16.msra.mxu0 %v10759
        %11011 = vmatpush.bf16.msra.mxu0 %v10758
        %11012 = vmatpush.bf16.msra.mxu0 %v10757
        %11013 = vmatpush.bf16.msra.mxu0 %v10756
        %11014 = vmatpush.bf16.msra.mxu0 %v10755
        %11015 = vmatpush.bf16.msra.mxu0 %v10754
        %11016 = vmatpush.bf16.msra.mxu0 %v10753
        %11017 = vmatmul.bf16.gmra.mxu0 %v9968
        %v11018 = vpop.f32.mrf.mxu0
        %v11019 = vadd.f32 %v10240, %v11018
        %v11020 = vpop.f32.mrf.mxu0
        %11021 = vdwg.mxu0
        %11022 = vmatpush.bf16.msra.mxu0 %v10768
        %11023 = vmatpush.bf16.msra.mxu0 %v10767
        %11024 = vmatpush.bf16.msra.mxu0 %v10766
        %11025 = vmatpush.bf16.msra.mxu0 %v10765
        %11026 = vmatpush.bf16.msra.mxu0 %v10764
        %11027 = vmatpush.bf16.msra.mxu0 %v10763
        %11028 = vmatpush.bf16.msra.mxu0 %v10762
        %11029 = vmatpush.bf16.msra.mxu0 %v10761
        %11030 = vmatmul.bf16.gmra.mxu0 %v9969
        %v11031 = vpop.f32.mrf.mxu0
        %v11032 = vadd.f32 %v11019, %v11031
        %v11033 = vpop.f32.mrf.mxu0
        %11034 = vdwg.mxu0
        %11035 = vmatpush.bf16.msra.mxu0 %v10776
        %11036 = vmatpush.bf16.msra.mxu0 %v10775
        %11037 = vmatpush.bf16.msra.mxu0 %v10774
        %11038 = vmatpush.bf16.msra.mxu0 %v10773
        %11039 = vmatpush.bf16.msra.mxu0 %v10772
        %11040 = vmatpush.bf16.msra.mxu0 %v10771
        %11041 = vmatpush.bf16.msra.mxu0 %v10770
        %11042 = vmatpush.bf16.msra.mxu0 %v10769
        %11043 = vmatmul.bf16.gmra.mxu0 %v9970
        %v11044 = vpop.f32.mrf.mxu0
        %v11045 = vadd.f32 %v11032, %v11044
        %v11046 = vpop.f32.mrf.mxu0
        %11047 = vdwg.mxu0
        %11048 = vmatpush.bf16.msra.mxu0 %v10784
        %11049 = vmatpush.bf16.msra.mxu0 %v10783
        %11050 = vmatpush.bf16.msra.mxu0 %v10782
        %11051 = vmatpush.bf16.msra.mxu0 %v10781
        %11052 = vmatpush.bf16.msra.mxu0 %v10780
        %11053 = vmatpush.bf16.msra.mxu0 %v10779
        %11054 = vmatpush.bf16.msra.mxu0 %v10778
        %11055 = vmatpush.bf16.msra.mxu0 %v10777
        %11056 = vmatmul.bf16.gmra.mxu0 %v9971
        %v11057 = vpop.f32.mrf.mxu0
        %v11058 = vadd.f32 %v11045, %v11057
        %v11059 = vpop.f32.mrf.mxu0
        %11060 = vdwg.mxu0
        %11061 = vmatpush.bf16.msra.mxu0 %v10792
        %11062 = vmatpush.bf16.msra.mxu0 %v10791
        %11063 = vmatpush.bf16.msra.mxu0 %v10790
        %11064 = vmatpush.bf16.msra.mxu0 %v10789
        %11065 = vmatpush.bf16.msra.mxu0 %v10788
        %11066 = vmatpush.bf16.msra.mxu0 %v10787
        %11067 = vmatpush.bf16.msra.mxu0 %v10786
        %11068 = vmatpush.bf16.msra.mxu0 %v10785
        %11069 = vmatmul.bf16.gmra.mxu0 %v9972
        %v11070 = vpop.f32.mrf.mxu0
        %v11071 = vadd.f32 %v11058, %v11070
        %v11072 = vpop.f32.mrf.mxu0
        %11073 = vdwg.mxu0
        %11074 = vmatpush.bf16.msra.mxu0 %v10800
        %11075 = vmatpush.bf16.msra.mxu0 %v10799
        %11076 = vmatpush.bf16.msra.mxu0 %v10798
        %11077 = vmatpush.bf16.msra.mxu0 %v10797
        %11078 = vmatpush.bf16.msra.mxu0 %v10796
        %11079 = vmatpush.bf16.msra.mxu0 %v10795
        %11080 = vmatpush.bf16.msra.mxu0 %v10794
        %11081 = vmatpush.bf16.msra.mxu0 %v10793
        %11082 = vmatmul.bf16.gmra.mxu0 %v9973
        %v11083 = vpop.f32.mrf.mxu0
        %v11084 = vadd.f32 %v11071, %v11083
        %v11085 = vpop.f32.mrf.mxu0
        %11086 = vdwg.mxu0
        %11087 = vmatpush.bf16.msra.mxu0 %v10808
        %11088 = vmatpush.bf16.msra.mxu0 %v10807
        %11089 = vmatpush.bf16.msra.mxu0 %v10806
        %11090 = vmatpush.bf16.msra.mxu0 %v10805
        %11091 = vmatpush.bf16.msra.mxu0 %v10804
        %11092 = vmatpush.bf16.msra.mxu0 %v10803
        %11093 = vmatpush.bf16.msra.mxu0 %v10802
        %11094 = vmatpush.bf16.msra.mxu0 %v10801
        %11095 = vmatmul.bf16.gmra.mxu0 %v9974
        %v11096 = vpop.f32.mrf.mxu0
        %v11097 = vadd.f32 %v11084, %v11096
        %v11098 = vpop.f32.mrf.mxu0
        %11099 = vdwg.mxu0
        %11100 = vmatpush.bf16.msra.mxu0 %v10816
        %11101 = vmatpush.bf16.msra.mxu0 %v10815
        %11102 = vmatpush.bf16.msra.mxu0 %v10814
        %11103 = vmatpush.bf16.msra.mxu0 %v10813
        %11104 = vmatpush.bf16.msra.mxu0 %v10812
        %11105 = vmatpush.bf16.msra.mxu0 %v10811
        %11106 = vmatpush.bf16.msra.mxu0 %v10810
        %11107 = vmatpush.bf16.msra.mxu0 %v10809
        %11108 = vmatmul.bf16.gmra.mxu0 %v9975
        %v11109 = vpop.f32.mrf.mxu0
        %v11110 = vadd.f32 %v11097, %v11109
        %v11111 = vpop.f32.mrf.mxu0
        %11112 = vdwg.mxu0
        %11113 = vmatpush.bf16.msra.mxu0 %v10824
        %11114 = vmatpush.bf16.msra.mxu0 %v10823
        %11115 = vmatpush.bf16.msra.mxu0 %v10822
        %11116 = vmatpush.bf16.msra.mxu0 %v10821
        %11117 = vmatpush.bf16.msra.mxu0 %v10820
        %11118 = vmatpush.bf16.msra.mxu0 %v10819
        %11119 = vmatpush.bf16.msra.mxu0 %v10818
        %11120 = vmatpush.bf16.msra.mxu0 %v10817
        %11121 = vmatmul.bf16.gmra.mxu0 %v9976
        %v11122 = vpop.f32.mrf.mxu0
        %v11123 = vadd.f32 %v11110, %v11122
        %v11124 = vpop.f32.mrf.mxu0
        %11125 = vdwg.mxu0
        %11126 = vmatpush.bf16.msra.mxu0 %v10832
        %11127 = vmatpush.bf16.msra.mxu0 %v10831
        %11128 = vmatpush.bf16.msra.mxu0 %v10830
        %11129 = vmatpush.bf16.msra.mxu0 %v10829
        %11130 = vmatpush.bf16.msra.mxu0 %v10828
        %11131 = vmatpush.bf16.msra.mxu0 %v10827
        %11132 = vmatpush.bf16.msra.mxu0 %v10826
        %11133 = vmatpush.bf16.msra.mxu0 %v10825
        %11134 = vmatmul.bf16.gmra.mxu0 %v9977
        %v11135 = vpop.f32.mrf.mxu0
        %v11136 = vadd.f32 %v11123, %v11135
        %v11137 = vpop.f32.mrf.mxu0
        %11138 = vdwg.mxu0
        %11139 = vmatpush.bf16.msra.mxu0 %v10840
        %11140 = vmatpush.bf16.msra.mxu0 %v10839
        %11141 = vmatpush.bf16.msra.mxu0 %v10838
        %11142 = vmatpush.bf16.msra.mxu0 %v10837
        %11143 = vmatpush.bf16.msra.mxu0 %v10836
        %11144 = vmatpush.bf16.msra.mxu0 %v10835
        %11145 = vmatpush.bf16.msra.mxu0 %v10834
        %11146 = vmatpush.bf16.msra.mxu0 %v10833
        %11147 = vmatmul.bf16.gmra.mxu0 %v9978
        %v11148 = vpop.f32.mrf.mxu0
        %v11149 = vadd.f32 %v11136, %v11148
        %v11150 = vpop.f32.mrf.mxu0
        %11151 = vdwg.mxu0
        %11152 = vmatpush.bf16.msra.mxu0 %v10848
        %11153 = vmatpush.bf16.msra.mxu0 %v10847
        %11154 = vmatpush.bf16.msra.mxu0 %v10846
        %11155 = vmatpush.bf16.msra.mxu0 %v10845
        %11156 = vmatpush.bf16.msra.mxu0 %v10844
        %11157 = vmatpush.bf16.msra.mxu0 %v10843
        %11158 = vmatpush.bf16.msra.mxu0 %v10842
        %11159 = vmatpush.bf16.msra.mxu0 %v10841
        %11160 = vmatmul.bf16.gmra.mxu0 %v9979
        %v11161 = vpop.f32.mrf.mxu0
        %v11162 = vadd.f32 %v11149, %v11161
        %v11163 = vpop.f32.mrf.mxu0
        %11164 = vdwg.mxu0
        %11165 = vmatpush.bf16.msra.mxu0 %v10856
        %11166 = vmatpush.bf16.msra.mxu0 %v10855
        %11167 = vmatpush.bf16.msra.mxu0 %v10854
        %11168 = vmatpush.bf16.msra.mxu0 %v10853
        %11169 = vmatpush.bf16.msra.mxu0 %v10852
        %11170 = vmatpush.bf16.msra.mxu0 %v10851
        %11171 = vmatpush.bf16.msra.mxu0 %v10850
        %11172 = vmatpush.bf16.msra.mxu0 %v10849
        %11173 = vmatmul.bf16.gmra.mxu0 %v9980
        %v11174 = vpop.f32.mrf.mxu0
        %v11175 = vadd.f32 %v11162, %v11174
        %v11176 = vpop.f32.mrf.mxu0
        %11177 = vdwg.mxu0
        %11178 = vmatpush.bf16.msra.mxu0 %v10864
        %11179 = vmatpush.bf16.msra.mxu0 %v10863
        %11180 = vmatpush.bf16.msra.mxu0 %v10862
        %11181 = vmatpush.bf16.msra.mxu0 %v10861
        %11182 = vmatpush.bf16.msra.mxu0 %v10860
        %11183 = vmatpush.bf16.msra.mxu0 %v10859
        %11184 = vmatpush.bf16.msra.mxu0 %v10858
        %11185 = vmatpush.bf16.msra.mxu0 %v10857
        %11186 = vmatmul.bf16.gmra.mxu0 %v9981
        %v11187 = vpop.f32.mrf.mxu0
        %v11188 = vadd.f32 %v11175, %v11187
        %v11189 = vpop.f32.mrf.mxu0
        %11190 = vdwg.mxu0
        %11191 = vmatpush.bf16.msra.mxu0 %v10872
        %11192 = vmatpush.bf16.msra.mxu0 %v10871
        %11193 = vmatpush.bf16.msra.mxu0 %v10870
        %11194 = vmatpush.bf16.msra.mxu0 %v10869
        %11195 = vmatpush.bf16.msra.mxu0 %v10868
        %11196 = vmatpush.bf16.msra.mxu0 %v10867
        %11197 = vmatpush.bf16.msra.mxu0 %v10866
        %11198 = vmatpush.bf16.msra.mxu0 %v10865
        %11199 = vmatmul.bf16.gmra.mxu0 %v9982
        %v11200 = vpop.f32.mrf.mxu0
        %v11201 = vadd.f32 %v11188, %v11200
        %v11202 = vpop.f32.mrf.mxu0
        %11203 = vdwg.mxu0
        %11204 = vmatpush.bf16.msra.mxu0 %v10880
        %11205 = vmatpush.bf16.msra.mxu0 %v10879
        %11206 = vmatpush.bf16.msra.mxu0 %v10878
        %11207 = vmatpush.bf16.msra.mxu0 %v10877
        %11208 = vmatpush.bf16.msra.mxu0 %v10876
        %11209 = vmatpush.bf16.msra.mxu0 %v10875
        %11210 = vmatpush.bf16.msra.mxu0 %v10874
        %11211 = vmatpush.bf16.msra.mxu0 %v10873
        %11212 = vmatmul.bf16.gmra.mxu0 %v9983
        %v11213 = vpop.f32.mrf.mxu0
        %v11214 = vadd.f32 %v11201, %v11213
        %v11215 = vpop.f32.mrf.mxu0
        %11216 = vdwg.mxu0
        %vm11217 = vcmask 73728
        %11218 = vst.msk [vmem:[%s486] sm:$0x1] %vm11217, %v11214
        %s11219 = sand.u32 %s357, 1
        %s11220 = scalar_lea.sflag [#allocation8], %s11219
        %s11221 = sand.u32 %s357, 1
        %s11222 = scalar_lea.vmem [#allocation7], %s11221
        // Predicated region
        $region81: #{netv2_forward.1} parent=79 // pred_check
          %p11223 = pneg %p367
        $region82: #{netv2_forward.1} parent=79 // pred_check_branch
          %11225 = sbr.rel (%p11223) target = $region84
        $region83: #{netv2_forward.1} parent=79 // pred_region
          %11227 = vsyncadd %s11220, 0
          %s11228 = scalar_lea.hbm %s15, %s29
          %s11230 = sshll.u32 %s11222, 4
          %s11231 = int_to_ptr.vmem [resolvable:$true] %s11230
          %s11232 = sshll.u32 %s11228, 4
          %s11233 = int_to_ptr.hbm [resolvable:$true] %s11232
          %11235 = dma.vmem_to_hbm [thread:$0]  %s11231, 16, %s11233, %s11220
        $region84: #{netv2_forward.1} parent=79 // pred_fallthru
          _
      $region80: #{netv2_forward.1} parent=5 // pred_fallthru
        _
      %p11236 = scmp.le.s32.totalorder 2, %s24
      // Predicated region
      $region85: #{netv2_forward.1} parent=5 // pred_check
        %p11237 = pneg %p11236
      $region86: #{netv2_forward.1} parent=5 // pred_check_branch
        %11239 = sbr.rel (%p11237) target = $region88
      $region87: #{netv2_forward.1} parent=5 // pred_region
        %s11240 = ssub.s32 %s24, 2
        // Predicated region
        $region89: #{netv2_forward.1} parent=87 // pred_check
          %p11241 = pneg %p373
        $region90: #{netv2_forward.1} parent=87 // pred_check_branch
          %11243 = sbr.rel (%p11241) target = $region92
        $region91: #{netv2_forward.1} parent=87 // pred_region
          %s11244 = sand.u32 %s358, 1
          %s11245 = scalar_lea.sflag [#allocation8], %s11244
          %s11246 = sand.u32 %s358, 1
          %s11247 = scalar_lea.vmem [#allocation7], %s11246
          %11249 = dma.done %s11245, 16
        $region92: #{netv2_forward.1} parent=87 // pred_fallthru
          _
      $region88: #{netv2_forward.1} parent=5 // pred_fallthru
        _
    $region6: #{netv2_forward.1} parent=1 // loop_footer
      %s28 = sadd.s32 1, %s24
    $region7: #{netv2_forward.1} parent=1 // loop_footer_branch
      %23 = sbr.rel target = $region3
    $region8: #{netv2_forward.1} parent=1 // loop_exit
      _
    %11250 = vsyncpa [#allocation8], 1
    %s11251 = scalar_lea.sflag [#allocation8], 1
    %11252 = vsyncpa %s11251, 1

</llo_original>
